<compile_context>
chip_gen: v7x
topology: tpu7x:2x2x1
jax: 0.10.0
libtpu: 0.0.40
codegen_flags: <defaults>
</compile_context>

<pallas_src>
import numpy as np
import jax
import jax.numpy as jnp
from jax.experimental import pallas as pl
from jax.experimental.pallas import tpu as pltpu

# ---------------- model hyper-params (match the PyTorch defaults) -----------
D_INPUT = 3
INPUT_ENC_L = 10
D_VIEW = 3
VIEW_ENC_L = 4
N_LAYERS = 8
H_SIZE = 256
SKIP = (4,)

ENC_IN = D_INPUT * (1 + 2 * INPUT_ENC_L)   # 63
ENC_VIEW = D_VIEW * (1 + 2 * VIEW_ENC_L)   # 27
H_HALF = H_SIZE // 2                       # 128

# lane-padded sizes used inside the kernel
ENC_IN_PAD = 64
ENC_VIEW_PAD = 32
OUT_PAD = 128           # lane-dense output slab; cols 0-2 rgb, col 3 sigma
SIGMA_COL = 3           # where sigma lives in the padded head / output block


# ---------------- positional encoder (cheap glue, plain JAX) ----------------
def positional_encode(x, L):
    # Standard NeRF encoder, log=False -> linearly spaced frequencies in
    # [2^0, 2^(L-1)].  Output dim = d * (1 + 2L).
    # TODO(synk): PositionalEncoder source not provided; sin/cos ordering and
    # linear (non-log) frequency spacing follow the canonical NeRF code.
    freqs = np.linspace(2.0 ** 0, 2.0 ** (L - 1), L).astype(np.float32)
    feats = [x]
    for f in freqs:
        feats.append(jnp.sin(x * f))
        feats.append(jnp.cos(x * f))
    return jnp.concatenate(feats, axis=-1)


# ---------------- Pallas kernel ----------------------------------------------
def nerf_kernel(x_ref, v_ref, *refs):
    # refs = 24 parameter refs followed by the output ref
    out_ref = refs[-1]
    (w0, b0, w1, b1, w2, b2, w3, b3, w4, b4,
     w5h, w5x, b5, w6, b6, w7, b7,
     wrs, brs, wbh, wbv, bb, wo, bo) = [r[...] for r in refs[:-1]]

    f32 = jnp.float32
    bf16 = jnp.bfloat16

    def dot(a, w):
        return jnp.dot(a, w, preferred_element_type=f32)

    def layer(a, w, b):
        return jnp.maximum(dot(a, w) + b, 0.0).astype(bf16)

    x_in = x_ref[...]          # (bn, 64)  bf16, cols 63.. are zero padding
    v = v_ref[...]             # (bn, 32)  bf16, cols 27.. are zero padding

    h = layer(x_in, w0, b0)    # layer 0
    h = layer(h, w1, b1)       # layer 1
    h = layer(h, w2, b2)       # layer 2
    h = layer(h, w3, b3)       # layer 3
    h = layer(h, w4, b4)       # layer 4  (skip concat follows)
    # cat([h, x_in]) @ W5  ==  h @ W5[:256] + x_in @ W5[256:]
    h = jnp.maximum(dot(h, w5h) + dot(x_in, w5x) + b5, 0.0).astype(bf16)  # layer 5
    h = layer(h, w6, b6)       # layer 6
    h = layer(h, w7, b7)       # layer 7

    # fused rgb_filters + sigma head: (bn, 384)
    #   cols 0..255  -> rgb_filters output (NO activation, matches torch)
    #   col 256+3    -> sigma (no activation), other padded cols are zero
    rs = dot(h, wrs) + brs
    rgb = rs[:, :H_SIZE].astype(bf16)   # (bn, 256)
    sigma_blk = rs[:, H_SIZE:]          # (bn, 128) f32, sigma at col 3, rest 0

    # view branch: cat([rgb, viewdir]) @ Wb == rgb @ Wb[:256] + v @ Wb[256:]
    z = jnp.maximum(dot(rgb, wbh) + dot(v, wbv) + bb, 0.0).astype(bf16)  # (bn,128)

    # output head, padded to 128 lanes: cols 0-2 rgb_out, cols 3..127 zero
    rgb_out = dot(z, wo) + bo           # (bn, 128) f32

    # lane-dense store: cols 0-2 = rgb, col 3 = sigma, rest zero
    out_ref[...] = rgb_out + sigma_blk


# ---------------- parameter init (deterministic, pre-transposed/padded) ------
def init_params(key):
    def linear(k, fan_in, fan_out):
        k1, k2 = jax.random.split(k)
        w = jax.random.normal(k1, (fan_in, fan_out), jnp.float32) / np.sqrt(fan_in)
        b = 0.01 * jax.random.normal(k2, (1, fan_out), jnp.float32)
        return w, b

    def pad_rows(w, rows):
        return jnp.pad(w, ((0, rows - w.shape[0]), (0, 0)))

    def pad_cols(w, cols):
        return jnp.pad(w, ((0, 0), (0, cols - w.shape[1])))

    keys = jax.random.split(key, 16)
    ki = iter(keys)

    # trunk layers (true, unpadded input dims as in the torch module)
    layer_ws, layer_bs = [], []
    in_dims = [ENC_IN] + [H_SIZE + (ENC_IN if i in SKIP else 0)
                          for i in range(N_LAYERS - 1)]
    for d_in in in_dims:
        w, b = linear(next(ki), d_in, H_SIZE)
        layer_ws.append(w)
        layer_bs.append(b)

    params = []
    # layer 0: pad input rows 63 -> 64
    params += [pad_rows(layer_ws[0], ENC_IN_PAD), layer_bs[0]]
    # layers 1..4
    for i in range(1, 5):
        params += [layer_ws[i], layer_bs[i]]
    # layer 5 (319 -> 256): split into (256->256) and (63->256, padded to 64)
    params += [layer_ws[5][:H_SIZE, :],
               pad_rows(layer_ws[5][H_SIZE:, :], ENC_IN_PAD),
               layer_bs[5]]
    # layers 6, 7
    for i in (6, 7):
        params += [layer_ws[i], layer_bs[i]]

    # heads
    ws, bs = linear(next(ki), H_SIZE, 1)                    # sigma_out
    wr, br = linear(next(ki), H_SIZE, H_SIZE)               # rgb_filters
    wb, bb = linear(next(ki), H_SIZE + ENC_VIEW, H_HALF)    # branch (283 -> 128)
    wo, bo = linear(next(ki), H_HALF, 3)                    # output (128 -> 3)

    # fused [rgb_filters | sigma] head: (256, 384), sigma at col 256+SIGMA_COL
    sig_w = jnp.zeros((H_SIZE, H_HALF), jnp.float32).at[:, SIGMA_COL].set(ws[:, 0])
    sig_b = jnp.zeros((1, H_HALF), jnp.float32).at[0, SIGMA_COL].set(bs[0, 0])
    wrs = jnp.concatenate([wr, sig_w], axis=1)              # (256, 384)
    brs = jnp.concatenate([br, sig_b], axis=1)              # (1, 384)

    params += [wrs, brs,
               wb[:H_SIZE, :],                              # branch, rgb half
               pad_rows(wb[H_SIZE:, :], ENC_VIEW_PAD),      # branch, view half
               bb,
               pad_cols(wo, OUT_PAD),                       # (128, 128)
               pad_cols(bo, OUT_PAD)]                       # (1, 128)

    # weights in bf16 (MXU-native), biases stay f32 (added to f32 accumulator)
    out = []
    for p in params:
        if p.shape[0] == 1:          # biases
            out.append(p.astype(jnp.float32))
        else:                        # weights
            out.append(p.astype(jnp.bfloat16))
    return out


# ---------------- wrapper -----------------------------------------------------
def nerf_forward(x, viewdir, params, *, block_n=512):
    x_enc = positional_encode(x, INPUT_ENC_L)        # (N, 63)
    v_enc = positional_encode(viewdir, VIEW_ENC_L)   # (N, 27)
    N = x_enc.shape[0]

    n_pad = pl.cdiv(N, block_n) * block_n
    x_enc = jnp.pad(x_enc, ((0, n_pad - N), (0, ENC_IN_PAD - ENC_IN))
                    ).astype(jnp.bfloat16)
    v_enc = jnp.pad(v_enc, ((0, n_pad - N), (0, ENC_VIEW_PAD - ENC_VIEW))
                    ).astype(jnp.bfloat16)

    in_specs = [
        pl.BlockSpec((block_n, ENC_IN_PAD), lambda i: (i, 0)),
        pl.BlockSpec((block_n, ENC_VIEW_PAD), lambda i: (i, 0)),
    ]
    # weights/biases: whole-array resident in VMEM, no per-step pipelining
    for _ in params:
        in_specs.append(pl.BlockSpec(memory_space=pltpu.MemorySpace.VMEM))

    out = pl.pallas_call(
        nerf_kernel,
        out_shape=jax.ShapeDtypeStruct((n_pad, OUT_PAD), jnp.float32),
        grid=(n_pad // block_n,),
        in_specs=in_specs,
        out_specs=pl.BlockSpec((block_n, OUT_PAD), lambda i: (i, 0)),
        compiler_params=pltpu.CompilerParams(
            dimension_semantics=("parallel",)),
    )(x_enc, v_enc, *params)

    # slice back to the true batch and the (rgb, sigma) columns
    return out[:N, :4]


if __name__ == "__main__":
    key = jax.random.PRNGKey(0)
    k_param, k_x, k_v = jax.random.split(key, 3)

    params = init_params(k_param)

    N = 16  # small batch of sample points
    x = jax.random.normal(k_x, (N, D_INPUT), jnp.float32)
    viewdir = jax.random.normal(k_v, (N, D_VIEW), jnp.float32)

    out = nerf_forward(x, viewdir, params)
    jax.block_until_ready(out)
    assert out.shape == (N, 4) and out.dtype == jnp.float32
    assert bool(jnp.all(jnp.isfinite(out)))
    print("KERNEL_OK")
</pallas_src>

<mosaic_0001>
module attributes {stable_mosaic.version = 11 : i64} {
  func.func @nerf_kernel(%arg0: i32, %arg1: memref<512x64xbf16, #tpu.memory_space<vmem>>, %arg2: memref<512x32xbf16, #tpu.memory_space<vmem>>, %arg3: memref<64x256xbf16, #tpu.memory_space<vmem>>, %arg4: memref<1x256xf32, #tpu.memory_space<vmem>>, %arg5: memref<256x256xbf16, #tpu.memory_space<vmem>>, %arg6: memref<1x256xf32, #tpu.memory_space<vmem>>, %arg7: memref<256x256xbf16, #tpu.memory_space<vmem>>, %arg8: memref<1x256xf32, #tpu.memory_space<vmem>>, %arg9: memref<256x256xbf16, #tpu.memory_space<vmem>>, %arg10: memref<1x256xf32, #tpu.memory_space<vmem>>, %arg11: memref<256x256xbf16, #tpu.memory_space<vmem>>, %arg12: memref<1x256xf32, #tpu.memory_space<vmem>>, %arg13: memref<256x256xbf16, #tpu.memory_space<vmem>>, %arg14: memref<64x256xbf16, #tpu.memory_space<vmem>>, %arg15: memref<1x256xf32, #tpu.memory_space<vmem>>, %arg16: memref<256x256xbf16, #tpu.memory_space<vmem>>, %arg17: memref<1x256xf32, #tpu.memory_space<vmem>>, %arg18: memref<256x256xbf16, #tpu.memory_space<vmem>>, %arg19: memref<1x256xf32, #tpu.memory_space<vmem>>, %arg20: memref<256x384xbf16, #tpu.memory_space<vmem>>, %arg21: memref<1x384xf32, #tpu.memory_space<vmem>>, %arg22: memref<256x128xbf16, #tpu.memory_space<vmem>>, %arg23: memref<32x128xbf16, #tpu.memory_space<vmem>>, %arg24: memref<1x128xf32, #tpu.memory_space<vmem>>, %arg25: memref<128x128xbf16, #tpu.memory_space<vmem>>, %arg26: memref<1x128xf32, #tpu.memory_space<vmem>>, %arg27: memref<512x128xf32, #tpu.memory_space<vmem>>) attributes {dimension_semantics = [#tpu.dimension_semantics<parallel>], iteration_bounds = array<i64: 1>, scalar_prefetch = 0 : i64, scratch_operands = 0 : i64, tpu.core_type = #tpu.core_type<tc>, window_params = [{transform_indices = @transform_0, window_bounds = array<i64: 512, 64>}, {transform_indices = @transform_1, window_bounds = array<i64: 512, 32>}, {pipeline_mode = #tpu.pipeline_mode<synchronous>, transform_indices = @transform_2, window_bounds = array<i64: 64, 256>}, {pipeline_mode = #tpu.pipeline_mode<synchronous>, transform_indices = @transform_3, window_bounds = array<i64: 1, 256>}, {pipeline_mode = #tpu.pipeline_mode<synchronous>, transform_indices = @transform_4, window_bounds = array<i64: 256, 256>}, {pipeline_mode = #tpu.pipeline_mode<synchronous>, transform_indices = @transform_5, window_bounds = array<i64: 1, 256>}, {pipeline_mode = #tpu.pipeline_mode<synchronous>, transform_indices = @transform_6, window_bounds = array<i64: 256, 256>}, {pipeline_mode = #tpu.pipeline_mode<synchronous>, transform_indices = @transform_7, window_bounds = array<i64: 1, 256>}, {pipeline_mode = #tpu.pipeline_mode<synchronous>, transform_indices = @transform_8, window_bounds = array<i64: 256, 256>}, {pipeline_mode = #tpu.pipeline_mode<synchronous>, transform_indices = @transform_9, window_bounds = array<i64: 1, 256>}, {pipeline_mode = #tpu.pipeline_mode<synchronous>, transform_indices = @transform_10, window_bounds = array<i64: 256, 256>}, {pipeline_mode = #tpu.pipeline_mode<synchronous>, transform_indices = @transform_11, window_bounds = array<i64: 1, 256>}, {pipeline_mode = #tpu.pipeline_mode<synchronous>, transform_indices = @transform_12, window_bounds = array<i64: 256, 256>}, {pipeline_mode = #tpu.pipeline_mode<synchronous>, transform_indices = @transform_13, window_bounds = array<i64: 64, 256>}, {pipeline_mode = #tpu.pipeline_mode<synchronous>, transform_indices = @transform_14, window_bounds = array<i64: 1, 256>}, {pipeline_mode = #tpu.pipeline_mode<synchronous>, transform_indices = @transform_15, window_bounds = array<i64: 256, 256>}, {pipeline_mode = #tpu.pipeline_mode<synchronous>, transform_indices = @transform_16, window_bounds = array<i64: 1, 256>}, {pipeline_mode = #tpu.pipeline_mode<synchronous>, transform_indices = @transform_17, window_bounds = array<i64: 256, 256>}, {pipeline_mode = #tpu.pipeline_mode<synchronous>, transform_indices = @transform_18, window_bounds = array<i64: 1, 256>}, {pipeline_mode = #tpu.pipeline_mode<synchronous>, transform_indices = @transform_19, window_bounds = array<i64: 256, 384>}, {pipeline_mode = #tpu.pipeline_mode<synchronous>, transform_indices = @transform_20, window_bounds = array<i64: 1, 384>}, {pipeline_mode = #tpu.pipeline_mode<synchronous>, transform_indices = @transform_21, window_bounds = array<i64: 256, 128>}, {pipeline_mode = #tpu.pipeline_mode<synchronous>, transform_indices = @transform_22, window_bounds = array<i64: 32, 128>}, {pipeline_mode = #tpu.pipeline_mode<synchronous>, transform_indices = @transform_23, window_bounds = array<i64: 1, 128>}, {pipeline_mode = #tpu.pipeline_mode<synchronous>, transform_indices = @transform_24, window_bounds = array<i64: 128, 128>}, {pipeline_mode = #tpu.pipeline_mode<synchronous>, transform_indices = @transform_25, window_bounds = array<i64: 1, 128>}, {transform_indices = @transform_26, window_bounds = array<i64: 512, 128>}]} {
    %c0 = arith.constant 0 : index
    %c0_0 = arith.constant 0 : index
    %0 = vector.load %arg3[%c0, %c0_0] : memref<64x256xbf16, #tpu.memory_space<vmem>>, vector<64x256xbf16>
    %c0_1 = arith.constant 0 : index
    %c0_2 = arith.constant 0 : index
    %1 = vector.load %arg4[%c0_1, %c0_2] : memref<1x256xf32, #tpu.memory_space<vmem>>, vector<1x256xf32>
    %c0_3 = arith.constant 0 : index
    %c0_4 = arith.constant 0 : index
    %2 = vector.load %arg5[%c0_3, %c0_4] : memref<256x256xbf16, #tpu.memory_space<vmem>>, vector<256x256xbf16>
    %c0_5 = arith.constant 0 : index
    %c0_6 = arith.constant 0 : index
    %3 = vector.load %arg6[%c0_5, %c0_6] : memref<1x256xf32, #tpu.memory_space<vmem>>, vector<1x256xf32>
    %c0_7 = arith.constant 0 : index
    %c0_8 = arith.constant 0 : index
    %4 = vector.load %arg7[%c0_7, %c0_8] : memref<256x256xbf16, #tpu.memory_space<vmem>>, vector<256x256xbf16>
    %c0_9 = arith.constant 0 : index
    %c0_10 = arith.constant 0 : index
    %5 = vector.load %arg8[%c0_9, %c0_10] : memref<1x256xf32, #tpu.memory_space<vmem>>, vector<1x256xf32>
    %c0_11 = arith.constant 0 : index
    %c0_12 = arith.constant 0 : index
    %6 = vector.load %arg9[%c0_11, %c0_12] : memref<256x256xbf16, #tpu.memory_space<vmem>>, vector<256x256xbf16>
    %c0_13 = arith.constant 0 : index
    %c0_14 = arith.constant 0 : index
    %7 = vector.load %arg10[%c0_13, %c0_14] : memref<1x256xf32, #tpu.memory_space<vmem>>, vector<1x256xf32>
    %c0_15 = arith.constant 0 : index
    %c0_16 = arith.constant 0 : index
    %8 = vector.load %arg11[%c0_15, %c0_16] : memref<256x256xbf16, #tpu.memory_space<vmem>>, vector<256x256xbf16>
    %c0_17 = arith.constant 0 : index
    %c0_18 = arith.constant 0 : index
    %9 = vector.load %arg12[%c0_17, %c0_18] : memref<1x256xf32, #tpu.memory_space<vmem>>, vector<1x256xf32>
    %c0_19 = arith.constant 0 : index
    %c0_20 = arith.constant 0 : index
    %10 = vector.load %arg13[%c0_19, %c0_20] : memref<256x256xbf16, #tpu.memory_space<vmem>>, vector<256x256xbf16>
    %c0_21 = arith.constant 0 : index
    %c0_22 = arith.constant 0 : index
    %11 = vector.load %arg14[%c0_21, %c0_22] : memref<64x256xbf16, #tpu.memory_space<vmem>>, vector<64x256xbf16>
    %c0_23 = arith.constant 0 : index
    %c0_24 = arith.constant 0 : index
    %12 = vector.load %arg15[%c0_23, %c0_24] : memref<1x256xf32, #tpu.memory_space<vmem>>, vector<1x256xf32>
    %c0_25 = arith.constant 0 : index
    %c0_26 = arith.constant 0 : index
    %13 = vector.load %arg16[%c0_25, %c0_26] : memref<256x256xbf16, #tpu.memory_space<vmem>>, vector<256x256xbf16>
    %c0_27 = arith.constant 0 : index
    %c0_28 = arith.constant 0 : index
    %14 = vector.load %arg17[%c0_27, %c0_28] : memref<1x256xf32, #tpu.memory_space<vmem>>, vector<1x256xf32>
    %c0_29 = arith.constant 0 : index
    %c0_30 = arith.constant 0 : index
    %15 = vector.load %arg18[%c0_29, %c0_30] : memref<256x256xbf16, #tpu.memory_space<vmem>>, vector<256x256xbf16>
    %c0_31 = arith.constant 0 : index
    %c0_32 = arith.constant 0 : index
    %16 = vector.load %arg19[%c0_31, %c0_32] : memref<1x256xf32, #tpu.memory_space<vmem>>, vector<1x256xf32>
    %c0_33 = arith.constant 0 : index
    %c0_34 = arith.constant 0 : index
    %17 = vector.load %arg20[%c0_33, %c0_34] : memref<256x384xbf16, #tpu.memory_space<vmem>>, vector<256x384xbf16>
    %c0_35 = arith.constant 0 : index
    %c0_36 = arith.constant 0 : index
    %18 = vector.load %arg21[%c0_35, %c0_36] : memref<1x384xf32, #tpu.memory_space<vmem>>, vector<1x384xf32>
    %c0_37 = arith.constant 0 : index
    %c0_38 = arith.constant 0 : index
    %19 = vector.load %arg22[%c0_37, %c0_38] : memref<256x128xbf16, #tpu.memory_space<vmem>>, vector<256x128xbf16>
    %c0_39 = arith.constant 0 : index
    %c0_40 = arith.constant 0 : index
    %20 = vector.load %arg23[%c0_39, %c0_40] : memref<32x128xbf16, #tpu.memory_space<vmem>>, vector<32x128xbf16>
    %c0_41 = arith.constant 0 : index
    %c0_42 = arith.constant 0 : index
    %21 = vector.load %arg24[%c0_41, %c0_42] : memref<1x128xf32, #tpu.memory_space<vmem>>, vector<1x128xf32>
    %c0_43 = arith.constant 0 : index
    %c0_44 = arith.constant 0 : index
    %22 = vector.load %arg25[%c0_43, %c0_44] : memref<128x128xbf16, #tpu.memory_space<vmem>>, vector<128x128xbf16>
    %c0_45 = arith.constant 0 : index
    %c0_46 = arith.constant 0 : index
    %23 = vector.load %arg26[%c0_45, %c0_46] : memref<1x128xf32, #tpu.memory_space<vmem>>, vector<1x128xf32>
    %c0_47 = arith.constant 0 : index
    %c0_48 = arith.constant 0 : index
    %24 = vector.load %arg1[%c0_47, %c0_48] : memref<512x64xbf16, #tpu.memory_space<vmem>>, vector<512x64xbf16>
    %c0_49 = arith.constant 0 : index
    %c0_50 = arith.constant 0 : index
    %25 = vector.load %arg2[%c0_49, %c0_50] : memref<512x32xbf16, #tpu.memory_space<vmem>>, vector<512x32xbf16>
    %cst = arith.constant dense<0.000000e+00> : vector<512x256xf32>
    %26 = tpu.matmul %24, %0, %cst {dimension_numbers = #tpu.dot_dimension_numbers<[1], [0], [0], [1], [0, 0, 1, 1], [], []>} : vector<512x64xbf16>, vector<64x256xbf16>, vector<512x256xf32> -> vector<512x256xf32>
    %27 = vector.broadcast %1 : vector<1x256xf32> to vector<512x256xf32>
    %28 = arith.addf %26, %27 : vector<512x256xf32>
    %cst_51 = arith.constant 0.000000e+00 : f32
    %29 = vector.broadcast %cst_51 : f32 to vector<512x256xf32>
    %30 = arith.maximumf %28, %29 : vector<512x256xf32>
    %31 = arith.truncf %30 : vector<512x256xf32> to vector<512x256xbf16>
    %cst_52 = arith.constant dense<0.000000e+00> : vector<512x256xf32>
    %32 = tpu.matmul %31, %2, %cst_52 {dimension_numbers = #tpu.dot_dimension_numbers<[1], [0], [0], [1], [0, 0, 1, 1], [], []>} : vector<512x256xbf16>, vector<256x256xbf16>, vector<512x256xf32> -> vector<512x256xf32>
    %33 = vector.broadcast %3 : vector<1x256xf32> to vector<512x256xf32>
    %34 = arith.addf %32, %33 : vector<512x256xf32>
    %cst_53 = arith.constant 0.000000e+00 : f32
    %35 = vector.broadcast %cst_53 : f32 to vector<512x256xf32>
    %36 = arith.maximumf %34, %35 : vector<512x256xf32>
    %37 = arith.truncf %36 : vector<512x256xf32> to vector<512x256xbf16>
    %cst_54 = arith.constant dense<0.000000e+00> : vector<512x256xf32>
    %38 = tpu.matmul %37, %4, %cst_54 {dimension_numbers = #tpu.dot_dimension_numbers<[1], [0], [0], [1], [0, 0, 1, 1], [], []>} : vector<512x256xbf16>, vector<256x256xbf16>, vector<512x256xf32> -> vector<512x256xf32>
    %39 = vector.broadcast %5 : vector<1x256xf32> to vector<512x256xf32>
    %40 = arith.addf %38, %39 : vector<512x256xf32>
    %cst_55 = arith.constant 0.000000e+00 : f32
    %41 = vector.broadcast %cst_55 : f32 to vector<512x256xf32>
    %42 = arith.maximumf %40, %41 : vector<512x256xf32>
    %43 = arith.truncf %42 : vector<512x256xf32> to vector<512x256xbf16>
    %cst_56 = arith.constant dense<0.000000e+00> : vector<512x256xf32>
    %44 = tpu.matmul %43, %6, %cst_56 {dimension_numbers = #tpu.dot_dimension_numbers<[1], [0], [0], [1], [0, 0, 1, 1], [], []>} : vector<512x256xbf16>, vector<256x256xbf16>, vector<512x256xf32> -> vector<512x256xf32>
    %45 = vector.broadcast %7 : vector<1x256xf32> to vector<512x256xf32>
    %46 = arith.addf %44, %45 : vector<512x256xf32>
    %cst_57 = arith.constant 0.000000e+00 : f32
    %47 = vector.broadcast %cst_57 : f32 to vector<512x256xf32>
    %48 = arith.maximumf %46, %47 : vector<512x256xf32>
    %49 = arith.truncf %48 : vector<512x256xf32> to vector<512x256xbf16>
    %cst_58 = arith.constant dense<0.000000e+00> : vector<512x256xf32>
    %50 = tpu.matmul %49, %8, %cst_58 {dimension_numbers = #tpu.dot_dimension_numbers<[1], [0], [0], [1], [0, 0, 1, 1], [], []>} : vector<512x256xbf16>, vector<256x256xbf16>, vector<512x256xf32> -> vector<512x256xf32>
    %51 = vector.broadcast %9 : vector<1x256xf32> to vector<512x256xf32>
    %52 = arith.addf %50, %51 : vector<512x256xf32>
    %cst_59 = arith.constant 0.000000e+00 : f32
    %53 = vector.broadcast %cst_59 : f32 to vector<512x256xf32>
    %54 = arith.maximumf %52, %53 : vector<512x256xf32>
    %55 = arith.truncf %54 : vector<512x256xf32> to vector<512x256xbf16>
    %cst_60 = arith.constant dense<0.000000e+00> : vector<512x256xf32>
    %56 = tpu.matmul %55, %10, %cst_60 {dimension_numbers = #tpu.dot_dimension_numbers<[1], [0], [0], [1], [0, 0, 1, 1], [], []>} : vector<512x256xbf16>, vector<256x256xbf16>, vector<512x256xf32> -> vector<512x256xf32>
    %cst_61 = arith.constant dense<0.000000e+00> : vector<512x256xf32>
    %57 = tpu.matmul %24, %11, %cst_61 {dimension_numbers = #tpu.dot_dimension_numbers<[1], [0], [0], [1], [0, 0, 1, 1], [], []>} : vector<512x64xbf16>, vector<64x256xbf16>, vector<512x256xf32> -> vector<512x256xf32>
    %58 = arith.addf %56, %57 : vector<512x256xf32>
    %59 = vector.broadcast %12 : vector<1x256xf32> to vector<512x256xf32>
    %60 = arith.addf %58, %59 : vector<512x256xf32>
    %cst_62 = arith.constant 0.000000e+00 : f32
    %61 = vector.broadcast %cst_62 : f32 to vector<512x256xf32>
    %62 = arith.maximumf %60, %61 : vector<512x256xf32>
    %63 = arith.truncf %62 : vector<512x256xf32> to vector<512x256xbf16>
    %cst_63 = arith.constant dense<0.000000e+00> : vector<512x256xf32>
    %64 = tpu.matmul %63, %13, %cst_63 {dimension_numbers = #tpu.dot_dimension_numbers<[1], [0], [0], [1], [0, 0, 1, 1], [], []>} : vector<512x256xbf16>, vector<256x256xbf16>, vector<512x256xf32> -> vector<512x256xf32>
    %65 = vector.broadcast %14 : vector<1x256xf32> to vector<512x256xf32>
    %66 = arith.addf %64, %65 : vector<512x256xf32>
    %cst_64 = arith.constant 0.000000e+00 : f32
    %67 = vector.broadcast %cst_64 : f32 to vector<512x256xf32>
    %68 = arith.maximumf %66, %67 : vector<512x256xf32>
    %69 = arith.truncf %68 : vector<512x256xf32> to vector<512x256xbf16>
    %cst_65 = arith.constant dense<0.000000e+00> : vector<512x256xf32>
    %70 = tpu.matmul %69, %15, %cst_65 {dimension_numbers = #tpu.dot_dimension_numbers<[1], [0], [0], [1], [0, 0, 1, 1], [], []>} : vector<512x256xbf16>, vector<256x256xbf16>, vector<512x256xf32> -> vector<512x256xf32>
    %71 = vector.broadcast %16 : vector<1x256xf32> to vector<512x256xf32>
    %72 = arith.addf %70, %71 : vector<512x256xf32>
    %cst_66 = arith.constant 0.000000e+00 : f32
    %73 = vector.broadcast %cst_66 : f32 to vector<512x256xf32>
    %74 = arith.maximumf %72, %73 : vector<512x256xf32>
    %75 = arith.truncf %74 : vector<512x256xf32> to vector<512x256xbf16>
    %cst_67 = arith.constant dense<0.000000e+00> : vector<512x384xf32>
    %76 = tpu.matmul %75, %17, %cst_67 {dimension_numbers = #tpu.dot_dimension_numbers<[1], [0], [0], [1], [0, 0, 1, 1], [], []>} : vector<512x256xbf16>, vector<256x384xbf16>, vector<512x384xf32> -> vector<512x384xf32>
    %77 = vector.broadcast %18 : vector<1x384xf32> to vector<512x384xf32>
    %78 = arith.addf %76, %77 : vector<512x384xf32>
    %79 = vector.extract_strided_slice %78 {offsets = [0, 0], sizes = [512, 256], strides = [1, 1]} : vector<512x384xf32> to vector<512x256xf32>
    %80 = arith.truncf %79 : vector<512x256xf32> to vector<512x256xbf16>
    %81 = vector.extract_strided_slice %78 {offsets = [0, 256], sizes = [512, 128], strides = [1, 1]} : vector<512x384xf32> to vector<512x128xf32>
    %cst_68 = arith.constant dense<0.000000e+00> : vector<512x128xf32>
    %82 = tpu.matmul %80, %19, %cst_68 {dimension_numbers = #tpu.dot_dimension_numbers<[1], [0], [0], [1], [0, 0, 1, 1], [], []>} : vector<512x256xbf16>, vector<256x128xbf16>, vector<512x128xf32> -> vector<512x128xf32>
    %cst_69 = arith.constant dense<0.000000e+00> : vector<512x128xf32>
    %83 = tpu.matmul %25, %20, %cst_69 {dimension_numbers = #tpu.dot_dimension_numbers<[1], [0], [0], [1], [0, 0, 1, 1], [], []>} : vector<512x32xbf16>, vector<32x128xbf16>, vector<512x128xf32> -> vector<512x128xf32>
    %84 = arith.addf %82, %83 : vector<512x128xf32>
    %85 = vector.broadcast %21 : vector<1x128xf32> to vector<512x128xf32>
    %86 = arith.addf %84, %85 : vector<512x128xf32>
    %cst_70 = arith.constant 0.000000e+00 : f32
    %87 = vector.broadcast %cst_70 : f32 to vector<512x128xf32>
    %88 = arith.maximumf %86, %87 : vector<512x128xf32>
    %89 = arith.truncf %88 : vector<512x128xf32> to vector<512x128xbf16>
    %cst_71 = arith.constant dense<0.000000e+00> : vector<512x128xf32>
    %90 = tpu.matmul %89, %22, %cst_71 {dimension_numbers = #tpu.dot_dimension_numbers<[1], [0], [0], [1], [0, 0, 1, 1], [], []>} : vector<512x128xbf16>, vector<128x128xbf16>, vector<512x128xf32> -> vector<512x128xf32>
    %91 = vector.broadcast %23 : vector<1x128xf32> to vector<512x128xf32>
    %92 = arith.addf %90, %91 : vector<512x128xf32>
    %93 = arith.addf %92, %81 : vector<512x128xf32>
    %c0_72 = arith.constant 0 : index
    %c0_73 = arith.constant 0 : index
    %94 = vector.load %arg27[%c0_72, %c0_73] : memref<512x128xf32, #tpu.memory_space<vmem>>, vector<512x128xf32>
    tpu.vector_store %arg27[%c0_72, %c0_73], %93 {strides = array<i32>} : memref<512x128xf32, #tpu.memory_space<vmem>>, vector<512x128xf32>,
    return
  }
  func.func @transform_0(%arg0: i32) -> (i32, i32) {
    %c0_i32 = arith.constant 0 : i32
    %c0_i32_0 = arith.constant 0 : i32
    return %arg0, %c0_i32 : i32, i32
  }
  func.func @transform_1(%arg0: i32) -> (i32, i32) {
    %c0_i32 = arith.constant 0 : i32
    %c0_i32_0 = arith.constant 0 : i32
    return %arg0, %c0_i32 : i32, i32
  }
  func.func @transform_2(%arg0: i32) -> (i32, i32) {
    %c0_i32 = arith.constant 0 : i32
    %c0_i32_0 = arith.constant 0 : i32
    %c0_i32_1 = arith.constant 0 : i32
    return %c0_i32, %c0_i32_0 : i32, i32
  }
  func.func @transform_3(%arg0: i32) -> (i32, i32) {
    %c0_i32 = arith.constant 0 : i32
    %c0_i32_0 = arith.constant 0 : i32
    %c0_i32_1 = arith.constant 0 : i32
    return %c0_i32, %c0_i32_0 : i32, i32
  }
  func.func @transform_4(%arg0: i32) -> (i32, i32) {
    %c0_i32 = arith.constant 0 : i32
    %c0_i32_0 = arith.constant 0 : i32
    %c0_i32_1 = arith.constant 0 : i32
    return %c0_i32, %c0_i32_0 : i32, i32
  }
  func.func @transform_5(%arg0: i32) -> (i32, i32) {
    %c0_i32 = arith.constant 0 : i32
    %c0_i32_0 = arith.constant 0 : i32
    %c0_i32_1 = arith.constant 0 : i32
    return %c0_i32, %c0_i32_0 : i32, i32
  }
  func.func @transform_6(%arg0: i32) -> (i32, i32) {
    %c0_i32 = arith.constant 0 : i32
    %c0_i32_0 = arith.constant 0 : i32
    %c0_i32_1 = arith.constant 0 : i32
    return %c0_i32, %c0_i32_0 : i32, i32
  }
  func.func @transform_7(%arg0: i32) -> (i32, i32) {
    %c0_i32 = arith.constant 0 : i32
    %c0_i32_0 = arith.constant 0 : i32
    %c0_i32_1 = arith.constant 0 : i32
    return %c0_i32, %c0_i32_0 : i32, i32
  }
  func.func @transform_8(%arg0: i32) -> (i32, i32) {
    %c0_i32 = arith.constant 0 : i32
    %c0_i32_0 = arith.constant 0 : i32
    %c0_i32_1 = arith.constant 0 : i32
    return %c0_i32, %c0_i32_0 : i32, i32
  }
  func.func @transform_9(%arg0: i32) -> (i32, i32) {
    %c0_i32 = arith.constant 0 : i32
    %c0_i32_0 = arith.constant 0 : i32
    %c0_i32_1 = arith.constant 0 : i32
    return %c0_i32, %c0_i32_0 : i32, i32
  }
  func.func @transform_10(%arg0: i32) -> (i32, i32) {
    %c0_i32 = arith.constant 0 : i32
    %c0_i32_0 = arith.constant 0 : i32
    %c0_i32_1 = arith.constant 0 : i32
    return %c0_i32, %c0_i32_0 : i32, i32
  }
  func.func @transform_11(%arg0: i32) -> (i32, i32) {
    %c0_i32 = arith.constant 0 : i32
    %c0_i32_0 = arith.constant 0 : i32
    %c0_i32_1 = arith.constant 0 : i32
    return %c0_i32, %c0_i32_0 : i32, i32
  }
  func.func @transform_12(%arg0: i32) -> (i32, i32) {
    %c0_i32 = arith.constant 0 : i32
    %c0_i32_0 = arith.constant 0 : i32
    %c0_i32_1 = arith.constant 0 : i32
    return %c0_i32, %c0_i32_0 : i32, i32
  }
  func.func @transform_13(%arg0: i32) -> (i32, i32) {
    %c0_i32 = arith.constant 0 : i32
    %c0_i32_0 = arith.constant 0 : i32
    %c0_i32_1 = arith.constant 0 : i32
    return %c0_i32, %c0_i32_0 : i32, i32
  }
  func.func @transform_14(%arg0: i32) -> (i32, i32) {
    %c0_i32 = arith.constant 0 : i32
    %c0_i32_0 = arith.constant 0 : i32
    %c0_i32_1 = arith.constant 0 : i32
    return %c0_i32, %c0_i32_0 : i32, i32
  }
  func.func @transform_15(%arg0: i32) -> (i32, i32) {
    %c0_i32 = arith.constant 0 : i32
    %c0_i32_0 = arith.constant 0 : i32
    %c0_i32_1 = arith.constant 0 : i32
    return %c0_i32, %c0_i32_0 : i32, i32
  }
  func.func @transform_16(%arg0: i32) -> (i32, i32) {
    %c0_i32 = arith.constant 0 : i32
    %c0_i32_0 = arith.constant 0 : i32
    %c0_i32_1 = arith.constant 0 : i32
    return %c0_i32, %c0_i32_0 : i32, i32
  }
  func.func @transform_17(%arg0: i32) -> (i32, i32) {
    %c0_i32 = arith.constant 0 : i32
    %c0_i32_0 = arith.constant 0 : i32
    %c0_i32_1 = arith.constant 0 : i32
    return %c0_i32, %c0_i32_0 : i32, i32
  }
  func.func @transform_18(%arg0: i32) -> (i32, i32) {
    %c0_i32 = arith.constant 0 : i32
    %c0_i32_0 = arith.constant 0 : i32
    %c0_i32_1 = arith.constant 0 : i32
    return %c0_i32, %c0_i32_0 : i32, i32
  }
  func.func @transform_19(%arg0: i32) -> (i32, i32) {
    %c0_i32 = arith.constant 0 : i32
    %c0_i32_0 = arith.constant 0 : i32
    %c0_i32_1 = arith.constant 0 : i32
    return %c0_i32, %c0_i32_0 : i32, i32
  }
  func.func @transform_20(%arg0: i32) -> (i32, i32) {
    %c0_i32 = arith.constant 0 : i32
    %c0_i32_0 = arith.constant 0 : i32
    %c0_i32_1 = arith.constant 0 : i32
    return %c0_i32, %c0_i32_0 : i32, i32
  }
  func.func @transform_21(%arg0: i32) -> (i32, i32) {
    %c0_i32 = arith.constant 0 : i32
    %c0_i32_0 = arith.constant 0 : i32
    %c0_i32_1 = arith.constant 0 : i32
    return %c0_i32, %c0_i32_0 : i32, i32
  }
  func.func @transform_22(%arg0: i32) -> (i32, i32) {
    %c0_i32 = arith.constant 0 : i32
    %c0_i32_0 = arith.constant 0 : i32
    %c0_i32_1 = arith.constant 0 : i32
    return %c0_i32, %c0_i32_0 : i32, i32
  }
  func.func @transform_23(%arg0: i32) -> (i32, i32) {
    %c0_i32 = arith.constant 0 : i32
    %c0_i32_0 = arith.constant 0 : i32
    %c0_i32_1 = arith.constant 0 : i32
    return %c0_i32, %c0_i32_0 : i32, i32
  }
  func.func @transform_24(%arg0: i32) -> (i32, i32) {
    %c0_i32 = arith.constant 0 : i32
    %c0_i32_0 = arith.constant 0 : i32
    %c0_i32_1 = arith.constant 0 : i32
    return %c0_i32, %c0_i32_0 : i32, i32
  }
  func.func @transform_25(%arg0: i32) -> (i32, i32) {
    %c0_i32 = arith.constant 0 : i32
    %c0_i32_0 = arith.constant 0 : i32
    %c0_i32_1 = arith.constant 0 : i32
    return %c0_i32, %c0_i32_0 : i32, i32
  }
  func.func @transform_26(%arg0: i32) -> (i32, i32) {
    %c0_i32 = arith.constant 0 : i32
    %c0_i32_0 = arith.constant 0 : i32
    return %arg0, %c0_i32 : i32, i32
  }
}

</mosaic_0001>

<llo_original>
// kernel: tpu_custom_call.1
$region0: #{tpu_custom_call.1}
  #allocation0 [shape = 'u32[]', space=smem, size = 0x4, offset = 0x4, fixed_abs, tag = 'smem constant byte address 0x4 - core index']
  #allocation1 [shape = 'u32[144,128]{1,0:T(1,128)}', space=vmem, size = 0x12000, scoped, tag = 'internal scratch']
  %s0 = inlined_call_operand.vmem [shape: bf16[512,64], index: 0, kind: input, shape index: {}]
  %s1 = inlined_call_operand.vmem [shape: bf16[512,32], index: 1, kind: input, shape index: {}]
  %s2 = inlined_call_operand.hbm [shape: bf16[64,256], index: 2, kind: input, shape index: {}]
  %s3 = inlined_call_operand.hbm [shape: f32[1,256], index: 3, kind: input, shape index: {}]
  %s4 = inlined_call_operand.vmem [shape: bf16[256,256], index: 4, kind: input, shape index: {}]
  %s5 = inlined_call_operand.hbm [shape: f32[1,256], index: 5, kind: input, shape index: {}]
  %s6 = inlined_call_operand.hbm [shape: bf16[256,256], index: 6, kind: input, shape index: {}]
  %s7 = inlined_call_operand.hbm [shape: f32[1,256], index: 7, kind: input, shape index: {}]
  %s8 = inlined_call_operand.hbm [shape: bf16[256,256], index: 8, kind: input, shape index: {}]
  %s9 = inlined_call_operand.hbm [shape: f32[1,256], index: 9, kind: input, shape index: {}]
  %s10 = inlined_call_operand.hbm [shape: bf16[256,256], index: 10, kind: input, shape index: {}]
  %s11 = inlined_call_operand.hbm [shape: f32[1,256], index: 11, kind: input, shape index: {}]
  %s12 = inlined_call_operand.hbm [shape: bf16[256,256], index: 12, kind: input, shape index: {}]
  %s13 = inlined_call_operand.hbm [shape: bf16[64,256], index: 13, kind: input, shape index: {}]
  %s14 = inlined_call_operand.hbm [shape: f32[1,256], index: 14, kind: input, shape index: {}]
  %s15 = inlined_call_operand.hbm [shape: bf16[256,256], index: 15, kind: input, shape index: {}]
  %s16 = inlined_call_operand.hbm [shape: f32[1,256], index: 16, kind: input, shape index: {}]
  %s17 = inlined_call_operand.hbm [shape: bf16[256,256], index: 17, kind: input, shape index: {}]
  %s18 = inlined_call_operand.hbm [shape: f32[1,256], index: 18, kind: input, shape index: {}]
  %s19 = inlined_call_operand.vmem [shape: bf16[256,384], index: 19, kind: input, shape index: {}]
  %s20 = inlined_call_operand.vmem [shape: f32[1,384], index: 20, kind: input, shape index: {}]
  %s21 = inlined_call_operand.vmem [shape: bf16[256,128], index: 21, kind: input, shape index: {}]
  %s22 = inlined_call_operand.hbm [shape: bf16[32,128], index: 22, kind: input, shape index: {}]
  %s23 = inlined_call_operand.vmem [shape: f32[1,128], index: 23, kind: input, shape index: {}]
  %s24 = inlined_call_operand.hbm [shape: bf16[128,128], index: 24, kind: input, shape index: {}]
  %s25 = inlined_call_operand.vmem [shape: f32[1,128], index: 25, kind: input, shape index: {}]
  %s26 = inlined_call_operand.hbm [shape: f32[512,128], index: 26, kind: output, shape index: {}]
  %s27 = sld [smem:[#allocation0]]
  $region186: #{tpu_custom_call.1} parent=0
    _
  %s29 = ssub.s32 1, %s27
  %s30 = scalar_select 0, %s29, %s27
  $region1: #{tpu_custom_call.1} parent=0
    #allocation2 [shape = 'u8[32768]{0}', space=vmem, size = 0x8000, scoped, tag = 'input window, operand 2, single buffered']
    #allocation3 [shape = 's32[1]{0}', space=sflag, size = 0x4, scoped, tag = 'scoped memory for tpu_custom_call.1']
    #allocation4 [shape = 's32[1]{0}', space=sflag, size = 0x4, scoped, tag = 'scoped memory for tpu_custom_call.1']
    #allocation5 [shape = 'u8[1024]{0}', space=vmem, size = 0x400, scoped, tag = 'input window, operand 3, single buffered']
    #allocation6 [shape = 's32[1]{0}', space=sflag, size = 0x4, scoped, tag = 'scoped memory for tpu_custom_call.1']
    #allocation7 [shape = 'u8[1024]{0}', space=vmem, size = 0x400, scoped, tag = 'input window, operand 5, single buffered']
    #allocation8 [shape = 'u8[131072]{0}', space=vmem, size = 0x20000, scoped, tag = 'input window, operand 6, single buffered']
    #allocation9 [shape = 's32[1]{0}', space=sflag, size = 0x4, scoped, tag = 'scoped memory for tpu_custom_call.1']
    #allocation10 [shape = 'u8[1024]{0}', space=vmem, size = 0x400, scoped, tag = 'input window, operand 7, single buffered']
    #allocation11 [shape = 'u8[131072]{0}', space=vmem, size = 0x20000, scoped, tag = 'input window, operand 8, single buffered']
    #allocation12 [shape = 's32[1]{0}', space=sflag, size = 0x4, scoped, tag = 'scoped memory for tpu_custom_call.1']
    #allocation13 [shape = 'u8[1024]{0}', space=vmem, size = 0x400, scoped, tag = 'input window, operand 9, single buffered']
    #allocation14 [shape = 'u8[131072]{0}', space=vmem, size = 0x20000, scoped, tag = 'input window, operand 10, single buffered']
    #allocation15 [shape = 's32[1]{0}', space=sflag, size = 0x4, scoped, tag = 'scoped memory for tpu_custom_call.1']
    #allocation16 [shape = 'u8[1024]{0}', space=vmem, size = 0x400, scoped, tag = 'input window, operand 11, single buffered']
    #allocation17 [shape = 'u8[131072]{0}', space=vmem, size = 0x20000, scoped, tag = 'input window, operand 12, single buffered']
    #allocation18 [shape = 's32[1]{0}', space=sflag, size = 0x4, scoped, tag = 'scoped memory for tpu_custom_call.1']
    #allocation19 [shape = 'u8[32768]{0}', space=vmem, size = 0x8000, scoped, tag = 'input window, operand 13, single buffered']
    #allocation20 [shape = 'u8[1024]{0}', space=vmem, size = 0x400, scoped, tag = 'input window, operand 14, single buffered']
    #allocation21 [shape = 's32[1]{0}', space=sflag, size = 0x4, scoped, tag = 'scoped memory for tpu_custom_call.1']
    #allocation22 [shape = 'u8[131072]{0}', space=vmem, size = 0x20000, scoped, tag = 'input window, operand 15, single buffered']
    #allocation23 [shape = 'u8[1024]{0}', space=vmem, size = 0x400, scoped, tag = 'input window, operand 16, single buffered']
    #allocation24 [shape = 's32[1]{0}', space=sflag, size = 0x4, scoped, tag = 'scoped memory for tpu_custom_call.1']
    #allocation25 [shape = 'u8[131072]{0}', space=vmem, size = 0x20000, scoped, tag = 'input window, operand 17, single buffered']
    #allocation26 [shape = 'u8[1024]{0}', space=vmem, size = 0x400, scoped, tag = 'input window, operand 18, single buffered']
    #allocation27 [shape = 's32[1]{0}', space=sflag, size = 0x4, scoped, tag = 'scoped memory for tpu_custom_call.1']
    #allocation28 [shape = 'u8[8192]{0}', space=vmem, size = 0x2000, scoped, tag = 'input window, operand 22, single buffered']
    #allocation29 [shape = 'u8[32768]{0}', space=vmem, size = 0x8000, scoped, tag = 'input window, operand 24, single buffered']
    #allocation30 [shape = 's32[1]{0}', space=sflag, size = 0x4, scoped, tag = 'scoped memory for tpu_custom_call.1']
    #allocation31 [shape = 'u8[262144]{0}', space=vmem, size = 0x40000, scoped, tag = 'output window, operand 0, single buffered']
    %31 = vsyncpa [#allocation3], 0
    %32 = vsyncpa [#allocation6], 0
    %33 = vsyncpa [#allocation9], 0
    %34 = vsyncpa [#allocation12], 0
    %35 = vsyncpa [#allocation15], 0
    %36 = vsyncpa [#allocation18], 0
    %37 = vsyncpa [#allocation21], 0
    %38 = vsyncpa [#allocation24], 0
    %39 = vsyncpa [#allocation27], 0
    %40 = vsyncpa [#allocation30], 0
    %41 = vsyncpa [#allocation4], 0
    // Predicated region
    $region2: #{tpu_custom_call.1} parent=1 // pred_check
      _
    $region3: #{tpu_custom_call.1} parent=1 // pred_check_branch
      %43 = sbr.rel (0) target = $region5
    $region4: #{tpu_custom_call.1} parent=1 // pred_region
      _
    $region5: #{tpu_custom_call.1} parent=1 // pred_fallthru
      _
    // Predicated region
    $region6: #{tpu_custom_call.1} parent=1 // pred_check
      _
    $region7: #{tpu_custom_call.1} parent=1 // pred_check_branch
      %45 = sbr.rel (0) target = $region9
    $region8: #{tpu_custom_call.1} parent=1 // pred_region
      _
    $region9: #{tpu_custom_call.1} parent=1 // pred_fallthru
      _
    // Predicated region
    $region10: #{tpu_custom_call.1} parent=1 // pred_check
      _
    $region11: #{tpu_custom_call.1} parent=1 // pred_check_branch
      %47 = sbr.rel (0) target = $region13
    $region12: #{tpu_custom_call.1} parent=1 // pred_region
      %s49 = ssub.s32 1024, 1024
      %50 = vsyncadd [#allocation3], %s49
      %s51 = sshll.u32 [#allocation2], 4
      %s52 = int_to_ptr.vmem [resolvable:$true] %s51
      %57 = dma.hbm_to_vmem [thread:$0]  %s2, 1024, %s52, [#allocation3], 128, 128, 8
    $region13: #{tpu_custom_call.1} parent=1 // pred_fallthru
      _
    // Predicated region
    $region14: #{tpu_custom_call.1} parent=1 // pred_check
      _
    $region15: #{tpu_custom_call.1} parent=1 // pred_check_branch
      %59 = sbr.rel (0) target = $region17
    $region16: #{tpu_custom_call.1} parent=1 // pred_region
      %s61 = ssub.s32 32, 32
      %62 = vsyncadd [#allocation6], %s61
      %s64 = sshll.u32 [#allocation5], 4
      %s65 = int_to_ptr.vmem [resolvable:$true] %s64
      %67 = dma.hbm_to_vmem [thread:$0]  %s3, 32, %s65, [#allocation6]
    $region17: #{tpu_custom_call.1} parent=1 // pred_fallthru
      _
    // Predicated region
    $region18: #{tpu_custom_call.1} parent=1 // pred_check
      _
    $region19: #{tpu_custom_call.1} parent=1 // pred_check_branch
      %69 = sbr.rel (0) target = $region21
    $region20: #{tpu_custom_call.1} parent=1 // pred_region
      _
    $region21: #{tpu_custom_call.1} parent=1 // pred_fallthru
      _
    // Predicated region
    $region22: #{tpu_custom_call.1} parent=1 // pred_check
      _
    $region23: #{tpu_custom_call.1} parent=1 // pred_check_branch
      %71 = sbr.rel (0) target = $region25
    $region24: #{tpu_custom_call.1} parent=1 // pred_region
      %s73 = ssub.s32 32, 32
      %74 = vsyncadd [#allocation6], %s73
      %s76 = sshll.u32 [#allocation7], 4
      %s77 = int_to_ptr.vmem [resolvable:$true] %s76
      %79 = dma.hbm_to_vmem [thread:$0]  %s5, 32, %s77, [#allocation6]
    $region25: #{tpu_custom_call.1} parent=1 // pred_fallthru
      _
    // Predicated region
    $region26: #{tpu_custom_call.1} parent=1 // pred_check
      _
    $region27: #{tpu_custom_call.1} parent=1 // pred_check_branch
      %81 = sbr.rel (0) target = $region29
    $region28: #{tpu_custom_call.1} parent=1 // pred_region
      %s83 = ssub.s32 4096, 4096
      %84 = vsyncadd [#allocation9], %s83
      %s85 = sshll.u32 [#allocation8], 4
      %s86 = int_to_ptr.vmem [resolvable:$true] %s85
      %91 = dma.hbm_to_vmem [thread:$0]  %s6, 4096, %s86, [#allocation9], 128, 128, 8
    $region29: #{tpu_custom_call.1} parent=1 // pred_fallthru
      _
    // Predicated region
    $region30: #{tpu_custom_call.1} parent=1 // pred_check
      _
    $region31: #{tpu_custom_call.1} parent=1 // pred_check_branch
      %93 = sbr.rel (0) target = $region33
    $region32: #{tpu_custom_call.1} parent=1 // pred_region
      %s95 = ssub.s32 32, 32
      %96 = vsyncadd [#allocation9], %s95
      %s98 = sshll.u32 [#allocation10], 4
      %s99 = int_to_ptr.vmem [resolvable:$true] %s98
      %101 = dma.hbm_to_vmem [thread:$0]  %s7, 32, %s99, [#allocation9]
    $region33: #{tpu_custom_call.1} parent=1 // pred_fallthru
      _
    // Predicated region
    $region34: #{tpu_custom_call.1} parent=1 // pred_check
      _
    $region35: #{tpu_custom_call.1} parent=1 // pred_check_branch
      %103 = sbr.rel (0) target = $region37
    $region36: #{tpu_custom_call.1} parent=1 // pred_region
      %s105 = ssub.s32 4096, 4096
      %106 = vsyncadd [#allocation12], %s105
      %s107 = sshll.u32 [#allocation11], 4
      %s108 = int_to_ptr.vmem [resolvable:$true] %s107
      %113 = dma.hbm_to_vmem [thread:$0]  %s8, 4096, %s108, [#allocation12], 128, 128, 8
    $region37: #{tpu_custom_call.1} parent=1 // pred_fallthru
      _
    // Predicated region
    $region38: #{tpu_custom_call.1} parent=1 // pred_check
      _
    $region39: #{tpu_custom_call.1} parent=1 // pred_check_branch
      %115 = sbr.rel (0) target = $region41
    $region40: #{tpu_custom_call.1} parent=1 // pred_region
      %s117 = ssub.s32 32, 32
      %118 = vsyncadd [#allocation12], %s117
      %s120 = sshll.u32 [#allocation13], 4
      %s121 = int_to_ptr.vmem [resolvable:$true] %s120
      %123 = dma.hbm_to_vmem [thread:$0]  %s9, 32, %s121, [#allocation12]
    $region41: #{tpu_custom_call.1} parent=1 // pred_fallthru
      _
    // Predicated region
    $region42: #{tpu_custom_call.1} parent=1 // pred_check
      _
    $region43: #{tpu_custom_call.1} parent=1 // pred_check_branch
      %125 = sbr.rel (0) target = $region45
    $region44: #{tpu_custom_call.1} parent=1 // pred_region
      %s127 = ssub.s32 4096, 4096
      %128 = vsyncadd [#allocation15], %s127
      %s129 = sshll.u32 [#allocation14], 4
      %s130 = int_to_ptr.vmem [resolvable:$true] %s129
      %135 = dma.hbm_to_vmem [thread:$0]  %s10, 4096, %s130, [#allocation15], 128, 128, 8
    $region45: #{tpu_custom_call.1} parent=1 // pred_fallthru
      _
    // Predicated region
    $region46: #{tpu_custom_call.1} parent=1 // pred_check
      _
    $region47: #{tpu_custom_call.1} parent=1 // pred_check_branch
      %137 = sbr.rel (0) target = $region49
    $region48: #{tpu_custom_call.1} parent=1 // pred_region
      %s139 = ssub.s32 32, 32
      %140 = vsyncadd [#allocation15], %s139
      %s142 = sshll.u32 [#allocation16], 4
      %s143 = int_to_ptr.vmem [resolvable:$true] %s142
      %145 = dma.hbm_to_vmem [thread:$0]  %s11, 32, %s143, [#allocation15]
    $region49: #{tpu_custom_call.1} parent=1 // pred_fallthru
      _
    // Predicated region
    $region50: #{tpu_custom_call.1} parent=1 // pred_check
      _
    $region51: #{tpu_custom_call.1} parent=1 // pred_check_branch
      %147 = sbr.rel (0) target = $region53
    $region52: #{tpu_custom_call.1} parent=1 // pred_region
      %s149 = ssub.s32 4096, 4096
      %150 = vsyncadd [#allocation18], %s149
      %s151 = sshll.u32 [#allocation17], 4
      %s152 = int_to_ptr.vmem [resolvable:$true] %s151
      %157 = dma.hbm_to_vmem [thread:$0]  %s12, 4096, %s152, [#allocation18], 128, 128, 8
    $region53: #{tpu_custom_call.1} parent=1 // pred_fallthru
      _
    // Predicated region
    $region54: #{tpu_custom_call.1} parent=1 // pred_check
      _
    $region55: #{tpu_custom_call.1} parent=1 // pred_check_branch
      %159 = sbr.rel (0) target = $region57
    $region56: #{tpu_custom_call.1} parent=1 // pred_region
      %s161 = ssub.s32 1024, 1024
      %162 = vsyncadd [#allocation18], %s161
      %s163 = sshll.u32 [#allocation19], 4
      %s164 = int_to_ptr.vmem [resolvable:$true] %s163
      %169 = dma.hbm_to_vmem [thread:$0]  %s13, 1024, %s164, [#allocation18], 128, 128, 8
    $region57: #{tpu_custom_call.1} parent=1 // pred_fallthru
      _
    // Predicated region
    $region58: #{tpu_custom_call.1} parent=1 // pred_check
      _
    $region59: #{tpu_custom_call.1} parent=1 // pred_check_branch
      %171 = sbr.rel (0) target = $region61
    $region60: #{tpu_custom_call.1} parent=1 // pred_region
      %s173 = ssub.s32 32, 32
      %174 = vsyncadd [#allocation21], %s173
      %s176 = sshll.u32 [#allocation20], 4
      %s177 = int_to_ptr.vmem [resolvable:$true] %s176
      %179 = dma.hbm_to_vmem [thread:$0]  %s14, 32, %s177, [#allocation21]
    $region61: #{tpu_custom_call.1} parent=1 // pred_fallthru
      _
    // Predicated region
    $region62: #{tpu_custom_call.1} parent=1 // pred_check
      _
    $region63: #{tpu_custom_call.1} parent=1 // pred_check_branch
      %181 = sbr.rel (0) target = $region65
    $region64: #{tpu_custom_call.1} parent=1 // pred_region
      %s183 = ssub.s32 4096, 4096
      %184 = vsyncadd [#allocation21], %s183
      %s185 = sshll.u32 [#allocation22], 4
      %s186 = int_to_ptr.vmem [resolvable:$true] %s185
      %191 = dma.hbm_to_vmem [thread:$0]  %s15, 4096, %s186, [#allocation21], 128, 128, 8
    $region65: #{tpu_custom_call.1} parent=1 // pred_fallthru
      _
    // Predicated region
    $region66: #{tpu_custom_call.1} parent=1 // pred_check
      _
    $region67: #{tpu_custom_call.1} parent=1 // pred_check_branch
      %193 = sbr.rel (0) target = $region69
    $region68: #{tpu_custom_call.1} parent=1 // pred_region
      %s195 = ssub.s32 32, 32
      %196 = vsyncadd [#allocation24], %s195
      %s198 = sshll.u32 [#allocation23], 4
      %s199 = int_to_ptr.vmem [resolvable:$true] %s198
      %201 = dma.hbm_to_vmem [thread:$0]  %s16, 32, %s199, [#allocation24]
    $region69: #{tpu_custom_call.1} parent=1 // pred_fallthru
      _
    // Predicated region
    $region70: #{tpu_custom_call.1} parent=1 // pred_check
      _
    $region71: #{tpu_custom_call.1} parent=1 // pred_check_branch
      %203 = sbr.rel (0) target = $region73
    $region72: #{tpu_custom_call.1} parent=1 // pred_region
      %s205 = ssub.s32 4096, 4096
      %206 = vsyncadd [#allocation24], %s205
      %s207 = sshll.u32 [#allocation25], 4
      %s208 = int_to_ptr.vmem [resolvable:$true] %s207
      %213 = dma.hbm_to_vmem [thread:$0]  %s17, 4096, %s208, [#allocation24], 128, 128, 8
    $region73: #{tpu_custom_call.1} parent=1 // pred_fallthru
      _
    // Predicated region
    $region74: #{tpu_custom_call.1} parent=1 // pred_check
      _
    $region75: #{tpu_custom_call.1} parent=1 // pred_check_branch
      %215 = sbr.rel (0) target = $region77
    $region76: #{tpu_custom_call.1} parent=1 // pred_region
      %s217 = ssub.s32 32, 32
      %218 = vsyncadd [#allocation27], %s217
      %s220 = sshll.u32 [#allocation26], 4
      %s221 = int_to_ptr.vmem [resolvable:$true] %s220
      %223 = dma.hbm_to_vmem [thread:$0]  %s18, 32, %s221, [#allocation27]
    $region77: #{tpu_custom_call.1} parent=1 // pred_fallthru
      _
    // Predicated region
    $region78: #{tpu_custom_call.1} parent=1 // pred_check
      _
    $region79: #{tpu_custom_call.1} parent=1 // pred_check_branch
      %225 = sbr.rel (0) target = $region81
    $region80: #{tpu_custom_call.1} parent=1 // pred_region
      _
    $region81: #{tpu_custom_call.1} parent=1 // pred_fallthru
      _
    // Predicated region
    $region82: #{tpu_custom_call.1} parent=1 // pred_check
      _
    $region83: #{tpu_custom_call.1} parent=1 // pred_check_branch
      %227 = sbr.rel (0) target = $region85
    $region84: #{tpu_custom_call.1} parent=1 // pred_region
      _
    $region85: #{tpu_custom_call.1} parent=1 // pred_fallthru
      _
    // Predicated region
    $region86: #{tpu_custom_call.1} parent=1 // pred_check
      _
    $region87: #{tpu_custom_call.1} parent=1 // pred_check_branch
      %229 = sbr.rel (0) target = $region89
    $region88: #{tpu_custom_call.1} parent=1 // pred_region
      _
    $region89: #{tpu_custom_call.1} parent=1 // pred_fallthru
      _
    // Predicated region
    $region90: #{tpu_custom_call.1} parent=1 // pred_check
      _
    $region91: #{tpu_custom_call.1} parent=1 // pred_check_branch
      %231 = sbr.rel (0) target = $region93
    $region92: #{tpu_custom_call.1} parent=1 // pred_region
      %s233 = ssub.s32 256, 256
      %234 = vsyncadd [#allocation27], %s233
      %s235 = sshll.u32 [#allocation28], 4
      %s236 = int_to_ptr.vmem [resolvable:$true] %s235
      %241 = dma.hbm_to_vmem [thread:$0]  %s22, 256, %s236, [#allocation27], 64, 64, 4
    $region93: #{tpu_custom_call.1} parent=1 // pred_fallthru
      _
    // Predicated region
    $region94: #{tpu_custom_call.1} parent=1 // pred_check
      _
    $region95: #{tpu_custom_call.1} parent=1 // pred_check_branch
      %243 = sbr.rel (0) target = $region97
    $region96: #{tpu_custom_call.1} parent=1 // pred_region
      _
    $region97: #{tpu_custom_call.1} parent=1 // pred_fallthru
      _
    // Predicated region
    $region98: #{tpu_custom_call.1} parent=1 // pred_check
      _
    $region99: #{tpu_custom_call.1} parent=1 // pred_check_branch
      %245 = sbr.rel (0) target = $region101
    $region100: #{tpu_custom_call.1} parent=1 // pred_region
      %s247 = ssub.s32 1024, 1024
      %248 = vsyncadd [#allocation30], %s247
      %s249 = sshll.u32 [#allocation29], 4
      %s250 = int_to_ptr.vmem [resolvable:$true] %s249
      %255 = dma.hbm_to_vmem [thread:$0]  %s24, 1024, %s250, [#allocation30], 64, 64, 4
    $region101: #{tpu_custom_call.1} parent=1 // pred_fallthru
      _
    // Predicated region
    $region102: #{tpu_custom_call.1} parent=1 // pred_check
      _
    $region103: #{tpu_custom_call.1} parent=1 // pred_check_branch
      %257 = sbr.rel (0) target = $region105
    $region104: #{tpu_custom_call.1} parent=1 // pred_region
      _
    $region105: #{tpu_custom_call.1} parent=1 // pred_fallthru
      _
    // Predicated region
    $region106: #{tpu_custom_call.1} parent=1 // pred_check
      _
    $region107: #{tpu_custom_call.1} parent=1 // pred_check_branch
      %259 = sbr.rel (0) target = $region109
    $region108: #{tpu_custom_call.1} parent=1 // pred_region
      %260 = dma.done [#allocation3], 1024
    $region109: #{tpu_custom_call.1} parent=1 // pred_fallthru
      _
    // Predicated region
    $region110: #{tpu_custom_call.1} parent=1 // pred_check
      _
    $region111: #{tpu_custom_call.1} parent=1 // pred_check_branch
      %262 = sbr.rel (0) target = $region113
    $region112: #{tpu_custom_call.1} parent=1 // pred_region
      %263 = dma.done [#allocation6], 32
    $region113: #{tpu_custom_call.1} parent=1 // pred_fallthru
      _
    // Predicated region
    $region114: #{tpu_custom_call.1} parent=1 // pred_check
      _
    $region115: #{tpu_custom_call.1} parent=1 // pred_check_branch
      %265 = sbr.rel (0) target = $region117
    $region116: #{tpu_custom_call.1} parent=1 // pred_region
      %266 = dma.done [#allocation6], 32
    $region117: #{tpu_custom_call.1} parent=1 // pred_fallthru
      _
    // Predicated region
    $region118: #{tpu_custom_call.1} parent=1 // pred_check
      _
    $region119: #{tpu_custom_call.1} parent=1 // pred_check_branch
      %268 = sbr.rel (0) target = $region121
    $region120: #{tpu_custom_call.1} parent=1 // pred_region
      %269 = dma.done [#allocation9], 4096
    $region121: #{tpu_custom_call.1} parent=1 // pred_fallthru
      _
    // Predicated region
    $region122: #{tpu_custom_call.1} parent=1 // pred_check
      _
    $region123: #{tpu_custom_call.1} parent=1 // pred_check_branch
      %271 = sbr.rel (0) target = $region125
    $region124: #{tpu_custom_call.1} parent=1 // pred_region
      %272 = dma.done [#allocation9], 32
    $region125: #{tpu_custom_call.1} parent=1 // pred_fallthru
      _
    // Predicated region
    $region126: #{tpu_custom_call.1} parent=1 // pred_check
      _
    $region127: #{tpu_custom_call.1} parent=1 // pred_check_branch
      %274 = sbr.rel (0) target = $region129
    $region128: #{tpu_custom_call.1} parent=1 // pred_region
      %275 = dma.done [#allocation12], 4096
    $region129: #{tpu_custom_call.1} parent=1 // pred_fallthru
      _
    // Predicated region
    $region130: #{tpu_custom_call.1} parent=1 // pred_check
      _
    $region131: #{tpu_custom_call.1} parent=1 // pred_check_branch
      %277 = sbr.rel (0) target = $region133
    $region132: #{tpu_custom_call.1} parent=1 // pred_region
      %278 = dma.done [#allocation12], 32
    $region133: #{tpu_custom_call.1} parent=1 // pred_fallthru
      _
    // Predicated region
    $region134: #{tpu_custom_call.1} parent=1 // pred_check
      _
    $region135: #{tpu_custom_call.1} parent=1 // pred_check_branch
      %280 = sbr.rel (0) target = $region137
    $region136: #{tpu_custom_call.1} parent=1 // pred_region
      %281 = dma.done [#allocation15], 4096
    $region137: #{tpu_custom_call.1} parent=1 // pred_fallthru
      _
    // Predicated region
    $region138: #{tpu_custom_call.1} parent=1 // pred_check
      _
    $region139: #{tpu_custom_call.1} parent=1 // pred_check_branch
      %283 = sbr.rel (0) target = $region141
    $region140: #{tpu_custom_call.1} parent=1 // pred_region
      %284 = dma.done [#allocation15], 32
    $region141: #{tpu_custom_call.1} parent=1 // pred_fallthru
      _
    // Predicated region
    $region142: #{tpu_custom_call.1} parent=1 // pred_check
      _
    $region143: #{tpu_custom_call.1} parent=1 // pred_check_branch
      %286 = sbr.rel (0) target = $region145
    $region144: #{tpu_custom_call.1} parent=1 // pred_region
      %287 = dma.done [#allocation18], 4096
    $region145: #{tpu_custom_call.1} parent=1 // pred_fallthru
      _
    // Predicated region
    $region146: #{tpu_custom_call.1} parent=1 // pred_check
      _
    $region147: #{tpu_custom_call.1} parent=1 // pred_check_branch
      %289 = sbr.rel (0) target = $region149
    $region148: #{tpu_custom_call.1} parent=1 // pred_region
      %290 = dma.done [#allocation18], 1024
    $region149: #{tpu_custom_call.1} parent=1 // pred_fallthru
      _
    // Predicated region
    $region150: #{tpu_custom_call.1} parent=1 // pred_check
      _
    $region151: #{tpu_custom_call.1} parent=1 // pred_check_branch
      %292 = sbr.rel (0) target = $region153
    $region152: #{tpu_custom_call.1} parent=1 // pred_region
      %293 = dma.done [#allocation21], 32
    $region153: #{tpu_custom_call.1} parent=1 // pred_fallthru
      _
    // Predicated region
    $region154: #{tpu_custom_call.1} parent=1 // pred_check
      _
    $region155: #{tpu_custom_call.1} parent=1 // pred_check_branch
      %295 = sbr.rel (0) target = $region157
    $region156: #{tpu_custom_call.1} parent=1 // pred_region
      %296 = dma.done [#allocation21], 4096
    $region157: #{tpu_custom_call.1} parent=1 // pred_fallthru
      _
    // Predicated region
    $region158: #{tpu_custom_call.1} parent=1 // pred_check
      _
    $region159: #{tpu_custom_call.1} parent=1 // pred_check_branch
      %298 = sbr.rel (0) target = $region161
    $region160: #{tpu_custom_call.1} parent=1 // pred_region
      %299 = dma.done [#allocation24], 32
    $region161: #{tpu_custom_call.1} parent=1 // pred_fallthru
      _
    // Predicated region
    $region162: #{tpu_custom_call.1} parent=1 // pred_check
      _
    $region163: #{tpu_custom_call.1} parent=1 // pred_check_branch
      %301 = sbr.rel (0) target = $region165
    $region164: #{tpu_custom_call.1} parent=1 // pred_region
      %302 = dma.done [#allocation24], 4096
    $region165: #{tpu_custom_call.1} parent=1 // pred_fallthru
      _
    // Predicated region
    $region166: #{tpu_custom_call.1} parent=1 // pred_check
      _
    $region167: #{tpu_custom_call.1} parent=1 // pred_check_branch
      %304 = sbr.rel (0) target = $region169
    $region168: #{tpu_custom_call.1} parent=1 // pred_region
      %305 = dma.done [#allocation27], 32
    $region169: #{tpu_custom_call.1} parent=1 // pred_fallthru
      _
    // Predicated region
    $region170: #{tpu_custom_call.1} parent=1 // pred_check
      _
    $region171: #{tpu_custom_call.1} parent=1 // pred_check_branch
      %307 = sbr.rel (0) target = $region173
    $region172: #{tpu_custom_call.1} parent=1 // pred_region
      %308 = dma.done [#allocation27], 256
    $region173: #{tpu_custom_call.1} parent=1 // pred_fallthru
      _
    // Predicated region
    $region174: #{tpu_custom_call.1} parent=1 // pred_check
      _
    $region175: #{tpu_custom_call.1} parent=1 // pred_check_branch
      %310 = sbr.rel (0) target = $region177
    $region176: #{tpu_custom_call.1} parent=1 // pred_region
      %311 = dma.done [#allocation30], 1024
    $region177: #{tpu_custom_call.1} parent=1 // pred_fallthru
      _
    %v313 = vld [vmem:[#allocation2] sm:$0xff]
    %v314 = vld [vmem:[#allocation2 + $0x8] sm:$0xff]
    %v315 = vld [vmem:[#allocation2 + $0x10] sm:$0xff]
    %v316 = vld [vmem:[#allocation2 + $0x18] sm:$0xff]
    %v317 = vld [vmem:[#allocation2 + $0x20] sm:$0xff]
    %v318 = vld [vmem:[#allocation2 + $0x28] sm:$0xff]
    %v319 = vld [vmem:[#allocation2 + $0x30] sm:$0xff]
    %v320 = vld [vmem:[#allocation2 + $0x38] sm:$0xff]
    %v321 = vld [vmem:[#allocation5] sm:$0x3]
    %v322 = vld [vmem:[%s4] sm:$0xff]
    %v323 = vld [vmem:[%s4 + $0x8] sm:$0xff]
    %v324 = vld [vmem:[%s4 + $0x10] sm:$0xff]
    %v325 = vld [vmem:[%s4 + $0x18] sm:$0xff]
    %v326 = vld [vmem:[%s4 + $0x20] sm:$0xff]
    %v327 = vld [vmem:[%s4 + $0x28] sm:$0xff]
    %v328 = vld [vmem:[%s4 + $0x30] sm:$0xff]
    %v329 = vld [vmem:[%s4 + $0x38] sm:$0xff]
    %v330 = vld [vmem:[%s4 + $0x40] sm:$0xff]
    %v331 = vld [vmem:[%s4 + $0x48] sm:$0xff]
    %v332 = vld [vmem:[%s4 + $0x50] sm:$0xff]
    %v333 = vld [vmem:[%s4 + $0x58] sm:$0xff]
    %v334 = vld [vmem:[%s4 + $0x60] sm:$0xff]
    %v335 = vld [vmem:[%s4 + $0x68] sm:$0xff]
    %v336 = vld [vmem:[%s4 + $0x70] sm:$0xff]
    %v337 = vld [vmem:[%s4 + $0x78] sm:$0xff]
    %v338 = vld [vmem:[%s4 + $0x80] sm:$0xff]
    %v339 = vld [vmem:[%s4 + $0x88] sm:$0xff]
    %v340 = vld [vmem:[%s4 + $0x90] sm:$0xff]
    %v341 = vld [vmem:[%s4 + $0x98] sm:$0xff]
    %v342 = vld [vmem:[%s4 + $0xa0] sm:$0xff]
    %v343 = vld [vmem:[%s4 + $0xa8] sm:$0xff]
    %v344 = vld [vmem:[%s4 + $0xb0] sm:$0xff]
    %v345 = vld [vmem:[%s4 + $0xb8] sm:$0xff]
    %v346 = vld [vmem:[%s4 + $0xc0] sm:$0xff]
    %v347 = vld [vmem:[%s4 + $0xc8] sm:$0xff]
    %v348 = vld [vmem:[%s4 + $0xd0] sm:$0xff]
    %v349 = vld [vmem:[%s4 + $0xd8] sm:$0xff]
    %v350 = vld [vmem:[%s4 + $0xe0] sm:$0xff]
    %v351 = vld [vmem:[%s4 + $0xe8] sm:$0xff]
    %v352 = vld [vmem:[%s4 + $0xf0] sm:$0xff]
    %v353 = vld [vmem:[%s4 + $0xf8] sm:$0xff]
    %v354 = vld [vmem:[#allocation7] sm:$0x3]
    %v355 = vld [vmem:[#allocation8] sm:$0xff]
    %v356 = vld [vmem:[#allocation8 + $0x8] sm:$0xff]
    %v357 = vld [vmem:[#allocation8 + $0x10] sm:$0xff]
    %v358 = vld [vmem:[#allocation8 + $0x18] sm:$0xff]
    %v359 = vld [vmem:[#allocation8 + $0x20] sm:$0xff]
    %v360 = vld [vmem:[#allocation8 + $0x28] sm:$0xff]
    %v361 = vld [vmem:[#allocation8 + $0x30] sm:$0xff]
    %v362 = vld [vmem:[#allocation8 + $0x38] sm:$0xff]
    %v363 = vld [vmem:[#allocation8 + $0x40] sm:$0xff]
    %v364 = vld [vmem:[#allocation8 + $0x48] sm:$0xff]
    %v365 = vld [vmem:[#allocation8 + $0x50] sm:$0xff]
    %v366 = vld [vmem:[#allocation8 + $0x58] sm:$0xff]
    %v367 = vld [vmem:[#allocation8 + $0x60] sm:$0xff]
    %v368 = vld [vmem:[#allocation8 + $0x68] sm:$0xff]
    %v369 = vld [vmem:[#allocation8 + $0x70] sm:$0xff]
    %v370 = vld [vmem:[#allocation8 + $0x78] sm:$0xff]
    %v371 = vld [vmem:[#allocation8 + $0x80] sm:$0xff]
    %v372 = vld [vmem:[#allocation8 + $0x88] sm:$0xff]
    %v373 = vld [vmem:[#allocation8 + $0x90] sm:$0xff]
    %v374 = vld [vmem:[#allocation8 + $0x98] sm:$0xff]
    %v375 = vld [vmem:[#allocation8 + $0xa0] sm:$0xff]
    %v376 = vld [vmem:[#allocation8 + $0xa8] sm:$0xff]
    %v377 = vld [vmem:[#allocation8 + $0xb0] sm:$0xff]
    %v378 = vld [vmem:[#allocation8 + $0xb8] sm:$0xff]
    %v379 = vld [vmem:[#allocation8 + $0xc0] sm:$0xff]
    %v380 = vld [vmem:[#allocation8 + $0xc8] sm:$0xff]
    %v381 = vld [vmem:[#allocation8 + $0xd0] sm:$0xff]
    %v382 = vld [vmem:[#allocation8 + $0xd8] sm:$0xff]
    %v383 = vld [vmem:[#allocation8 + $0xe0] sm:$0xff]
    %v384 = vld [vmem:[#allocation8 + $0xe8] sm:$0xff]
    %v385 = vld [vmem:[#allocation8 + $0xf0] sm:$0xff]
    %v386 = vld [vmem:[#allocation8 + $0xf8] sm:$0xff]
    %v387 = vld [vmem:[#allocation10] sm:$0x3]
    %v388 = vld [vmem:[#allocation11] sm:$0xff]
    %v389 = vld [vmem:[#allocation11 + $0x8] sm:$0xff]
    %v390 = vld [vmem:[#allocation11 + $0x10] sm:$0xff]
    %v391 = vld [vmem:[#allocation11 + $0x18] sm:$0xff]
    %v392 = vld [vmem:[#allocation11 + $0x20] sm:$0xff]
    %v393 = vld [vmem:[#allocation11 + $0x28] sm:$0xff]
    %v394 = vld [vmem:[#allocation11 + $0x30] sm:$0xff]
    %v395 = vld [vmem:[#allocation11 + $0x38] sm:$0xff]
    %v396 = vld [vmem:[#allocation11 + $0x40] sm:$0xff]
    %v397 = vld [vmem:[#allocation11 + $0x48] sm:$0xff]
    %v398 = vld [vmem:[#allocation11 + $0x50] sm:$0xff]
    %v399 = vld [vmem:[#allocation11 + $0x58] sm:$0xff]
    %v400 = vld [vmem:[#allocation11 + $0x60] sm:$0xff]
    %v401 = vld [vmem:[#allocation11 + $0x68] sm:$0xff]
    %v402 = vld [vmem:[#allocation11 + $0x70] sm:$0xff]
    %v403 = vld [vmem:[#allocation11 + $0x78] sm:$0xff]
    %v404 = vld [vmem:[#allocation11 + $0x80] sm:$0xff]
    %v405 = vld [vmem:[#allocation11 + $0x88] sm:$0xff]
    %v406 = vld [vmem:[#allocation11 + $0x90] sm:$0xff]
    %v407 = vld [vmem:[#allocation11 + $0x98] sm:$0xff]
    %v408 = vld [vmem:[#allocation11 + $0xa0] sm:$0xff]
    %v409 = vld [vmem:[#allocation11 + $0xa8] sm:$0xff]
    %v410 = vld [vmem:[#allocation11 + $0xb0] sm:$0xff]
    %v411 = vld [vmem:[#allocation11 + $0xb8] sm:$0xff]
    %v412 = vld [vmem:[#allocation11 + $0xc0] sm:$0xff]
    %v413 = vld [vmem:[#allocation11 + $0xc8] sm:$0xff]
    %v414 = vld [vmem:[#allocation11 + $0xd0] sm:$0xff]
    %v415 = vld [vmem:[#allocation11 + $0xd8] sm:$0xff]
    %v416 = vld [vmem:[#allocation11 + $0xe0] sm:$0xff]
    %v417 = vld [vmem:[#allocation11 + $0xe8] sm:$0xff]
    %v418 = vld [vmem:[#allocation11 + $0xf0] sm:$0xff]
    %v419 = vld [vmem:[#allocation11 + $0xf8] sm:$0xff]
    %v420 = vld [vmem:[#allocation13] sm:$0x3]
    %v421 = vld [vmem:[#allocation14] sm:$0xff]
    %v422 = vld [vmem:[#allocation14 + $0x8] sm:$0xff]
    %v423 = vld [vmem:[#allocation14 + $0x10] sm:$0xff]
    %v424 = vld [vmem:[#allocation14 + $0x18] sm:$0xff]
    %v425 = vld [vmem:[#allocation14 + $0x20] sm:$0xff]
    %v426 = vld [vmem:[#allocation14 + $0x28] sm:$0xff]
    %v427 = vld [vmem:[#allocation14 + $0x30] sm:$0xff]
    %v428 = vld [vmem:[#allocation14 + $0x38] sm:$0xff]
    %v429 = vld [vmem:[#allocation14 + $0x40] sm:$0xff]
    %v430 = vld [vmem:[#allocation14 + $0x48] sm:$0xff]
    %v431 = vld [vmem:[#allocation14 + $0x50] sm:$0xff]
    %v432 = vld [vmem:[#allocation14 + $0x58] sm:$0xff]
    %v433 = vld [vmem:[#allocation14 + $0x60] sm:$0xff]
    %v434 = vld [vmem:[#allocation14 + $0x68] sm:$0xff]
    %v435 = vld [vmem:[#allocation14 + $0x70] sm:$0xff]
    %v436 = vld [vmem:[#allocation14 + $0x78] sm:$0xff]
    %v437 = vld [vmem:[#allocation14 + $0x80] sm:$0xff]
    %v438 = vld [vmem:[#allocation14 + $0x88] sm:$0xff]
    %v439 = vld [vmem:[#allocation14 + $0x90] sm:$0xff]
    %v440 = vld [vmem:[#allocation14 + $0x98] sm:$0xff]
    %v441 = vld [vmem:[#allocation14 + $0xa0] sm:$0xff]
    %v442 = vld [vmem:[#allocation14 + $0xa8] sm:$0xff]
    %v443 = vld [vmem:[#allocation14 + $0xb0] sm:$0xff]
    %v444 = vld [vmem:[#allocation14 + $0xb8] sm:$0xff]
    %v445 = vld [vmem:[#allocation14 + $0xc0] sm:$0xff]
    %v446 = vld [vmem:[#allocation14 + $0xc8] sm:$0xff]
    %v447 = vld [vmem:[#allocation14 + $0xd0] sm:$0xff]
    %v448 = vld [vmem:[#allocation14 + $0xd8] sm:$0xff]
    %v449 = vld [vmem:[#allocation14 + $0xe0] sm:$0xff]
    %v450 = vld [vmem:[#allocation14 + $0xe8] sm:$0xff]
    %v451 = vld [vmem:[#allocation14 + $0xf0] sm:$0xff]
    %v452 = vld [vmem:[#allocation14 + $0xf8] sm:$0xff]
    %v453 = vld [vmem:[#allocation16] sm:$0x3]
    %v454 = vld [vmem:[#allocation17] sm:$0xff]
    %v455 = vld [vmem:[#allocation17 + $0x8] sm:$0xff]
    %v456 = vld [vmem:[#allocation17 + $0x10] sm:$0xff]
    %v457 = vld [vmem:[#allocation17 + $0x18] sm:$0xff]
    %v458 = vld [vmem:[#allocation17 + $0x20] sm:$0xff]
    %v459 = vld [vmem:[#allocation17 + $0x28] sm:$0xff]
    %v460 = vld [vmem:[#allocation17 + $0x30] sm:$0xff]
    %v461 = vld [vmem:[#allocation17 + $0x38] sm:$0xff]
    %v462 = vld [vmem:[#allocation17 + $0x40] sm:$0xff]
    %v463 = vld [vmem:[#allocation17 + $0x48] sm:$0xff]
    %v464 = vld [vmem:[#allocation17 + $0x50] sm:$0xff]
    %v465 = vld [vmem:[#allocation17 + $0x58] sm:$0xff]
    %v466 = vld [vmem:[#allocation17 + $0x60] sm:$0xff]
    %v467 = vld [vmem:[#allocation17 + $0x68] sm:$0xff]
    %v468 = vld [vmem:[#allocation17 + $0x70] sm:$0xff]
    %v469 = vld [vmem:[#allocation17 + $0x78] sm:$0xff]
    %v470 = vld [vmem:[#allocation17 + $0x80] sm:$0xff]
    %v471 = vld [vmem:[#allocation17 + $0x88] sm:$0xff]
    %v472 = vld [vmem:[#allocation17 + $0x90] sm:$0xff]
    %v473 = vld [vmem:[#allocation17 + $0x98] sm:$0xff]
    %v474 = vld [vmem:[#allocation17 + $0xa0] sm:$0xff]
    %v475 = vld [vmem:[#allocation17 + $0xa8] sm:$0xff]
    %v476 = vld [vmem:[#allocation17 + $0xb0] sm:$0xff]
    %v477 = vld [vmem:[#allocation17 + $0xb8] sm:$0xff]
    %v478 = vld [vmem:[#allocation17 + $0xc0] sm:$0xff]
    %v479 = vld [vmem:[#allocation17 + $0xc8] sm:$0xff]
    %v480 = vld [vmem:[#allocation17 + $0xd0] sm:$0xff]
    %v481 = vld [vmem:[#allocation17 + $0xd8] sm:$0xff]
    %v482 = vld [vmem:[#allocation17 + $0xe0] sm:$0xff]
    %v483 = vld [vmem:[#allocation17 + $0xe8] sm:$0xff]
    %v484 = vld [vmem:[#allocation17 + $0xf0] sm:$0xff]
    %v485 = vld [vmem:[#allocation17 + $0xf8] sm:$0xff]
    %v486 = vld [vmem:[#allocation19] sm:$0xff]
    %v487 = vld [vmem:[#allocation19 + $0x8] sm:$0xff]
    %v488 = vld [vmem:[#allocation19 + $0x10] sm:$0xff]
    %v489 = vld [vmem:[#allocation19 + $0x18] sm:$0xff]
    %v490 = vld [vmem:[#allocation19 + $0x20] sm:$0xff]
    %v491 = vld [vmem:[#allocation19 + $0x28] sm:$0xff]
    %v492 = vld [vmem:[#allocation19 + $0x30] sm:$0xff]
    %v493 = vld [vmem:[#allocation19 + $0x38] sm:$0xff]
    %v494 = vld [vmem:[#allocation20] sm:$0x3]
    %v495 = vld [vmem:[#allocation22] sm:$0xff]
    %v496 = vld [vmem:[#allocation22 + $0x8] sm:$0xff]
    %v497 = vld [vmem:[#allocation22 + $0x10] sm:$0xff]
    %v498 = vld [vmem:[#allocation22 + $0x18] sm:$0xff]
    %v499 = vld [vmem:[#allocation22 + $0x20] sm:$0xff]
    %v500 = vld [vmem:[#allocation22 + $0x28] sm:$0xff]
    %v501 = vld [vmem:[#allocation22 + $0x30] sm:$0xff]
    %v502 = vld [vmem:[#allocation22 + $0x38] sm:$0xff]
    %v503 = vld [vmem:[#allocation22 + $0x40] sm:$0xff]
    %v504 = vld [vmem:[#allocation22 + $0x48] sm:$0xff]
    %v505 = vld [vmem:[#allocation22 + $0x50] sm:$0xff]
    %v506 = vld [vmem:[#allocation22 + $0x58] sm:$0xff]
    %v507 = vld [vmem:[#allocation22 + $0x60] sm:$0xff]
    %v508 = vld [vmem:[#allocation22 + $0x68] sm:$0xff]
    %v509 = vld [vmem:[#allocation22 + $0x70] sm:$0xff]
    %v510 = vld [vmem:[#allocation22 + $0x78] sm:$0xff]
    %v511 = vld [vmem:[#allocation22 + $0x80] sm:$0xff]
    %v512 = vld [vmem:[#allocation22 + $0x88] sm:$0xff]
    %v513 = vld [vmem:[#allocation22 + $0x90] sm:$0xff]
    %v514 = vld [vmem:[#allocation22 + $0x98] sm:$0xff]
    %v515 = vld [vmem:[#allocation22 + $0xa0] sm:$0xff]
    %v516 = vld [vmem:[#allocation22 + $0xa8] sm:$0xff]
    %v517 = vld [vmem:[#allocation22 + $0xb0] sm:$0xff]
    %v518 = vld [vmem:[#allocation22 + $0xb8] sm:$0xff]
    %v519 = vld [vmem:[#allocation22 + $0xc0] sm:$0xff]
    %v520 = vld [vmem:[#allocation22 + $0xc8] sm:$0xff]
    %v521 = vld [vmem:[#allocation22 + $0xd0] sm:$0xff]
    %v522 = vld [vmem:[#allocation22 + $0xd8] sm:$0xff]
    %v523 = vld [vmem:[#allocation22 + $0xe0] sm:$0xff]
    %v524 = vld [vmem:[#allocation22 + $0xe8] sm:$0xff]
    %v525 = vld [vmem:[#allocation22 + $0xf0] sm:$0xff]
    %v526 = vld [vmem:[#allocation22 + $0xf8] sm:$0xff]
    %v527 = vld [vmem:[#allocation23] sm:$0x3]
    %v528 = vld [vmem:[#allocation25] sm:$0xff]
    %v529 = vld [vmem:[#allocation25 + $0x8] sm:$0xff]
    %v530 = vld [vmem:[#allocation25 + $0x10] sm:$0xff]
    %v531 = vld [vmem:[#allocation25 + $0x18] sm:$0xff]
    %v532 = vld [vmem:[#allocation25 + $0x20] sm:$0xff]
    %v533 = vld [vmem:[#allocation25 + $0x28] sm:$0xff]
    %v534 = vld [vmem:[#allocation25 + $0x30] sm:$0xff]
    %v535 = vld [vmem:[#allocation25 + $0x38] sm:$0xff]
    %v536 = vld [vmem:[#allocation25 + $0x40] sm:$0xff]
    %v537 = vld [vmem:[#allocation25 + $0x48] sm:$0xff]
    %v538 = vld [vmem:[#allocation25 + $0x50] sm:$0xff]
    %v539 = vld [vmem:[#allocation25 + $0x58] sm:$0xff]
    %v540 = vld [vmem:[#allocation25 + $0x60] sm:$0xff]
    %v541 = vld [vmem:[#allocation25 + $0x68] sm:$0xff]
    %v542 = vld [vmem:[#allocation25 + $0x70] sm:$0xff]
    %v543 = vld [vmem:[#allocation25 + $0x78] sm:$0xff]
    %v544 = vld [vmem:[#allocation25 + $0x80] sm:$0xff]
    %v545 = vld [vmem:[#allocation25 + $0x88] sm:$0xff]
    %v546 = vld [vmem:[#allocation25 + $0x90] sm:$0xff]
    %v547 = vld [vmem:[#allocation25 + $0x98] sm:$0xff]
    %v548 = vld [vmem:[#allocation25 + $0xa0] sm:$0xff]
    %v549 = vld [vmem:[#allocation25 + $0xa8] sm:$0xff]
    %v550 = vld [vmem:[#allocation25 + $0xb0] sm:$0xff]
    %v551 = vld [vmem:[#allocation25 + $0xb8] sm:$0xff]
    %v552 = vld [vmem:[#allocation25 + $0xc0] sm:$0xff]
    %v553 = vld [vmem:[#allocation25 + $0xc8] sm:$0xff]
    %v554 = vld [vmem:[#allocation25 + $0xd0] sm:$0xff]
    %v555 = vld [vmem:[#allocation25 + $0xd8] sm:$0xff]
    %v556 = vld [vmem:[#allocation25 + $0xe0] sm:$0xff]
    %v557 = vld [vmem:[#allocation25 + $0xe8] sm:$0xff]
    %v558 = vld [vmem:[#allocation25 + $0xf0] sm:$0xff]
    %v559 = vld [vmem:[#allocation25 + $0xf8] sm:$0xff]
    %v560 = vld [vmem:[#allocation26] sm:$0x3]
    %v561 = vld [vmem:[%s19] sm:$0xff]
    %v562 = vld [vmem:[%s19 + $0x8] sm:$0xf]
    %v563 = vld [vmem:[%s19 + $0xc] sm:$0xff]
    %v564 = vld [vmem:[%s19 + $0x14] sm:$0xf]
    %v565 = vld [vmem:[%s19 + $0x18] sm:$0xff]
    %v566 = vld [vmem:[%s19 + $0x20] sm:$0xf]
    %v567 = vld [vmem:[%s19 + $0x24] sm:$0xff]
    %v568 = vld [vmem:[%s19 + $0x2c] sm:$0xf]
    %v569 = vld [vmem:[%s19 + $0x30] sm:$0xff]
    %v570 = vld [vmem:[%s19 + $0x38] sm:$0xf]
    %v571 = vld [vmem:[%s19 + $0x3c] sm:$0xff]
    %v572 = vld [vmem:[%s19 + $0x44] sm:$0xf]
    %v573 = vld [vmem:[%s19 + $0x48] sm:$0xff]
    %v574 = vld [vmem:[%s19 + $0x50] sm:$0xf]
    %v575 = vld [vmem:[%s19 + $0x54] sm:$0xff]
    %v576 = vld [vmem:[%s19 + $0x5c] sm:$0xf]
    %v577 = vld [vmem:[%s19 + $0x60] sm:$0xff]
    %v578 = vld [vmem:[%s19 + $0x68] sm:$0xf]
    %v579 = vld [vmem:[%s19 + $0x6c] sm:$0xff]
    %v580 = vld [vmem:[%s19 + $0x74] sm:$0xf]
    %v581 = vld [vmem:[%s19 + $0x78] sm:$0xff]
    %v582 = vld [vmem:[%s19 + $0x80] sm:$0xf]
    %v583 = vld [vmem:[%s19 + $0x84] sm:$0xff]
    %v584 = vld [vmem:[%s19 + $0x8c] sm:$0xf]
    %v585 = vld [vmem:[%s19 + $0x90] sm:$0xff]
    %v586 = vld [vmem:[%s19 + $0x98] sm:$0xf]
    %v587 = vld [vmem:[%s19 + $0x9c] sm:$0xff]
    %v588 = vld [vmem:[%s19 + $0xa4] sm:$0xf]
    %v589 = vld [vmem:[%s19 + $0xa8] sm:$0xff]
    %v590 = vld [vmem:[%s19 + $0xb0] sm:$0xf]
    %v591 = vld [vmem:[%s19 + $0xb4] sm:$0xff]
    %v592 = vld [vmem:[%s19 + $0xbc] sm:$0xf]
    %v593 = vld [vmem:[%s19 + $0xc0] sm:$0xff]
    %v594 = vld [vmem:[%s19 + $0xc8] sm:$0xf]
    %v595 = vld [vmem:[%s19 + $0xcc] sm:$0xff]
    %v596 = vld [vmem:[%s19 + $0xd4] sm:$0xf]
    %v597 = vld [vmem:[%s19 + $0xd8] sm:$0xff]
    %v598 = vld [vmem:[%s19 + $0xe0] sm:$0xf]
    %v599 = vld [vmem:[%s19 + $0xe4] sm:$0xff]
    %v600 = vld [vmem:[%s19 + $0xec] sm:$0xf]
    %v601 = vld [vmem:[%s19 + $0xf0] sm:$0xff]
    %v602 = vld [vmem:[%s19 + $0xf8] sm:$0xf]
    %v603 = vld [vmem:[%s19 + $0xfc] sm:$0xff]
    %v604 = vld [vmem:[%s19 + $0x104] sm:$0xf]
    %v605 = vld [vmem:[%s19 + $0x108] sm:$0xff]
    %v606 = vld [vmem:[%s19 + $0x110] sm:$0xf]
    %v607 = vld [vmem:[%s19 + $0x114] sm:$0xff]
    %v608 = vld [vmem:[%s19 + $0x11c] sm:$0xf]
    %v609 = vld [vmem:[%s19 + $0x120] sm:$0xff]
    %v610 = vld [vmem:[%s19 + $0x128] sm:$0xf]
    %v611 = vld [vmem:[%s19 + $0x12c] sm:$0xff]
    %v612 = vld [vmem:[%s19 + $0x134] sm:$0xf]
    %v613 = vld [vmem:[%s19 + $0x138] sm:$0xff]
    %v614 = vld [vmem:[%s19 + $0x140] sm:$0xf]
    %v615 = vld [vmem:[%s19 + $0x144] sm:$0xff]
    %v616 = vld [vmem:[%s19 + $0x14c] sm:$0xf]
    %v617 = vld [vmem:[%s19 + $0x150] sm:$0xff]
    %v618 = vld [vmem:[%s19 + $0x158] sm:$0xf]
    %v619 = vld [vmem:[%s19 + $0x15c] sm:$0xff]
    %v620 = vld [vmem:[%s19 + $0x164] sm:$0xf]
    %v621 = vld [vmem:[%s19 + $0x168] sm:$0xff]
    %v622 = vld [vmem:[%s19 + $0x170] sm:$0xf]
    %v623 = vld [vmem:[%s19 + $0x174] sm:$0xff]
    %v624 = vld [vmem:[%s19 + $0x17c] sm:$0xf]
    %v625 = vld [vmem:[%s20] sm:$0x7]
    %v626 = vld [vmem:[%s21] sm:$0xf]
    %v627 = vld [vmem:[%s21 + $0x4] sm:$0xf]
    %v628 = vld [vmem:[%s21 + $0x8] sm:$0xf]
    %v629 = vld [vmem:[%s21 + $0xc] sm:$0xf]
    %v630 = vld [vmem:[%s21 + $0x10] sm:$0xf]
    %v631 = vld [vmem:[%s21 + $0x14] sm:$0xf]
    %v632 = vld [vmem:[%s21 + $0x18] sm:$0xf]
    %v633 = vld [vmem:[%s21 + $0x1c] sm:$0xf]
    %v634 = vld [vmem:[%s21 + $0x20] sm:$0xf]
    %v635 = vld [vmem:[%s21 + $0x24] sm:$0xf]
    %v636 = vld [vmem:[%s21 + $0x28] sm:$0xf]
    %v637 = vld [vmem:[%s21 + $0x2c] sm:$0xf]
    %v638 = vld [vmem:[%s21 + $0x30] sm:$0xf]
    %v639 = vld [vmem:[%s21 + $0x34] sm:$0xf]
    %v640 = vld [vmem:[%s21 + $0x38] sm:$0xf]
    %v641 = vld [vmem:[%s21 + $0x3c] sm:$0xf]
    %v642 = vld [vmem:[%s21 + $0x40] sm:$0xf]
    %v643 = vld [vmem:[%s21 + $0x44] sm:$0xf]
    %v644 = vld [vmem:[%s21 + $0x48] sm:$0xf]
    %v645 = vld [vmem:[%s21 + $0x4c] sm:$0xf]
    %v646 = vld [vmem:[%s21 + $0x50] sm:$0xf]
    %v647 = vld [vmem:[%s21 + $0x54] sm:$0xf]
    %v648 = vld [vmem:[%s21 + $0x58] sm:$0xf]
    %v649 = vld [vmem:[%s21 + $0x5c] sm:$0xf]
    %v650 = vld [vmem:[%s21 + $0x60] sm:$0xf]
    %v651 = vld [vmem:[%s21 + $0x64] sm:$0xf]
    %v652 = vld [vmem:[%s21 + $0x68] sm:$0xf]
    %v653 = vld [vmem:[%s21 + $0x6c] sm:$0xf]
    %v654 = vld [vmem:[%s21 + $0x70] sm:$0xf]
    %v655 = vld [vmem:[%s21 + $0x74] sm:$0xf]
    %v656 = vld [vmem:[%s21 + $0x78] sm:$0xf]
    %v657 = vld [vmem:[%s21 + $0x7c] sm:$0xf]
    %v658 = vld [vmem:[#allocation28] sm:$0xf]
    %v659 = vld [vmem:[#allocation28 + $0x4] sm:$0xf]
    %v660 = vld [vmem:[#allocation28 + $0x8] sm:$0xf]
    %v661 = vld [vmem:[#allocation28 + $0xc] sm:$0xf]
    %v662 = vld [vmem:[%s23] sm:$0x1]
    %v663 = vld [vmem:[#allocation29] sm:$0xf]
    %v664 = vld [vmem:[#allocation29 + $0x4] sm:$0xf]
    %v665 = vld [vmem:[#allocation29 + $0x8] sm:$0xf]
    %v666 = vld [vmem:[#allocation29 + $0xc] sm:$0xf]
    %v667 = vld [vmem:[#allocation29 + $0x10] sm:$0xf]
    %v668 = vld [vmem:[#allocation29 + $0x14] sm:$0xf]
    %v669 = vld [vmem:[#allocation29 + $0x18] sm:$0xf]
    %v670 = vld [vmem:[#allocation29 + $0x1c] sm:$0xf]
    %v671 = vld [vmem:[#allocation29 + $0x20] sm:$0xf]
    %v672 = vld [vmem:[#allocation29 + $0x24] sm:$0xf]
    %v673 = vld [vmem:[#allocation29 + $0x28] sm:$0xf]
    %v674 = vld [vmem:[#allocation29 + $0x2c] sm:$0xf]
    %v675 = vld [vmem:[#allocation29 + $0x30] sm:$0xf]
    %v676 = vld [vmem:[#allocation29 + $0x34] sm:$0xf]
    %v677 = vld [vmem:[#allocation29 + $0x38] sm:$0xf]
    %v678 = vld [vmem:[#allocation29 + $0x3c] sm:$0xf]
    %v679 = vld [vmem:[%s25] sm:$0x1]
    %v680 = vld [vmem:[%s0] sm:$0xf]
    %v681 = vld [vmem:[%s0 + $0x4] sm:$0xf]
    %v682 = vld [vmem:[%s0 + $0x8] sm:$0xf]
    %v683 = vld [vmem:[%s0 + $0xc] sm:$0xf]
    %v684 = vld [vmem:[%s0 + $0x10] sm:$0xf]
    %v685 = vld [vmem:[%s0 + $0x14] sm:$0xf]
    %v686 = vld [vmem:[%s0 + $0x18] sm:$0xf]
    %v687 = vld [vmem:[%s0 + $0x1c] sm:$0xf]
    %v688 = vld [vmem:[%s0 + $0x20] sm:$0xf]
    %v689 = vld [vmem:[%s0 + $0x24] sm:$0xf]
    %v690 = vld [vmem:[%s0 + $0x28] sm:$0xf]
    %v691 = vld [vmem:[%s0 + $0x2c] sm:$0xf]
    %v692 = vld [vmem:[%s0 + $0x30] sm:$0xf]
    %v693 = vld [vmem:[%s0 + $0x34] sm:$0xf]
    %v694 = vld [vmem:[%s0 + $0x38] sm:$0xf]
    %v695 = vld [vmem:[%s0 + $0x3c] sm:$0xf]
    %v696 = vld [vmem:[%s0 + $0x40] sm:$0xf]
    %v697 = vld [vmem:[%s0 + $0x44] sm:$0xf]
    %v698 = vld [vmem:[%s0 + $0x48] sm:$0xf]
    %v699 = vld [vmem:[%s0 + $0x4c] sm:$0xf]
    %v700 = vld [vmem:[%s0 + $0x50] sm:$0xf]
    %v701 = vld [vmem:[%s0 + $0x54] sm:$0xf]
    %v702 = vld [vmem:[%s0 + $0x58] sm:$0xf]
    %v703 = vld [vmem:[%s0 + $0x5c] sm:$0xf]
    %v704 = vld [vmem:[%s0 + $0x60] sm:$0xf]
    %v705 = vld [vmem:[%s0 + $0x64] sm:$0xf]
    %v706 = vld [vmem:[%s0 + $0x68] sm:$0xf]
    %v707 = vld [vmem:[%s0 + $0x6c] sm:$0xf]
    %v708 = vld [vmem:[%s0 + $0x70] sm:$0xf]
    %v709 = vld [vmem:[%s0 + $0x74] sm:$0xf]
    %v710 = vld [vmem:[%s0 + $0x78] sm:$0xf]
    %v711 = vld [vmem:[%s0 + $0x7c] sm:$0xf]
    %v712 = vld [vmem:[%s0 + $0x80] sm:$0xf]
    %v713 = vld [vmem:[%s0 + $0x84] sm:$0xf]
    %v714 = vld [vmem:[%s0 + $0x88] sm:$0xf]
    %v715 = vld [vmem:[%s0 + $0x8c] sm:$0xf]
    %v716 = vld [vmem:[%s0 + $0x90] sm:$0xf]
    %v717 = vld [vmem:[%s0 + $0x94] sm:$0xf]
    %v718 = vld [vmem:[%s0 + $0x98] sm:$0xf]
    %v719 = vld [vmem:[%s0 + $0x9c] sm:$0xf]
    %v720 = vld [vmem:[%s0 + $0xa0] sm:$0xf]
    %v721 = vld [vmem:[%s0 + $0xa4] sm:$0xf]
    %v722 = vld [vmem:[%s0 + $0xa8] sm:$0xf]
    %v723 = vld [vmem:[%s0 + $0xac] sm:$0xf]
    %v724 = vld [vmem:[%s0 + $0xb0] sm:$0xf]
    %v725 = vld [vmem:[%s0 + $0xb4] sm:$0xf]
    %v726 = vld [vmem:[%s0 + $0xb8] sm:$0xf]
    %v727 = vld [vmem:[%s0 + $0xbc] sm:$0xf]
    %v728 = vld [vmem:[%s0 + $0xc0] sm:$0xf]
    %v729 = vld [vmem:[%s0 + $0xc4] sm:$0xf]
    %v730 = vld [vmem:[%s0 + $0xc8] sm:$0xf]
    %v731 = vld [vmem:[%s0 + $0xcc] sm:$0xf]
    %v732 = vld [vmem:[%s0 + $0xd0] sm:$0xf]
    %v733 = vld [vmem:[%s0 + $0xd4] sm:$0xf]
    %v734 = vld [vmem:[%s0 + $0xd8] sm:$0xf]
    %v735 = vld [vmem:[%s0 + $0xdc] sm:$0xf]
    %v736 = vld [vmem:[%s0 + $0xe0] sm:$0xf]
    %v737 = vld [vmem:[%s0 + $0xe4] sm:$0xf]
    %v738 = vld [vmem:[%s0 + $0xe8] sm:$0xf]
    %v739 = vld [vmem:[%s0 + $0xec] sm:$0xf]
    %v740 = vld [vmem:[%s0 + $0xf0] sm:$0xf]
    %v741 = vld [vmem:[%s0 + $0xf4] sm:$0xf]
    %v742 = vld [vmem:[%s0 + $0xf8] sm:$0xf]
    %v743 = vld [vmem:[%s0 + $0xfc] sm:$0xf]
    %v744 = vld [vmem:[%s1] sm:$0xf]
    %v745 = vld [vmem:[%s1 + $0x4] sm:$0xf]
    %v746 = vld [vmem:[%s1 + $0x8] sm:$0xf]
    %v747 = vld [vmem:[%s1 + $0xc] sm:$0xf]
    %v748 = vld [vmem:[%s1 + $0x10] sm:$0xf]
    %v749 = vld [vmem:[%s1 + $0x14] sm:$0xf]
    %v750 = vld [vmem:[%s1 + $0x18] sm:$0xf]
    %v751 = vld [vmem:[%s1 + $0x1c] sm:$0xf]
    %v752 = vld [vmem:[%s1 + $0x20] sm:$0xf]
    %v753 = vld [vmem:[%s1 + $0x24] sm:$0xf]
    %v754 = vld [vmem:[%s1 + $0x28] sm:$0xf]
    %v755 = vld [vmem:[%s1 + $0x2c] sm:$0xf]
    %v756 = vld [vmem:[%s1 + $0x30] sm:$0xf]
    %v757 = vld [vmem:[%s1 + $0x34] sm:$0xf]
    %v758 = vld [vmem:[%s1 + $0x38] sm:$0xf]
    %v759 = vld [vmem:[%s1 + $0x3c] sm:$0xf]
    %v760 = vld [vmem:[%s1 + $0x40] sm:$0xf]
    %v761 = vld [vmem:[%s1 + $0x44] sm:$0xf]
    %v762 = vld [vmem:[%s1 + $0x48] sm:$0xf]
    %v763 = vld [vmem:[%s1 + $0x4c] sm:$0xf]
    %v764 = vld [vmem:[%s1 + $0x50] sm:$0xf]
    %v765 = vld [vmem:[%s1 + $0x54] sm:$0xf]
    %v766 = vld [vmem:[%s1 + $0x58] sm:$0xf]
    %v767 = vld [vmem:[%s1 + $0x5c] sm:$0xf]
    %v768 = vld [vmem:[%s1 + $0x60] sm:$0xf]
    %v769 = vld [vmem:[%s1 + $0x64] sm:$0xf]
    %v770 = vld [vmem:[%s1 + $0x68] sm:$0xf]
    %v771 = vld [vmem:[%s1 + $0x6c] sm:$0xf]
    %v772 = vld [vmem:[%s1 + $0x70] sm:$0xf]
    %v773 = vld [vmem:[%s1 + $0x74] sm:$0xf]
    %v774 = vld [vmem:[%s1 + $0x78] sm:$0xf]
    %v775 = vld [vmem:[%s1 + $0x7c] sm:$0xf]
    %v776 = vld [vmem:[%s1 + $0x80] sm:$0xf]
    %v777 = vld [vmem:[%s1 + $0x84] sm:$0xf]
    %v778 = vld [vmem:[%s1 + $0x88] sm:$0xf]
    %v779 = vld [vmem:[%s1 + $0x8c] sm:$0xf]
    %v780 = vld [vmem:[%s1 + $0x90] sm:$0xf]
    %v781 = vld [vmem:[%s1 + $0x94] sm:$0xf]
    %v782 = vld [vmem:[%s1 + $0x98] sm:$0xf]
    %v783 = vld [vmem:[%s1 + $0x9c] sm:$0xf]
    %v784 = vld [vmem:[%s1 + $0xa0] sm:$0xf]
    %v785 = vld [vmem:[%s1 + $0xa4] sm:$0xf]
    %v786 = vld [vmem:[%s1 + $0xa8] sm:$0xf]
    %v787 = vld [vmem:[%s1 + $0xac] sm:$0xf]
    %v788 = vld [vmem:[%s1 + $0xb0] sm:$0xf]
    %v789 = vld [vmem:[%s1 + $0xb4] sm:$0xf]
    %v790 = vld [vmem:[%s1 + $0xb8] sm:$0xf]
    %v791 = vld [vmem:[%s1 + $0xbc] sm:$0xf]
    %v792 = vld [vmem:[%s1 + $0xc0] sm:$0xf]
    %v793 = vld [vmem:[%s1 + $0xc4] sm:$0xf]
    %v794 = vld [vmem:[%s1 + $0xc8] sm:$0xf]
    %v795 = vld [vmem:[%s1 + $0xcc] sm:$0xf]
    %v796 = vld [vmem:[%s1 + $0xd0] sm:$0xf]
    %v797 = vld [vmem:[%s1 + $0xd4] sm:$0xf]
    %v798 = vld [vmem:[%s1 + $0xd8] sm:$0xf]
    %v799 = vld [vmem:[%s1 + $0xdc] sm:$0xf]
    %v800 = vld [vmem:[%s1 + $0xe0] sm:$0xf]
    %v801 = vld [vmem:[%s1 + $0xe4] sm:$0xf]
    %v802 = vld [vmem:[%s1 + $0xe8] sm:$0xf]
    %v803 = vld [vmem:[%s1 + $0xec] sm:$0xf]
    %v804 = vld [vmem:[%s1 + $0xf0] sm:$0xf]
    %v805 = vld [vmem:[%s1 + $0xf4] sm:$0xf]
    %v806 = vld [vmem:[%s1 + $0xf8] sm:$0xf]
    %v807 = vld [vmem:[%s1 + $0xfc] sm:$0xf]
    %v809 = vlaneseq
    %v810 = vshrl.u32 %v809, 7
    %v811 = vsub.s32 0, %v810
    %v812 = vrot.slane %v321, %v811
    %v813 = vlaneseq
    %v814 = vshrl.u32 %v813, 7
    %v815 = vsub.s32 1, %v814
    %v816 = vrot.slane %v321, %v815
    %v883 = vunpack.c.l.b16 %v680
    %v884 = vunpack.c.l.b16 %v681
    %v885 = vunpack.c.l.b16 %v682
    %v886 = vunpack.c.l.b16 %v683
    %v887 = vunpack.c.l.b16 %v684
    %v888 = vunpack.c.l.b16 %v685
    %v889 = vunpack.c.l.b16 %v686
    %v890 = vunpack.c.l.b16 %v687
    %v891 = vunpack.c.l.b16 %v688
    %v892 = vunpack.c.l.b16 %v689
    %v893 = vunpack.c.l.b16 %v690
    %v894 = vunpack.c.l.b16 %v691
    %v895 = vunpack.c.l.b16 %v692
    %v896 = vunpack.c.l.b16 %v693
    %v897 = vunpack.c.l.b16 %v694
    %v898 = vunpack.c.l.b16 %v695
    %v899 = vunpack.c.l.b16 %v696
    %v900 = vunpack.c.l.b16 %v697
    %v901 = vunpack.c.l.b16 %v698
    %v902 = vunpack.c.l.b16 %v699
    %v903 = vunpack.c.l.b16 %v700
    %v904 = vunpack.c.l.b16 %v701
    %v905 = vunpack.c.l.b16 %v702
    %v906 = vunpack.c.l.b16 %v703
    %v907 = vunpack.c.l.b16 %v704
    %v908 = vunpack.c.l.b16 %v705
    %v909 = vunpack.c.l.b16 %v706
    %v910 = vunpack.c.l.b16 %v707
    %v911 = vunpack.c.l.b16 %v708
    %v912 = vunpack.c.l.b16 %v709
    %v913 = vunpack.c.l.b16 %v710
    %v914 = vunpack.c.l.b16 %v711
    %v915 = vunpack.c.l.b16 %v712
    %v916 = vunpack.c.l.b16 %v713
    %v917 = vunpack.c.l.b16 %v714
    %v918 = vunpack.c.l.b16 %v715
    %v919 = vunpack.c.l.b16 %v716
    %v920 = vunpack.c.l.b16 %v717
    %v921 = vunpack.c.l.b16 %v718
    %v922 = vunpack.c.l.b16 %v719
    %v923 = vunpack.c.l.b16 %v720
    %v924 = vunpack.c.l.b16 %v721
    %v925 = vunpack.c.l.b16 %v722
    %v926 = vunpack.c.l.b16 %v723
    %v927 = vunpack.c.l.b16 %v724
    %v928 = vunpack.c.l.b16 %v725
    %v929 = vunpack.c.l.b16 %v726
    %v930 = vunpack.c.l.b16 %v727
    %v931 = vunpack.c.l.b16 %v728
    %v932 = vunpack.c.l.b16 %v729
    %v933 = vunpack.c.l.b16 %v730
    %v934 = vunpack.c.l.b16 %v731
    %v935 = vunpack.c.l.b16 %v732
    %v936 = vunpack.c.l.b16 %v733
    %v937 = vunpack.c.l.b16 %v734
    %v938 = vunpack.c.l.b16 %v735
    %v939 = vunpack.c.l.b16 %v736
    %v940 = vunpack.c.l.b16 %v737
    %v941 = vunpack.c.l.b16 %v738
    %v942 = vunpack.c.l.b16 %v739
    %v943 = vunpack.c.l.b16 %v740
    %v944 = vunpack.c.l.b16 %v741
    %v945 = vunpack.c.l.b16 %v742
    %v946 = vunpack.c.l.b16 %v743
    %v947 = vpack.c.b16 %v884, %v883
    %v948 = vpack.c.b16 %v886, %v885
    %v949 = vpack.c.b16 %v888, %v887
    %v950 = vpack.c.b16 %v890, %v889
    %v951 = vpack.c.b16 %v892, %v891
    %v952 = vpack.c.b16 %v894, %v893
    %v953 = vpack.c.b16 %v896, %v895
    %v954 = vpack.c.b16 %v898, %v897
    %v955 = vpack.c.b16 %v900, %v899
    %v956 = vpack.c.b16 %v902, %v901
    %v957 = vpack.c.b16 %v904, %v903
    %v958 = vpack.c.b16 %v906, %v905
    %v959 = vpack.c.b16 %v908, %v907
    %v960 = vpack.c.b16 %v910, %v909
    %v961 = vpack.c.b16 %v912, %v911
    %v962 = vpack.c.b16 %v914, %v913
    %v963 = vpack.c.b16 %v916, %v915
    %v964 = vpack.c.b16 %v918, %v917
    %v965 = vpack.c.b16 %v920, %v919
    %v966 = vpack.c.b16 %v922, %v921
    %v967 = vpack.c.b16 %v924, %v923
    %v968 = vpack.c.b16 %v926, %v925
    %v969 = vpack.c.b16 %v928, %v927
    %v970 = vpack.c.b16 %v930, %v929
    %v971 = vpack.c.b16 %v932, %v931
    %v972 = vpack.c.b16 %v934, %v933
    %v973 = vpack.c.b16 %v936, %v935
    %v974 = vpack.c.b16 %v938, %v937
    %v975 = vpack.c.b16 %v940, %v939
    %v976 = vpack.c.b16 %v942, %v941
    %v977 = vpack.c.b16 %v944, %v943
    %v978 = vpack.c.b16 %v946, %v945
    %v987 = vunpack.c.l.b16 %v313
    %v988 = vunpack.c.h.b16 %v313
    %v989 = vunpack.c.l.b16 %v314
    %v990 = vunpack.c.h.b16 %v314
    %v991 = vunpack.c.l.b16 %v315
    %v992 = vunpack.c.h.b16 %v315
    %v993 = vunpack.c.l.b16 %v316
    %v994 = vunpack.c.h.b16 %v316
    %v995 = vunpack.c.l.b16 %v317
    %v996 = vunpack.c.h.b16 %v317
    %v997 = vunpack.c.l.b16 %v318
    %v998 = vunpack.c.h.b16 %v318
    %v999 = vunpack.c.l.b16 %v319
    %v1000 = vunpack.c.h.b16 %v319
    %v1001 = vunpack.c.l.b16 %v320
    %v1002 = vunpack.c.h.b16 %v320
    %v1003 = vpack.c.b16 %v989, %v987
    %v1004 = vpack.c.b16 %v990, %v988
    %v1005 = vpack.c.b16 %v993, %v991
    %v1006 = vpack.c.b16 %v994, %v992
    %v1007 = vpack.c.b16 %v997, %v995
    %v1008 = vpack.c.b16 %v998, %v996
    %v1009 = vpack.c.b16 %v1001, %v999
    %v1010 = vpack.c.b16 %v1002, %v1000
    %vm1019 = vcmask 523264
    %v1021 = vsel %vm1019, %v947, 0
    %v1024 = vsel %vm1019, %v948, 0
    %v1027 = vsel %vm1019, %v949, 0
    %v1030 = vsel %vm1019, %v950, 0
    %v1033 = vsel %vm1019, %v951, 0
    %v1036 = vsel %vm1019, %v952, 0
    %v1039 = vsel %vm1019, %v953, 0
    %v1042 = vsel %vm1019, %v954, 0
    %v1045 = vsel %vm1019, %v955, 0
    %v1048 = vsel %vm1019, %v956, 0
    %v1051 = vsel %vm1019, %v957, 0
    %v1054 = vsel %vm1019, %v958, 0
    %v1057 = vsel %vm1019, %v959, 0
    %v1060 = vsel %vm1019, %v960, 0
    %v1063 = vsel %vm1019, %v961, 0
    %v1066 = vsel %vm1019, %v962, 0
    %v1069 = vsel %vm1019, %v963, 0
    %v1072 = vsel %vm1019, %v964, 0
    %v1075 = vsel %vm1019, %v965, 0
    %v1078 = vsel %vm1019, %v966, 0
    %v1081 = vsel %vm1019, %v967, 0
    %v1084 = vsel %vm1019, %v968, 0
    %v1087 = vsel %vm1019, %v969, 0
    %v1090 = vsel %vm1019, %v970, 0
    %v1093 = vsel %vm1019, %v971, 0
    %v1096 = vsel %vm1019, %v972, 0
    %v1099 = vsel %vm1019, %v973, 0
    %v1102 = vsel %vm1019, %v974, 0
    %v1105 = vsel %vm1019, %v975, 0
    %v1108 = vsel %vm1019, %v976, 0
    %v1111 = vsel %vm1019, %v977, 0
    %v1114 = vsel %vm1019, %v978, 0
    %1116 = vmatprep.subr.bf16.mxu0 %v1004
    %1117 = vmatpush1.bf16.msra.mxu0 %v1003
    %1118 = vmatprep.subr.bf16.mxu0 %v1006
    %1119 = vmatpush1.bf16.msra.mxu0 %v1005
    %1120 = vmatprep.subr.bf16.mxu0 %v1008
    %1121 = vmatpush1.bf16.msra.mxu0 %v1007
    %1122 = vmatprep.subr.bf16.mxu0 %v1010
    %1123 = vmatpush1.bf16.msra.mxu0 %v1009
    %1124 = vmatprep.subr.bf16.mxu0 0
    %1125 = vmatpush1.bf16.msra.mxu0 0
    %1126 = vmatprep.subr.bf16.mxu0 0
    %1127 = vmatpush1.bf16.msra.mxu0 0
    %1128 = vmatprep.subr.bf16.mxu0 0
    %1129 = vmatpush1.bf16.msra.mxu0 0
    %1130 = vmatprep.subr.bf16.mxu0 0
    %1131 = vmatpush1.bf16.msra.mxu0 0
    %1132 = vmatprep.subr.bf16.mxu0 0
    %1133 = vmatpush1.bf16.msra.mxu0 0
    %1134 = vmatprep.subr.bf16.mxu0 0
    %1135 = vmatpush1.bf16.msra.mxu0 0
    %1136 = vmatprep.subr.bf16.mxu0 0
    %1137 = vmatpush1.bf16.msra.mxu0 0
    %1138 = vmatprep.subr.bf16.mxu0 0
    %1139 = vmatpush1.bf16.msra.mxu0 0
    %1140 = vmatprep.subr.bf16.mxu0 0
    %1141 = vmatpush1.bf16.msra.mxu0 0
    %1142 = vmatprep.subr.bf16.mxu0 0
    %1143 = vmatpush1.bf16.msra.mxu0 0
    %1144 = vmatprep.subr.bf16.mxu0 0
    %1145 = vmatpush1.bf16.msra.mxu0 0
    %1146 = vmatprep.subr.bf16.mxu0 0
    %1147 = vmatpush1.bf16.msra.mxu0 0
    %1148 = vmatprep.mubr.bf16.mxu0 0
    %1149 = vmatmul.mubr.bf16.gmra.mrb[0].mxu0 %v1021
    %v1150 = vpop.f32.mrb[0].mxu0
    %v1151 = vadd.f32 %v812, %v1150
    %v1152 = vpop.f32.mrb[0].mxu0
    %v1153 = vadd.f32 %v816, %v1152
    %v1154 = vpop.f32.mrb[0].mxu0
    %v1155 = vadd.f32 %v812, %v1154
    %v1156 = vpop.f32.mrb[0].mxu0
    %v1157 = vadd.f32 %v816, %v1156
    %1158 = vmatprep.mubr.bf16.mxu0 0
    %1159 = vmatmul.mubr.bf16.gmra.mrb[0].mxu0 %v1024
    %v1160 = vpop.f32.mrb[0].mxu0
    %v1161 = vadd.f32 %v812, %v1160
    %v1162 = vpop.f32.mrb[0].mxu0
    %v1163 = vadd.f32 %v816, %v1162
    %v1164 = vpop.f32.mrb[0].mxu0
    %v1165 = vadd.f32 %v812, %v1164
    %v1166 = vpop.f32.mrb[0].mxu0
    %v1167 = vadd.f32 %v816, %v1166
    %1168 = vmatprep.mubr.bf16.mxu0 0
    %1169 = vmatmul.mubr.bf16.gmra.mrb[0].mxu0 %v1027
    %v1170 = vpop.f32.mrb[0].mxu0
    %v1171 = vadd.f32 %v812, %v1170
    %v1172 = vpop.f32.mrb[0].mxu0
    %v1173 = vadd.f32 %v816, %v1172
    %v1174 = vpop.f32.mrb[0].mxu0
    %v1175 = vadd.f32 %v812, %v1174
    %v1176 = vpop.f32.mrb[0].mxu0
    %v1177 = vadd.f32 %v816, %v1176
    %1178 = vmatprep.mubr.bf16.mxu0 0
    %1179 = vmatmul.mubr.bf16.gmra.mrb[0].mxu0 %v1030
    %v1180 = vpop.f32.mrb[0].mxu0
    %v1181 = vadd.f32 %v812, %v1180
    %v1182 = vpop.f32.mrb[0].mxu0
    %v1183 = vadd.f32 %v816, %v1182
    %v1184 = vpop.f32.mrb[0].mxu0
    %v1185 = vadd.f32 %v812, %v1184
    %v1186 = vpop.f32.mrb[0].mxu0
    %v1187 = vadd.f32 %v816, %v1186
    %1188 = vmatprep.mubr.bf16.mxu0 0
    %1189 = vmatmul.mubr.bf16.gmra.mrb[0].mxu0 %v1033
    %v1190 = vpop.f32.mrb[0].mxu0
    %v1191 = vadd.f32 %v812, %v1190
    %v1192 = vpop.f32.mrb[0].mxu0
    %v1193 = vadd.f32 %v816, %v1192
    %v1194 = vpop.f32.mrb[0].mxu0
    %v1195 = vadd.f32 %v812, %v1194
    %v1196 = vpop.f32.mrb[0].mxu0
    %v1197 = vadd.f32 %v816, %v1196
    %1198 = vmatprep.mubr.bf16.mxu0 0
    %1199 = vmatmul.mubr.bf16.gmra.mrb[0].mxu0 %v1036
    %v1200 = vpop.f32.mrb[0].mxu0
    %v1201 = vadd.f32 %v812, %v1200
    %v1202 = vpop.f32.mrb[0].mxu0
    %v1203 = vadd.f32 %v816, %v1202
    %v1204 = vpop.f32.mrb[0].mxu0
    %v1205 = vadd.f32 %v812, %v1204
    %v1206 = vpop.f32.mrb[0].mxu0
    %v1207 = vadd.f32 %v816, %v1206
    %1208 = vmatprep.mubr.bf16.mxu0 0
    %1209 = vmatmul.mubr.bf16.gmra.mrb[0].mxu0 %v1039
    %v1210 = vpop.f32.mrb[0].mxu0
    %v1211 = vadd.f32 %v812, %v1210
    %v1212 = vpop.f32.mrb[0].mxu0
    %v1213 = vadd.f32 %v816, %v1212
    %v1214 = vpop.f32.mrb[0].mxu0
    %v1215 = vadd.f32 %v812, %v1214
    %v1216 = vpop.f32.mrb[0].mxu0
    %v1217 = vadd.f32 %v816, %v1216
    %1218 = vmatprep.mubr.bf16.mxu0 0
    %1219 = vmatmul.mubr.bf16.gmra.mrb[0].mxu0 %v1042
    %v1220 = vpop.f32.mrb[0].mxu0
    %v1221 = vadd.f32 %v812, %v1220
    %v1222 = vpop.f32.mrb[0].mxu0
    %v1223 = vadd.f32 %v816, %v1222
    %v1224 = vpop.f32.mrb[0].mxu0
    %v1225 = vadd.f32 %v812, %v1224
    %v1226 = vpop.f32.mrb[0].mxu0
    %v1227 = vadd.f32 %v816, %v1226
    %1228 = vmatprep.mubr.bf16.mxu0 0
    %1229 = vmatmul.mubr.bf16.gmra.mrb[0].mxu0 %v1045
    %v1230 = vpop.f32.mrb[0].mxu0
    %v1231 = vadd.f32 %v812, %v1230
    %v1232 = vpop.f32.mrb[0].mxu0
    %v1233 = vadd.f32 %v816, %v1232
    %v1234 = vpop.f32.mrb[0].mxu0
    %v1235 = vadd.f32 %v812, %v1234
    %v1236 = vpop.f32.mrb[0].mxu0
    %v1237 = vadd.f32 %v816, %v1236
    %1238 = vmatprep.mubr.bf16.mxu0 0
    %1239 = vmatmul.mubr.bf16.gmra.mrb[0].mxu0 %v1048
    %v1240 = vpop.f32.mrb[0].mxu0
    %v1241 = vadd.f32 %v812, %v1240
    %v1242 = vpop.f32.mrb[0].mxu0
    %v1243 = vadd.f32 %v816, %v1242
    %v1244 = vpop.f32.mrb[0].mxu0
    %v1245 = vadd.f32 %v812, %v1244
    %v1246 = vpop.f32.mrb[0].mxu0
    %v1247 = vadd.f32 %v816, %v1246
    %1248 = vmatprep.mubr.bf16.mxu0 0
    %1249 = vmatmul.mubr.bf16.gmra.mrb[0].mxu0 %v1051
    %v1250 = vpop.f32.mrb[0].mxu0
    %v1251 = vadd.f32 %v812, %v1250
    %v1252 = vpop.f32.mrb[0].mxu0
    %v1253 = vadd.f32 %v816, %v1252
    %v1254 = vpop.f32.mrb[0].mxu0
    %v1255 = vadd.f32 %v812, %v1254
    %v1256 = vpop.f32.mrb[0].mxu0
    %v1257 = vadd.f32 %v816, %v1256
    %1258 = vmatprep.mubr.bf16.mxu0 0
    %1259 = vmatmul.mubr.bf16.gmra.mrb[0].mxu0 %v1054
    %v1260 = vpop.f32.mrb[0].mxu0
    %v1261 = vadd.f32 %v812, %v1260
    %v1262 = vpop.f32.mrb[0].mxu0
    %v1263 = vadd.f32 %v816, %v1262
    %v1264 = vpop.f32.mrb[0].mxu0
    %v1265 = vadd.f32 %v812, %v1264
    %v1266 = vpop.f32.mrb[0].mxu0
    %v1267 = vadd.f32 %v816, %v1266
    %1268 = vmatprep.mubr.bf16.mxu0 0
    %1269 = vmatmul.mubr.bf16.gmra.mrb[0].mxu0 %v1057
    %v1270 = vpop.f32.mrb[0].mxu0
    %v1271 = vadd.f32 %v812, %v1270
    %v1272 = vpop.f32.mrb[0].mxu0
    %v1273 = vadd.f32 %v816, %v1272
    %v1274 = vpop.f32.mrb[0].mxu0
    %v1275 = vadd.f32 %v812, %v1274
    %v1276 = vpop.f32.mrb[0].mxu0
    %v1277 = vadd.f32 %v816, %v1276
    %1278 = vmatprep.mubr.bf16.mxu0 0
    %1279 = vmatmul.mubr.bf16.gmra.mrb[0].mxu0 %v1060
    %v1280 = vpop.f32.mrb[0].mxu0
    %v1281 = vadd.f32 %v812, %v1280
    %v1282 = vpop.f32.mrb[0].mxu0
    %v1283 = vadd.f32 %v816, %v1282
    %v1284 = vpop.f32.mrb[0].mxu0
    %v1285 = vadd.f32 %v812, %v1284
    %v1286 = vpop.f32.mrb[0].mxu0
    %v1287 = vadd.f32 %v816, %v1286
    %1288 = vmatprep.mubr.bf16.mxu0 0
    %1289 = vmatmul.mubr.bf16.gmra.mrb[0].mxu0 %v1063
    %v1290 = vpop.f32.mrb[0].mxu0
    %v1291 = vadd.f32 %v812, %v1290
    %v1292 = vpop.f32.mrb[0].mxu0
    %v1293 = vadd.f32 %v816, %v1292
    %v1294 = vpop.f32.mrb[0].mxu0
    %v1295 = vadd.f32 %v812, %v1294
    %v1296 = vpop.f32.mrb[0].mxu0
    %v1297 = vadd.f32 %v816, %v1296
    %1298 = vmatprep.mubr.bf16.mxu0 0
    %1299 = vmatmul.mubr.bf16.gmra.mrb[0].mxu0 %v1066
    %v1300 = vpop.f32.mrb[0].mxu0
    %v1301 = vadd.f32 %v812, %v1300
    %v1302 = vpop.f32.mrb[0].mxu0
    %v1303 = vadd.f32 %v816, %v1302
    %v1304 = vpop.f32.mrb[0].mxu0
    %v1305 = vadd.f32 %v812, %v1304
    %v1306 = vpop.f32.mrb[0].mxu0
    %v1307 = vadd.f32 %v816, %v1306
    %1308 = vmatprep.mubr.bf16.mxu0 0
    %1309 = vmatmul.mubr.bf16.gmra.mrb[0].mxu0 %v1069
    %v1310 = vpop.f32.mrb[0].mxu0
    %v1311 = vadd.f32 %v812, %v1310
    %v1312 = vpop.f32.mrb[0].mxu0
    %v1313 = vadd.f32 %v816, %v1312
    %v1314 = vpop.f32.mrb[0].mxu0
    %v1315 = vadd.f32 %v812, %v1314
    %v1316 = vpop.f32.mrb[0].mxu0
    %v1317 = vadd.f32 %v816, %v1316
    %1318 = vmatprep.mubr.bf16.mxu0 0
    %1319 = vmatmul.mubr.bf16.gmra.mrb[0].mxu0 %v1072
    %v1320 = vpop.f32.mrb[0].mxu0
    %v1321 = vadd.f32 %v812, %v1320
    %v1322 = vpop.f32.mrb[0].mxu0
    %v1323 = vadd.f32 %v816, %v1322
    %v1324 = vpop.f32.mrb[0].mxu0
    %v1325 = vadd.f32 %v812, %v1324
    %v1326 = vpop.f32.mrb[0].mxu0
    %v1327 = vadd.f32 %v816, %v1326
    %1328 = vmatprep.mubr.bf16.mxu0 0
    %1329 = vmatmul.mubr.bf16.gmra.mrb[0].mxu0 %v1075
    %v1330 = vpop.f32.mrb[0].mxu0
    %v1331 = vadd.f32 %v812, %v1330
    %v1332 = vpop.f32.mrb[0].mxu0
    %v1333 = vadd.f32 %v816, %v1332
    %v1334 = vpop.f32.mrb[0].mxu0
    %v1335 = vadd.f32 %v812, %v1334
    %v1336 = vpop.f32.mrb[0].mxu0
    %v1337 = vadd.f32 %v816, %v1336
    %1338 = vmatprep.mubr.bf16.mxu0 0
    %1339 = vmatmul.mubr.bf16.gmra.mrb[0].mxu0 %v1078
    %v1340 = vpop.f32.mrb[0].mxu0
    %v1341 = vadd.f32 %v812, %v1340
    %v1342 = vpop.f32.mrb[0].mxu0
    %v1343 = vadd.f32 %v816, %v1342
    %v1344 = vpop.f32.mrb[0].mxu0
    %v1345 = vadd.f32 %v812, %v1344
    %v1346 = vpop.f32.mrb[0].mxu0
    %v1347 = vadd.f32 %v816, %v1346
    %1348 = vmatprep.mubr.bf16.mxu0 0
    %1349 = vmatmul.mubr.bf16.gmra.mrb[0].mxu0 %v1081
    %v1350 = vpop.f32.mrb[0].mxu0
    %v1351 = vadd.f32 %v812, %v1350
    %v1352 = vpop.f32.mrb[0].mxu0
    %v1353 = vadd.f32 %v816, %v1352
    %v1354 = vpop.f32.mrb[0].mxu0
    %v1355 = vadd.f32 %v812, %v1354
    %v1356 = vpop.f32.mrb[0].mxu0
    %v1357 = vadd.f32 %v816, %v1356
    %1358 = vmatprep.mubr.bf16.mxu0 0
    %1359 = vmatmul.mubr.bf16.gmra.mrb[0].mxu0 %v1084
    %v1360 = vpop.f32.mrb[0].mxu0
    %v1361 = vadd.f32 %v812, %v1360
    %v1362 = vpop.f32.mrb[0].mxu0
    %v1363 = vadd.f32 %v816, %v1362
    %v1364 = vpop.f32.mrb[0].mxu0
    %v1365 = vadd.f32 %v812, %v1364
    %v1366 = vpop.f32.mrb[0].mxu0
    %v1367 = vadd.f32 %v816, %v1366
    %1368 = vmatprep.mubr.bf16.mxu0 0
    %1369 = vmatmul.mubr.bf16.gmra.mrb[0].mxu0 %v1087
    %v1370 = vpop.f32.mrb[0].mxu0
    %v1371 = vadd.f32 %v812, %v1370
    %v1372 = vpop.f32.mrb[0].mxu0
    %v1373 = vadd.f32 %v816, %v1372
    %v1374 = vpop.f32.mrb[0].mxu0
    %v1375 = vadd.f32 %v812, %v1374
    %v1376 = vpop.f32.mrb[0].mxu0
    %v1377 = vadd.f32 %v816, %v1376
    %1378 = vmatprep.mubr.bf16.mxu0 0
    %1379 = vmatmul.mubr.bf16.gmra.mrb[0].mxu0 %v1090
    %v1380 = vpop.f32.mrb[0].mxu0
    %v1381 = vadd.f32 %v812, %v1380
    %v1382 = vpop.f32.mrb[0].mxu0
    %v1383 = vadd.f32 %v816, %v1382
    %v1384 = vpop.f32.mrb[0].mxu0
    %v1385 = vadd.f32 %v812, %v1384
    %v1386 = vpop.f32.mrb[0].mxu0
    %v1387 = vadd.f32 %v816, %v1386
    %1388 = vmatprep.mubr.bf16.mxu0 0
    %1389 = vmatmul.mubr.bf16.gmra.mrb[0].mxu0 %v1093
    %v1390 = vpop.f32.mrb[0].mxu0
    %v1391 = vadd.f32 %v812, %v1390
    %v1392 = vpop.f32.mrb[0].mxu0
    %v1393 = vadd.f32 %v816, %v1392
    %v1394 = vpop.f32.mrb[0].mxu0
    %v1395 = vadd.f32 %v812, %v1394
    %v1396 = vpop.f32.mrb[0].mxu0
    %v1397 = vadd.f32 %v816, %v1396
    %1398 = vmatprep.mubr.bf16.mxu0 0
    %1399 = vmatmul.mubr.bf16.gmra.mrb[0].mxu0 %v1096
    %v1400 = vpop.f32.mrb[0].mxu0
    %v1401 = vadd.f32 %v812, %v1400
    %v1402 = vpop.f32.mrb[0].mxu0
    %v1403 = vadd.f32 %v816, %v1402
    %v1404 = vpop.f32.mrb[0].mxu0
    %v1405 = vadd.f32 %v812, %v1404
    %v1406 = vpop.f32.mrb[0].mxu0
    %v1407 = vadd.f32 %v816, %v1406
    %1408 = vmatprep.mubr.bf16.mxu0 0
    %1409 = vmatmul.mubr.bf16.gmra.mrb[0].mxu0 %v1099
    %v1410 = vpop.f32.mrb[0].mxu0
    %v1411 = vadd.f32 %v812, %v1410
    %v1412 = vpop.f32.mrb[0].mxu0
    %v1413 = vadd.f32 %v816, %v1412
    %v1414 = vpop.f32.mrb[0].mxu0
    %v1415 = vadd.f32 %v812, %v1414
    %v1416 = vpop.f32.mrb[0].mxu0
    %v1417 = vadd.f32 %v816, %v1416
    %1418 = vmatprep.mubr.bf16.mxu0 0
    %1419 = vmatmul.mubr.bf16.gmra.mrb[0].mxu0 %v1102
    %v1420 = vpop.f32.mrb[0].mxu0
    %v1421 = vadd.f32 %v812, %v1420
    %v1422 = vpop.f32.mrb[0].mxu0
    %v1423 = vadd.f32 %v816, %v1422
    %v1424 = vpop.f32.mrb[0].mxu0
    %v1425 = vadd.f32 %v812, %v1424
    %v1426 = vpop.f32.mrb[0].mxu0
    %v1427 = vadd.f32 %v816, %v1426
    %1428 = vmatprep.mubr.bf16.mxu0 0
    %1429 = vmatmul.mubr.bf16.gmra.mrb[0].mxu0 %v1105
    %v1430 = vpop.f32.mrb[0].mxu0
    %v1431 = vadd.f32 %v812, %v1430
    %v1432 = vpop.f32.mrb[0].mxu0
    %v1433 = vadd.f32 %v816, %v1432
    %v1434 = vpop.f32.mrb[0].mxu0
    %v1435 = vadd.f32 %v812, %v1434
    %v1436 = vpop.f32.mrb[0].mxu0
    %v1437 = vadd.f32 %v816, %v1436
    %1438 = vmatprep.mubr.bf16.mxu0 0
    %1439 = vmatmul.mubr.bf16.gmra.mrb[0].mxu0 %v1108
    %v1440 = vpop.f32.mrb[0].mxu0
    %v1441 = vadd.f32 %v812, %v1440
    %v1442 = vpop.f32.mrb[0].mxu0
    %v1443 = vadd.f32 %v816, %v1442
    %v1444 = vpop.f32.mrb[0].mxu0
    %v1445 = vadd.f32 %v812, %v1444
    %v1446 = vpop.f32.mrb[0].mxu0
    %v1447 = vadd.f32 %v816, %v1446
    %1448 = vmatprep.mubr.bf16.mxu0 0
    %1449 = vmatmul.mubr.bf16.gmra.mrb[0].mxu0 %v1111
    %v1450 = vpop.f32.mrb[0].mxu0
    %v1451 = vadd.f32 %v812, %v1450
    %v1452 = vpop.f32.mrb[0].mxu0
    %v1453 = vadd.f32 %v816, %v1452
    %v1454 = vpop.f32.mrb[0].mxu0
    %v1455 = vadd.f32 %v812, %v1454
    %v1456 = vpop.f32.mrb[0].mxu0
    %v1457 = vadd.f32 %v816, %v1456
    %1458 = vmatprep.mubr.bf16.mxu0 0
    %1459 = vmatmul.mubr.bf16.gmra.mrb[0].mxu0 %v1114
    %v1460 = vpop.f32.mrb[0].mxu0
    %v1461 = vadd.f32 %v812, %v1460
    %v1462 = vpop.f32.mrb[0].mxu0
    %v1463 = vadd.f32 %v816, %v1462
    %v1464 = vpop.f32.mrb[0].mxu0
    %v1465 = vadd.f32 %v812, %v1464
    %v1466 = vpop.f32.mrb[0].mxu0
    %v1467 = vadd.f32 %v816, %v1466
    %1468 = vdwg.mxu0
    %v1469 = vmax.f32 %v1151, 0.0
    %v1470 = vmax.f32 %v1153, 0.0
    %v1471 = vmax.f32 %v1155, 0.0
    %v1472 = vmax.f32 %v1157, 0.0
    %v1473 = vmax.f32 %v1161, 0.0
    %v1474 = vmax.f32 %v1163, 0.0
    %v1475 = vmax.f32 %v1165, 0.0
    %v1476 = vmax.f32 %v1167, 0.0
    %v1477 = vmax.f32 %v1171, 0.0
    %v1478 = vmax.f32 %v1173, 0.0
    %v1479 = vmax.f32 %v1175, 0.0
    %v1480 = vmax.f32 %v1177, 0.0
    %v1481 = vmax.f32 %v1181, 0.0
    %v1482 = vmax.f32 %v1183, 0.0
    %v1483 = vmax.f32 %v1185, 0.0
    %v1484 = vmax.f32 %v1187, 0.0
    %v1485 = vmax.f32 %v1191, 0.0
    %v1486 = vmax.f32 %v1193, 0.0
    %v1487 = vmax.f32 %v1195, 0.0
    %v1488 = vmax.f32 %v1197, 0.0
    %v1489 = vmax.f32 %v1201, 0.0
    %v1490 = vmax.f32 %v1203, 0.0
    %v1491 = vmax.f32 %v1205, 0.0
    %v1492 = vmax.f32 %v1207, 0.0
    %v1493 = vmax.f32 %v1211, 0.0
    %v1494 = vmax.f32 %v1213, 0.0
    %v1495 = vmax.f32 %v1215, 0.0
    %v1496 = vmax.f32 %v1217, 0.0
    %v1497 = vmax.f32 %v1221, 0.0
    %v1498 = vmax.f32 %v1223, 0.0
    %v1499 = vmax.f32 %v1225, 0.0
    %v1500 = vmax.f32 %v1227, 0.0
    %v1501 = vmax.f32 %v1231, 0.0
    %v1502 = vmax.f32 %v1233, 0.0
    %v1503 = vmax.f32 %v1235, 0.0
    %v1504 = vmax.f32 %v1237, 0.0
    %v1505 = vmax.f32 %v1241, 0.0
    %v1506 = vmax.f32 %v1243, 0.0
    %v1507 = vmax.f32 %v1245, 0.0
    %v1508 = vmax.f32 %v1247, 0.0
    %v1509 = vmax.f32 %v1251, 0.0
    %v1510 = vmax.f32 %v1253, 0.0
    %v1511 = vmax.f32 %v1255, 0.0
    %v1512 = vmax.f32 %v1257, 0.0
    %v1513 = vmax.f32 %v1261, 0.0
    %v1514 = vmax.f32 %v1263, 0.0
    %v1515 = vmax.f32 %v1265, 0.0
    %v1516 = vmax.f32 %v1267, 0.0
    %v1517 = vmax.f32 %v1271, 0.0
    %v1518 = vmax.f32 %v1273, 0.0
    %v1519 = vmax.f32 %v1275, 0.0
    %v1520 = vmax.f32 %v1277, 0.0
    %v1521 = vmax.f32 %v1281, 0.0
    %v1522 = vmax.f32 %v1283, 0.0
    %v1523 = vmax.f32 %v1285, 0.0
    %v1524 = vmax.f32 %v1287, 0.0
    %v1525 = vmax.f32 %v1291, 0.0
    %v1526 = vmax.f32 %v1293, 0.0
    %v1527 = vmax.f32 %v1295, 0.0
    %v1528 = vmax.f32 %v1297, 0.0
    %v1529 = vmax.f32 %v1301, 0.0
    %v1530 = vmax.f32 %v1303, 0.0
    %v1531 = vmax.f32 %v1305, 0.0
    %v1532 = vmax.f32 %v1307, 0.0
    %v1533 = vmax.f32 %v1311, 0.0
    %v1534 = vmax.f32 %v1313, 0.0
    %v1535 = vmax.f32 %v1315, 0.0
    %v1536 = vmax.f32 %v1317, 0.0
    %v1537 = vmax.f32 %v1321, 0.0
    %v1538 = vmax.f32 %v1323, 0.0
    %v1539 = vmax.f32 %v1325, 0.0
    %v1540 = vmax.f32 %v1327, 0.0
    %v1541 = vmax.f32 %v1331, 0.0
    %v1542 = vmax.f32 %v1333, 0.0
    %v1543 = vmax.f32 %v1335, 0.0
    %v1544 = vmax.f32 %v1337, 0.0
    %v1545 = vmax.f32 %v1341, 0.0
    %v1546 = vmax.f32 %v1343, 0.0
    %v1547 = vmax.f32 %v1345, 0.0
    %v1548 = vmax.f32 %v1347, 0.0
    %v1549 = vmax.f32 %v1351, 0.0
    %v1550 = vmax.f32 %v1353, 0.0
    %v1551 = vmax.f32 %v1355, 0.0
    %v1552 = vmax.f32 %v1357, 0.0
    %v1553 = vmax.f32 %v1361, 0.0
    %v1554 = vmax.f32 %v1363, 0.0
    %v1555 = vmax.f32 %v1365, 0.0
    %v1556 = vmax.f32 %v1367, 0.0
    %v1557 = vmax.f32 %v1371, 0.0
    %v1558 = vmax.f32 %v1373, 0.0
    %v1559 = vmax.f32 %v1375, 0.0
    %v1560 = vmax.f32 %v1377, 0.0
    %v1561 = vmax.f32 %v1381, 0.0
    %v1562 = vmax.f32 %v1383, 0.0
    %v1563 = vmax.f32 %v1385, 0.0
    %v1564 = vmax.f32 %v1387, 0.0
    %v1565 = vmax.f32 %v1391, 0.0
    %v1566 = vmax.f32 %v1393, 0.0
    %v1567 = vmax.f32 %v1395, 0.0
    %v1568 = vmax.f32 %v1397, 0.0
    %v1569 = vmax.f32 %v1401, 0.0
    %v1570 = vmax.f32 %v1403, 0.0
    %v1571 = vmax.f32 %v1405, 0.0
    %v1572 = vmax.f32 %v1407, 0.0
    %v1573 = vmax.f32 %v1411, 0.0
    %v1574 = vmax.f32 %v1413, 0.0
    %v1575 = vmax.f32 %v1415, 0.0
    %v1576 = vmax.f32 %v1417, 0.0
    %v1577 = vmax.f32 %v1421, 0.0
    %v1578 = vmax.f32 %v1423, 0.0
    %v1579 = vmax.f32 %v1425, 0.0
    %v1580 = vmax.f32 %v1427, 0.0
    %v1581 = vmax.f32 %v1431, 0.0
    %v1582 = vmax.f32 %v1433, 0.0
    %v1583 = vmax.f32 %v1435, 0.0
    %v1584 = vmax.f32 %v1437, 0.0
    %v1585 = vmax.f32 %v1441, 0.0
    %v1586 = vmax.f32 %v1443, 0.0
    %v1587 = vmax.f32 %v1445, 0.0
    %v1588 = vmax.f32 %v1447, 0.0
    %v1589 = vmax.f32 %v1451, 0.0
    %v1590 = vmax.f32 %v1453, 0.0
    %v1591 = vmax.f32 %v1455, 0.0
    %v1592 = vmax.f32 %v1457, 0.0
    %v1593 = vmax.f32 %v1461, 0.0
    %v1594 = vmax.f32 %v1463, 0.0
    %v1595 = vmax.f32 %v1465, 0.0
    %v1596 = vmax.f32 %v1467, 0.0
    %v1597 = vpack.c.bf16 %v1471, %v1469
    %v1598 = vpack.c.bf16 %v1472, %v1470
    %v1599 = vpack.c.bf16 %v1475, %v1473
    %v1600 = vpack.c.bf16 %v1476, %v1474
    %v1601 = vpack.c.bf16 %v1479, %v1477
    %v1602 = vpack.c.bf16 %v1480, %v1478
    %v1603 = vpack.c.bf16 %v1483, %v1481
    %v1604 = vpack.c.bf16 %v1484, %v1482
    %v1605 = vpack.c.bf16 %v1487, %v1485
    %v1606 = vpack.c.bf16 %v1488, %v1486
    %v1607 = vpack.c.bf16 %v1491, %v1489
    %v1608 = vpack.c.bf16 %v1492, %v1490
    %v1609 = vpack.c.bf16 %v1495, %v1493
    %v1610 = vpack.c.bf16 %v1496, %v1494
    %v1611 = vpack.c.bf16 %v1499, %v1497
    %v1612 = vpack.c.bf16 %v1500, %v1498
    %v1613 = vpack.c.bf16 %v1503, %v1501
    %v1614 = vpack.c.bf16 %v1504, %v1502
    %v1615 = vpack.c.bf16 %v1507, %v1505
    %v1616 = vpack.c.bf16 %v1508, %v1506
    %v1617 = vpack.c.bf16 %v1511, %v1509
    %v1618 = vpack.c.bf16 %v1512, %v1510
    %v1619 = vpack.c.bf16 %v1515, %v1513
    %v1620 = vpack.c.bf16 %v1516, %v1514
    %v1621 = vpack.c.bf16 %v1519, %v1517
    %v1622 = vpack.c.bf16 %v1520, %v1518
    %v1623 = vpack.c.bf16 %v1523, %v1521
    %v1624 = vpack.c.bf16 %v1524, %v1522
    %v1625 = vpack.c.bf16 %v1527, %v1525
    %v1626 = vpack.c.bf16 %v1528, %v1526
    %v1627 = vpack.c.bf16 %v1531, %v1529
    %v1628 = vpack.c.bf16 %v1532, %v1530
    %v1629 = vpack.c.bf16 %v1535, %v1533
    %v1630 = vpack.c.bf16 %v1536, %v1534
    %v1631 = vpack.c.bf16 %v1539, %v1537
    %v1632 = vpack.c.bf16 %v1540, %v1538
    %v1633 = vpack.c.bf16 %v1543, %v1541
    %v1634 = vpack.c.bf16 %v1544, %v1542
    %v1635 = vpack.c.bf16 %v1547, %v1545
    %v1636 = vpack.c.bf16 %v1548, %v1546
    %v1637 = vpack.c.bf16 %v1551, %v1549
    %v1638 = vpack.c.bf16 %v1552, %v1550
    %v1639 = vpack.c.bf16 %v1555, %v1553
    %v1640 = vpack.c.bf16 %v1556, %v1554
    %v1641 = vpack.c.bf16 %v1559, %v1557
    %v1642 = vpack.c.bf16 %v1560, %v1558
    %v1643 = vpack.c.bf16 %v1563, %v1561
    %v1644 = vpack.c.bf16 %v1564, %v1562
    %v1645 = vpack.c.bf16 %v1567, %v1565
    %v1646 = vpack.c.bf16 %v1568, %v1566
    %v1647 = vpack.c.bf16 %v1571, %v1569
    %v1648 = vpack.c.bf16 %v1572, %v1570
    %v1649 = vpack.c.bf16 %v1575, %v1573
    %v1650 = vpack.c.bf16 %v1576, %v1574
    %v1651 = vpack.c.bf16 %v1579, %v1577
    %v1652 = vpack.c.bf16 %v1580, %v1578
    %v1653 = vpack.c.bf16 %v1583, %v1581
    %v1654 = vpack.c.bf16 %v1584, %v1582
    %v1655 = vpack.c.bf16 %v1587, %v1585
    %v1656 = vpack.c.bf16 %v1588, %v1586
    %v1657 = vpack.c.bf16 %v1591, %v1589
    %v1658 = vpack.c.bf16 %v1592, %v1590
    %v1659 = vpack.c.bf16 %v1595, %v1593
    %v1660 = vpack.c.bf16 %v1596, %v1594
    %v1662 = vlaneseq
    %v1663 = vshrl.u32 %v1662, 7
    %v1664 = vsub.s32 0, %v1663
    %v1665 = vrot.slane %v354, %v1664
    %v1666 = vlaneseq
    %v1667 = vshrl.u32 %v1666, 7
    %v1668 = vsub.s32 1, %v1667
    %v1669 = vrot.slane %v354, %v1668
    %v1704 = vunpack.c.l.b16 %v322
    %v1705 = vunpack.c.h.b16 %v322
    %v1706 = vunpack.c.l.b16 %v323
    %v1707 = vunpack.c.h.b16 %v323
    %v1708 = vunpack.c.l.b16 %v324
    %v1709 = vunpack.c.h.b16 %v324
    %v1710 = vunpack.c.l.b16 %v325
    %v1711 = vunpack.c.h.b16 %v325
    %v1712 = vunpack.c.l.b16 %v326
    %v1713 = vunpack.c.h.b16 %v326
    %v1714 = vunpack.c.l.b16 %v327
    %v1715 = vunpack.c.h.b16 %v327
    %v1716 = vunpack.c.l.b16 %v328
    %v1717 = vunpack.c.h.b16 %v328
    %v1718 = vunpack.c.l.b16 %v329
    %v1719 = vunpack.c.h.b16 %v329
    %v1720 = vunpack.c.l.b16 %v330
    %v1721 = vunpack.c.h.b16 %v330
    %v1722 = vunpack.c.l.b16 %v331
    %v1723 = vunpack.c.h.b16 %v331
    %v1724 = vunpack.c.l.b16 %v332
    %v1725 = vunpack.c.h.b16 %v332
    %v1726 = vunpack.c.l.b16 %v333
    %v1727 = vunpack.c.h.b16 %v333
    %v1728 = vunpack.c.l.b16 %v334
    %v1729 = vunpack.c.h.b16 %v334
    %v1730 = vunpack.c.l.b16 %v335
    %v1731 = vunpack.c.h.b16 %v335
    %v1732 = vunpack.c.l.b16 %v336
    %v1733 = vunpack.c.h.b16 %v336
    %v1734 = vunpack.c.l.b16 %v337
    %v1735 = vunpack.c.h.b16 %v337
    %v1736 = vunpack.c.l.b16 %v338
    %v1737 = vunpack.c.h.b16 %v338
    %v1738 = vunpack.c.l.b16 %v339
    %v1739 = vunpack.c.h.b16 %v339
    %v1740 = vunpack.c.l.b16 %v340
    %v1741 = vunpack.c.h.b16 %v340
    %v1742 = vunpack.c.l.b16 %v341
    %v1743 = vunpack.c.h.b16 %v341
    %v1744 = vunpack.c.l.b16 %v342
    %v1745 = vunpack.c.h.b16 %v342
    %v1746 = vunpack.c.l.b16 %v343
    %v1747 = vunpack.c.h.b16 %v343
    %v1748 = vunpack.c.l.b16 %v344
    %v1749 = vunpack.c.h.b16 %v344
    %v1750 = vunpack.c.l.b16 %v345
    %v1751 = vunpack.c.h.b16 %v345
    %v1752 = vunpack.c.l.b16 %v346
    %v1753 = vunpack.c.h.b16 %v346
    %v1754 = vunpack.c.l.b16 %v347
    %v1755 = vunpack.c.h.b16 %v347
    %v1756 = vunpack.c.l.b16 %v348
    %v1757 = vunpack.c.h.b16 %v348
    %v1758 = vunpack.c.l.b16 %v349
    %v1759 = vunpack.c.h.b16 %v349
    %v1760 = vunpack.c.l.b16 %v350
    %v1761 = vunpack.c.h.b16 %v350
    %v1762 = vunpack.c.l.b16 %v351
    %v1763 = vunpack.c.h.b16 %v351
    %v1764 = vunpack.c.l.b16 %v352
    %v1765 = vunpack.c.h.b16 %v352
    %v1766 = vunpack.c.l.b16 %v353
    %v1767 = vunpack.c.h.b16 %v353
    %v1768 = vpack.c.b16 %v1706, %v1704
    %v1769 = vpack.c.b16 %v1707, %v1705
    %v1770 = vpack.c.b16 %v1710, %v1708
    %v1771 = vpack.c.b16 %v1711, %v1709
    %v1772 = vpack.c.b16 %v1714, %v1712
    %v1773 = vpack.c.b16 %v1715, %v1713
    %v1774 = vpack.c.b16 %v1718, %v1716
    %v1775 = vpack.c.b16 %v1719, %v1717
    %v1776 = vpack.c.b16 %v1722, %v1720
    %v1777 = vpack.c.b16 %v1723, %v1721
    %v1778 = vpack.c.b16 %v1726, %v1724
    %v1779 = vpack.c.b16 %v1727, %v1725
    %v1780 = vpack.c.b16 %v1730, %v1728
    %v1781 = vpack.c.b16 %v1731, %v1729
    %v1782 = vpack.c.b16 %v1734, %v1732
    %v1783 = vpack.c.b16 %v1735, %v1733
    %v1784 = vpack.c.b16 %v1738, %v1736
    %v1785 = vpack.c.b16 %v1739, %v1737
    %v1786 = vpack.c.b16 %v1742, %v1740
    %v1787 = vpack.c.b16 %v1743, %v1741
    %v1788 = vpack.c.b16 %v1746, %v1744
    %v1789 = vpack.c.b16 %v1747, %v1745
    %v1790 = vpack.c.b16 %v1750, %v1748
    %v1791 = vpack.c.b16 %v1751, %v1749
    %v1792 = vpack.c.b16 %v1754, %v1752
    %v1793 = vpack.c.b16 %v1755, %v1753
    %v1794 = vpack.c.b16 %v1758, %v1756
    %v1795 = vpack.c.b16 %v1759, %v1757
    %v1796 = vpack.c.b16 %v1762, %v1760
    %v1797 = vpack.c.b16 %v1763, %v1761
    %v1798 = vpack.c.b16 %v1766, %v1764
    %v1799 = vpack.c.b16 %v1767, %v1765
    %1832 = vmatprep.subr.bf16.mxu0 %v1769
    %1833 = vmatpush1.bf16.msra.mxu0 %v1768
    %1834 = vmatprep.subr.bf16.mxu0 %v1771
    %1835 = vmatpush1.bf16.msra.mxu0 %v1770
    %1836 = vmatprep.subr.bf16.mxu0 %v1773
    %1837 = vmatpush1.bf16.msra.mxu0 %v1772
    %1838 = vmatprep.subr.bf16.mxu0 %v1775
    %1839 = vmatpush1.bf16.msra.mxu0 %v1774
    %1840 = vmatprep.subr.bf16.mxu0 %v1777
    %1841 = vmatpush1.bf16.msra.mxu0 %v1776
    %1842 = vmatprep.subr.bf16.mxu0 %v1779
    %1843 = vmatpush1.bf16.msra.mxu0 %v1778
    %1844 = vmatprep.subr.bf16.mxu0 %v1781
    %1845 = vmatpush1.bf16.msra.mxu0 %v1780
    %1846 = vmatprep.subr.bf16.mxu0 %v1783
    %1847 = vmatpush1.bf16.msra.mxu0 %v1782
    %1848 = vmatprep.subr.bf16.mxu0 %v1785
    %1849 = vmatpush1.bf16.msra.mxu0 %v1784
    %1850 = vmatprep.subr.bf16.mxu0 %v1787
    %1851 = vmatpush1.bf16.msra.mxu0 %v1786
    %1852 = vmatprep.subr.bf16.mxu0 %v1789
    %1853 = vmatpush1.bf16.msra.mxu0 %v1788
    %1854 = vmatprep.subr.bf16.mxu0 %v1791
    %1855 = vmatpush1.bf16.msra.mxu0 %v1790
    %1856 = vmatprep.subr.bf16.mxu0 %v1793
    %1857 = vmatpush1.bf16.msra.mxu0 %v1792
    %1858 = vmatprep.subr.bf16.mxu0 %v1795
    %1859 = vmatpush1.bf16.msra.mxu0 %v1794
    %1860 = vmatprep.subr.bf16.mxu0 %v1797
    %1861 = vmatpush1.bf16.msra.mxu0 %v1796
    %1862 = vmatprep.subr.bf16.mxu0 %v1799
    %1863 = vmatpush1.bf16.msra.mxu0 %v1798
    %1864 = vmatprep.mubr.bf16.mxu0 %v1598
    %1865 = vmatmul.mubr.bf16.gmra.mrb[0].mxu0 %v1597
    %v1866 = vpop.f32.mrb[0].mxu0
    %v1867 = vadd.f32 %v1665, %v1866
    %v1868 = vpop.f32.mrb[0].mxu0
    %v1869 = vadd.f32 %v1669, %v1868
    %v1870 = vpop.f32.mrb[0].mxu0
    %v1871 = vadd.f32 %v1665, %v1870
    %v1872 = vpop.f32.mrb[0].mxu0
    %v1873 = vadd.f32 %v1669, %v1872
    %1874 = vmatprep.mubr.bf16.mxu0 %v1600
    %1875 = vmatmul.mubr.bf16.gmra.mrb[0].mxu0 %v1599
    %v1876 = vpop.f32.mrb[0].mxu0
    %v1877 = vadd.f32 %v1665, %v1876
    %v1878 = vpop.f32.mrb[0].mxu0
    %v1879 = vadd.f32 %v1669, %v1878
    %v1880 = vpop.f32.mrb[0].mxu0
    %v1881 = vadd.f32 %v1665, %v1880
    %v1882 = vpop.f32.mrb[0].mxu0
    %v1883 = vadd.f32 %v1669, %v1882
    %1884 = vmatprep.mubr.bf16.mxu0 %v1602
    %1885 = vmatmul.mubr.bf16.gmra.mrb[0].mxu0 %v1601
    %v1886 = vpop.f32.mrb[0].mxu0
    %v1887 = vadd.f32 %v1665, %v1886
    %v1888 = vpop.f32.mrb[0].mxu0
    %v1889 = vadd.f32 %v1669, %v1888
    %v1890 = vpop.f32.mrb[0].mxu0
    %v1891 = vadd.f32 %v1665, %v1890
    %v1892 = vpop.f32.mrb[0].mxu0
    %v1893 = vadd.f32 %v1669, %v1892
    %1894 = vmatprep.mubr.bf16.mxu0 %v1604
    %1895 = vmatmul.mubr.bf16.gmra.mrb[0].mxu0 %v1603
    %v1896 = vpop.f32.mrb[0].mxu0
    %v1897 = vadd.f32 %v1665, %v1896
    %v1898 = vpop.f32.mrb[0].mxu0
    %v1899 = vadd.f32 %v1669, %v1898
    %v1900 = vpop.f32.mrb[0].mxu0
    %v1901 = vadd.f32 %v1665, %v1900
    %v1902 = vpop.f32.mrb[0].mxu0
    %v1903 = vadd.f32 %v1669, %v1902
    %1904 = vmatprep.mubr.bf16.mxu0 %v1606
    %1905 = vmatmul.mubr.bf16.gmra.mrb[0].mxu0 %v1605
    %v1906 = vpop.f32.mrb[0].mxu0
    %v1907 = vadd.f32 %v1665, %v1906
    %v1908 = vpop.f32.mrb[0].mxu0
    %v1909 = vadd.f32 %v1669, %v1908
    %v1910 = vpop.f32.mrb[0].mxu0
    %v1911 = vadd.f32 %v1665, %v1910
    %v1912 = vpop.f32.mrb[0].mxu0
    %v1913 = vadd.f32 %v1669, %v1912
    %1914 = vmatprep.mubr.bf16.mxu0 %v1608
    %1915 = vmatmul.mubr.bf16.gmra.mrb[0].mxu0 %v1607
    %v1916 = vpop.f32.mrb[0].mxu0
    %v1917 = vadd.f32 %v1665, %v1916
    %v1918 = vpop.f32.mrb[0].mxu0
    %v1919 = vadd.f32 %v1669, %v1918
    %v1920 = vpop.f32.mrb[0].mxu0
    %v1921 = vadd.f32 %v1665, %v1920
    %v1922 = vpop.f32.mrb[0].mxu0
    %v1923 = vadd.f32 %v1669, %v1922
    %1924 = vmatprep.mubr.bf16.mxu0 %v1610
    %1925 = vmatmul.mubr.bf16.gmra.mrb[0].mxu0 %v1609
    %v1926 = vpop.f32.mrb[0].mxu0
    %v1927 = vadd.f32 %v1665, %v1926
    %v1928 = vpop.f32.mrb[0].mxu0
    %v1929 = vadd.f32 %v1669, %v1928
    %v1930 = vpop.f32.mrb[0].mxu0
    %v1931 = vadd.f32 %v1665, %v1930
    %v1932 = vpop.f32.mrb[0].mxu0
    %v1933 = vadd.f32 %v1669, %v1932
    %1934 = vmatprep.mubr.bf16.mxu0 %v1612
    %1935 = vmatmul.mubr.bf16.gmra.mrb[0].mxu0 %v1611
    %v1936 = vpop.f32.mrb[0].mxu0
    %v1937 = vadd.f32 %v1665, %v1936
    %v1938 = vpop.f32.mrb[0].mxu0
    %v1939 = vadd.f32 %v1669, %v1938
    %v1940 = vpop.f32.mrb[0].mxu0
    %v1941 = vadd.f32 %v1665, %v1940
    %v1942 = vpop.f32.mrb[0].mxu0
    %v1943 = vadd.f32 %v1669, %v1942
    %1944 = vmatprep.mubr.bf16.mxu0 %v1614
    %1945 = vmatmul.mubr.bf16.gmra.mrb[0].mxu0 %v1613
    %v1946 = vpop.f32.mrb[0].mxu0
    %v1947 = vadd.f32 %v1665, %v1946
    %v1948 = vpop.f32.mrb[0].mxu0
    %v1949 = vadd.f32 %v1669, %v1948
    %v1950 = vpop.f32.mrb[0].mxu0
    %v1951 = vadd.f32 %v1665, %v1950
    %v1952 = vpop.f32.mrb[0].mxu0
    %v1953 = vadd.f32 %v1669, %v1952
    %1954 = vmatprep.mubr.bf16.mxu0 %v1616
    %1955 = vmatmul.mubr.bf16.gmra.mrb[0].mxu0 %v1615
    %v1956 = vpop.f32.mrb[0].mxu0
    %v1957 = vadd.f32 %v1665, %v1956
    %v1958 = vpop.f32.mrb[0].mxu0
    %v1959 = vadd.f32 %v1669, %v1958
    %v1960 = vpop.f32.mrb[0].mxu0
    %v1961 = vadd.f32 %v1665, %v1960
    %v1962 = vpop.f32.mrb[0].mxu0
    %v1963 = vadd.f32 %v1669, %v1962
    %1964 = vmatprep.mubr.bf16.mxu0 %v1618
    %1965 = vmatmul.mubr.bf16.gmra.mrb[0].mxu0 %v1617
    %v1966 = vpop.f32.mrb[0].mxu0
    %v1967 = vadd.f32 %v1665, %v1966
    %v1968 = vpop.f32.mrb[0].mxu0
    %v1969 = vadd.f32 %v1669, %v1968
    %v1970 = vpop.f32.mrb[0].mxu0
    %v1971 = vadd.f32 %v1665, %v1970
    %v1972 = vpop.f32.mrb[0].mxu0
    %v1973 = vadd.f32 %v1669, %v1972
    %1974 = vmatprep.mubr.bf16.mxu0 %v1620
    %1975 = vmatmul.mubr.bf16.gmra.mrb[0].mxu0 %v1619
    %v1976 = vpop.f32.mrb[0].mxu0
    %v1977 = vadd.f32 %v1665, %v1976
    %v1978 = vpop.f32.mrb[0].mxu0
    %v1979 = vadd.f32 %v1669, %v1978
    %v1980 = vpop.f32.mrb[0].mxu0
    %v1981 = vadd.f32 %v1665, %v1980
    %v1982 = vpop.f32.mrb[0].mxu0
    %v1983 = vadd.f32 %v1669, %v1982
    %1984 = vmatprep.mubr.bf16.mxu0 %v1622
    %1985 = vmatmul.mubr.bf16.gmra.mrb[0].mxu0 %v1621
    %v1986 = vpop.f32.mrb[0].mxu0
    %v1987 = vadd.f32 %v1665, %v1986
    %v1988 = vpop.f32.mrb[0].mxu0
    %v1989 = vadd.f32 %v1669, %v1988
    %v1990 = vpop.f32.mrb[0].mxu0
    %v1991 = vadd.f32 %v1665, %v1990
    %v1992 = vpop.f32.mrb[0].mxu0
    %v1993 = vadd.f32 %v1669, %v1992
    %1994 = vmatprep.mubr.bf16.mxu0 %v1624
    %1995 = vmatmul.mubr.bf16.gmra.mrb[0].mxu0 %v1623
    %v1996 = vpop.f32.mrb[0].mxu0
    %v1997 = vadd.f32 %v1665, %v1996
    %v1998 = vpop.f32.mrb[0].mxu0
    %v1999 = vadd.f32 %v1669, %v1998
    %v2000 = vpop.f32.mrb[0].mxu0
    %v2001 = vadd.f32 %v1665, %v2000
    %v2002 = vpop.f32.mrb[0].mxu0
    %v2003 = vadd.f32 %v1669, %v2002
    %2004 = vmatprep.mubr.bf16.mxu0 %v1626
    %2005 = vmatmul.mubr.bf16.gmra.mrb[0].mxu0 %v1625
    %v2006 = vpop.f32.mrb[0].mxu0
    %v2007 = vadd.f32 %v1665, %v2006
    %v2008 = vpop.f32.mrb[0].mxu0
    %v2009 = vadd.f32 %v1669, %v2008
    %v2010 = vpop.f32.mrb[0].mxu0
    %v2011 = vadd.f32 %v1665, %v2010
    %v2012 = vpop.f32.mrb[0].mxu0
    %v2013 = vadd.f32 %v1669, %v2012
    %2014 = vmatprep.mubr.bf16.mxu0 %v1628
    %2015 = vmatmul.mubr.bf16.gmra.mrb[0].mxu0 %v1627
    %v2016 = vpop.f32.mrb[0].mxu0
    %v2017 = vadd.f32 %v1665, %v2016
    %v2018 = vpop.f32.mrb[0].mxu0
    %v2019 = vadd.f32 %v1669, %v2018
    %v2020 = vpop.f32.mrb[0].mxu0
    %v2021 = vadd.f32 %v1665, %v2020
    %v2022 = vpop.f32.mrb[0].mxu0
    %v2023 = vadd.f32 %v1669, %v2022
    %2024 = vmatprep.mubr.bf16.mxu0 %v1630
    %2025 = vmatmul.mubr.bf16.gmra.mrb[0].mxu0 %v1629
    %v2026 = vpop.f32.mrb[0].mxu0
    %v2027 = vadd.f32 %v1665, %v2026
    %v2028 = vpop.f32.mrb[0].mxu0
    %v2029 = vadd.f32 %v1669, %v2028
    %v2030 = vpop.f32.mrb[0].mxu0
    %v2031 = vadd.f32 %v1665, %v2030
    %v2032 = vpop.f32.mrb[0].mxu0
    %v2033 = vadd.f32 %v1669, %v2032
    %2034 = vmatprep.mubr.bf16.mxu0 %v1632
    %2035 = vmatmul.mubr.bf16.gmra.mrb[0].mxu0 %v1631
    %v2036 = vpop.f32.mrb[0].mxu0
    %v2037 = vadd.f32 %v1665, %v2036
    %v2038 = vpop.f32.mrb[0].mxu0
    %v2039 = vadd.f32 %v1669, %v2038
    %v2040 = vpop.f32.mrb[0].mxu0
    %v2041 = vadd.f32 %v1665, %v2040
    %v2042 = vpop.f32.mrb[0].mxu0
    %v2043 = vadd.f32 %v1669, %v2042
    %2044 = vmatprep.mubr.bf16.mxu0 %v1634
    %2045 = vmatmul.mubr.bf16.gmra.mrb[0].mxu0 %v1633
    %v2046 = vpop.f32.mrb[0].mxu0
    %v2047 = vadd.f32 %v1665, %v2046
    %v2048 = vpop.f32.mrb[0].mxu0
    %v2049 = vadd.f32 %v1669, %v2048
    %v2050 = vpop.f32.mrb[0].mxu0
    %v2051 = vadd.f32 %v1665, %v2050
    %v2052 = vpop.f32.mrb[0].mxu0
    %v2053 = vadd.f32 %v1669, %v2052
    %2054 = vmatprep.mubr.bf16.mxu0 %v1636
    %2055 = vmatmul.mubr.bf16.gmra.mrb[0].mxu0 %v1635
    %v2056 = vpop.f32.mrb[0].mxu0
    %v2057 = vadd.f32 %v1665, %v2056
    %v2058 = vpop.f32.mrb[0].mxu0
    %v2059 = vadd.f32 %v1669, %v2058
    %v2060 = vpop.f32.mrb[0].mxu0
    %v2061 = vadd.f32 %v1665, %v2060
    %v2062 = vpop.f32.mrb[0].mxu0
    %v2063 = vadd.f32 %v1669, %v2062
    %2064 = vmatprep.mubr.bf16.mxu0 %v1638
    %2065 = vmatmul.mubr.bf16.gmra.mrb[0].mxu0 %v1637
    %v2066 = vpop.f32.mrb[0].mxu0
    %v2067 = vadd.f32 %v1665, %v2066
    %v2068 = vpop.f32.mrb[0].mxu0
    %v2069 = vadd.f32 %v1669, %v2068
    %v2070 = vpop.f32.mrb[0].mxu0
    %v2071 = vadd.f32 %v1665, %v2070
    %v2072 = vpop.f32.mrb[0].mxu0
    %v2073 = vadd.f32 %v1669, %v2072
    %2074 = vmatprep.mubr.bf16.mxu0 %v1640
    %2075 = vmatmul.mubr.bf16.gmra.mrb[0].mxu0 %v1639
    %v2076 = vpop.f32.mrb[0].mxu0
    %v2077 = vadd.f32 %v1665, %v2076
    %v2078 = vpop.f32.mrb[0].mxu0
    %v2079 = vadd.f32 %v1669, %v2078
    %v2080 = vpop.f32.mrb[0].mxu0
    %v2081 = vadd.f32 %v1665, %v2080
    %v2082 = vpop.f32.mrb[0].mxu0
    %v2083 = vadd.f32 %v1669, %v2082
    %2084 = vmatprep.mubr.bf16.mxu0 %v1642
    %2085 = vmatmul.mubr.bf16.gmra.mrb[0].mxu0 %v1641
    %v2086 = vpop.f32.mrb[0].mxu0
    %v2087 = vadd.f32 %v1665, %v2086
    %v2088 = vpop.f32.mrb[0].mxu0
    %v2089 = vadd.f32 %v1669, %v2088
    %v2090 = vpop.f32.mrb[0].mxu0
    %v2091 = vadd.f32 %v1665, %v2090
    %v2092 = vpop.f32.mrb[0].mxu0
    %v2093 = vadd.f32 %v1669, %v2092
    %2094 = vmatprep.mubr.bf16.mxu0 %v1644
    %2095 = vmatmul.mubr.bf16.gmra.mrb[0].mxu0 %v1643
    %v2096 = vpop.f32.mrb[0].mxu0
    %v2097 = vadd.f32 %v1665, %v2096
    %v2098 = vpop.f32.mrb[0].mxu0
    %v2099 = vadd.f32 %v1669, %v2098
    %v2100 = vpop.f32.mrb[0].mxu0
    %v2101 = vadd.f32 %v1665, %v2100
    %v2102 = vpop.f32.mrb[0].mxu0
    %v2103 = vadd.f32 %v1669, %v2102
    %2104 = vmatprep.mubr.bf16.mxu0 %v1646
    %2105 = vmatmul.mubr.bf16.gmra.mrb[0].mxu0 %v1645
    %v2106 = vpop.f32.mrb[0].mxu0
    %v2107 = vadd.f32 %v1665, %v2106
    %v2108 = vpop.f32.mrb[0].mxu0
    %v2109 = vadd.f32 %v1669, %v2108
    %v2110 = vpop.f32.mrb[0].mxu0
    %v2111 = vadd.f32 %v1665, %v2110
    %v2112 = vpop.f32.mrb[0].mxu0
    %v2113 = vadd.f32 %v1669, %v2112
    %2114 = vmatprep.mubr.bf16.mxu0 %v1648
    %2115 = vmatmul.mubr.bf16.gmra.mrb[0].mxu0 %v1647
    %v2116 = vpop.f32.mrb[0].mxu0
    %v2117 = vadd.f32 %v1665, %v2116
    %v2118 = vpop.f32.mrb[0].mxu0
    %v2119 = vadd.f32 %v1669, %v2118
    %v2120 = vpop.f32.mrb[0].mxu0
    %v2121 = vadd.f32 %v1665, %v2120
    %v2122 = vpop.f32.mrb[0].mxu0
    %v2123 = vadd.f32 %v1669, %v2122
    %2124 = vmatprep.mubr.bf16.mxu0 %v1650
    %2125 = vmatmul.mubr.bf16.gmra.mrb[0].mxu0 %v1649
    %v2126 = vpop.f32.mrb[0].mxu0
    %v2127 = vadd.f32 %v1665, %v2126
    %v2128 = vpop.f32.mrb[0].mxu0
    %v2129 = vadd.f32 %v1669, %v2128
    %v2130 = vpop.f32.mrb[0].mxu0
    %v2131 = vadd.f32 %v1665, %v2130
    %v2132 = vpop.f32.mrb[0].mxu0
    %v2133 = vadd.f32 %v1669, %v2132
    %2134 = vmatprep.mubr.bf16.mxu0 %v1652
    %2135 = vmatmul.mubr.bf16.gmra.mrb[0].mxu0 %v1651
    %v2136 = vpop.f32.mrb[0].mxu0
    %v2137 = vadd.f32 %v1665, %v2136
    %v2138 = vpop.f32.mrb[0].mxu0
    %v2139 = vadd.f32 %v1669, %v2138
    %v2140 = vpop.f32.mrb[0].mxu0
    %v2141 = vadd.f32 %v1665, %v2140
    %v2142 = vpop.f32.mrb[0].mxu0
    %v2143 = vadd.f32 %v1669, %v2142
    %2144 = vmatprep.mubr.bf16.mxu0 %v1654
    %2145 = vmatmul.mubr.bf16.gmra.mrb[0].mxu0 %v1653
    %v2146 = vpop.f32.mrb[0].mxu0
    %v2147 = vadd.f32 %v1665, %v2146
    %v2148 = vpop.f32.mrb[0].mxu0
    %v2149 = vadd.f32 %v1669, %v2148
    %v2150 = vpop.f32.mrb[0].mxu0
    %v2151 = vadd.f32 %v1665, %v2150
    %v2152 = vpop.f32.mrb[0].mxu0
    %v2153 = vadd.f32 %v1669, %v2152
    %2154 = vmatprep.mubr.bf16.mxu0 %v1656
    %2155 = vmatmul.mubr.bf16.gmra.mrb[0].mxu0 %v1655
    %v2156 = vpop.f32.mrb[0].mxu0
    %v2157 = vadd.f32 %v1665, %v2156
    %v2158 = vpop.f32.mrb[0].mxu0
    %v2159 = vadd.f32 %v1669, %v2158
    %v2160 = vpop.f32.mrb[0].mxu0
    %v2161 = vadd.f32 %v1665, %v2160
    %v2162 = vpop.f32.mrb[0].mxu0
    %v2163 = vadd.f32 %v1669, %v2162
    %2164 = vmatprep.mubr.bf16.mxu0 %v1658
    %2165 = vmatmul.mubr.bf16.gmra.mrb[0].mxu0 %v1657
    %v2166 = vpop.f32.mrb[0].mxu0
    %v2167 = vadd.f32 %v1665, %v2166
    %v2168 = vpop.f32.mrb[0].mxu0
    %v2169 = vadd.f32 %v1669, %v2168
    %v2170 = vpop.f32.mrb[0].mxu0
    %v2171 = vadd.f32 %v1665, %v2170
    %v2172 = vpop.f32.mrb[0].mxu0
    %v2173 = vadd.f32 %v1669, %v2172
    %2174 = vmatprep.mubr.bf16.mxu0 %v1660
    %2175 = vmatmul.mubr.bf16.gmra.mrb[0].mxu0 %v1659
    %v2176 = vpop.f32.mrb[0].mxu0
    %v2177 = vadd.f32 %v1665, %v2176
    %v2178 = vpop.f32.mrb[0].mxu0
    %v2179 = vadd.f32 %v1669, %v2178
    %v2180 = vpop.f32.mrb[0].mxu0
    %v2181 = vadd.f32 %v1665, %v2180
    %v2182 = vpop.f32.mrb[0].mxu0
    %v2183 = vadd.f32 %v1669, %v2182
    %2184 = vdwg.mxu0
    %v2185 = vmax.f32 %v1867, 0.0
    %v2186 = vmax.f32 %v1869, 0.0
    %v2187 = vmax.f32 %v1871, 0.0
    %v2188 = vmax.f32 %v1873, 0.0
    %v2189 = vmax.f32 %v1877, 0.0
    %v2190 = vmax.f32 %v1879, 0.0
    %v2191 = vmax.f32 %v1881, 0.0
    %v2192 = vmax.f32 %v1883, 0.0
    %v2193 = vmax.f32 %v1887, 0.0
    %v2194 = vmax.f32 %v1889, 0.0
    %v2195 = vmax.f32 %v1891, 0.0
    %v2196 = vmax.f32 %v1893, 0.0
    %v2197 = vmax.f32 %v1897, 0.0
    %v2198 = vmax.f32 %v1899, 0.0
    %v2199 = vmax.f32 %v1901, 0.0
    %v2200 = vmax.f32 %v1903, 0.0
    %v2201 = vmax.f32 %v1907, 0.0
    %v2202 = vmax.f32 %v1909, 0.0
    %v2203 = vmax.f32 %v1911, 0.0
    %v2204 = vmax.f32 %v1913, 0.0
    %v2205 = vmax.f32 %v1917, 0.0
    %v2206 = vmax.f32 %v1919, 0.0
    %v2207 = vmax.f32 %v1921, 0.0
    %v2208 = vmax.f32 %v1923, 0.0
    %v2209 = vmax.f32 %v1927, 0.0
    %v2210 = vmax.f32 %v1929, 0.0
    %v2211 = vmax.f32 %v1931, 0.0
    %v2212 = vmax.f32 %v1933, 0.0
    %v2213 = vmax.f32 %v1937, 0.0
    %v2214 = vmax.f32 %v1939, 0.0
    %v2215 = vmax.f32 %v1941, 0.0
    %v2216 = vmax.f32 %v1943, 0.0
    %v2217 = vmax.f32 %v1947, 0.0
    %v2218 = vmax.f32 %v1949, 0.0
    %v2219 = vmax.f32 %v1951, 0.0
    %v2220 = vmax.f32 %v1953, 0.0
    %v2221 = vmax.f32 %v1957, 0.0
    %v2222 = vmax.f32 %v1959, 0.0
    %v2223 = vmax.f32 %v1961, 0.0
    %v2224 = vmax.f32 %v1963, 0.0
    %v2225 = vmax.f32 %v1967, 0.0
    %v2226 = vmax.f32 %v1969, 0.0
    %v2227 = vmax.f32 %v1971, 0.0
    %v2228 = vmax.f32 %v1973, 0.0
    %v2229 = vmax.f32 %v1977, 0.0
    %v2230 = vmax.f32 %v1979, 0.0
    %v2231 = vmax.f32 %v1981, 0.0
    %v2232 = vmax.f32 %v1983, 0.0
    %v2233 = vmax.f32 %v1987, 0.0
    %v2234 = vmax.f32 %v1989, 0.0
    %v2235 = vmax.f32 %v1991, 0.0
    %v2236 = vmax.f32 %v1993, 0.0
    %v2237 = vmax.f32 %v1997, 0.0
    %v2238 = vmax.f32 %v1999, 0.0
    %v2239 = vmax.f32 %v2001, 0.0
    %v2240 = vmax.f32 %v2003, 0.0
    %v2241 = vmax.f32 %v2007, 0.0
    %v2242 = vmax.f32 %v2009, 0.0
    %v2243 = vmax.f32 %v2011, 0.0
    %v2244 = vmax.f32 %v2013, 0.0
    %v2245 = vmax.f32 %v2017, 0.0
    %v2246 = vmax.f32 %v2019, 0.0
    %v2247 = vmax.f32 %v2021, 0.0
    %v2248 = vmax.f32 %v2023, 0.0
    %v2249 = vmax.f32 %v2027, 0.0
    %v2250 = vmax.f32 %v2029, 0.0
    %v2251 = vmax.f32 %v2031, 0.0
    %v2252 = vmax.f32 %v2033, 0.0
    %v2253 = vmax.f32 %v2037, 0.0
    %v2254 = vmax.f32 %v2039, 0.0
    %v2255 = vmax.f32 %v2041, 0.0
    %v2256 = vmax.f32 %v2043, 0.0
    %v2257 = vmax.f32 %v2047, 0.0
    %v2258 = vmax.f32 %v2049, 0.0
    %v2259 = vmax.f32 %v2051, 0.0
    %v2260 = vmax.f32 %v2053, 0.0
    %v2261 = vmax.f32 %v2057, 0.0
    %v2262 = vmax.f32 %v2059, 0.0
    %v2263 = vmax.f32 %v2061, 0.0
    %v2264 = vmax.f32 %v2063, 0.0
    %v2265 = vmax.f32 %v2067, 0.0
    %v2266 = vmax.f32 %v2069, 0.0
    %v2267 = vmax.f32 %v2071, 0.0
    %v2268 = vmax.f32 %v2073, 0.0
    %v2269 = vmax.f32 %v2077, 0.0
    %v2270 = vmax.f32 %v2079, 0.0
    %v2271 = vmax.f32 %v2081, 0.0
    %v2272 = vmax.f32 %v2083, 0.0
    %v2273 = vmax.f32 %v2087, 0.0
    %v2274 = vmax.f32 %v2089, 0.0
    %v2275 = vmax.f32 %v2091, 0.0
    %v2276 = vmax.f32 %v2093, 0.0
    %v2277 = vmax.f32 %v2097, 0.0
    %v2278 = vmax.f32 %v2099, 0.0
    %v2279 = vmax.f32 %v2101, 0.0
    %v2280 = vmax.f32 %v2103, 0.0
    %v2281 = vmax.f32 %v2107, 0.0
    %v2282 = vmax.f32 %v2109, 0.0
    %v2283 = vmax.f32 %v2111, 0.0
    %v2284 = vmax.f32 %v2113, 0.0
    %v2285 = vmax.f32 %v2117, 0.0
    %v2286 = vmax.f32 %v2119, 0.0
    %v2287 = vmax.f32 %v2121, 0.0
    %v2288 = vmax.f32 %v2123, 0.0
    %v2289 = vmax.f32 %v2127, 0.0
    %v2290 = vmax.f32 %v2129, 0.0
    %v2291 = vmax.f32 %v2131, 0.0
    %v2292 = vmax.f32 %v2133, 0.0
    %v2293 = vmax.f32 %v2137, 0.0
    %v2294 = vmax.f32 %v2139, 0.0
    %v2295 = vmax.f32 %v2141, 0.0
    %v2296 = vmax.f32 %v2143, 0.0
    %v2297 = vmax.f32 %v2147, 0.0
    %v2298 = vmax.f32 %v2149, 0.0
    %v2299 = vmax.f32 %v2151, 0.0
    %v2300 = vmax.f32 %v2153, 0.0
    %v2301 = vmax.f32 %v2157, 0.0
    %v2302 = vmax.f32 %v2159, 0.0
    %v2303 = vmax.f32 %v2161, 0.0
    %v2304 = vmax.f32 %v2163, 0.0
    %v2305 = vmax.f32 %v2167, 0.0
    %v2306 = vmax.f32 %v2169, 0.0
    %v2307 = vmax.f32 %v2171, 0.0
    %v2308 = vmax.f32 %v2173, 0.0
    %v2309 = vmax.f32 %v2177, 0.0
    %v2310 = vmax.f32 %v2179, 0.0
    %v2311 = vmax.f32 %v2181, 0.0
    %v2312 = vmax.f32 %v2183, 0.0
    %v2313 = vpack.c.bf16 %v2187, %v2185
    %v2314 = vpack.c.bf16 %v2188, %v2186
    %v2315 = vpack.c.bf16 %v2191, %v2189
    %v2316 = vpack.c.bf16 %v2192, %v2190
    %v2317 = vpack.c.bf16 %v2195, %v2193
    %v2318 = vpack.c.bf16 %v2196, %v2194
    %v2319 = vpack.c.bf16 %v2199, %v2197
    %v2320 = vpack.c.bf16 %v2200, %v2198
    %v2321 = vpack.c.bf16 %v2203, %v2201
    %v2322 = vpack.c.bf16 %v2204, %v2202
    %v2323 = vpack.c.bf16 %v2207, %v2205
    %v2324 = vpack.c.bf16 %v2208, %v2206
    %v2325 = vpack.c.bf16 %v2211, %v2209
    %v2326 = vpack.c.bf16 %v2212, %v2210
    %v2327 = vpack.c.bf16 %v2215, %v2213
    %v2328 = vpack.c.bf16 %v2216, %v2214
    %v2329 = vpack.c.bf16 %v2219, %v2217
    %v2330 = vpack.c.bf16 %v2220, %v2218
    %v2331 = vpack.c.bf16 %v2223, %v2221
    %v2332 = vpack.c.bf16 %v2224, %v2222
    %v2333 = vpack.c.bf16 %v2227, %v2225
    %v2334 = vpack.c.bf16 %v2228, %v2226
    %v2335 = vpack.c.bf16 %v2231, %v2229
    %v2336 = vpack.c.bf16 %v2232, %v2230
    %v2337 = vpack.c.bf16 %v2235, %v2233
    %v2338 = vpack.c.bf16 %v2236, %v2234
    %v2339 = vpack.c.bf16 %v2239, %v2237
    %v2340 = vpack.c.bf16 %v2240, %v2238
    %v2341 = vpack.c.bf16 %v2243, %v2241
    %v2342 = vpack.c.bf16 %v2244, %v2242
    %v2343 = vpack.c.bf16 %v2247, %v2245
    %v2344 = vpack.c.bf16 %v2248, %v2246
    %v2345 = vpack.c.bf16 %v2251, %v2249
    %v2346 = vpack.c.bf16 %v2252, %v2250
    %v2347 = vpack.c.bf16 %v2255, %v2253
    %v2348 = vpack.c.bf16 %v2256, %v2254
    %v2349 = vpack.c.bf16 %v2259, %v2257
    %v2350 = vpack.c.bf16 %v2260, %v2258
    %v2351 = vpack.c.bf16 %v2263, %v2261
    %v2352 = vpack.c.bf16 %v2264, %v2262
    %v2353 = vpack.c.bf16 %v2267, %v2265
    %v2354 = vpack.c.bf16 %v2268, %v2266
    %v2355 = vpack.c.bf16 %v2271, %v2269
    %v2356 = vpack.c.bf16 %v2272, %v2270
    %v2357 = vpack.c.bf16 %v2275, %v2273
    %v2358 = vpack.c.bf16 %v2276, %v2274
    %v2359 = vpack.c.bf16 %v2279, %v2277
    %v2360 = vpack.c.bf16 %v2280, %v2278
    %v2361 = vpack.c.bf16 %v2283, %v2281
    %v2362 = vpack.c.bf16 %v2284, %v2282
    %v2363 = vpack.c.bf16 %v2287, %v2285
    %v2364 = vpack.c.bf16 %v2288, %v2286
    %v2365 = vpack.c.bf16 %v2291, %v2289
    %v2366 = vpack.c.bf16 %v2292, %v2290
    %v2367 = vpack.c.bf16 %v2295, %v2293
    %v2368 = vpack.c.bf16 %v2296, %v2294
    %v2369 = vpack.c.bf16 %v2299, %v2297
    %v2370 = vpack.c.bf16 %v2300, %v2298
    %v2371 = vpack.c.bf16 %v2303, %v2301
    %v2372 = vpack.c.bf16 %v2304, %v2302
    %v2373 = vpack.c.bf16 %v2307, %v2305
    %v2374 = vpack.c.bf16 %v2308, %v2306
    %v2375 = vpack.c.bf16 %v2311, %v2309
    %v2376 = vpack.c.bf16 %v2312, %v2310
    %v2378 = vlaneseq
    %v2379 = vshrl.u32 %v2378, 7
    %v2380 = vsub.s32 0, %v2379
    %v2381 = vrot.slane %v387, %v2380
    %v2382 = vlaneseq
    %v2383 = vshrl.u32 %v2382, 7
    %v2384 = vsub.s32 1, %v2383
    %v2385 = vrot.slane %v387, %v2384
    %v2420 = vunpack.c.l.b16 %v355
    %v2421 = vunpack.c.h.b16 %v355
    %v2422 = vunpack.c.l.b16 %v356
    %v2423 = vunpack.c.h.b16 %v356
    %v2424 = vunpack.c.l.b16 %v357
    %v2425 = vunpack.c.h.b16 %v357
    %v2426 = vunpack.c.l.b16 %v358
    %v2427 = vunpack.c.h.b16 %v358
    %v2428 = vunpack.c.l.b16 %v359
    %v2429 = vunpack.c.h.b16 %v359
    %v2430 = vunpack.c.l.b16 %v360
    %v2431 = vunpack.c.h.b16 %v360
    %v2432 = vunpack.c.l.b16 %v361
    %v2433 = vunpack.c.h.b16 %v361
    %v2434 = vunpack.c.l.b16 %v362
    %v2435 = vunpack.c.h.b16 %v362
    %v2436 = vunpack.c.l.b16 %v363
    %v2437 = vunpack.c.h.b16 %v363
    %v2438 = vunpack.c.l.b16 %v364
    %v2439 = vunpack.c.h.b16 %v364
    %v2440 = vunpack.c.l.b16 %v365
    %v2441 = vunpack.c.h.b16 %v365
    %v2442 = vunpack.c.l.b16 %v366
    %v2443 = vunpack.c.h.b16 %v366
    %v2444 = vunpack.c.l.b16 %v367
    %v2445 = vunpack.c.h.b16 %v367
    %v2446 = vunpack.c.l.b16 %v368
    %v2447 = vunpack.c.h.b16 %v368
    %v2448 = vunpack.c.l.b16 %v369
    %v2449 = vunpack.c.h.b16 %v369
    %v2450 = vunpack.c.l.b16 %v370
    %v2451 = vunpack.c.h.b16 %v370
    %v2452 = vunpack.c.l.b16 %v371
    %v2453 = vunpack.c.h.b16 %v371
    %v2454 = vunpack.c.l.b16 %v372
    %v2455 = vunpack.c.h.b16 %v372
    %v2456 = vunpack.c.l.b16 %v373
    %v2457 = vunpack.c.h.b16 %v373
    %v2458 = vunpack.c.l.b16 %v374
    %v2459 = vunpack.c.h.b16 %v374
    %v2460 = vunpack.c.l.b16 %v375
    %v2461 = vunpack.c.h.b16 %v375
    %v2462 = vunpack.c.l.b16 %v376
    %v2463 = vunpack.c.h.b16 %v376
    %v2464 = vunpack.c.l.b16 %v377
    %v2465 = vunpack.c.h.b16 %v377
    %v2466 = vunpack.c.l.b16 %v378
    %v2467 = vunpack.c.h.b16 %v378
    %v2468 = vunpack.c.l.b16 %v379
    %v2469 = vunpack.c.h.b16 %v379
    %v2470 = vunpack.c.l.b16 %v380
    %v2471 = vunpack.c.h.b16 %v380
    %v2472 = vunpack.c.l.b16 %v381
    %v2473 = vunpack.c.h.b16 %v381
    %v2474 = vunpack.c.l.b16 %v382
    %v2475 = vunpack.c.h.b16 %v382
    %v2476 = vunpack.c.l.b16 %v383
    %v2477 = vunpack.c.h.b16 %v383
    %v2478 = vunpack.c.l.b16 %v384
    %v2479 = vunpack.c.h.b16 %v384
    %v2480 = vunpack.c.l.b16 %v385
    %v2481 = vunpack.c.h.b16 %v385
    %v2482 = vunpack.c.l.b16 %v386
    %v2483 = vunpack.c.h.b16 %v386
    %v2484 = vpack.c.b16 %v2422, %v2420
    %v2485 = vpack.c.b16 %v2423, %v2421
    %v2486 = vpack.c.b16 %v2426, %v2424
    %v2487 = vpack.c.b16 %v2427, %v2425
    %v2488 = vpack.c.b16 %v2430, %v2428
    %v2489 = vpack.c.b16 %v2431, %v2429
    %v2490 = vpack.c.b16 %v2434, %v2432
    %v2491 = vpack.c.b16 %v2435, %v2433
    %v2492 = vpack.c.b16 %v2438, %v2436
    %v2493 = vpack.c.b16 %v2439, %v2437
    %v2494 = vpack.c.b16 %v2442, %v2440
    %v2495 = vpack.c.b16 %v2443, %v2441
    %v2496 = vpack.c.b16 %v2446, %v2444
    %v2497 = vpack.c.b16 %v2447, %v2445
    %v2498 = vpack.c.b16 %v2450, %v2448
    %v2499 = vpack.c.b16 %v2451, %v2449
    %v2500 = vpack.c.b16 %v2454, %v2452
    %v2501 = vpack.c.b16 %v2455, %v2453
    %v2502 = vpack.c.b16 %v2458, %v2456
    %v2503 = vpack.c.b16 %v2459, %v2457
    %v2504 = vpack.c.b16 %v2462, %v2460
    %v2505 = vpack.c.b16 %v2463, %v2461
    %v2506 = vpack.c.b16 %v2466, %v2464
    %v2507 = vpack.c.b16 %v2467, %v2465
    %v2508 = vpack.c.b16 %v2470, %v2468
    %v2509 = vpack.c.b16 %v2471, %v2469
    %v2510 = vpack.c.b16 %v2474, %v2472
    %v2511 = vpack.c.b16 %v2475, %v2473
    %v2512 = vpack.c.b16 %v2478, %v2476
    %v2513 = vpack.c.b16 %v2479, %v2477
    %v2514 = vpack.c.b16 %v2482, %v2480
    %v2515 = vpack.c.b16 %v2483, %v2481
    %2548 = vmatprep.subr.bf16.mxu0 %v2485
    %2549 = vmatpush1.bf16.msra.mxu0 %v2484
    %2550 = vmatprep.subr.bf16.mxu0 %v2487
    %2551 = vmatpush1.bf16.msra.mxu0 %v2486
    %2552 = vmatprep.subr.bf16.mxu0 %v2489
    %2553 = vmatpush1.bf16.msra.mxu0 %v2488
    %2554 = vmatprep.subr.bf16.mxu0 %v2491
    %2555 = vmatpush1.bf16.msra.mxu0 %v2490
    %2556 = vmatprep.subr.bf16.mxu0 %v2493
    %2557 = vmatpush1.bf16.msra.mxu0 %v2492
    %2558 = vmatprep.subr.bf16.mxu0 %v2495
    %2559 = vmatpush1.bf16.msra.mxu0 %v2494
    %2560 = vmatprep.subr.bf16.mxu0 %v2497
    %2561 = vmatpush1.bf16.msra.mxu0 %v2496
    %2562 = vmatprep.subr.bf16.mxu0 %v2499
    %2563 = vmatpush1.bf16.msra.mxu0 %v2498
    %2564 = vmatprep.subr.bf16.mxu0 %v2501
    %2565 = vmatpush1.bf16.msra.mxu0 %v2500
    %2566 = vmatprep.subr.bf16.mxu0 %v2503
    %2567 = vmatpush1.bf16.msra.mxu0 %v2502
    %2568 = vmatprep.subr.bf16.mxu0 %v2505
    %2569 = vmatpush1.bf16.msra.mxu0 %v2504
    %2570 = vmatprep.subr.bf16.mxu0 %v2507
    %2571 = vmatpush1.bf16.msra.mxu0 %v2506
    %2572 = vmatprep.subr.bf16.mxu0 %v2509
    %2573 = vmatpush1.bf16.msra.mxu0 %v2508
    %2574 = vmatprep.subr.bf16.mxu0 %v2511
    %2575 = vmatpush1.bf16.msra.mxu0 %v2510
    %2576 = vmatprep.subr.bf16.mxu0 %v2513
    %2577 = vmatpush1.bf16.msra.mxu0 %v2512
    %2578 = vmatprep.subr.bf16.mxu0 %v2515
    %2579 = vmatpush1.bf16.msra.mxu0 %v2514
    %2580 = vmatprep.mubr.bf16.mxu0 %v2314
    %2581 = vmatmul.mubr.bf16.gmra.mrb[0].mxu0 %v2313
    %v2582 = vpop.f32.mrb[0].mxu0
    %v2583 = vadd.f32 %v2381, %v2582
    %v2584 = vpop.f32.mrb[0].mxu0
    %v2585 = vadd.f32 %v2385, %v2584
    %v2586 = vpop.f32.mrb[0].mxu0
    %v2587 = vadd.f32 %v2381, %v2586
    %v2588 = vpop.f32.mrb[0].mxu0
    %v2589 = vadd.f32 %v2385, %v2588
    %2590 = vmatprep.mubr.bf16.mxu0 %v2316
    %2591 = vmatmul.mubr.bf16.gmra.mrb[0].mxu0 %v2315
    %v2592 = vpop.f32.mrb[0].mxu0
    %v2593 = vadd.f32 %v2381, %v2592
    %v2594 = vpop.f32.mrb[0].mxu0
    %v2595 = vadd.f32 %v2385, %v2594
    %v2596 = vpop.f32.mrb[0].mxu0
    %v2597 = vadd.f32 %v2381, %v2596
    %v2598 = vpop.f32.mrb[0].mxu0
    %v2599 = vadd.f32 %v2385, %v2598
    %2600 = vmatprep.mubr.bf16.mxu0 %v2318
    %2601 = vmatmul.mubr.bf16.gmra.mrb[0].mxu0 %v2317
    %v2602 = vpop.f32.mrb[0].mxu0
    %v2603 = vadd.f32 %v2381, %v2602
    %v2604 = vpop.f32.mrb[0].mxu0
    %v2605 = vadd.f32 %v2385, %v2604
    %v2606 = vpop.f32.mrb[0].mxu0
    %v2607 = vadd.f32 %v2381, %v2606
    %v2608 = vpop.f32.mrb[0].mxu0
    %v2609 = vadd.f32 %v2385, %v2608
    %2610 = vmatprep.mubr.bf16.mxu0 %v2320
    %2611 = vmatmul.mubr.bf16.gmra.mrb[0].mxu0 %v2319
    %v2612 = vpop.f32.mrb[0].mxu0
    %v2613 = vadd.f32 %v2381, %v2612
    %v2614 = vpop.f32.mrb[0].mxu0
    %v2615 = vadd.f32 %v2385, %v2614
    %v2616 = vpop.f32.mrb[0].mxu0
    %v2617 = vadd.f32 %v2381, %v2616
    %v2618 = vpop.f32.mrb[0].mxu0
    %v2619 = vadd.f32 %v2385, %v2618
    %2620 = vmatprep.mubr.bf16.mxu0 %v2322
    %2621 = vmatmul.mubr.bf16.gmra.mrb[0].mxu0 %v2321
    %v2622 = vpop.f32.mrb[0].mxu0
    %v2623 = vadd.f32 %v2381, %v2622
    %v2624 = vpop.f32.mrb[0].mxu0
    %v2625 = vadd.f32 %v2385, %v2624
    %v2626 = vpop.f32.mrb[0].mxu0
    %v2627 = vadd.f32 %v2381, %v2626
    %v2628 = vpop.f32.mrb[0].mxu0
    %v2629 = vadd.f32 %v2385, %v2628
    %2630 = vmatprep.mubr.bf16.mxu0 %v2324
    %2631 = vmatmul.mubr.bf16.gmra.mrb[0].mxu0 %v2323
    %v2632 = vpop.f32.mrb[0].mxu0
    %v2633 = vadd.f32 %v2381, %v2632
    %v2634 = vpop.f32.mrb[0].mxu0
    %v2635 = vadd.f32 %v2385, %v2634
    %v2636 = vpop.f32.mrb[0].mxu0
    %v2637 = vadd.f32 %v2381, %v2636
    %v2638 = vpop.f32.mrb[0].mxu0
    %v2639 = vadd.f32 %v2385, %v2638
    %2640 = vmatprep.mubr.bf16.mxu0 %v2326
    %2641 = vmatmul.mubr.bf16.gmra.mrb[0].mxu0 %v2325
    %v2642 = vpop.f32.mrb[0].mxu0
    %v2643 = vadd.f32 %v2381, %v2642
    %v2644 = vpop.f32.mrb[0].mxu0
    %v2645 = vadd.f32 %v2385, %v2644
    %v2646 = vpop.f32.mrb[0].mxu0
    %v2647 = vadd.f32 %v2381, %v2646
    %v2648 = vpop.f32.mrb[0].mxu0
    %v2649 = vadd.f32 %v2385, %v2648
    %2650 = vmatprep.mubr.bf16.mxu0 %v2328
    %2651 = vmatmul.mubr.bf16.gmra.mrb[0].mxu0 %v2327
    %v2652 = vpop.f32.mrb[0].mxu0
    %v2653 = vadd.f32 %v2381, %v2652
    %v2654 = vpop.f32.mrb[0].mxu0
    %v2655 = vadd.f32 %v2385, %v2654
    %v2656 = vpop.f32.mrb[0].mxu0
    %v2657 = vadd.f32 %v2381, %v2656
    %v2658 = vpop.f32.mrb[0].mxu0
    %v2659 = vadd.f32 %v2385, %v2658
    %2660 = vmatprep.mubr.bf16.mxu0 %v2330
    %2661 = vmatmul.mubr.bf16.gmra.mrb[0].mxu0 %v2329
    %v2662 = vpop.f32.mrb[0].mxu0
    %v2663 = vadd.f32 %v2381, %v2662
    %v2664 = vpop.f32.mrb[0].mxu0
    %v2665 = vadd.f32 %v2385, %v2664
    %v2666 = vpop.f32.mrb[0].mxu0
    %v2667 = vadd.f32 %v2381, %v2666
    %v2668 = vpop.f32.mrb[0].mxu0
    %v2669 = vadd.f32 %v2385, %v2668
    %2670 = vmatprep.mubr.bf16.mxu0 %v2332
    %2671 = vmatmul.mubr.bf16.gmra.mrb[0].mxu0 %v2331
    %v2672 = vpop.f32.mrb[0].mxu0
    %v2673 = vadd.f32 %v2381, %v2672
    %v2674 = vpop.f32.mrb[0].mxu0
    %v2675 = vadd.f32 %v2385, %v2674
    %v2676 = vpop.f32.mrb[0].mxu0
    %v2677 = vadd.f32 %v2381, %v2676
    %v2678 = vpop.f32.mrb[0].mxu0
    %v2679 = vadd.f32 %v2385, %v2678
    %2680 = vmatprep.mubr.bf16.mxu0 %v2334
    %2681 = vmatmul.mubr.bf16.gmra.mrb[0].mxu0 %v2333
    %v2682 = vpop.f32.mrb[0].mxu0
    %v2683 = vadd.f32 %v2381, %v2682
    %v2684 = vpop.f32.mrb[0].mxu0
    %v2685 = vadd.f32 %v2385, %v2684
    %v2686 = vpop.f32.mrb[0].mxu0
    %v2687 = vadd.f32 %v2381, %v2686
    %v2688 = vpop.f32.mrb[0].mxu0
    %v2689 = vadd.f32 %v2385, %v2688
    %2690 = vmatprep.mubr.bf16.mxu0 %v2336
    %2691 = vmatmul.mubr.bf16.gmra.mrb[0].mxu0 %v2335
    %v2692 = vpop.f32.mrb[0].mxu0
    %v2693 = vadd.f32 %v2381, %v2692
    %v2694 = vpop.f32.mrb[0].mxu0
    %v2695 = vadd.f32 %v2385, %v2694
    %v2696 = vpop.f32.mrb[0].mxu0
    %v2697 = vadd.f32 %v2381, %v2696
    %v2698 = vpop.f32.mrb[0].mxu0
    %v2699 = vadd.f32 %v2385, %v2698
    %2700 = vmatprep.mubr.bf16.mxu0 %v2338
    %2701 = vmatmul.mubr.bf16.gmra.mrb[0].mxu0 %v2337
    %v2702 = vpop.f32.mrb[0].mxu0
    %v2703 = vadd.f32 %v2381, %v2702
    %v2704 = vpop.f32.mrb[0].mxu0
    %v2705 = vadd.f32 %v2385, %v2704
    %v2706 = vpop.f32.mrb[0].mxu0
    %v2707 = vadd.f32 %v2381, %v2706
    %v2708 = vpop.f32.mrb[0].mxu0
    %v2709 = vadd.f32 %v2385, %v2708
    %2710 = vmatprep.mubr.bf16.mxu0 %v2340
    %2711 = vmatmul.mubr.bf16.gmra.mrb[0].mxu0 %v2339
    %v2712 = vpop.f32.mrb[0].mxu0
    %v2713 = vadd.f32 %v2381, %v2712
    %v2714 = vpop.f32.mrb[0].mxu0
    %v2715 = vadd.f32 %v2385, %v2714
    %v2716 = vpop.f32.mrb[0].mxu0
    %v2717 = vadd.f32 %v2381, %v2716
    %v2718 = vpop.f32.mrb[0].mxu0
    %v2719 = vadd.f32 %v2385, %v2718
    %2720 = vmatprep.mubr.bf16.mxu0 %v2342
    %2721 = vmatmul.mubr.bf16.gmra.mrb[0].mxu0 %v2341
    %v2722 = vpop.f32.mrb[0].mxu0
    %v2723 = vadd.f32 %v2381, %v2722
    %v2724 = vpop.f32.mrb[0].mxu0
    %v2725 = vadd.f32 %v2385, %v2724
    %v2726 = vpop.f32.mrb[0].mxu0
    %v2727 = vadd.f32 %v2381, %v2726
    %v2728 = vpop.f32.mrb[0].mxu0
    %v2729 = vadd.f32 %v2385, %v2728
    %2730 = vmatprep.mubr.bf16.mxu0 %v2344
    %2731 = vmatmul.mubr.bf16.gmra.mrb[0].mxu0 %v2343
    %v2732 = vpop.f32.mrb[0].mxu0
    %v2733 = vadd.f32 %v2381, %v2732
    %v2734 = vpop.f32.mrb[0].mxu0
    %v2735 = vadd.f32 %v2385, %v2734
    %v2736 = vpop.f32.mrb[0].mxu0
    %v2737 = vadd.f32 %v2381, %v2736
    %v2738 = vpop.f32.mrb[0].mxu0
    %v2739 = vadd.f32 %v2385, %v2738
    %2740 = vmatprep.mubr.bf16.mxu0 %v2346
    %2741 = vmatmul.mubr.bf16.gmra.mrb[0].mxu0 %v2345
    %v2742 = vpop.f32.mrb[0].mxu0
    %v2743 = vadd.f32 %v2381, %v2742
    %v2744 = vpop.f32.mrb[0].mxu0
    %v2745 = vadd.f32 %v2385, %v2744
    %v2746 = vpop.f32.mrb[0].mxu0
    %v2747 = vadd.f32 %v2381, %v2746
    %v2748 = vpop.f32.mrb[0].mxu0
    %v2749 = vadd.f32 %v2385, %v2748
    %2750 = vmatprep.mubr.bf16.mxu0 %v2348
    %2751 = vmatmul.mubr.bf16.gmra.mrb[0].mxu0 %v2347
    %v2752 = vpop.f32.mrb[0].mxu0
    %v2753 = vadd.f32 %v2381, %v2752
    %v2754 = vpop.f32.mrb[0].mxu0
    %v2755 = vadd.f32 %v2385, %v2754
    %v2756 = vpop.f32.mrb[0].mxu0
    %v2757 = vadd.f32 %v2381, %v2756
    %v2758 = vpop.f32.mrb[0].mxu0
    %v2759 = vadd.f32 %v2385, %v2758
    %2760 = vmatprep.mubr.bf16.mxu0 %v2350
    %2761 = vmatmul.mubr.bf16.gmra.mrb[0].mxu0 %v2349
    %v2762 = vpop.f32.mrb[0].mxu0
    %v2763 = vadd.f32 %v2381, %v2762
    %v2764 = vpop.f32.mrb[0].mxu0
    %v2765 = vadd.f32 %v2385, %v2764
    %v2766 = vpop.f32.mrb[0].mxu0
    %v2767 = vadd.f32 %v2381, %v2766
    %v2768 = vpop.f32.mrb[0].mxu0
    %v2769 = vadd.f32 %v2385, %v2768
    %2770 = vmatprep.mubr.bf16.mxu0 %v2352
    %2771 = vmatmul.mubr.bf16.gmra.mrb[0].mxu0 %v2351
    %v2772 = vpop.f32.mrb[0].mxu0
    %v2773 = vadd.f32 %v2381, %v2772
    %v2774 = vpop.f32.mrb[0].mxu0
    %v2775 = vadd.f32 %v2385, %v2774
    %v2776 = vpop.f32.mrb[0].mxu0
    %v2777 = vadd.f32 %v2381, %v2776
    %v2778 = vpop.f32.mrb[0].mxu0
    %v2779 = vadd.f32 %v2385, %v2778
    %2780 = vmatprep.mubr.bf16.mxu0 %v2354
    %2781 = vmatmul.mubr.bf16.gmra.mrb[0].mxu0 %v2353
    %v2782 = vpop.f32.mrb[0].mxu0
    %v2783 = vadd.f32 %v2381, %v2782
    %v2784 = vpop.f32.mrb[0].mxu0
    %v2785 = vadd.f32 %v2385, %v2784
    %v2786 = vpop.f32.mrb[0].mxu0
    %v2787 = vadd.f32 %v2381, %v2786
    %v2788 = vpop.f32.mrb[0].mxu0
    %v2789 = vadd.f32 %v2385, %v2788
    %2790 = vmatprep.mubr.bf16.mxu0 %v2356
    %2791 = vmatmul.mubr.bf16.gmra.mrb[0].mxu0 %v2355
    %v2792 = vpop.f32.mrb[0].mxu0
    %v2793 = vadd.f32 %v2381, %v2792
    %v2794 = vpop.f32.mrb[0].mxu0
    %v2795 = vadd.f32 %v2385, %v2794
    %v2796 = vpop.f32.mrb[0].mxu0
    %v2797 = vadd.f32 %v2381, %v2796
    %v2798 = vpop.f32.mrb[0].mxu0
    %v2799 = vadd.f32 %v2385, %v2798
    %2800 = vmatprep.mubr.bf16.mxu0 %v2358
    %2801 = vmatmul.mubr.bf16.gmra.mrb[0].mxu0 %v2357
    %v2802 = vpop.f32.mrb[0].mxu0
    %v2803 = vadd.f32 %v2381, %v2802
    %v2804 = vpop.f32.mrb[0].mxu0
    %v2805 = vadd.f32 %v2385, %v2804
    %v2806 = vpop.f32.mrb[0].mxu0
    %v2807 = vadd.f32 %v2381, %v2806
    %v2808 = vpop.f32.mrb[0].mxu0
    %v2809 = vadd.f32 %v2385, %v2808
    %2810 = vmatprep.mubr.bf16.mxu0 %v2360
    %2811 = vmatmul.mubr.bf16.gmra.mrb[0].mxu0 %v2359
    %v2812 = vpop.f32.mrb[0].mxu0
    %v2813 = vadd.f32 %v2381, %v2812
    %v2814 = vpop.f32.mrb[0].mxu0
    %v2815 = vadd.f32 %v2385, %v2814
    %v2816 = vpop.f32.mrb[0].mxu0
    %v2817 = vadd.f32 %v2381, %v2816
    %v2818 = vpop.f32.mrb[0].mxu0
    %v2819 = vadd.f32 %v2385, %v2818
    %2820 = vmatprep.mubr.bf16.mxu0 %v2362
    %2821 = vmatmul.mubr.bf16.gmra.mrb[0].mxu0 %v2361
    %v2822 = vpop.f32.mrb[0].mxu0
    %v2823 = vadd.f32 %v2381, %v2822
    %v2824 = vpop.f32.mrb[0].mxu0
    %v2825 = vadd.f32 %v2385, %v2824
    %v2826 = vpop.f32.mrb[0].mxu0
    %v2827 = vadd.f32 %v2381, %v2826
    %v2828 = vpop.f32.mrb[0].mxu0
    %v2829 = vadd.f32 %v2385, %v2828
    %2830 = vmatprep.mubr.bf16.mxu0 %v2364
    %2831 = vmatmul.mubr.bf16.gmra.mrb[0].mxu0 %v2363
    %v2832 = vpop.f32.mrb[0].mxu0
    %v2833 = vadd.f32 %v2381, %v2832
    %v2834 = vpop.f32.mrb[0].mxu0
    %v2835 = vadd.f32 %v2385, %v2834
    %v2836 = vpop.f32.mrb[0].mxu0
    %v2837 = vadd.f32 %v2381, %v2836
    %v2838 = vpop.f32.mrb[0].mxu0
    %v2839 = vadd.f32 %v2385, %v2838
    %2840 = vmatprep.mubr.bf16.mxu0 %v2366
    %2841 = vmatmul.mubr.bf16.gmra.mrb[0].mxu0 %v2365
    %v2842 = vpop.f32.mrb[0].mxu0
    %v2843 = vadd.f32 %v2381, %v2842
    %v2844 = vpop.f32.mrb[0].mxu0
    %v2845 = vadd.f32 %v2385, %v2844
    %v2846 = vpop.f32.mrb[0].mxu0
    %v2847 = vadd.f32 %v2381, %v2846
    %v2848 = vpop.f32.mrb[0].mxu0
    %v2849 = vadd.f32 %v2385, %v2848
    %2850 = vmatprep.mubr.bf16.mxu0 %v2368
    %2851 = vmatmul.mubr.bf16.gmra.mrb[0].mxu0 %v2367
    %v2852 = vpop.f32.mrb[0].mxu0
    %v2853 = vadd.f32 %v2381, %v2852
    %v2854 = vpop.f32.mrb[0].mxu0
    %v2855 = vadd.f32 %v2385, %v2854
    %v2856 = vpop.f32.mrb[0].mxu0
    %v2857 = vadd.f32 %v2381, %v2856
    %v2858 = vpop.f32.mrb[0].mxu0
    %v2859 = vadd.f32 %v2385, %v2858
    %2860 = vmatprep.mubr.bf16.mxu0 %v2370
    %2861 = vmatmul.mubr.bf16.gmra.mrb[0].mxu0 %v2369
    %v2862 = vpop.f32.mrb[0].mxu0
    %v2863 = vadd.f32 %v2381, %v2862
    %v2864 = vpop.f32.mrb[0].mxu0
    %v2865 = vadd.f32 %v2385, %v2864
    %v2866 = vpop.f32.mrb[0].mxu0
    %v2867 = vadd.f32 %v2381, %v2866
    %v2868 = vpop.f32.mrb[0].mxu0
    %v2869 = vadd.f32 %v2385, %v2868
    %2870 = vmatprep.mubr.bf16.mxu0 %v2372
    %2871 = vmatmul.mubr.bf16.gmra.mrb[0].mxu0 %v2371
    %v2872 = vpop.f32.mrb[0].mxu0
    %v2873 = vadd.f32 %v2381, %v2872
    %v2874 = vpop.f32.mrb[0].mxu0
    %v2875 = vadd.f32 %v2385, %v2874
    %v2876 = vpop.f32.mrb[0].mxu0
    %v2877 = vadd.f32 %v2381, %v2876
    %v2878 = vpop.f32.mrb[0].mxu0
    %v2879 = vadd.f32 %v2385, %v2878
    %2880 = vmatprep.mubr.bf16.mxu0 %v2374
    %2881 = vmatmul.mubr.bf16.gmra.mrb[0].mxu0 %v2373
    %v2882 = vpop.f32.mrb[0].mxu0
    %v2883 = vadd.f32 %v2381, %v2882
    %v2884 = vpop.f32.mrb[0].mxu0
    %v2885 = vadd.f32 %v2385, %v2884
    %v2886 = vpop.f32.mrb[0].mxu0
    %v2887 = vadd.f32 %v2381, %v2886
    %v2888 = vpop.f32.mrb[0].mxu0
    %v2889 = vadd.f32 %v2385, %v2888
    %2890 = vmatprep.mubr.bf16.mxu0 %v2376
    %2891 = vmatmul.mubr.bf16.gmra.mrb[0].mxu0 %v2375
    %v2892 = vpop.f32.mrb[0].mxu0
    %v2893 = vadd.f32 %v2381, %v2892
    %v2894 = vpop.f32.mrb[0].mxu0
    %v2895 = vadd.f32 %v2385, %v2894
    %v2896 = vpop.f32.mrb[0].mxu0
    %v2897 = vadd.f32 %v2381, %v2896
    %v2898 = vpop.f32.mrb[0].mxu0
    %v2899 = vadd.f32 %v2385, %v2898
    %2900 = vdwg.mxu0
    %v2901 = vmax.f32 %v2583, 0.0
    %v2902 = vmax.f32 %v2585, 0.0
    %v2903 = vmax.f32 %v2587, 0.0
    %v2904 = vmax.f32 %v2589, 0.0
    %v2905 = vmax.f32 %v2593, 0.0
    %v2906 = vmax.f32 %v2595, 0.0
    %v2907 = vmax.f32 %v2597, 0.0
    %v2908 = vmax.f32 %v2599, 0.0
    %v2909 = vmax.f32 %v2603, 0.0
    %v2910 = vmax.f32 %v2605, 0.0
    %v2911 = vmax.f32 %v2607, 0.0
    %v2912 = vmax.f32 %v2609, 0.0
    %v2913 = vmax.f32 %v2613, 0.0
    %v2914 = vmax.f32 %v2615, 0.0
    %v2915 = vmax.f32 %v2617, 0.0
    %v2916 = vmax.f32 %v2619, 0.0
    %v2917 = vmax.f32 %v2623, 0.0
    %v2918 = vmax.f32 %v2625, 0.0
    %v2919 = vmax.f32 %v2627, 0.0
    %v2920 = vmax.f32 %v2629, 0.0
    %v2921 = vmax.f32 %v2633, 0.0
    %v2922 = vmax.f32 %v2635, 0.0
    %v2923 = vmax.f32 %v2637, 0.0
    %v2924 = vmax.f32 %v2639, 0.0
    %v2925 = vmax.f32 %v2643, 0.0
    %v2926 = vmax.f32 %v2645, 0.0
    %v2927 = vmax.f32 %v2647, 0.0
    %v2928 = vmax.f32 %v2649, 0.0
    %v2929 = vmax.f32 %v2653, 0.0
    %v2930 = vmax.f32 %v2655, 0.0
    %v2931 = vmax.f32 %v2657, 0.0
    %v2932 = vmax.f32 %v2659, 0.0
    %v2933 = vmax.f32 %v2663, 0.0
    %v2934 = vmax.f32 %v2665, 0.0
    %v2935 = vmax.f32 %v2667, 0.0
    %v2936 = vmax.f32 %v2669, 0.0
    %v2937 = vmax.f32 %v2673, 0.0
    %v2938 = vmax.f32 %v2675, 0.0
    %v2939 = vmax.f32 %v2677, 0.0
    %v2940 = vmax.f32 %v2679, 0.0
    %v2941 = vmax.f32 %v2683, 0.0
    %v2942 = vmax.f32 %v2685, 0.0
    %v2943 = vmax.f32 %v2687, 0.0
    %v2944 = vmax.f32 %v2689, 0.0
    %v2945 = vmax.f32 %v2693, 0.0
    %v2946 = vmax.f32 %v2695, 0.0
    %v2947 = vmax.f32 %v2697, 0.0
    %v2948 = vmax.f32 %v2699, 0.0
    %v2949 = vmax.f32 %v2703, 0.0
    %v2950 = vmax.f32 %v2705, 0.0
    %v2951 = vmax.f32 %v2707, 0.0
    %v2952 = vmax.f32 %v2709, 0.0
    %v2953 = vmax.f32 %v2713, 0.0
    %v2954 = vmax.f32 %v2715, 0.0
    %v2955 = vmax.f32 %v2717, 0.0
    %v2956 = vmax.f32 %v2719, 0.0
    %v2957 = vmax.f32 %v2723, 0.0
    %v2958 = vmax.f32 %v2725, 0.0
    %v2959 = vmax.f32 %v2727, 0.0
    %v2960 = vmax.f32 %v2729, 0.0
    %v2961 = vmax.f32 %v2733, 0.0
    %v2962 = vmax.f32 %v2735, 0.0
    %v2963 = vmax.f32 %v2737, 0.0
    %v2964 = vmax.f32 %v2739, 0.0
    %v2965 = vmax.f32 %v2743, 0.0
    %v2966 = vmax.f32 %v2745, 0.0
    %v2967 = vmax.f32 %v2747, 0.0
    %v2968 = vmax.f32 %v2749, 0.0
    %v2969 = vmax.f32 %v2753, 0.0
    %v2970 = vmax.f32 %v2755, 0.0
    %v2971 = vmax.f32 %v2757, 0.0
    %v2972 = vmax.f32 %v2759, 0.0
    %v2973 = vmax.f32 %v2763, 0.0
    %v2974 = vmax.f32 %v2765, 0.0
    %v2975 = vmax.f32 %v2767, 0.0
    %v2976 = vmax.f32 %v2769, 0.0
    %v2977 = vmax.f32 %v2773, 0.0
    %v2978 = vmax.f32 %v2775, 0.0
    %v2979 = vmax.f32 %v2777, 0.0
    %v2980 = vmax.f32 %v2779, 0.0
    %v2981 = vmax.f32 %v2783, 0.0
    %v2982 = vmax.f32 %v2785, 0.0
    %v2983 = vmax.f32 %v2787, 0.0
    %v2984 = vmax.f32 %v2789, 0.0
    %v2985 = vmax.f32 %v2793, 0.0
    %v2986 = vmax.f32 %v2795, 0.0
    %v2987 = vmax.f32 %v2797, 0.0
    %v2988 = vmax.f32 %v2799, 0.0
    %v2989 = vmax.f32 %v2803, 0.0
    %v2990 = vmax.f32 %v2805, 0.0
    %v2991 = vmax.f32 %v2807, 0.0
    %v2992 = vmax.f32 %v2809, 0.0
    %v2993 = vmax.f32 %v2813, 0.0
    %v2994 = vmax.f32 %v2815, 0.0
    %v2995 = vmax.f32 %v2817, 0.0
    %v2996 = vmax.f32 %v2819, 0.0
    %v2997 = vmax.f32 %v2823, 0.0
    %v2998 = vmax.f32 %v2825, 0.0
    %v2999 = vmax.f32 %v2827, 0.0
    %v3000 = vmax.f32 %v2829, 0.0
    %v3001 = vmax.f32 %v2833, 0.0
    %v3002 = vmax.f32 %v2835, 0.0
    %v3003 = vmax.f32 %v2837, 0.0
    %v3004 = vmax.f32 %v2839, 0.0
    %v3005 = vmax.f32 %v2843, 0.0
    %v3006 = vmax.f32 %v2845, 0.0
    %v3007 = vmax.f32 %v2847, 0.0
    %v3008 = vmax.f32 %v2849, 0.0
    %v3009 = vmax.f32 %v2853, 0.0
    %v3010 = vmax.f32 %v2855, 0.0
    %v3011 = vmax.f32 %v2857, 0.0
    %v3012 = vmax.f32 %v2859, 0.0
    %v3013 = vmax.f32 %v2863, 0.0
    %v3014 = vmax.f32 %v2865, 0.0
    %v3015 = vmax.f32 %v2867, 0.0
    %v3016 = vmax.f32 %v2869, 0.0
    %v3017 = vmax.f32 %v2873, 0.0
    %v3018 = vmax.f32 %v2875, 0.0
    %v3019 = vmax.f32 %v2877, 0.0
    %v3020 = vmax.f32 %v2879, 0.0
    %v3021 = vmax.f32 %v2883, 0.0
    %v3022 = vmax.f32 %v2885, 0.0
    %v3023 = vmax.f32 %v2887, 0.0
    %v3024 = vmax.f32 %v2889, 0.0
    %v3025 = vmax.f32 %v2893, 0.0
    %v3026 = vmax.f32 %v2895, 0.0
    %v3027 = vmax.f32 %v2897, 0.0
    %v3028 = vmax.f32 %v2899, 0.0
    %v3029 = vpack.c.bf16 %v2903, %v2901
    %v3030 = vpack.c.bf16 %v2904, %v2902
    %v3031 = vpack.c.bf16 %v2907, %v2905
    %v3032 = vpack.c.bf16 %v2908, %v2906
    %v3033 = vpack.c.bf16 %v2911, %v2909
    %v3034 = vpack.c.bf16 %v2912, %v2910
    %v3035 = vpack.c.bf16 %v2915, %v2913
    %v3036 = vpack.c.bf16 %v2916, %v2914
    %v3037 = vpack.c.bf16 %v2919, %v2917
    %v3038 = vpack.c.bf16 %v2920, %v2918
    %v3039 = vpack.c.bf16 %v2923, %v2921
    %v3040 = vpack.c.bf16 %v2924, %v2922
    %v3041 = vpack.c.bf16 %v2927, %v2925
    %v3042 = vpack.c.bf16 %v2928, %v2926
    %v3043 = vpack.c.bf16 %v2931, %v2929
    %v3044 = vpack.c.bf16 %v2932, %v2930
    %v3045 = vpack.c.bf16 %v2935, %v2933
    %v3046 = vpack.c.bf16 %v2936, %v2934
    %v3047 = vpack.c.bf16 %v2939, %v2937
    %v3048 = vpack.c.bf16 %v2940, %v2938
    %v3049 = vpack.c.bf16 %v2943, %v2941
    %v3050 = vpack.c.bf16 %v2944, %v2942
    %v3051 = vpack.c.bf16 %v2947, %v2945
    %v3052 = vpack.c.bf16 %v2948, %v2946
    %v3053 = vpack.c.bf16 %v2951, %v2949
    %v3054 = vpack.c.bf16 %v2952, %v2950
    %v3055 = vpack.c.bf16 %v2955, %v2953
    %v3056 = vpack.c.bf16 %v2956, %v2954
    %v3057 = vpack.c.bf16 %v2959, %v2957
    %v3058 = vpack.c.bf16 %v2960, %v2958
    %v3059 = vpack.c.bf16 %v2963, %v2961
    %v3060 = vpack.c.bf16 %v2964, %v2962
    %v3061 = vpack.c.bf16 %v2967, %v2965
    %v3062 = vpack.c.bf16 %v2968, %v2966
    %v3063 = vpack.c.bf16 %v2971, %v2969
    %v3064 = vpack.c.bf16 %v2972, %v2970
    %v3065 = vpack.c.bf16 %v2975, %v2973
    %v3066 = vpack.c.bf16 %v2976, %v2974
    %v3067 = vpack.c.bf16 %v2979, %v2977
    %v3068 = vpack.c.bf16 %v2980, %v2978
    %v3069 = vpack.c.bf16 %v2983, %v2981
    %v3070 = vpack.c.bf16 %v2984, %v2982
    %v3071 = vpack.c.bf16 %v2987, %v2985
    %v3072 = vpack.c.bf16 %v2988, %v2986
    %v3073 = vpack.c.bf16 %v2991, %v2989
    %v3074 = vpack.c.bf16 %v2992, %v2990
    %v3075 = vpack.c.bf16 %v2995, %v2993
    %v3076 = vpack.c.bf16 %v2996, %v2994
    %v3077 = vpack.c.bf16 %v2999, %v2997
    %v3078 = vpack.c.bf16 %v3000, %v2998
    %v3079 = vpack.c.bf16 %v3003, %v3001
    %v3080 = vpack.c.bf16 %v3004, %v3002
    %v3081 = vpack.c.bf16 %v3007, %v3005
    %v3082 = vpack.c.bf16 %v3008, %v3006
    %v3083 = vpack.c.bf16 %v3011, %v3009
    %v3084 = vpack.c.bf16 %v3012, %v3010
    %v3085 = vpack.c.bf16 %v3015, %v3013
    %v3086 = vpack.c.bf16 %v3016, %v3014
    %v3087 = vpack.c.bf16 %v3019, %v3017
    %v3088 = vpack.c.bf16 %v3020, %v3018
    %v3089 = vpack.c.bf16 %v3023, %v3021
    %v3090 = vpack.c.bf16 %v3024, %v3022
    %v3091 = vpack.c.bf16 %v3027, %v3025
    %v3092 = vpack.c.bf16 %v3028, %v3026
    %v3094 = vlaneseq
    %v3095 = vshrl.u32 %v3094, 7
    %v3096 = vsub.s32 0, %v3095
    %v3097 = vrot.slane %v420, %v3096
    %v3098 = vlaneseq
    %v3099 = vshrl.u32 %v3098, 7
    %v3100 = vsub.s32 1, %v3099
    %v3101 = vrot.slane %v420, %v3100
    %v3136 = vunpack.c.l.b16 %v388
    %v3137 = vunpack.c.h.b16 %v388
    %v3138 = vunpack.c.l.b16 %v389
    %v3139 = vunpack.c.h.b16 %v389
    %v3140 = vunpack.c.l.b16 %v390
    %v3141 = vunpack.c.h.b16 %v390
    %v3142 = vunpack.c.l.b16 %v391
    %v3143 = vunpack.c.h.b16 %v391
    %v3144 = vunpack.c.l.b16 %v392
    %v3145 = vunpack.c.h.b16 %v392
    %v3146 = vunpack.c.l.b16 %v393
    %v3147 = vunpack.c.h.b16 %v393
    %v3148 = vunpack.c.l.b16 %v394
    %v3149 = vunpack.c.h.b16 %v394
    %v3150 = vunpack.c.l.b16 %v395
    %v3151 = vunpack.c.h.b16 %v395
    %v3152 = vunpack.c.l.b16 %v396
    %v3153 = vunpack.c.h.b16 %v396
    %v3154 = vunpack.c.l.b16 %v397
    %v3155 = vunpack.c.h.b16 %v397
    %v3156 = vunpack.c.l.b16 %v398
    %v3157 = vunpack.c.h.b16 %v398
    %v3158 = vunpack.c.l.b16 %v399
    %v3159 = vunpack.c.h.b16 %v399
    %v3160 = vunpack.c.l.b16 %v400
    %v3161 = vunpack.c.h.b16 %v400
    %v3162 = vunpack.c.l.b16 %v401
    %v3163 = vunpack.c.h.b16 %v401
    %v3164 = vunpack.c.l.b16 %v402
    %v3165 = vunpack.c.h.b16 %v402
    %v3166 = vunpack.c.l.b16 %v403
    %v3167 = vunpack.c.h.b16 %v403
    %v3168 = vunpack.c.l.b16 %v404
    %v3169 = vunpack.c.h.b16 %v404
    %v3170 = vunpack.c.l.b16 %v405
    %v3171 = vunpack.c.h.b16 %v405
    %v3172 = vunpack.c.l.b16 %v406
    %v3173 = vunpack.c.h.b16 %v406
    %v3174 = vunpack.c.l.b16 %v407
    %v3175 = vunpack.c.h.b16 %v407
    %v3176 = vunpack.c.l.b16 %v408
    %v3177 = vunpack.c.h.b16 %v408
    %v3178 = vunpack.c.l.b16 %v409
    %v3179 = vunpack.c.h.b16 %v409
    %v3180 = vunpack.c.l.b16 %v410
    %v3181 = vunpack.c.h.b16 %v410
    %v3182 = vunpack.c.l.b16 %v411
    %v3183 = vunpack.c.h.b16 %v411
    %v3184 = vunpack.c.l.b16 %v412
    %v3185 = vunpack.c.h.b16 %v412
    %v3186 = vunpack.c.l.b16 %v413
    %v3187 = vunpack.c.h.b16 %v413
    %v3188 = vunpack.c.l.b16 %v414
    %v3189 = vunpack.c.h.b16 %v414
    %v3190 = vunpack.c.l.b16 %v415
    %v3191 = vunpack.c.h.b16 %v415
    %v3192 = vunpack.c.l.b16 %v416
    %v3193 = vunpack.c.h.b16 %v416
    %v3194 = vunpack.c.l.b16 %v417
    %v3195 = vunpack.c.h.b16 %v417
    %v3196 = vunpack.c.l.b16 %v418
    %v3197 = vunpack.c.h.b16 %v418
    %v3198 = vunpack.c.l.b16 %v419
    %v3199 = vunpack.c.h.b16 %v419
    %v3200 = vpack.c.b16 %v3138, %v3136
    %v3201 = vpack.c.b16 %v3139, %v3137
    %v3202 = vpack.c.b16 %v3142, %v3140
    %v3203 = vpack.c.b16 %v3143, %v3141
    %v3204 = vpack.c.b16 %v3146, %v3144
    %v3205 = vpack.c.b16 %v3147, %v3145
    %v3206 = vpack.c.b16 %v3150, %v3148
    %v3207 = vpack.c.b16 %v3151, %v3149
    %v3208 = vpack.c.b16 %v3154, %v3152
    %v3209 = vpack.c.b16 %v3155, %v3153
    %v3210 = vpack.c.b16 %v3158, %v3156
    %v3211 = vpack.c.b16 %v3159, %v3157
    %v3212 = vpack.c.b16 %v3162, %v3160
    %v3213 = vpack.c.b16 %v3163, %v3161
    %v3214 = vpack.c.b16 %v3166, %v3164
    %v3215 = vpack.c.b16 %v3167, %v3165
    %v3216 = vpack.c.b16 %v3170, %v3168
    %v3217 = vpack.c.b16 %v3171, %v3169
    %v3218 = vpack.c.b16 %v3174, %v3172
    %v3219 = vpack.c.b16 %v3175, %v3173
    %v3220 = vpack.c.b16 %v3178, %v3176
    %v3221 = vpack.c.b16 %v3179, %v3177
    %v3222 = vpack.c.b16 %v3182, %v3180
    %v3223 = vpack.c.b16 %v3183, %v3181
    %v3224 = vpack.c.b16 %v3186, %v3184
    %v3225 = vpack.c.b16 %v3187, %v3185
    %v3226 = vpack.c.b16 %v3190, %v3188
    %v3227 = vpack.c.b16 %v3191, %v3189
    %v3228 = vpack.c.b16 %v3194, %v3192
    %v3229 = vpack.c.b16 %v3195, %v3193
    %v3230 = vpack.c.b16 %v3198, %v3196
    %v3231 = vpack.c.b16 %v3199, %v3197
    %3264 = vmatprep.subr.bf16.mxu0 %v3201
    %3265 = vmatpush1.bf16.msra.mxu0 %v3200
    %3266 = vmatprep.subr.bf16.mxu0 %v3203
    %3267 = vmatpush1.bf16.msra.mxu0 %v3202
    %3268 = vmatprep.subr.bf16.mxu0 %v3205
    %3269 = vmatpush1.bf16.msra.mxu0 %v3204
    %3270 = vmatprep.subr.bf16.mxu0 %v3207
    %3271 = vmatpush1.bf16.msra.mxu0 %v3206
    %3272 = vmatprep.subr.bf16.mxu0 %v3209
    %3273 = vmatpush1.bf16.msra.mxu0 %v3208
    %3274 = vmatprep.subr.bf16.mxu0 %v3211
    %3275 = vmatpush1.bf16.msra.mxu0 %v3210
    %3276 = vmatprep.subr.bf16.mxu0 %v3213
    %3277 = vmatpush1.bf16.msra.mxu0 %v3212
    %3278 = vmatprep.subr.bf16.mxu0 %v3215
    %3279 = vmatpush1.bf16.msra.mxu0 %v3214
    %3280 = vmatprep.subr.bf16.mxu0 %v3217
    %3281 = vmatpush1.bf16.msra.mxu0 %v3216
    %3282 = vmatprep.subr.bf16.mxu0 %v3219
    %3283 = vmatpush1.bf16.msra.mxu0 %v3218
    %3284 = vmatprep.subr.bf16.mxu0 %v3221
    %3285 = vmatpush1.bf16.msra.mxu0 %v3220
    %3286 = vmatprep.subr.bf16.mxu0 %v3223
    %3287 = vmatpush1.bf16.msra.mxu0 %v3222
    %3288 = vmatprep.subr.bf16.mxu0 %v3225
    %3289 = vmatpush1.bf16.msra.mxu0 %v3224
    %3290 = vmatprep.subr.bf16.mxu0 %v3227
    %3291 = vmatpush1.bf16.msra.mxu0 %v3226
    %3292 = vmatprep.subr.bf16.mxu0 %v3229
    %3293 = vmatpush1.bf16.msra.mxu0 %v3228
    %3294 = vmatprep.subr.bf16.mxu0 %v3231
    %3295 = vmatpush1.bf16.msra.mxu0 %v3230
    %3296 = vmatprep.mubr.bf16.mxu0 %v3030
    %3297 = vmatmul.mubr.bf16.gmra.mrb[0].mxu0 %v3029
    %v3298 = vpop.f32.mrb[0].mxu0
    %v3299 = vadd.f32 %v3097, %v3298
    %v3300 = vpop.f32.mrb[0].mxu0
    %v3301 = vadd.f32 %v3101, %v3300
    %v3302 = vpop.f32.mrb[0].mxu0
    %v3303 = vadd.f32 %v3097, %v3302
    %v3304 = vpop.f32.mrb[0].mxu0
    %v3305 = vadd.f32 %v3101, %v3304
    %3306 = vmatprep.mubr.bf16.mxu0 %v3032
    %3307 = vmatmul.mubr.bf16.gmra.mrb[0].mxu0 %v3031
    %v3308 = vpop.f32.mrb[0].mxu0
    %v3309 = vadd.f32 %v3097, %v3308
    %v3310 = vpop.f32.mrb[0].mxu0
    %v3311 = vadd.f32 %v3101, %v3310
    %v3312 = vpop.f32.mrb[0].mxu0
    %v3313 = vadd.f32 %v3097, %v3312
    %v3314 = vpop.f32.mrb[0].mxu0
    %v3315 = vadd.f32 %v3101, %v3314
    %3316 = vmatprep.mubr.bf16.mxu0 %v3034
    %3317 = vmatmul.mubr.bf16.gmra.mrb[0].mxu0 %v3033
    %v3318 = vpop.f32.mrb[0].mxu0
    %v3319 = vadd.f32 %v3097, %v3318
    %v3320 = vpop.f32.mrb[0].mxu0
    %v3321 = vadd.f32 %v3101, %v3320
    %v3322 = vpop.f32.mrb[0].mxu0
    %v3323 = vadd.f32 %v3097, %v3322
    %v3324 = vpop.f32.mrb[0].mxu0
    %v3325 = vadd.f32 %v3101, %v3324
    %3326 = vmatprep.mubr.bf16.mxu0 %v3036
    %3327 = vmatmul.mubr.bf16.gmra.mrb[0].mxu0 %v3035
    %v3328 = vpop.f32.mrb[0].mxu0
    %v3329 = vadd.f32 %v3097, %v3328
    %v3330 = vpop.f32.mrb[0].mxu0
    %v3331 = vadd.f32 %v3101, %v3330
    %v3332 = vpop.f32.mrb[0].mxu0
    %v3333 = vadd.f32 %v3097, %v3332
    %v3334 = vpop.f32.mrb[0].mxu0
    %v3335 = vadd.f32 %v3101, %v3334
    %3336 = vmatprep.mubr.bf16.mxu0 %v3038
    %3337 = vmatmul.mubr.bf16.gmra.mrb[0].mxu0 %v3037
    %v3338 = vpop.f32.mrb[0].mxu0
    %v3339 = vadd.f32 %v3097, %v3338
    %v3340 = vpop.f32.mrb[0].mxu0
    %v3341 = vadd.f32 %v3101, %v3340
    %v3342 = vpop.f32.mrb[0].mxu0
    %v3343 = vadd.f32 %v3097, %v3342
    %v3344 = vpop.f32.mrb[0].mxu0
    %v3345 = vadd.f32 %v3101, %v3344
    %3346 = vmatprep.mubr.bf16.mxu0 %v3040
    %3347 = vmatmul.mubr.bf16.gmra.mrb[0].mxu0 %v3039
    %v3348 = vpop.f32.mrb[0].mxu0
    %v3349 = vadd.f32 %v3097, %v3348
    %v3350 = vpop.f32.mrb[0].mxu0
    %v3351 = vadd.f32 %v3101, %v3350
    %v3352 = vpop.f32.mrb[0].mxu0
    %v3353 = vadd.f32 %v3097, %v3352
    %v3354 = vpop.f32.mrb[0].mxu0
    %v3355 = vadd.f32 %v3101, %v3354
    %3356 = vmatprep.mubr.bf16.mxu0 %v3042
    %3357 = vmatmul.mubr.bf16.gmra.mrb[0].mxu0 %v3041
    %v3358 = vpop.f32.mrb[0].mxu0
    %v3359 = vadd.f32 %v3097, %v3358
    %v3360 = vpop.f32.mrb[0].mxu0
    %v3361 = vadd.f32 %v3101, %v3360
    %v3362 = vpop.f32.mrb[0].mxu0
    %v3363 = vadd.f32 %v3097, %v3362
    %v3364 = vpop.f32.mrb[0].mxu0
    %v3365 = vadd.f32 %v3101, %v3364
    %3366 = vmatprep.mubr.bf16.mxu0 %v3044
    %3367 = vmatmul.mubr.bf16.gmra.mrb[0].mxu0 %v3043
    %v3368 = vpop.f32.mrb[0].mxu0
    %v3369 = vadd.f32 %v3097, %v3368
    %v3370 = vpop.f32.mrb[0].mxu0
    %v3371 = vadd.f32 %v3101, %v3370
    %v3372 = vpop.f32.mrb[0].mxu0
    %v3373 = vadd.f32 %v3097, %v3372
    %v3374 = vpop.f32.mrb[0].mxu0
    %v3375 = vadd.f32 %v3101, %v3374
    %3376 = vmatprep.mubr.bf16.mxu0 %v3046
    %3377 = vmatmul.mubr.bf16.gmra.mrb[0].mxu0 %v3045
    %v3378 = vpop.f32.mrb[0].mxu0
    %v3379 = vadd.f32 %v3097, %v3378
    %v3380 = vpop.f32.mrb[0].mxu0
    %v3381 = vadd.f32 %v3101, %v3380
    %v3382 = vpop.f32.mrb[0].mxu0
    %v3383 = vadd.f32 %v3097, %v3382
    %v3384 = vpop.f32.mrb[0].mxu0
    %v3385 = vadd.f32 %v3101, %v3384
    %3386 = vmatprep.mubr.bf16.mxu0 %v3048
    %3387 = vmatmul.mubr.bf16.gmra.mrb[0].mxu0 %v3047
    %v3388 = vpop.f32.mrb[0].mxu0
    %v3389 = vadd.f32 %v3097, %v3388
    %v3390 = vpop.f32.mrb[0].mxu0
    %v3391 = vadd.f32 %v3101, %v3390
    %v3392 = vpop.f32.mrb[0].mxu0
    %v3393 = vadd.f32 %v3097, %v3392
    %v3394 = vpop.f32.mrb[0].mxu0
    %v3395 = vadd.f32 %v3101, %v3394
    %3396 = vmatprep.mubr.bf16.mxu0 %v3050
    %3397 = vmatmul.mubr.bf16.gmra.mrb[0].mxu0 %v3049
    %v3398 = vpop.f32.mrb[0].mxu0
    %v3399 = vadd.f32 %v3097, %v3398
    %v3400 = vpop.f32.mrb[0].mxu0
    %v3401 = vadd.f32 %v3101, %v3400
    %v3402 = vpop.f32.mrb[0].mxu0
    %v3403 = vadd.f32 %v3097, %v3402
    %v3404 = vpop.f32.mrb[0].mxu0
    %v3405 = vadd.f32 %v3101, %v3404
    %3406 = vmatprep.mubr.bf16.mxu0 %v3052
    %3407 = vmatmul.mubr.bf16.gmra.mrb[0].mxu0 %v3051
    %v3408 = vpop.f32.mrb[0].mxu0
    %v3409 = vadd.f32 %v3097, %v3408
    %v3410 = vpop.f32.mrb[0].mxu0
    %v3411 = vadd.f32 %v3101, %v3410
    %v3412 = vpop.f32.mrb[0].mxu0
    %v3413 = vadd.f32 %v3097, %v3412
    %v3414 = vpop.f32.mrb[0].mxu0
    %v3415 = vadd.f32 %v3101, %v3414
    %3416 = vmatprep.mubr.bf16.mxu0 %v3054
    %3417 = vmatmul.mubr.bf16.gmra.mrb[0].mxu0 %v3053
    %v3418 = vpop.f32.mrb[0].mxu0
    %v3419 = vadd.f32 %v3097, %v3418
    %v3420 = vpop.f32.mrb[0].mxu0
    %v3421 = vadd.f32 %v3101, %v3420
    %v3422 = vpop.f32.mrb[0].mxu0
    %v3423 = vadd.f32 %v3097, %v3422
    %v3424 = vpop.f32.mrb[0].mxu0
    %v3425 = vadd.f32 %v3101, %v3424
    %3426 = vmatprep.mubr.bf16.mxu0 %v3056
    %3427 = vmatmul.mubr.bf16.gmra.mrb[0].mxu0 %v3055
    %v3428 = vpop.f32.mrb[0].mxu0
    %v3429 = vadd.f32 %v3097, %v3428
    %v3430 = vpop.f32.mrb[0].mxu0
    %v3431 = vadd.f32 %v3101, %v3430
    %v3432 = vpop.f32.mrb[0].mxu0
    %v3433 = vadd.f32 %v3097, %v3432
    %v3434 = vpop.f32.mrb[0].mxu0
    %v3435 = vadd.f32 %v3101, %v3434
    %3436 = vmatprep.mubr.bf16.mxu0 %v3058
    %3437 = vmatmul.mubr.bf16.gmra.mrb[0].mxu0 %v3057
    %v3438 = vpop.f32.mrb[0].mxu0
    %v3439 = vadd.f32 %v3097, %v3438
    %v3440 = vpop.f32.mrb[0].mxu0
    %v3441 = vadd.f32 %v3101, %v3440
    %v3442 = vpop.f32.mrb[0].mxu0
    %v3443 = vadd.f32 %v3097, %v3442
    %v3444 = vpop.f32.mrb[0].mxu0
    %v3445 = vadd.f32 %v3101, %v3444
    %3446 = vmatprep.mubr.bf16.mxu0 %v3060
    %3447 = vmatmul.mubr.bf16.gmra.mrb[0].mxu0 %v3059
    %v3448 = vpop.f32.mrb[0].mxu0
    %v3449 = vadd.f32 %v3097, %v3448
    %v3450 = vpop.f32.mrb[0].mxu0
    %v3451 = vadd.f32 %v3101, %v3450
    %v3452 = vpop.f32.mrb[0].mxu0
    %v3453 = vadd.f32 %v3097, %v3452
    %v3454 = vpop.f32.mrb[0].mxu0
    %v3455 = vadd.f32 %v3101, %v3454
    %3456 = vmatprep.mubr.bf16.mxu0 %v3062
    %3457 = vmatmul.mubr.bf16.gmra.mrb[0].mxu0 %v3061
    %v3458 = vpop.f32.mrb[0].mxu0
    %v3459 = vadd.f32 %v3097, %v3458
    %v3460 = vpop.f32.mrb[0].mxu0
    %v3461 = vadd.f32 %v3101, %v3460
    %v3462 = vpop.f32.mrb[0].mxu0
    %v3463 = vadd.f32 %v3097, %v3462
    %v3464 = vpop.f32.mrb[0].mxu0
    %v3465 = vadd.f32 %v3101, %v3464
    %3466 = vmatprep.mubr.bf16.mxu0 %v3064
    %3467 = vmatmul.mubr.bf16.gmra.mrb[0].mxu0 %v3063
    %v3468 = vpop.f32.mrb[0].mxu0
    %v3469 = vadd.f32 %v3097, %v3468
    %v3470 = vpop.f32.mrb[0].mxu0
    %v3471 = vadd.f32 %v3101, %v3470
    %v3472 = vpop.f32.mrb[0].mxu0
    %v3473 = vadd.f32 %v3097, %v3472
    %v3474 = vpop.f32.mrb[0].mxu0
    %v3475 = vadd.f32 %v3101, %v3474
    %3476 = vmatprep.mubr.bf16.mxu0 %v3066
    %3477 = vmatmul.mubr.bf16.gmra.mrb[0].mxu0 %v3065
    %v3478 = vpop.f32.mrb[0].mxu0
    %v3479 = vadd.f32 %v3097, %v3478
    %v3480 = vpop.f32.mrb[0].mxu0
    %v3481 = vadd.f32 %v3101, %v3480
    %v3482 = vpop.f32.mrb[0].mxu0
    %v3483 = vadd.f32 %v3097, %v3482
    %v3484 = vpop.f32.mrb[0].mxu0
    %v3485 = vadd.f32 %v3101, %v3484
    %3486 = vmatprep.mubr.bf16.mxu0 %v3068
    %3487 = vmatmul.mubr.bf16.gmra.mrb[0].mxu0 %v3067
    %v3488 = vpop.f32.mrb[0].mxu0
    %v3489 = vadd.f32 %v3097, %v3488
    %v3490 = vpop.f32.mrb[0].mxu0
    %v3491 = vadd.f32 %v3101, %v3490
    %v3492 = vpop.f32.mrb[0].mxu0
    %v3493 = vadd.f32 %v3097, %v3492
    %v3494 = vpop.f32.mrb[0].mxu0
    %v3495 = vadd.f32 %v3101, %v3494
    %3496 = vmatprep.mubr.bf16.mxu0 %v3070
    %3497 = vmatmul.mubr.bf16.gmra.mrb[0].mxu0 %v3069
    %v3498 = vpop.f32.mrb[0].mxu0
    %v3499 = vadd.f32 %v3097, %v3498
    %v3500 = vpop.f32.mrb[0].mxu0
    %v3501 = vadd.f32 %v3101, %v3500
    %v3502 = vpop.f32.mrb[0].mxu0
    %v3503 = vadd.f32 %v3097, %v3502
    %v3504 = vpop.f32.mrb[0].mxu0
    %v3505 = vadd.f32 %v3101, %v3504
    %3506 = vmatprep.mubr.bf16.mxu0 %v3072
    %3507 = vmatmul.mubr.bf16.gmra.mrb[0].mxu0 %v3071
    %v3508 = vpop.f32.mrb[0].mxu0
    %v3509 = vadd.f32 %v3097, %v3508
    %v3510 = vpop.f32.mrb[0].mxu0
    %v3511 = vadd.f32 %v3101, %v3510
    %v3512 = vpop.f32.mrb[0].mxu0
    %v3513 = vadd.f32 %v3097, %v3512
    %v3514 = vpop.f32.mrb[0].mxu0
    %v3515 = vadd.f32 %v3101, %v3514
    %3516 = vmatprep.mubr.bf16.mxu0 %v3074
    %3517 = vmatmul.mubr.bf16.gmra.mrb[0].mxu0 %v3073
    %v3518 = vpop.f32.mrb[0].mxu0
    %v3519 = vadd.f32 %v3097, %v3518
    %v3520 = vpop.f32.mrb[0].mxu0
    %v3521 = vadd.f32 %v3101, %v3520
    %v3522 = vpop.f32.mrb[0].mxu0
    %v3523 = vadd.f32 %v3097, %v3522
    %v3524 = vpop.f32.mrb[0].mxu0
    %v3525 = vadd.f32 %v3101, %v3524
    %3526 = vmatprep.mubr.bf16.mxu0 %v3076
    %3527 = vmatmul.mubr.bf16.gmra.mrb[0].mxu0 %v3075
    %v3528 = vpop.f32.mrb[0].mxu0
    %v3529 = vadd.f32 %v3097, %v3528
    %v3530 = vpop.f32.mrb[0].mxu0
    %v3531 = vadd.f32 %v3101, %v3530
    %v3532 = vpop.f32.mrb[0].mxu0
    %v3533 = vadd.f32 %v3097, %v3532
    %v3534 = vpop.f32.mrb[0].mxu0
    %v3535 = vadd.f32 %v3101, %v3534
    %3536 = vmatprep.mubr.bf16.mxu0 %v3078
    %3537 = vmatmul.mubr.bf16.gmra.mrb[0].mxu0 %v3077
    %v3538 = vpop.f32.mrb[0].mxu0
    %v3539 = vadd.f32 %v3097, %v3538
    %v3540 = vpop.f32.mrb[0].mxu0
    %v3541 = vadd.f32 %v3101, %v3540
    %v3542 = vpop.f32.mrb[0].mxu0
    %v3543 = vadd.f32 %v3097, %v3542
    %v3544 = vpop.f32.mrb[0].mxu0
    %v3545 = vadd.f32 %v3101, %v3544
    %3546 = vmatprep.mubr.bf16.mxu0 %v3080
    %3547 = vmatmul.mubr.bf16.gmra.mrb[0].mxu0 %v3079
    %v3548 = vpop.f32.mrb[0].mxu0
    %v3549 = vadd.f32 %v3097, %v3548
    %v3550 = vpop.f32.mrb[0].mxu0
    %v3551 = vadd.f32 %v3101, %v3550
    %v3552 = vpop.f32.mrb[0].mxu0
    %v3553 = vadd.f32 %v3097, %v3552
    %v3554 = vpop.f32.mrb[0].mxu0
    %v3555 = vadd.f32 %v3101, %v3554
    %3556 = vmatprep.mubr.bf16.mxu0 %v3082
    %3557 = vmatmul.mubr.bf16.gmra.mrb[0].mxu0 %v3081
    %v3558 = vpop.f32.mrb[0].mxu0
    %v3559 = vadd.f32 %v3097, %v3558
    %v3560 = vpop.f32.mrb[0].mxu0
    %v3561 = vadd.f32 %v3101, %v3560
    %v3562 = vpop.f32.mrb[0].mxu0
    %v3563 = vadd.f32 %v3097, %v3562
    %v3564 = vpop.f32.mrb[0].mxu0
    %v3565 = vadd.f32 %v3101, %v3564
    %3566 = vmatprep.mubr.bf16.mxu0 %v3084
    %3567 = vmatmul.mubr.bf16.gmra.mrb[0].mxu0 %v3083
    %v3568 = vpop.f32.mrb[0].mxu0
    %v3569 = vadd.f32 %v3097, %v3568
    %v3570 = vpop.f32.mrb[0].mxu0
    %v3571 = vadd.f32 %v3101, %v3570
    %v3572 = vpop.f32.mrb[0].mxu0
    %v3573 = vadd.f32 %v3097, %v3572
    %v3574 = vpop.f32.mrb[0].mxu0
    %v3575 = vadd.f32 %v3101, %v3574
    %3576 = vmatprep.mubr.bf16.mxu0 %v3086
    %3577 = vmatmul.mubr.bf16.gmra.mrb[0].mxu0 %v3085
    %v3578 = vpop.f32.mrb[0].mxu0
    %v3579 = vadd.f32 %v3097, %v3578
    %v3580 = vpop.f32.mrb[0].mxu0
    %v3581 = vadd.f32 %v3101, %v3580
    %v3582 = vpop.f32.mrb[0].mxu0
    %v3583 = vadd.f32 %v3097, %v3582
    %v3584 = vpop.f32.mrb[0].mxu0
    %v3585 = vadd.f32 %v3101, %v3584
    %3586 = vmatprep.mubr.bf16.mxu0 %v3088
    %3587 = vmatmul.mubr.bf16.gmra.mrb[0].mxu0 %v3087
    %v3588 = vpop.f32.mrb[0].mxu0
    %v3589 = vadd.f32 %v3097, %v3588
    %v3590 = vpop.f32.mrb[0].mxu0
    %v3591 = vadd.f32 %v3101, %v3590
    %v3592 = vpop.f32.mrb[0].mxu0
    %v3593 = vadd.f32 %v3097, %v3592
    %v3594 = vpop.f32.mrb[0].mxu0
    %v3595 = vadd.f32 %v3101, %v3594
    %3596 = vmatprep.mubr.bf16.mxu0 %v3090
    %3597 = vmatmul.mubr.bf16.gmra.mrb[0].mxu0 %v3089
    %v3598 = vpop.f32.mrb[0].mxu0
    %v3599 = vadd.f32 %v3097, %v3598
    %v3600 = vpop.f32.mrb[0].mxu0
    %v3601 = vadd.f32 %v3101, %v3600
    %v3602 = vpop.f32.mrb[0].mxu0
    %v3603 = vadd.f32 %v3097, %v3602
    %v3604 = vpop.f32.mrb[0].mxu0
    %v3605 = vadd.f32 %v3101, %v3604
    %3606 = vmatprep.mubr.bf16.mxu0 %v3092
    %3607 = vmatmul.mubr.bf16.gmra.mrb[0].mxu0 %v3091
    %v3608 = vpop.f32.mrb[0].mxu0
    %v3609 = vadd.f32 %v3097, %v3608
    %v3610 = vpop.f32.mrb[0].mxu0
    %v3611 = vadd.f32 %v3101, %v3610
    %v3612 = vpop.f32.mrb[0].mxu0
    %v3613 = vadd.f32 %v3097, %v3612
    %v3614 = vpop.f32.mrb[0].mxu0
    %v3615 = vadd.f32 %v3101, %v3614
    %3616 = vdwg.mxu0
    %v3617 = vmax.f32 %v3299, 0.0
    %v3618 = vmax.f32 %v3301, 0.0
    %v3619 = vmax.f32 %v3303, 0.0
    %v3620 = vmax.f32 %v3305, 0.0
    %v3621 = vmax.f32 %v3309, 0.0
    %v3622 = vmax.f32 %v3311, 0.0
    %v3623 = vmax.f32 %v3313, 0.0
    %v3624 = vmax.f32 %v3315, 0.0
    %v3625 = vmax.f32 %v3319, 0.0
    %v3626 = vmax.f32 %v3321, 0.0
    %v3627 = vmax.f32 %v3323, 0.0
    %v3628 = vmax.f32 %v3325, 0.0
    %v3629 = vmax.f32 %v3329, 0.0
    %v3630 = vmax.f32 %v3331, 0.0
    %v3631 = vmax.f32 %v3333, 0.0
    %v3632 = vmax.f32 %v3335, 0.0
    %v3633 = vmax.f32 %v3339, 0.0
    %v3634 = vmax.f32 %v3341, 0.0
    %v3635 = vmax.f32 %v3343, 0.0
    %v3636 = vmax.f32 %v3345, 0.0
    %v3637 = vmax.f32 %v3349, 0.0
    %v3638 = vmax.f32 %v3351, 0.0
    %v3639 = vmax.f32 %v3353, 0.0
    %v3640 = vmax.f32 %v3355, 0.0
    %v3641 = vmax.f32 %v3359, 0.0
    %v3642 = vmax.f32 %v3361, 0.0
    %v3643 = vmax.f32 %v3363, 0.0
    %v3644 = vmax.f32 %v3365, 0.0
    %v3645 = vmax.f32 %v3369, 0.0
    %v3646 = vmax.f32 %v3371, 0.0
    %v3647 = vmax.f32 %v3373, 0.0
    %v3648 = vmax.f32 %v3375, 0.0
    %v3649 = vmax.f32 %v3379, 0.0
    %v3650 = vmax.f32 %v3381, 0.0
    %v3651 = vmax.f32 %v3383, 0.0
    %v3652 = vmax.f32 %v3385, 0.0
    %v3653 = vmax.f32 %v3389, 0.0
    %v3654 = vmax.f32 %v3391, 0.0
    %v3655 = vmax.f32 %v3393, 0.0
    %v3656 = vmax.f32 %v3395, 0.0
    %v3657 = vmax.f32 %v3399, 0.0
    %v3658 = vmax.f32 %v3401, 0.0
    %v3659 = vmax.f32 %v3403, 0.0
    %v3660 = vmax.f32 %v3405, 0.0
    %v3661 = vmax.f32 %v3409, 0.0
    %v3662 = vmax.f32 %v3411, 0.0
    %v3663 = vmax.f32 %v3413, 0.0
    %v3664 = vmax.f32 %v3415, 0.0
    %v3665 = vmax.f32 %v3419, 0.0
    %v3666 = vmax.f32 %v3421, 0.0
    %v3667 = vmax.f32 %v3423, 0.0
    %v3668 = vmax.f32 %v3425, 0.0
    %v3669 = vmax.f32 %v3429, 0.0
    %v3670 = vmax.f32 %v3431, 0.0
    %v3671 = vmax.f32 %v3433, 0.0
    %v3672 = vmax.f32 %v3435, 0.0
    %v3673 = vmax.f32 %v3439, 0.0
    %v3674 = vmax.f32 %v3441, 0.0
    %v3675 = vmax.f32 %v3443, 0.0
    %v3676 = vmax.f32 %v3445, 0.0
    %v3677 = vmax.f32 %v3449, 0.0
    %v3678 = vmax.f32 %v3451, 0.0
    %v3679 = vmax.f32 %v3453, 0.0
    %v3680 = vmax.f32 %v3455, 0.0
    %v3681 = vmax.f32 %v3459, 0.0
    %v3682 = vmax.f32 %v3461, 0.0
    %v3683 = vmax.f32 %v3463, 0.0
    %v3684 = vmax.f32 %v3465, 0.0
    %v3685 = vmax.f32 %v3469, 0.0
    %v3686 = vmax.f32 %v3471, 0.0
    %v3687 = vmax.f32 %v3473, 0.0
    %v3688 = vmax.f32 %v3475, 0.0
    %v3689 = vmax.f32 %v3479, 0.0
    %v3690 = vmax.f32 %v3481, 0.0
    %v3691 = vmax.f32 %v3483, 0.0
    %v3692 = vmax.f32 %v3485, 0.0
    %v3693 = vmax.f32 %v3489, 0.0
    %v3694 = vmax.f32 %v3491, 0.0
    %v3695 = vmax.f32 %v3493, 0.0
    %v3696 = vmax.f32 %v3495, 0.0
    %v3697 = vmax.f32 %v3499, 0.0
    %v3698 = vmax.f32 %v3501, 0.0
    %v3699 = vmax.f32 %v3503, 0.0
    %v3700 = vmax.f32 %v3505, 0.0
    %v3701 = vmax.f32 %v3509, 0.0
    %v3702 = vmax.f32 %v3511, 0.0
    %v3703 = vmax.f32 %v3513, 0.0
    %v3704 = vmax.f32 %v3515, 0.0
    %v3705 = vmax.f32 %v3519, 0.0
    %v3706 = vmax.f32 %v3521, 0.0
    %v3707 = vmax.f32 %v3523, 0.0
    %v3708 = vmax.f32 %v3525, 0.0
    %v3709 = vmax.f32 %v3529, 0.0
    %v3710 = vmax.f32 %v3531, 0.0
    %v3711 = vmax.f32 %v3533, 0.0
    %v3712 = vmax.f32 %v3535, 0.0
    %v3713 = vmax.f32 %v3539, 0.0
    %v3714 = vmax.f32 %v3541, 0.0
    %v3715 = vmax.f32 %v3543, 0.0
    %v3716 = vmax.f32 %v3545, 0.0
    %v3717 = vmax.f32 %v3549, 0.0
    %v3718 = vmax.f32 %v3551, 0.0
    %v3719 = vmax.f32 %v3553, 0.0
    %v3720 = vmax.f32 %v3555, 0.0
    %v3721 = vmax.f32 %v3559, 0.0
    %v3722 = vmax.f32 %v3561, 0.0
    %v3723 = vmax.f32 %v3563, 0.0
    %v3724 = vmax.f32 %v3565, 0.0
    %v3725 = vmax.f32 %v3569, 0.0
    %v3726 = vmax.f32 %v3571, 0.0
    %v3727 = vmax.f32 %v3573, 0.0
    %v3728 = vmax.f32 %v3575, 0.0
    %v3729 = vmax.f32 %v3579, 0.0
    %v3730 = vmax.f32 %v3581, 0.0
    %v3731 = vmax.f32 %v3583, 0.0
    %v3732 = vmax.f32 %v3585, 0.0
    %v3733 = vmax.f32 %v3589, 0.0
    %v3734 = vmax.f32 %v3591, 0.0
    %v3735 = vmax.f32 %v3593, 0.0
    %v3736 = vmax.f32 %v3595, 0.0
    %v3737 = vmax.f32 %v3599, 0.0
    %v3738 = vmax.f32 %v3601, 0.0
    %v3739 = vmax.f32 %v3603, 0.0
    %v3740 = vmax.f32 %v3605, 0.0
    %v3741 = vmax.f32 %v3609, 0.0
    %v3742 = vmax.f32 %v3611, 0.0
    %v3743 = vmax.f32 %v3613, 0.0
    %v3744 = vmax.f32 %v3615, 0.0
    %v3745 = vpack.c.bf16 %v3619, %v3617
    %v3746 = vpack.c.bf16 %v3620, %v3618
    %v3747 = vpack.c.bf16 %v3623, %v3621
    %v3748 = vpack.c.bf16 %v3624, %v3622
    %v3749 = vpack.c.bf16 %v3627, %v3625
    %v3750 = vpack.c.bf16 %v3628, %v3626
    %v3751 = vpack.c.bf16 %v3631, %v3629
    %v3752 = vpack.c.bf16 %v3632, %v3630
    %v3753 = vpack.c.bf16 %v3635, %v3633
    %v3754 = vpack.c.bf16 %v3636, %v3634
    %v3755 = vpack.c.bf16 %v3639, %v3637
    %v3756 = vpack.c.bf16 %v3640, %v3638
    %v3757 = vpack.c.bf16 %v3643, %v3641
    %v3758 = vpack.c.bf16 %v3644, %v3642
    %v3759 = vpack.c.bf16 %v3647, %v3645
    %v3760 = vpack.c.bf16 %v3648, %v3646
    %v3761 = vpack.c.bf16 %v3651, %v3649
    %v3762 = vpack.c.bf16 %v3652, %v3650
    %v3763 = vpack.c.bf16 %v3655, %v3653
    %v3764 = vpack.c.bf16 %v3656, %v3654
    %v3765 = vpack.c.bf16 %v3659, %v3657
    %v3766 = vpack.c.bf16 %v3660, %v3658
    %v3767 = vpack.c.bf16 %v3663, %v3661
    %v3768 = vpack.c.bf16 %v3664, %v3662
    %v3769 = vpack.c.bf16 %v3667, %v3665
    %v3770 = vpack.c.bf16 %v3668, %v3666
    %v3771 = vpack.c.bf16 %v3671, %v3669
    %v3772 = vpack.c.bf16 %v3672, %v3670
    %v3773 = vpack.c.bf16 %v3675, %v3673
    %v3774 = vpack.c.bf16 %v3676, %v3674
    %v3775 = vpack.c.bf16 %v3679, %v3677
    %v3776 = vpack.c.bf16 %v3680, %v3678
    %v3777 = vpack.c.bf16 %v3683, %v3681
    %v3778 = vpack.c.bf16 %v3684, %v3682
    %v3779 = vpack.c.bf16 %v3687, %v3685
    %v3780 = vpack.c.bf16 %v3688, %v3686
    %v3781 = vpack.c.bf16 %v3691, %v3689
    %v3782 = vpack.c.bf16 %v3692, %v3690
    %v3783 = vpack.c.bf16 %v3695, %v3693
    %v3784 = vpack.c.bf16 %v3696, %v3694
    %v3785 = vpack.c.bf16 %v3699, %v3697
    %v3786 = vpack.c.bf16 %v3700, %v3698
    %v3787 = vpack.c.bf16 %v3703, %v3701
    %v3788 = vpack.c.bf16 %v3704, %v3702
    %v3789 = vpack.c.bf16 %v3707, %v3705
    %v3790 = vpack.c.bf16 %v3708, %v3706
    %v3791 = vpack.c.bf16 %v3711, %v3709
    %v3792 = vpack.c.bf16 %v3712, %v3710
    %v3793 = vpack.c.bf16 %v3715, %v3713
    %v3794 = vpack.c.bf16 %v3716, %v3714
    %v3795 = vpack.c.bf16 %v3719, %v3717
    %v3796 = vpack.c.bf16 %v3720, %v3718
    %v3797 = vpack.c.bf16 %v3723, %v3721
    %v3798 = vpack.c.bf16 %v3724, %v3722
    %v3799 = vpack.c.bf16 %v3727, %v3725
    %v3800 = vpack.c.bf16 %v3728, %v3726
    %v3801 = vpack.c.bf16 %v3731, %v3729
    %v3802 = vpack.c.bf16 %v3732, %v3730
    %v3803 = vpack.c.bf16 %v3735, %v3733
    %v3804 = vpack.c.bf16 %v3736, %v3734
    %v3805 = vpack.c.bf16 %v3739, %v3737
    %v3806 = vpack.c.bf16 %v3740, %v3738
    %v3807 = vpack.c.bf16 %v3743, %v3741
    %v3808 = vpack.c.bf16 %v3744, %v3742
    %v3810 = vlaneseq
    %v3811 = vshrl.u32 %v3810, 7
    %v3812 = vsub.s32 0, %v3811
    %v3813 = vrot.slane %v453, %v3812
    %v3814 = vlaneseq
    %v3815 = vshrl.u32 %v3814, 7
    %v3816 = vsub.s32 1, %v3815
    %v3817 = vrot.slane %v453, %v3816
    %v3852 = vunpack.c.l.b16 %v421
    %v3853 = vunpack.c.h.b16 %v421
    %v3854 = vunpack.c.l.b16 %v422
    %v3855 = vunpack.c.h.b16 %v422
    %v3856 = vunpack.c.l.b16 %v423
    %v3857 = vunpack.c.h.b16 %v423
    %v3858 = vunpack.c.l.b16 %v424
    %v3859 = vunpack.c.h.b16 %v424
    %v3860 = vunpack.c.l.b16 %v425
    %v3861 = vunpack.c.h.b16 %v425
    %v3862 = vunpack.c.l.b16 %v426
    %v3863 = vunpack.c.h.b16 %v426
    %v3864 = vunpack.c.l.b16 %v427
    %v3865 = vunpack.c.h.b16 %v427
    %v3866 = vunpack.c.l.b16 %v428
    %v3867 = vunpack.c.h.b16 %v428
    %v3868 = vunpack.c.l.b16 %v429
    %v3869 = vunpack.c.h.b16 %v429
    %v3870 = vunpack.c.l.b16 %v430
    %v3871 = vunpack.c.h.b16 %v430
    %v3872 = vunpack.c.l.b16 %v431
    %v3873 = vunpack.c.h.b16 %v431
    %v3874 = vunpack.c.l.b16 %v432
    %v3875 = vunpack.c.h.b16 %v432
    %v3876 = vunpack.c.l.b16 %v433
    %v3877 = vunpack.c.h.b16 %v433
    %v3878 = vunpack.c.l.b16 %v434
    %v3879 = vunpack.c.h.b16 %v434
    %v3880 = vunpack.c.l.b16 %v435
    %v3881 = vunpack.c.h.b16 %v435
    %v3882 = vunpack.c.l.b16 %v436
    %v3883 = vunpack.c.h.b16 %v436
    %v3884 = vunpack.c.l.b16 %v437
    %v3885 = vunpack.c.h.b16 %v437
    %v3886 = vunpack.c.l.b16 %v438
    %v3887 = vunpack.c.h.b16 %v438
    %v3888 = vunpack.c.l.b16 %v439
    %v3889 = vunpack.c.h.b16 %v439
    %v3890 = vunpack.c.l.b16 %v440
    %v3891 = vunpack.c.h.b16 %v440
    %v3892 = vunpack.c.l.b16 %v441
    %v3893 = vunpack.c.h.b16 %v441
    %v3894 = vunpack.c.l.b16 %v442
    %v3895 = vunpack.c.h.b16 %v442
    %v3896 = vunpack.c.l.b16 %v443
    %v3897 = vunpack.c.h.b16 %v443
    %v3898 = vunpack.c.l.b16 %v444
    %v3899 = vunpack.c.h.b16 %v444
    %v3900 = vunpack.c.l.b16 %v445
    %v3901 = vunpack.c.h.b16 %v445
    %v3902 = vunpack.c.l.b16 %v446
    %v3903 = vunpack.c.h.b16 %v446
    %v3904 = vunpack.c.l.b16 %v447
    %v3905 = vunpack.c.h.b16 %v447
    %v3906 = vunpack.c.l.b16 %v448
    %v3907 = vunpack.c.h.b16 %v448
    %v3908 = vunpack.c.l.b16 %v449
    %v3909 = vunpack.c.h.b16 %v449
    %v3910 = vunpack.c.l.b16 %v450
    %v3911 = vunpack.c.h.b16 %v450
    %v3912 = vunpack.c.l.b16 %v451
    %v3913 = vunpack.c.h.b16 %v451
    %v3914 = vunpack.c.l.b16 %v452
    %v3915 = vunpack.c.h.b16 %v452
    %v3916 = vpack.c.b16 %v3854, %v3852
    %v3917 = vpack.c.b16 %v3855, %v3853
    %v3918 = vpack.c.b16 %v3858, %v3856
    %v3919 = vpack.c.b16 %v3859, %v3857
    %v3920 = vpack.c.b16 %v3862, %v3860
    %v3921 = vpack.c.b16 %v3863, %v3861
    %v3922 = vpack.c.b16 %v3866, %v3864
    %v3923 = vpack.c.b16 %v3867, %v3865
    %v3924 = vpack.c.b16 %v3870, %v3868
    %v3925 = vpack.c.b16 %v3871, %v3869
    %v3926 = vpack.c.b16 %v3874, %v3872
    %v3927 = vpack.c.b16 %v3875, %v3873
    %v3928 = vpack.c.b16 %v3878, %v3876
    %v3929 = vpack.c.b16 %v3879, %v3877
    %v3930 = vpack.c.b16 %v3882, %v3880
    %v3931 = vpack.c.b16 %v3883, %v3881
    %v3932 = vpack.c.b16 %v3886, %v3884
    %v3933 = vpack.c.b16 %v3887, %v3885
    %v3934 = vpack.c.b16 %v3890, %v3888
    %v3935 = vpack.c.b16 %v3891, %v3889
    %v3936 = vpack.c.b16 %v3894, %v3892
    %v3937 = vpack.c.b16 %v3895, %v3893
    %v3938 = vpack.c.b16 %v3898, %v3896
    %v3939 = vpack.c.b16 %v3899, %v3897
    %v3940 = vpack.c.b16 %v3902, %v3900
    %v3941 = vpack.c.b16 %v3903, %v3901
    %v3942 = vpack.c.b16 %v3906, %v3904
    %v3943 = vpack.c.b16 %v3907, %v3905
    %v3944 = vpack.c.b16 %v3910, %v3908
    %v3945 = vpack.c.b16 %v3911, %v3909
    %v3946 = vpack.c.b16 %v3914, %v3912
    %v3947 = vpack.c.b16 %v3915, %v3913
    %3980 = vmatprep.subr.bf16.mxu0 %v3917
    %3981 = vmatpush1.bf16.msra.mxu0 %v3916
    %3982 = vmatprep.subr.bf16.mxu0 %v3919
    %3983 = vmatpush1.bf16.msra.mxu0 %v3918
    %3984 = vmatprep.subr.bf16.mxu0 %v3921
    %3985 = vmatpush1.bf16.msra.mxu0 %v3920
    %3986 = vmatprep.subr.bf16.mxu0 %v3923
    %3987 = vmatpush1.bf16.msra.mxu0 %v3922
    %3988 = vmatprep.subr.bf16.mxu0 %v3925
    %3989 = vmatpush1.bf16.msra.mxu0 %v3924
    %3990 = vmatprep.subr.bf16.mxu0 %v3927
    %3991 = vmatpush1.bf16.msra.mxu0 %v3926
    %3992 = vmatprep.subr.bf16.mxu0 %v3929
    %3993 = vmatpush1.bf16.msra.mxu0 %v3928
    %3994 = vmatprep.subr.bf16.mxu0 %v3931
    %3995 = vmatpush1.bf16.msra.mxu0 %v3930
    %3996 = vmatprep.subr.bf16.mxu0 %v3933
    %3997 = vmatpush1.bf16.msra.mxu0 %v3932
    %3998 = vmatprep.subr.bf16.mxu0 %v3935
    %3999 = vmatpush1.bf16.msra.mxu0 %v3934
    %4000 = vmatprep.subr.bf16.mxu0 %v3937
    %4001 = vmatpush1.bf16.msra.mxu0 %v3936
    %4002 = vmatprep.subr.bf16.mxu0 %v3939
    %4003 = vmatpush1.bf16.msra.mxu0 %v3938
    %4004 = vmatprep.subr.bf16.mxu0 %v3941
    %4005 = vmatpush1.bf16.msra.mxu0 %v3940
    %4006 = vmatprep.subr.bf16.mxu0 %v3943
    %4007 = vmatpush1.bf16.msra.mxu0 %v3942
    %4008 = vmatprep.subr.bf16.mxu0 %v3945
    %4009 = vmatpush1.bf16.msra.mxu0 %v3944
    %4010 = vmatprep.subr.bf16.mxu0 %v3947
    %4011 = vmatpush1.bf16.msra.mxu0 %v3946
    %4012 = vmatprep.mubr.bf16.mxu0 %v3746
    %4013 = vmatmul.mubr.bf16.gmra.mrb[0].mxu0 %v3745
    %v4014 = vpop.f32.mrb[0].mxu0
    %v4015 = vadd.f32 %v3813, %v4014
    %v4016 = vpop.f32.mrb[0].mxu0
    %v4017 = vadd.f32 %v3817, %v4016
    %v4018 = vpop.f32.mrb[0].mxu0
    %v4019 = vadd.f32 %v3813, %v4018
    %v4020 = vpop.f32.mrb[0].mxu0
    %v4021 = vadd.f32 %v3817, %v4020
    %4022 = vmatprep.mubr.bf16.mxu0 %v3748
    %4023 = vmatmul.mubr.bf16.gmra.mrb[0].mxu0 %v3747
    %v4024 = vpop.f32.mrb[0].mxu0
    %v4025 = vadd.f32 %v3813, %v4024
    %v4026 = vpop.f32.mrb[0].mxu0
    %v4027 = vadd.f32 %v3817, %v4026
    %v4028 = vpop.f32.mrb[0].mxu0
    %v4029 = vadd.f32 %v3813, %v4028
    %v4030 = vpop.f32.mrb[0].mxu0
    %v4031 = vadd.f32 %v3817, %v4030
    %4032 = vmatprep.mubr.bf16.mxu0 %v3750
    %4033 = vmatmul.mubr.bf16.gmra.mrb[0].mxu0 %v3749
    %v4034 = vpop.f32.mrb[0].mxu0
    %v4035 = vadd.f32 %v3813, %v4034
    %v4036 = vpop.f32.mrb[0].mxu0
    %v4037 = vadd.f32 %v3817, %v4036
    %v4038 = vpop.f32.mrb[0].mxu0
    %v4039 = vadd.f32 %v3813, %v4038
    %v4040 = vpop.f32.mrb[0].mxu0
    %v4041 = vadd.f32 %v3817, %v4040
    %4042 = vmatprep.mubr.bf16.mxu0 %v3752
    %4043 = vmatmul.mubr.bf16.gmra.mrb[0].mxu0 %v3751
    %v4044 = vpop.f32.mrb[0].mxu0
    %v4045 = vadd.f32 %v3813, %v4044
    %v4046 = vpop.f32.mrb[0].mxu0
    %v4047 = vadd.f32 %v3817, %v4046
    %v4048 = vpop.f32.mrb[0].mxu0
    %v4049 = vadd.f32 %v3813, %v4048
    %v4050 = vpop.f32.mrb[0].mxu0
    %v4051 = vadd.f32 %v3817, %v4050
    %4052 = vmatprep.mubr.bf16.mxu0 %v3754
    %4053 = vmatmul.mubr.bf16.gmra.mrb[0].mxu0 %v3753
    %v4054 = vpop.f32.mrb[0].mxu0
    %v4055 = vadd.f32 %v3813, %v4054
    %v4056 = vpop.f32.mrb[0].mxu0
    %v4057 = vadd.f32 %v3817, %v4056
    %v4058 = vpop.f32.mrb[0].mxu0
    %v4059 = vadd.f32 %v3813, %v4058
    %v4060 = vpop.f32.mrb[0].mxu0
    %v4061 = vadd.f32 %v3817, %v4060
    %4062 = vmatprep.mubr.bf16.mxu0 %v3756
    %4063 = vmatmul.mubr.bf16.gmra.mrb[0].mxu0 %v3755
    %v4064 = vpop.f32.mrb[0].mxu0
    %v4065 = vadd.f32 %v3813, %v4064
    %v4066 = vpop.f32.mrb[0].mxu0
    %v4067 = vadd.f32 %v3817, %v4066
    %v4068 = vpop.f32.mrb[0].mxu0
    %v4069 = vadd.f32 %v3813, %v4068
    %v4070 = vpop.f32.mrb[0].mxu0
    %v4071 = vadd.f32 %v3817, %v4070
    %4072 = vmatprep.mubr.bf16.mxu0 %v3758
    %4073 = vmatmul.mubr.bf16.gmra.mrb[0].mxu0 %v3757
    %v4074 = vpop.f32.mrb[0].mxu0
    %v4075 = vadd.f32 %v3813, %v4074
    %v4076 = vpop.f32.mrb[0].mxu0
    %v4077 = vadd.f32 %v3817, %v4076
    %v4078 = vpop.f32.mrb[0].mxu0
    %v4079 = vadd.f32 %v3813, %v4078
    %v4080 = vpop.f32.mrb[0].mxu0
    %v4081 = vadd.f32 %v3817, %v4080
    %4082 = vmatprep.mubr.bf16.mxu0 %v3760
    %4083 = vmatmul.mubr.bf16.gmra.mrb[0].mxu0 %v3759
    %v4084 = vpop.f32.mrb[0].mxu0
    %v4085 = vadd.f32 %v3813, %v4084
    %v4086 = vpop.f32.mrb[0].mxu0
    %v4087 = vadd.f32 %v3817, %v4086
    %v4088 = vpop.f32.mrb[0].mxu0
    %v4089 = vadd.f32 %v3813, %v4088
    %v4090 = vpop.f32.mrb[0].mxu0
    %v4091 = vadd.f32 %v3817, %v4090
    %4092 = vmatprep.mubr.bf16.mxu0 %v3762
    %4093 = vmatmul.mubr.bf16.gmra.mrb[0].mxu0 %v3761
    %v4094 = vpop.f32.mrb[0].mxu0
    %v4095 = vadd.f32 %v3813, %v4094
    %v4096 = vpop.f32.mrb[0].mxu0
    %v4097 = vadd.f32 %v3817, %v4096
    %v4098 = vpop.f32.mrb[0].mxu0
    %v4099 = vadd.f32 %v3813, %v4098
    %v4100 = vpop.f32.mrb[0].mxu0
    %v4101 = vadd.f32 %v3817, %v4100
    %4102 = vmatprep.mubr.bf16.mxu0 %v3764
    %4103 = vmatmul.mubr.bf16.gmra.mrb[0].mxu0 %v3763
    %v4104 = vpop.f32.mrb[0].mxu0
    %v4105 = vadd.f32 %v3813, %v4104
    %v4106 = vpop.f32.mrb[0].mxu0
    %v4107 = vadd.f32 %v3817, %v4106
    %v4108 = vpop.f32.mrb[0].mxu0
    %v4109 = vadd.f32 %v3813, %v4108
    %v4110 = vpop.f32.mrb[0].mxu0
    %v4111 = vadd.f32 %v3817, %v4110
    %4112 = vmatprep.mubr.bf16.mxu0 %v3766
    %4113 = vmatmul.mubr.bf16.gmra.mrb[0].mxu0 %v3765
    %v4114 = vpop.f32.mrb[0].mxu0
    %v4115 = vadd.f32 %v3813, %v4114
    %v4116 = vpop.f32.mrb[0].mxu0
    %v4117 = vadd.f32 %v3817, %v4116
    %v4118 = vpop.f32.mrb[0].mxu0
    %v4119 = vadd.f32 %v3813, %v4118
    %v4120 = vpop.f32.mrb[0].mxu0
    %v4121 = vadd.f32 %v3817, %v4120
    %4122 = vmatprep.mubr.bf16.mxu0 %v3768
    %4123 = vmatmul.mubr.bf16.gmra.mrb[0].mxu0 %v3767
    %v4124 = vpop.f32.mrb[0].mxu0
    %v4125 = vadd.f32 %v3813, %v4124
    %v4126 = vpop.f32.mrb[0].mxu0
    %v4127 = vadd.f32 %v3817, %v4126
    %v4128 = vpop.f32.mrb[0].mxu0
    %v4129 = vadd.f32 %v3813, %v4128
    %v4130 = vpop.f32.mrb[0].mxu0
    %v4131 = vadd.f32 %v3817, %v4130
    %4132 = vmatprep.mubr.bf16.mxu0 %v3770
    %4133 = vmatmul.mubr.bf16.gmra.mrb[0].mxu0 %v3769
    %v4134 = vpop.f32.mrb[0].mxu0
    %v4135 = vadd.f32 %v3813, %v4134
    %v4136 = vpop.f32.mrb[0].mxu0
    %v4137 = vadd.f32 %v3817, %v4136
    %v4138 = vpop.f32.mrb[0].mxu0
    %v4139 = vadd.f32 %v3813, %v4138
    %v4140 = vpop.f32.mrb[0].mxu0
    %v4141 = vadd.f32 %v3817, %v4140
    %4142 = vmatprep.mubr.bf16.mxu0 %v3772
    %4143 = vmatmul.mubr.bf16.gmra.mrb[0].mxu0 %v3771
    %v4144 = vpop.f32.mrb[0].mxu0
    %v4145 = vadd.f32 %v3813, %v4144
    %v4146 = vpop.f32.mrb[0].mxu0
    %v4147 = vadd.f32 %v3817, %v4146
    %v4148 = vpop.f32.mrb[0].mxu0
    %v4149 = vadd.f32 %v3813, %v4148
    %v4150 = vpop.f32.mrb[0].mxu0
    %v4151 = vadd.f32 %v3817, %v4150
    %4152 = vmatprep.mubr.bf16.mxu0 %v3774
    %4153 = vmatmul.mubr.bf16.gmra.mrb[0].mxu0 %v3773
    %v4154 = vpop.f32.mrb[0].mxu0
    %v4155 = vadd.f32 %v3813, %v4154
    %v4156 = vpop.f32.mrb[0].mxu0
    %v4157 = vadd.f32 %v3817, %v4156
    %v4158 = vpop.f32.mrb[0].mxu0
    %v4159 = vadd.f32 %v3813, %v4158
    %v4160 = vpop.f32.mrb[0].mxu0
    %v4161 = vadd.f32 %v3817, %v4160
    %4162 = vmatprep.mubr.bf16.mxu0 %v3776
    %4163 = vmatmul.mubr.bf16.gmra.mrb[0].mxu0 %v3775
    %v4164 = vpop.f32.mrb[0].mxu0
    %v4165 = vadd.f32 %v3813, %v4164
    %v4166 = vpop.f32.mrb[0].mxu0
    %v4167 = vadd.f32 %v3817, %v4166
    %v4168 = vpop.f32.mrb[0].mxu0
    %v4169 = vadd.f32 %v3813, %v4168
    %v4170 = vpop.f32.mrb[0].mxu0
    %v4171 = vadd.f32 %v3817, %v4170
    %4172 = vmatprep.mubr.bf16.mxu0 %v3778
    %4173 = vmatmul.mubr.bf16.gmra.mrb[0].mxu0 %v3777
    %v4174 = vpop.f32.mrb[0].mxu0
    %v4175 = vadd.f32 %v3813, %v4174
    %v4176 = vpop.f32.mrb[0].mxu0
    %v4177 = vadd.f32 %v3817, %v4176
    %v4178 = vpop.f32.mrb[0].mxu0
    %v4179 = vadd.f32 %v3813, %v4178
    %v4180 = vpop.f32.mrb[0].mxu0
    %v4181 = vadd.f32 %v3817, %v4180
    %4182 = vmatprep.mubr.bf16.mxu0 %v3780
    %4183 = vmatmul.mubr.bf16.gmra.mrb[0].mxu0 %v3779
    %v4184 = vpop.f32.mrb[0].mxu0
    %v4185 = vadd.f32 %v3813, %v4184
    %v4186 = vpop.f32.mrb[0].mxu0
    %v4187 = vadd.f32 %v3817, %v4186
    %v4188 = vpop.f32.mrb[0].mxu0
    %v4189 = vadd.f32 %v3813, %v4188
    %v4190 = vpop.f32.mrb[0].mxu0
    %v4191 = vadd.f32 %v3817, %v4190
    %4192 = vmatprep.mubr.bf16.mxu0 %v3782
    %4193 = vmatmul.mubr.bf16.gmra.mrb[0].mxu0 %v3781
    %v4194 = vpop.f32.mrb[0].mxu0
    %v4195 = vadd.f32 %v3813, %v4194
    %v4196 = vpop.f32.mrb[0].mxu0
    %v4197 = vadd.f32 %v3817, %v4196
    %v4198 = vpop.f32.mrb[0].mxu0
    %v4199 = vadd.f32 %v3813, %v4198
    %v4200 = vpop.f32.mrb[0].mxu0
    %v4201 = vadd.f32 %v3817, %v4200
    %4202 = vmatprep.mubr.bf16.mxu0 %v3784
    %4203 = vmatmul.mubr.bf16.gmra.mrb[0].mxu0 %v3783
    %v4204 = vpop.f32.mrb[0].mxu0
    %v4205 = vadd.f32 %v3813, %v4204
    %v4206 = vpop.f32.mrb[0].mxu0
    %v4207 = vadd.f32 %v3817, %v4206
    %v4208 = vpop.f32.mrb[0].mxu0
    %v4209 = vadd.f32 %v3813, %v4208
    %v4210 = vpop.f32.mrb[0].mxu0
    %v4211 = vadd.f32 %v3817, %v4210
    %4212 = vmatprep.mubr.bf16.mxu0 %v3786
    %4213 = vmatmul.mubr.bf16.gmra.mrb[0].mxu0 %v3785
    %v4214 = vpop.f32.mrb[0].mxu0
    %v4215 = vadd.f32 %v3813, %v4214
    %v4216 = vpop.f32.mrb[0].mxu0
    %v4217 = vadd.f32 %v3817, %v4216
    %v4218 = vpop.f32.mrb[0].mxu0
    %v4219 = vadd.f32 %v3813, %v4218
    %v4220 = vpop.f32.mrb[0].mxu0
    %v4221 = vadd.f32 %v3817, %v4220
    %4222 = vmatprep.mubr.bf16.mxu0 %v3788
    %4223 = vmatmul.mubr.bf16.gmra.mrb[0].mxu0 %v3787
    %v4224 = vpop.f32.mrb[0].mxu0
    %v4225 = vadd.f32 %v3813, %v4224
    %v4226 = vpop.f32.mrb[0].mxu0
    %v4227 = vadd.f32 %v3817, %v4226
    %v4228 = vpop.f32.mrb[0].mxu0
    %v4229 = vadd.f32 %v3813, %v4228
    %v4230 = vpop.f32.mrb[0].mxu0
    %v4231 = vadd.f32 %v3817, %v4230
    %4232 = vmatprep.mubr.bf16.mxu0 %v3790
    %4233 = vmatmul.mubr.bf16.gmra.mrb[0].mxu0 %v3789
    %v4234 = vpop.f32.mrb[0].mxu0
    %v4235 = vadd.f32 %v3813, %v4234
    %v4236 = vpop.f32.mrb[0].mxu0
    %v4237 = vadd.f32 %v3817, %v4236
    %v4238 = vpop.f32.mrb[0].mxu0
    %v4239 = vadd.f32 %v3813, %v4238
    %v4240 = vpop.f32.mrb[0].mxu0
    %v4241 = vadd.f32 %v3817, %v4240
    %4242 = vmatprep.mubr.bf16.mxu0 %v3792
    %4243 = vmatmul.mubr.bf16.gmra.mrb[0].mxu0 %v3791
    %v4244 = vpop.f32.mrb[0].mxu0
    %v4245 = vadd.f32 %v3813, %v4244
    %v4246 = vpop.f32.mrb[0].mxu0
    %v4247 = vadd.f32 %v3817, %v4246
    %v4248 = vpop.f32.mrb[0].mxu0
    %v4249 = vadd.f32 %v3813, %v4248
    %v4250 = vpop.f32.mrb[0].mxu0
    %v4251 = vadd.f32 %v3817, %v4250
    %4252 = vmatprep.mubr.bf16.mxu0 %v3794
    %4253 = vmatmul.mubr.bf16.gmra.mrb[0].mxu0 %v3793
    %v4254 = vpop.f32.mrb[0].mxu0
    %v4255 = vadd.f32 %v3813, %v4254
    %v4256 = vpop.f32.mrb[0].mxu0
    %v4257 = vadd.f32 %v3817, %v4256
    %v4258 = vpop.f32.mrb[0].mxu0
    %v4259 = vadd.f32 %v3813, %v4258
    %v4260 = vpop.f32.mrb[0].mxu0
    %v4261 = vadd.f32 %v3817, %v4260
    %4262 = vmatprep.mubr.bf16.mxu0 %v3796
    %4263 = vmatmul.mubr.bf16.gmra.mrb[0].mxu0 %v3795
    %v4264 = vpop.f32.mrb[0].mxu0
    %v4265 = vadd.f32 %v3813, %v4264
    %v4266 = vpop.f32.mrb[0].mxu0
    %v4267 = vadd.f32 %v3817, %v4266
    %v4268 = vpop.f32.mrb[0].mxu0
    %v4269 = vadd.f32 %v3813, %v4268
    %v4270 = vpop.f32.mrb[0].mxu0
    %v4271 = vadd.f32 %v3817, %v4270
    %4272 = vmatprep.mubr.bf16.mxu0 %v3798
    %4273 = vmatmul.mubr.bf16.gmra.mrb[0].mxu0 %v3797
    %v4274 = vpop.f32.mrb[0].mxu0
    %v4275 = vadd.f32 %v3813, %v4274
    %v4276 = vpop.f32.mrb[0].mxu0
    %v4277 = vadd.f32 %v3817, %v4276
    %v4278 = vpop.f32.mrb[0].mxu0
    %v4279 = vadd.f32 %v3813, %v4278
    %v4280 = vpop.f32.mrb[0].mxu0
    %v4281 = vadd.f32 %v3817, %v4280
    %4282 = vmatprep.mubr.bf16.mxu0 %v3800
    %4283 = vmatmul.mubr.bf16.gmra.mrb[0].mxu0 %v3799
    %v4284 = vpop.f32.mrb[0].mxu0
    %v4285 = vadd.f32 %v3813, %v4284
    %v4286 = vpop.f32.mrb[0].mxu0
    %v4287 = vadd.f32 %v3817, %v4286
    %v4288 = vpop.f32.mrb[0].mxu0
    %v4289 = vadd.f32 %v3813, %v4288
    %v4290 = vpop.f32.mrb[0].mxu0
    %v4291 = vadd.f32 %v3817, %v4290
    %4292 = vmatprep.mubr.bf16.mxu0 %v3802
    %4293 = vmatmul.mubr.bf16.gmra.mrb[0].mxu0 %v3801
    %v4294 = vpop.f32.mrb[0].mxu0
    %v4295 = vadd.f32 %v3813, %v4294
    %v4296 = vpop.f32.mrb[0].mxu0
    %v4297 = vadd.f32 %v3817, %v4296
    %v4298 = vpop.f32.mrb[0].mxu0
    %v4299 = vadd.f32 %v3813, %v4298
    %v4300 = vpop.f32.mrb[0].mxu0
    %v4301 = vadd.f32 %v3817, %v4300
    %4302 = vmatprep.mubr.bf16.mxu0 %v3804
    %4303 = vmatmul.mubr.bf16.gmra.mrb[0].mxu0 %v3803
    %v4304 = vpop.f32.mrb[0].mxu0
    %v4305 = vadd.f32 %v3813, %v4304
    %v4306 = vpop.f32.mrb[0].mxu0
    %v4307 = vadd.f32 %v3817, %v4306
    %v4308 = vpop.f32.mrb[0].mxu0
    %v4309 = vadd.f32 %v3813, %v4308
    %v4310 = vpop.f32.mrb[0].mxu0
    %v4311 = vadd.f32 %v3817, %v4310
    %4312 = vmatprep.mubr.bf16.mxu0 %v3806
    %4313 = vmatmul.mubr.bf16.gmra.mrb[0].mxu0 %v3805
    %v4314 = vpop.f32.mrb[0].mxu0
    %v4315 = vadd.f32 %v3813, %v4314
    %v4316 = vpop.f32.mrb[0].mxu0
    %v4317 = vadd.f32 %v3817, %v4316
    %v4318 = vpop.f32.mrb[0].mxu0
    %v4319 = vadd.f32 %v3813, %v4318
    %v4320 = vpop.f32.mrb[0].mxu0
    %v4321 = vadd.f32 %v3817, %v4320
    %4322 = vmatprep.mubr.bf16.mxu0 %v3808
    %4323 = vmatmul.mubr.bf16.gmra.mrb[0].mxu0 %v3807
    %v4324 = vpop.f32.mrb[0].mxu0
    %v4325 = vadd.f32 %v3813, %v4324
    %v4326 = vpop.f32.mrb[0].mxu0
    %v4327 = vadd.f32 %v3817, %v4326
    %v4328 = vpop.f32.mrb[0].mxu0
    %v4329 = vadd.f32 %v3813, %v4328
    %v4330 = vpop.f32.mrb[0].mxu0
    %v4331 = vadd.f32 %v3817, %v4330
    %4332 = vdwg.mxu0
    %v4333 = vmax.f32 %v4015, 0.0
    %v4334 = vmax.f32 %v4017, 0.0
    %v4335 = vmax.f32 %v4019, 0.0
    %v4336 = vmax.f32 %v4021, 0.0
    %v4337 = vmax.f32 %v4025, 0.0
    %v4338 = vmax.f32 %v4027, 0.0
    %v4339 = vmax.f32 %v4029, 0.0
    %v4340 = vmax.f32 %v4031, 0.0
    %v4341 = vmax.f32 %v4035, 0.0
    %v4342 = vmax.f32 %v4037, 0.0
    %v4343 = vmax.f32 %v4039, 0.0
    %v4344 = vmax.f32 %v4041, 0.0
    %v4345 = vmax.f32 %v4045, 0.0
    %v4346 = vmax.f32 %v4047, 0.0
    %v4347 = vmax.f32 %v4049, 0.0
    %v4348 = vmax.f32 %v4051, 0.0
    %v4349 = vmax.f32 %v4055, 0.0
    %v4350 = vmax.f32 %v4057, 0.0
    %v4351 = vmax.f32 %v4059, 0.0
    %v4352 = vmax.f32 %v4061, 0.0
    %v4353 = vmax.f32 %v4065, 0.0
    %v4354 = vmax.f32 %v4067, 0.0
    %v4355 = vmax.f32 %v4069, 0.0
    %v4356 = vmax.f32 %v4071, 0.0
    %v4357 = vmax.f32 %v4075, 0.0
    %v4358 = vmax.f32 %v4077, 0.0
    %v4359 = vmax.f32 %v4079, 0.0
    %v4360 = vmax.f32 %v4081, 0.0
    %v4361 = vmax.f32 %v4085, 0.0
    %v4362 = vmax.f32 %v4087, 0.0
    %v4363 = vmax.f32 %v4089, 0.0
    %v4364 = vmax.f32 %v4091, 0.0
    %v4365 = vmax.f32 %v4095, 0.0
    %v4366 = vmax.f32 %v4097, 0.0
    %v4367 = vmax.f32 %v4099, 0.0
    %v4368 = vmax.f32 %v4101, 0.0
    %v4369 = vmax.f32 %v4105, 0.0
    %v4370 = vmax.f32 %v4107, 0.0
    %v4371 = vmax.f32 %v4109, 0.0
    %v4372 = vmax.f32 %v4111, 0.0
    %v4373 = vmax.f32 %v4115, 0.0
    %v4374 = vmax.f32 %v4117, 0.0
    %v4375 = vmax.f32 %v4119, 0.0
    %v4376 = vmax.f32 %v4121, 0.0
    %v4377 = vmax.f32 %v4125, 0.0
    %v4378 = vmax.f32 %v4127, 0.0
    %v4379 = vmax.f32 %v4129, 0.0
    %v4380 = vmax.f32 %v4131, 0.0
    %v4381 = vmax.f32 %v4135, 0.0
    %v4382 = vmax.f32 %v4137, 0.0
    %v4383 = vmax.f32 %v4139, 0.0
    %v4384 = vmax.f32 %v4141, 0.0
    %v4385 = vmax.f32 %v4145, 0.0
    %v4386 = vmax.f32 %v4147, 0.0
    %v4387 = vmax.f32 %v4149, 0.0
    %v4388 = vmax.f32 %v4151, 0.0
    %v4389 = vmax.f32 %v4155, 0.0
    %v4390 = vmax.f32 %v4157, 0.0
    %v4391 = vmax.f32 %v4159, 0.0
    %v4392 = vmax.f32 %v4161, 0.0
    %v4393 = vmax.f32 %v4165, 0.0
    %v4394 = vmax.f32 %v4167, 0.0
    %v4395 = vmax.f32 %v4169, 0.0
    %v4396 = vmax.f32 %v4171, 0.0
    %v4397 = vmax.f32 %v4175, 0.0
    %v4398 = vmax.f32 %v4177, 0.0
    %v4399 = vmax.f32 %v4179, 0.0
    %v4400 = vmax.f32 %v4181, 0.0
    %v4401 = vmax.f32 %v4185, 0.0
    %v4402 = vmax.f32 %v4187, 0.0
    %v4403 = vmax.f32 %v4189, 0.0
    %v4404 = vmax.f32 %v4191, 0.0
    %v4405 = vmax.f32 %v4195, 0.0
    %v4406 = vmax.f32 %v4197, 0.0
    %v4407 = vmax.f32 %v4199, 0.0
    %v4408 = vmax.f32 %v4201, 0.0
    %v4409 = vmax.f32 %v4205, 0.0
    %v4410 = vmax.f32 %v4207, 0.0
    %v4411 = vmax.f32 %v4209, 0.0
    %v4412 = vmax.f32 %v4211, 0.0
    %v4413 = vmax.f32 %v4215, 0.0
    %v4414 = vmax.f32 %v4217, 0.0
    %v4415 = vmax.f32 %v4219, 0.0
    %v4416 = vmax.f32 %v4221, 0.0
    %v4417 = vmax.f32 %v4225, 0.0
    %v4418 = vmax.f32 %v4227, 0.0
    %v4419 = vmax.f32 %v4229, 0.0
    %v4420 = vmax.f32 %v4231, 0.0
    %v4421 = vmax.f32 %v4235, 0.0
    %v4422 = vmax.f32 %v4237, 0.0
    %v4423 = vmax.f32 %v4239, 0.0
    %v4424 = vmax.f32 %v4241, 0.0
    %v4425 = vmax.f32 %v4245, 0.0
    %v4426 = vmax.f32 %v4247, 0.0
    %v4427 = vmax.f32 %v4249, 0.0
    %v4428 = vmax.f32 %v4251, 0.0
    %v4429 = vmax.f32 %v4255, 0.0
    %v4430 = vmax.f32 %v4257, 0.0
    %v4431 = vmax.f32 %v4259, 0.0
    %v4432 = vmax.f32 %v4261, 0.0
    %v4433 = vmax.f32 %v4265, 0.0
    %v4434 = vmax.f32 %v4267, 0.0
    %v4435 = vmax.f32 %v4269, 0.0
    %v4436 = vmax.f32 %v4271, 0.0
    %v4437 = vmax.f32 %v4275, 0.0
    %v4438 = vmax.f32 %v4277, 0.0
    %v4439 = vmax.f32 %v4279, 0.0
    %v4440 = vmax.f32 %v4281, 0.0
    %v4441 = vmax.f32 %v4285, 0.0
    %v4442 = vmax.f32 %v4287, 0.0
    %v4443 = vmax.f32 %v4289, 0.0
    %v4444 = vmax.f32 %v4291, 0.0
    %v4445 = vmax.f32 %v4295, 0.0
    %v4446 = vmax.f32 %v4297, 0.0
    %v4447 = vmax.f32 %v4299, 0.0
    %v4448 = vmax.f32 %v4301, 0.0
    %v4449 = vmax.f32 %v4305, 0.0
    %v4450 = vmax.f32 %v4307, 0.0
    %v4451 = vmax.f32 %v4309, 0.0
    %v4452 = vmax.f32 %v4311, 0.0
    %v4453 = vmax.f32 %v4315, 0.0
    %v4454 = vmax.f32 %v4317, 0.0
    %v4455 = vmax.f32 %v4319, 0.0
    %v4456 = vmax.f32 %v4321, 0.0
    %v4457 = vmax.f32 %v4325, 0.0
    %v4458 = vmax.f32 %v4327, 0.0
    %v4459 = vmax.f32 %v4329, 0.0
    %v4460 = vmax.f32 %v4331, 0.0
    %v4461 = vpack.c.bf16 %v4335, %v4333
    %v4462 = vpack.c.bf16 %v4336, %v4334
    %v4463 = vpack.c.bf16 %v4339, %v4337
    %v4464 = vpack.c.bf16 %v4340, %v4338
    %v4465 = vpack.c.bf16 %v4343, %v4341
    %v4466 = vpack.c.bf16 %v4344, %v4342
    %v4467 = vpack.c.bf16 %v4347, %v4345
    %v4468 = vpack.c.bf16 %v4348, %v4346
    %v4469 = vpack.c.bf16 %v4351, %v4349
    %v4470 = vpack.c.bf16 %v4352, %v4350
    %v4471 = vpack.c.bf16 %v4355, %v4353
    %v4472 = vpack.c.bf16 %v4356, %v4354
    %v4473 = vpack.c.bf16 %v4359, %v4357
    %v4474 = vpack.c.bf16 %v4360, %v4358
    %v4475 = vpack.c.bf16 %v4363, %v4361
    %v4476 = vpack.c.bf16 %v4364, %v4362
    %v4477 = vpack.c.bf16 %v4367, %v4365
    %v4478 = vpack.c.bf16 %v4368, %v4366
    %v4479 = vpack.c.bf16 %v4371, %v4369
    %v4480 = vpack.c.bf16 %v4372, %v4370
    %v4481 = vpack.c.bf16 %v4375, %v4373
    %v4482 = vpack.c.bf16 %v4376, %v4374
    %v4483 = vpack.c.bf16 %v4379, %v4377
    %v4484 = vpack.c.bf16 %v4380, %v4378
    %v4485 = vpack.c.bf16 %v4383, %v4381
    %v4486 = vpack.c.bf16 %v4384, %v4382
    %v4487 = vpack.c.bf16 %v4387, %v4385
    %v4488 = vpack.c.bf16 %v4388, %v4386
    %v4489 = vpack.c.bf16 %v4391, %v4389
    %v4490 = vpack.c.bf16 %v4392, %v4390
    %v4491 = vpack.c.bf16 %v4395, %v4393
    %v4492 = vpack.c.bf16 %v4396, %v4394
    %v4493 = vpack.c.bf16 %v4399, %v4397
    %v4494 = vpack.c.bf16 %v4400, %v4398
    %v4495 = vpack.c.bf16 %v4403, %v4401
    %v4496 = vpack.c.bf16 %v4404, %v4402
    %v4497 = vpack.c.bf16 %v4407, %v4405
    %v4498 = vpack.c.bf16 %v4408, %v4406
    %v4499 = vpack.c.bf16 %v4411, %v4409
    %v4500 = vpack.c.bf16 %v4412, %v4410
    %v4501 = vpack.c.bf16 %v4415, %v4413
    %v4502 = vpack.c.bf16 %v4416, %v4414
    %v4503 = vpack.c.bf16 %v4419, %v4417
    %v4504 = vpack.c.bf16 %v4420, %v4418
    %v4505 = vpack.c.bf16 %v4423, %v4421
    %v4506 = vpack.c.bf16 %v4424, %v4422
    %v4507 = vpack.c.bf16 %v4427, %v4425
    %v4508 = vpack.c.bf16 %v4428, %v4426
    %v4509 = vpack.c.bf16 %v4431, %v4429
    %v4510 = vpack.c.bf16 %v4432, %v4430
    %v4511 = vpack.c.bf16 %v4435, %v4433
    %v4512 = vpack.c.bf16 %v4436, %v4434
    %v4513 = vpack.c.bf16 %v4439, %v4437
    %v4514 = vpack.c.bf16 %v4440, %v4438
    %v4515 = vpack.c.bf16 %v4443, %v4441
    %v4516 = vpack.c.bf16 %v4444, %v4442
    %v4517 = vpack.c.bf16 %v4447, %v4445
    %v4518 = vpack.c.bf16 %v4448, %v4446
    %v4519 = vpack.c.bf16 %v4451, %v4449
    %v4520 = vpack.c.bf16 %v4452, %v4450
    %v4521 = vpack.c.bf16 %v4455, %v4453
    %v4522 = vpack.c.bf16 %v4456, %v4454
    %v4523 = vpack.c.bf16 %v4459, %v4457
    %v4524 = vpack.c.bf16 %v4460, %v4458
    %v4533 = vunpack.c.l.b16 %v486
    %v4534 = vunpack.c.h.b16 %v486
    %v4535 = vunpack.c.l.b16 %v487
    %v4536 = vunpack.c.h.b16 %v487
    %v4537 = vunpack.c.l.b16 %v488
    %v4538 = vunpack.c.h.b16 %v488
    %v4539 = vunpack.c.l.b16 %v489
    %v4540 = vunpack.c.h.b16 %v489
    %v4541 = vunpack.c.l.b16 %v490
    %v4542 = vunpack.c.h.b16 %v490
    %v4543 = vunpack.c.l.b16 %v491
    %v4544 = vunpack.c.h.b16 %v491
    %v4545 = vunpack.c.l.b16 %v492
    %v4546 = vunpack.c.h.b16 %v492
    %v4547 = vunpack.c.l.b16 %v493
    %v4548 = vunpack.c.h.b16 %v493
    %v4549 = vpack.c.b16 %v4535, %v4533
    %v4550 = vpack.c.b16 %v4536, %v4534
    %v4551 = vpack.c.b16 %v4539, %v4537
    %v4552 = vpack.c.b16 %v4540, %v4538
    %v4553 = vpack.c.b16 %v4543, %v4541
    %v4554 = vpack.c.b16 %v4544, %v4542
    %v4555 = vpack.c.b16 %v4547, %v4545
    %v4556 = vpack.c.b16 %v4548, %v4546
    %4565 = vmatprep.subr.bf16.mxu0 %v4550
    %4566 = vmatpush1.bf16.msra.mxu0 %v4549
    %4567 = vmatprep.subr.bf16.mxu0 %v4552
    %4568 = vmatpush1.bf16.msra.mxu0 %v4551
    %4569 = vmatprep.subr.bf16.mxu0 %v4554
    %4570 = vmatpush1.bf16.msra.mxu0 %v4553
    %4571 = vmatprep.subr.bf16.mxu0 %v4556
    %4572 = vmatpush1.bf16.msra.mxu0 %v4555
    %4573 = vmatprep.subr.bf16.mxu0 0
    %4574 = vmatpush1.bf16.msra.mxu0 0
    %4575 = vmatprep.subr.bf16.mxu0 0
    %4576 = vmatpush1.bf16.msra.mxu0 0
    %4577 = vmatprep.subr.bf16.mxu0 0
    %4578 = vmatpush1.bf16.msra.mxu0 0
    %4579 = vmatprep.subr.bf16.mxu0 0
    %4580 = vmatpush1.bf16.msra.mxu0 0
    %4581 = vmatprep.subr.bf16.mxu0 0
    %4582 = vmatpush1.bf16.msra.mxu0 0
    %4583 = vmatprep.subr.bf16.mxu0 0
    %4584 = vmatpush1.bf16.msra.mxu0 0
    %4585 = vmatprep.subr.bf16.mxu0 0
    %4586 = vmatpush1.bf16.msra.mxu0 0
    %4587 = vmatprep.subr.bf16.mxu0 0
    %4588 = vmatpush1.bf16.msra.mxu0 0
    %4589 = vmatprep.subr.bf16.mxu0 0
    %4590 = vmatpush1.bf16.msra.mxu0 0
    %4591 = vmatprep.subr.bf16.mxu0 0
    %4592 = vmatpush1.bf16.msra.mxu0 0
    %4593 = vmatprep.subr.bf16.mxu0 0
    %4594 = vmatpush1.bf16.msra.mxu0 0
    %4595 = vmatprep.subr.bf16.mxu0 0
    %4596 = vmatpush1.bf16.msra.mxu0 0
    %4597 = vmatprep.mubr.bf16.mxu0 0
    %4598 = vmatmul.mubr.bf16.gmra.mrb[0].mxu0 %v1021
    %v4599 = vpop.f32.mrb[0].mxu0
    %v4600 = vadd.f32 0.0, %v4599
    %v4601 = vpop.f32.mrb[0].mxu0
    %v4602 = vadd.f32 0.0, %v4601
    %v4603 = vpop.f32.mrb[0].mxu0
    %v4604 = vadd.f32 0.0, %v4603
    %v4605 = vpop.f32.mrb[0].mxu0
    %v4606 = vadd.f32 0.0, %v4605
    %4607 = vmatprep.mubr.bf16.mxu0 0
    %4608 = vmatmul.mubr.bf16.gmra.mrb[0].mxu0 %v1024
    %v4609 = vpop.f32.mrb[0].mxu0
    %v4610 = vadd.f32 0.0, %v4609
    %v4611 = vpop.f32.mrb[0].mxu0
    %v4612 = vadd.f32 0.0, %v4611
    %v4613 = vpop.f32.mrb[0].mxu0
    %v4614 = vadd.f32 0.0, %v4613
    %v4615 = vpop.f32.mrb[0].mxu0
    %v4616 = vadd.f32 0.0, %v4615
    %4617 = vmatprep.mubr.bf16.mxu0 0
    %4618 = vmatmul.mubr.bf16.gmra.mrb[0].mxu0 %v1027
    %v4619 = vpop.f32.mrb[0].mxu0
    %v4620 = vadd.f32 0.0, %v4619
    %v4621 = vpop.f32.mrb[0].mxu0
    %v4622 = vadd.f32 0.0, %v4621
    %v4623 = vpop.f32.mrb[0].mxu0
    %v4624 = vadd.f32 0.0, %v4623
    %v4625 = vpop.f32.mrb[0].mxu0
    %v4626 = vadd.f32 0.0, %v4625
    %4627 = vmatprep.mubr.bf16.mxu0 0
    %4628 = vmatmul.mubr.bf16.gmra.mrb[0].mxu0 %v1030
    %v4629 = vpop.f32.mrb[0].mxu0
    %v4630 = vadd.f32 0.0, %v4629
    %v4631 = vpop.f32.mrb[0].mxu0
    %v4632 = vadd.f32 0.0, %v4631
    %v4633 = vpop.f32.mrb[0].mxu0
    %v4634 = vadd.f32 0.0, %v4633
    %v4635 = vpop.f32.mrb[0].mxu0
    %v4636 = vadd.f32 0.0, %v4635
    %4637 = vmatprep.mubr.bf16.mxu0 0
    %4638 = vmatmul.mubr.bf16.gmra.mrb[0].mxu0 %v1033
    %v4639 = vpop.f32.mrb[0].mxu0
    %v4640 = vadd.f32 0.0, %v4639
    %v4641 = vpop.f32.mrb[0].mxu0
    %v4642 = vadd.f32 0.0, %v4641
    %v4643 = vpop.f32.mrb[0].mxu0
    %v4644 = vadd.f32 0.0, %v4643
    %v4645 = vpop.f32.mrb[0].mxu0
    %v4646 = vadd.f32 0.0, %v4645
    %4647 = vmatprep.mubr.bf16.mxu0 0
    %4648 = vmatmul.mubr.bf16.gmra.mrb[0].mxu0 %v1036
    %v4649 = vpop.f32.mrb[0].mxu0
    %v4650 = vadd.f32 0.0, %v4649
    %v4651 = vpop.f32.mrb[0].mxu0
    %v4652 = vadd.f32 0.0, %v4651
    %v4653 = vpop.f32.mrb[0].mxu0
    %v4654 = vadd.f32 0.0, %v4653
    %v4655 = vpop.f32.mrb[0].mxu0
    %v4656 = vadd.f32 0.0, %v4655
    %4657 = vmatprep.mubr.bf16.mxu0 0
    %4658 = vmatmul.mubr.bf16.gmra.mrb[0].mxu0 %v1039
    %v4659 = vpop.f32.mrb[0].mxu0
    %v4660 = vadd.f32 0.0, %v4659
    %v4661 = vpop.f32.mrb[0].mxu0
    %v4662 = vadd.f32 0.0, %v4661
    %v4663 = vpop.f32.mrb[0].mxu0
    %v4664 = vadd.f32 0.0, %v4663
    %v4665 = vpop.f32.mrb[0].mxu0
    %v4666 = vadd.f32 0.0, %v4665
    %4667 = vmatprep.mubr.bf16.mxu0 0
    %4668 = vmatmul.mubr.bf16.gmra.mrb[0].mxu0 %v1042
    %v4669 = vpop.f32.mrb[0].mxu0
    %v4670 = vadd.f32 0.0, %v4669
    %v4671 = vpop.f32.mrb[0].mxu0
    %v4672 = vadd.f32 0.0, %v4671
    %v4673 = vpop.f32.mrb[0].mxu0
    %v4674 = vadd.f32 0.0, %v4673
    %v4675 = vpop.f32.mrb[0].mxu0
    %v4676 = vadd.f32 0.0, %v4675
    %4677 = vmatprep.mubr.bf16.mxu0 0
    %4678 = vmatmul.mubr.bf16.gmra.mrb[0].mxu0 %v1045
    %v4679 = vpop.f32.mrb[0].mxu0
    %v4680 = vadd.f32 0.0, %v4679
    %v4681 = vpop.f32.mrb[0].mxu0
    %v4682 = vadd.f32 0.0, %v4681
    %v4683 = vpop.f32.mrb[0].mxu0
    %v4684 = vadd.f32 0.0, %v4683
    %v4685 = vpop.f32.mrb[0].mxu0
    %v4686 = vadd.f32 0.0, %v4685
    %4687 = vmatprep.mubr.bf16.mxu0 0
    %4688 = vmatmul.mubr.bf16.gmra.mrb[0].mxu0 %v1048
    %v4689 = vpop.f32.mrb[0].mxu0
    %v4690 = vadd.f32 0.0, %v4689
    %v4691 = vpop.f32.mrb[0].mxu0
    %v4692 = vadd.f32 0.0, %v4691
    %v4693 = vpop.f32.mrb[0].mxu0
    %v4694 = vadd.f32 0.0, %v4693
    %v4695 = vpop.f32.mrb[0].mxu0
    %v4696 = vadd.f32 0.0, %v4695
    %4697 = vmatprep.mubr.bf16.mxu0 0
    %4698 = vmatmul.mubr.bf16.gmra.mrb[0].mxu0 %v1051
    %v4699 = vpop.f32.mrb[0].mxu0
    %v4700 = vadd.f32 0.0, %v4699
    %v4701 = vpop.f32.mrb[0].mxu0
    %v4702 = vadd.f32 0.0, %v4701
    %v4703 = vpop.f32.mrb[0].mxu0
    %v4704 = vadd.f32 0.0, %v4703
    %v4705 = vpop.f32.mrb[0].mxu0
    %v4706 = vadd.f32 0.0, %v4705
    %4707 = vmatprep.mubr.bf16.mxu0 0
    %4708 = vmatmul.mubr.bf16.gmra.mrb[0].mxu0 %v1054
    %v4709 = vpop.f32.mrb[0].mxu0
    %v4710 = vadd.f32 0.0, %v4709
    %v4711 = vpop.f32.mrb[0].mxu0
    %v4712 = vadd.f32 0.0, %v4711
    %v4713 = vpop.f32.mrb[0].mxu0
    %v4714 = vadd.f32 0.0, %v4713
    %v4715 = vpop.f32.mrb[0].mxu0
    %v4716 = vadd.f32 0.0, %v4715
    %4717 = vmatprep.mubr.bf16.mxu0 0
    %4718 = vmatmul.mubr.bf16.gmra.mrb[0].mxu0 %v1057
    %v4719 = vpop.f32.mrb[0].mxu0
    %v4720 = vadd.f32 0.0, %v4719
    %v4721 = vpop.f32.mrb[0].mxu0
    %v4722 = vadd.f32 0.0, %v4721
    %v4723 = vpop.f32.mrb[0].mxu0
    %v4724 = vadd.f32 0.0, %v4723
    %v4725 = vpop.f32.mrb[0].mxu0
    %v4726 = vadd.f32 0.0, %v4725
    %4727 = vmatprep.mubr.bf16.mxu0 0
    %4728 = vmatmul.mubr.bf16.gmra.mrb[0].mxu0 %v1060
    %v4729 = vpop.f32.mrb[0].mxu0
    %v4730 = vadd.f32 0.0, %v4729
    %v4731 = vpop.f32.mrb[0].mxu0
    %v4732 = vadd.f32 0.0, %v4731
    %v4733 = vpop.f32.mrb[0].mxu0
    %v4734 = vadd.f32 0.0, %v4733
    %v4735 = vpop.f32.mrb[0].mxu0
    %v4736 = vadd.f32 0.0, %v4735
    %4737 = vmatprep.mubr.bf16.mxu0 0
    %4738 = vmatmul.mubr.bf16.gmra.mrb[0].mxu0 %v1063
    %v4739 = vpop.f32.mrb[0].mxu0
    %v4740 = vadd.f32 0.0, %v4739
    %v4741 = vpop.f32.mrb[0].mxu0
    %v4742 = vadd.f32 0.0, %v4741
    %v4743 = vpop.f32.mrb[0].mxu0
    %v4744 = vadd.f32 0.0, %v4743
    %v4745 = vpop.f32.mrb[0].mxu0
    %v4746 = vadd.f32 0.0, %v4745
    %4747 = vmatprep.mubr.bf16.mxu0 0
    %4748 = vmatmul.mubr.bf16.gmra.mrb[0].mxu0 %v1066
    %v4749 = vpop.f32.mrb[0].mxu0
    %v4750 = vadd.f32 0.0, %v4749
    %v4751 = vpop.f32.mrb[0].mxu0
    %v4752 = vadd.f32 0.0, %v4751
    %v4753 = vpop.f32.mrb[0].mxu0
    %v4754 = vadd.f32 0.0, %v4753
    %v4755 = vpop.f32.mrb[0].mxu0
    %v4756 = vadd.f32 0.0, %v4755
    %4757 = vmatprep.mubr.bf16.mxu0 0
    %4758 = vmatmul.mubr.bf16.gmra.mrb[0].mxu0 %v1069
    %v4759 = vpop.f32.mrb[0].mxu0
    %v4760 = vadd.f32 0.0, %v4759
    %v4761 = vpop.f32.mrb[0].mxu0
    %v4762 = vadd.f32 0.0, %v4761
    %v4763 = vpop.f32.mrb[0].mxu0
    %v4764 = vadd.f32 0.0, %v4763
    %v4765 = vpop.f32.mrb[0].mxu0
    %v4766 = vadd.f32 0.0, %v4765
    %4767 = vmatprep.mubr.bf16.mxu0 0
    %4768 = vmatmul.mubr.bf16.gmra.mrb[0].mxu0 %v1072
    %v4769 = vpop.f32.mrb[0].mxu0
    %v4770 = vadd.f32 0.0, %v4769
    %v4771 = vpop.f32.mrb[0].mxu0
    %v4772 = vadd.f32 0.0, %v4771
    %v4773 = vpop.f32.mrb[0].mxu0
    %v4774 = vadd.f32 0.0, %v4773
    %v4775 = vpop.f32.mrb[0].mxu0
    %v4776 = vadd.f32 0.0, %v4775
    %4777 = vmatprep.mubr.bf16.mxu0 0
    %4778 = vmatmul.mubr.bf16.gmra.mrb[0].mxu0 %v1075
    %v4779 = vpop.f32.mrb[0].mxu0
    %v4780 = vadd.f32 0.0, %v4779
    %v4781 = vpop.f32.mrb[0].mxu0
    %v4782 = vadd.f32 0.0, %v4781
    %v4783 = vpop.f32.mrb[0].mxu0
    %v4784 = vadd.f32 0.0, %v4783
    %v4785 = vpop.f32.mrb[0].mxu0
    %v4786 = vadd.f32 0.0, %v4785
    %4787 = vmatprep.mubr.bf16.mxu0 0
    %4788 = vmatmul.mubr.bf16.gmra.mrb[0].mxu0 %v1078
    %v4789 = vpop.f32.mrb[0].mxu0
    %v4790 = vadd.f32 0.0, %v4789
    %v4791 = vpop.f32.mrb[0].mxu0
    %v4792 = vadd.f32 0.0, %v4791
    %v4793 = vpop.f32.mrb[0].mxu0
    %v4794 = vadd.f32 0.0, %v4793
    %v4795 = vpop.f32.mrb[0].mxu0
    %v4796 = vadd.f32 0.0, %v4795
    %4797 = vmatprep.mubr.bf16.mxu0 0
    %4798 = vmatmul.mubr.bf16.gmra.mrb[0].mxu0 %v1081
    %v4799 = vpop.f32.mrb[0].mxu0
    %v4800 = vadd.f32 0.0, %v4799
    %v4801 = vpop.f32.mrb[0].mxu0
    %v4802 = vadd.f32 0.0, %v4801
    %v4803 = vpop.f32.mrb[0].mxu0
    %v4804 = vadd.f32 0.0, %v4803
    %v4805 = vpop.f32.mrb[0].mxu0
    %v4806 = vadd.f32 0.0, %v4805
    %4807 = vmatprep.mubr.bf16.mxu0 0
    %4808 = vmatmul.mubr.bf16.gmra.mrb[0].mxu0 %v1084
    %v4809 = vpop.f32.mrb[0].mxu0
    %v4810 = vadd.f32 0.0, %v4809
    %v4811 = vpop.f32.mrb[0].mxu0
    %v4812 = vadd.f32 0.0, %v4811
    %v4813 = vpop.f32.mrb[0].mxu0
    %v4814 = vadd.f32 0.0, %v4813
    %v4815 = vpop.f32.mrb[0].mxu0
    %v4816 = vadd.f32 0.0, %v4815
    %4817 = vmatprep.mubr.bf16.mxu0 0
    %4818 = vmatmul.mubr.bf16.gmra.mrb[0].mxu0 %v1087
    %v4819 = vpop.f32.mrb[0].mxu0
    %v4820 = vadd.f32 0.0, %v4819
    %v4821 = vpop.f32.mrb[0].mxu0
    %v4822 = vadd.f32 0.0, %v4821
    %v4823 = vpop.f32.mrb[0].mxu0
    %v4824 = vadd.f32 0.0, %v4823
    %v4825 = vpop.f32.mrb[0].mxu0
    %v4826 = vadd.f32 0.0, %v4825
    %4827 = vmatprep.mubr.bf16.mxu0 0
    %4828 = vmatmul.mubr.bf16.gmra.mrb[0].mxu0 %v1090
    %v4829 = vpop.f32.mrb[0].mxu0
    %v4830 = vadd.f32 0.0, %v4829
    %v4831 = vpop.f32.mrb[0].mxu0
    %v4832 = vadd.f32 0.0, %v4831
    %v4833 = vpop.f32.mrb[0].mxu0
    %v4834 = vadd.f32 0.0, %v4833
    %v4835 = vpop.f32.mrb[0].mxu0
    %v4836 = vadd.f32 0.0, %v4835
    %4837 = vmatprep.mubr.bf16.mxu0 0
    %4838 = vmatmul.mubr.bf16.gmra.mrb[0].mxu0 %v1093
    %v4839 = vpop.f32.mrb[0].mxu0
    %v4840 = vadd.f32 0.0, %v4839
    %v4841 = vpop.f32.mrb[0].mxu0
    %v4842 = vadd.f32 0.0, %v4841
    %v4843 = vpop.f32.mrb[0].mxu0
    %v4844 = vadd.f32 0.0, %v4843
    %v4845 = vpop.f32.mrb[0].mxu0
    %v4846 = vadd.f32 0.0, %v4845
    %4847 = vmatprep.mubr.bf16.mxu0 0
    %4848 = vmatmul.mubr.bf16.gmra.mrb[0].mxu0 %v1096
    %v4849 = vpop.f32.mrb[0].mxu0
    %v4850 = vadd.f32 0.0, %v4849
    %v4851 = vpop.f32.mrb[0].mxu0
    %v4852 = vadd.f32 0.0, %v4851
    %v4853 = vpop.f32.mrb[0].mxu0
    %v4854 = vadd.f32 0.0, %v4853
    %v4855 = vpop.f32.mrb[0].mxu0
    %v4856 = vadd.f32 0.0, %v4855
    %4857 = vmatprep.mubr.bf16.mxu0 0
    %4858 = vmatmul.mubr.bf16.gmra.mrb[0].mxu0 %v1099
    %v4859 = vpop.f32.mrb[0].mxu0
    %v4860 = vadd.f32 0.0, %v4859
    %v4861 = vpop.f32.mrb[0].mxu0
    %v4862 = vadd.f32 0.0, %v4861
    %v4863 = vpop.f32.mrb[0].mxu0
    %v4864 = vadd.f32 0.0, %v4863
    %v4865 = vpop.f32.mrb[0].mxu0
    %v4866 = vadd.f32 0.0, %v4865
    %4867 = vmatprep.mubr.bf16.mxu0 0
    %4868 = vmatmul.mubr.bf16.gmra.mrb[0].mxu0 %v1102
    %v4869 = vpop.f32.mrb[0].mxu0
    %v4870 = vadd.f32 0.0, %v4869
    %v4871 = vpop.f32.mrb[0].mxu0
    %v4872 = vadd.f32 0.0, %v4871
    %v4873 = vpop.f32.mrb[0].mxu0
    %v4874 = vadd.f32 0.0, %v4873
    %v4875 = vpop.f32.mrb[0].mxu0
    %v4876 = vadd.f32 0.0, %v4875
    %4877 = vmatprep.mubr.bf16.mxu0 0
    %4878 = vmatmul.mubr.bf16.gmra.mrb[0].mxu0 %v1105
    %v4879 = vpop.f32.mrb[0].mxu0
    %v4880 = vadd.f32 0.0, %v4879
    %v4881 = vpop.f32.mrb[0].mxu0
    %v4882 = vadd.f32 0.0, %v4881
    %v4883 = vpop.f32.mrb[0].mxu0
    %v4884 = vadd.f32 0.0, %v4883
    %v4885 = vpop.f32.mrb[0].mxu0
    %v4886 = vadd.f32 0.0, %v4885
    %4887 = vmatprep.mubr.bf16.mxu0 0
    %4888 = vmatmul.mubr.bf16.gmra.mrb[0].mxu0 %v1108
    %v4889 = vpop.f32.mrb[0].mxu0
    %v4890 = vadd.f32 0.0, %v4889
    %v4891 = vpop.f32.mrb[0].mxu0
    %v4892 = vadd.f32 0.0, %v4891
    %v4893 = vpop.f32.mrb[0].mxu0
    %v4894 = vadd.f32 0.0, %v4893
    %v4895 = vpop.f32.mrb[0].mxu0
    %v4896 = vadd.f32 0.0, %v4895
    %4897 = vmatprep.mubr.bf16.mxu0 0
    %4898 = vmatmul.mubr.bf16.gmra.mrb[0].mxu0 %v1111
    %v4899 = vpop.f32.mrb[0].mxu0
    %v4900 = vadd.f32 0.0, %v4899
    %v4901 = vpop.f32.mrb[0].mxu0
    %v4902 = vadd.f32 0.0, %v4901
    %v4903 = vpop.f32.mrb[0].mxu0
    %v4904 = vadd.f32 0.0, %v4903
    %v4905 = vpop.f32.mrb[0].mxu0
    %v4906 = vadd.f32 0.0, %v4905
    %4907 = vmatprep.mubr.bf16.mxu0 0
    %4908 = vmatmul.mubr.bf16.gmra.mrb[0].mxu0 %v1114
    %v4909 = vpop.f32.mrb[0].mxu0
    %v4910 = vadd.f32 0.0, %v4909
    %v4911 = vpop.f32.mrb[0].mxu0
    %v4912 = vadd.f32 0.0, %v4911
    %v4913 = vpop.f32.mrb[0].mxu0
    %v4914 = vadd.f32 0.0, %v4913
    %v4915 = vpop.f32.mrb[0].mxu0
    %v4916 = vadd.f32 0.0, %v4915
    %4917 = vdwg.mxu0
    %v4950 = vunpack.c.l.b16 %v454
    %v4951 = vunpack.c.h.b16 %v454
    %v4952 = vunpack.c.l.b16 %v455
    %v4953 = vunpack.c.h.b16 %v455
    %v4954 = vunpack.c.l.b16 %v456
    %v4955 = vunpack.c.h.b16 %v456
    %v4956 = vunpack.c.l.b16 %v457
    %v4957 = vunpack.c.h.b16 %v457
    %v4958 = vunpack.c.l.b16 %v458
    %v4959 = vunpack.c.h.b16 %v458
    %v4960 = vunpack.c.l.b16 %v459
    %v4961 = vunpack.c.h.b16 %v459
    %v4962 = vunpack.c.l.b16 %v460
    %v4963 = vunpack.c.h.b16 %v460
    %v4964 = vunpack.c.l.b16 %v461
    %v4965 = vunpack.c.h.b16 %v461
    %v4966 = vunpack.c.l.b16 %v462
    %v4967 = vunpack.c.h.b16 %v462
    %v4968 = vunpack.c.l.b16 %v463
    %v4969 = vunpack.c.h.b16 %v463
    %v4970 = vunpack.c.l.b16 %v464
    %v4971 = vunpack.c.h.b16 %v464
    %v4972 = vunpack.c.l.b16 %v465
    %v4973 = vunpack.c.h.b16 %v465
    %v4974 = vunpack.c.l.b16 %v466
    %v4975 = vunpack.c.h.b16 %v466
    %v4976 = vunpack.c.l.b16 %v467
    %v4977 = vunpack.c.h.b16 %v467
    %v4978 = vunpack.c.l.b16 %v468
    %v4979 = vunpack.c.h.b16 %v468
    %v4980 = vunpack.c.l.b16 %v469
    %v4981 = vunpack.c.h.b16 %v469
    %v4982 = vunpack.c.l.b16 %v470
    %v4983 = vunpack.c.h.b16 %v470
    %v4984 = vunpack.c.l.b16 %v471
    %v4985 = vunpack.c.h.b16 %v471
    %v4986 = vunpack.c.l.b16 %v472
    %v4987 = vunpack.c.h.b16 %v472
    %v4988 = vunpack.c.l.b16 %v473
    %v4989 = vunpack.c.h.b16 %v473
    %v4990 = vunpack.c.l.b16 %v474
    %v4991 = vunpack.c.h.b16 %v474
    %v4992 = vunpack.c.l.b16 %v475
    %v4993 = vunpack.c.h.b16 %v475
    %v4994 = vunpack.c.l.b16 %v476
    %v4995 = vunpack.c.h.b16 %v476
    %v4996 = vunpack.c.l.b16 %v477
    %v4997 = vunpack.c.h.b16 %v477
    %v4998 = vunpack.c.l.b16 %v478
    %v4999 = vunpack.c.h.b16 %v478
    %v5000 = vunpack.c.l.b16 %v479
    %v5001 = vunpack.c.h.b16 %v479
    %v5002 = vunpack.c.l.b16 %v480
    %v5003 = vunpack.c.h.b16 %v480
    %v5004 = vunpack.c.l.b16 %v481
    %v5005 = vunpack.c.h.b16 %v481
    %v5006 = vunpack.c.l.b16 %v482
    %v5007 = vunpack.c.h.b16 %v482
    %v5008 = vunpack.c.l.b16 %v483
    %v5009 = vunpack.c.h.b16 %v483
    %v5010 = vunpack.c.l.b16 %v484
    %v5011 = vunpack.c.h.b16 %v484
    %v5012 = vunpack.c.l.b16 %v485
    %v5013 = vunpack.c.h.b16 %v485
    %v5014 = vpack.c.b16 %v4952, %v4950
    %v5015 = vpack.c.b16 %v4953, %v4951
    %v5016 = vpack.c.b16 %v4956, %v4954
    %v5017 = vpack.c.b16 %v4957, %v4955
    %v5018 = vpack.c.b16 %v4960, %v4958
    %v5019 = vpack.c.b16 %v4961, %v4959
    %v5020 = vpack.c.b16 %v4964, %v4962
    %v5021 = vpack.c.b16 %v4965, %v4963
    %v5022 = vpack.c.b16 %v4968, %v4966
    %v5023 = vpack.c.b16 %v4969, %v4967
    %v5024 = vpack.c.b16 %v4972, %v4970
    %v5025 = vpack.c.b16 %v4973, %v4971
    %v5026 = vpack.c.b16 %v4976, %v4974
    %v5027 = vpack.c.b16 %v4977, %v4975
    %v5028 = vpack.c.b16 %v4980, %v4978
    %v5029 = vpack.c.b16 %v4981, %v4979
    %v5030 = vpack.c.b16 %v4984, %v4982
    %v5031 = vpack.c.b16 %v4985, %v4983
    %v5032 = vpack.c.b16 %v4988, %v4986
    %v5033 = vpack.c.b16 %v4989, %v4987
    %v5034 = vpack.c.b16 %v4992, %v4990
    %v5035 = vpack.c.b16 %v4993, %v4991
    %v5036 = vpack.c.b16 %v4996, %v4994
    %v5037 = vpack.c.b16 %v4997, %v4995
    %v5038 = vpack.c.b16 %v5000, %v4998
    %v5039 = vpack.c.b16 %v5001, %v4999
    %v5040 = vpack.c.b16 %v5004, %v5002
    %v5041 = vpack.c.b16 %v5005, %v5003
    %v5042 = vpack.c.b16 %v5008, %v5006
    %v5043 = vpack.c.b16 %v5009, %v5007
    %v5044 = vpack.c.b16 %v5012, %v5010
    %v5045 = vpack.c.b16 %v5013, %v5011
    %5078 = vmatprep.subr.bf16.mxu0 %v5015
    %5079 = vmatpush1.bf16.msra.mxu0 %v5014
    %5080 = vmatprep.subr.bf16.mxu0 %v5017
    %5081 = vmatpush1.bf16.msra.mxu0 %v5016
    %5082 = vmatprep.subr.bf16.mxu0 %v5019
    %5083 = vmatpush1.bf16.msra.mxu0 %v5018
    %5084 = vmatprep.subr.bf16.mxu0 %v5021
    %5085 = vmatpush1.bf16.msra.mxu0 %v5020
    %5086 = vmatprep.subr.bf16.mxu0 %v5023
    %5087 = vmatpush1.bf16.msra.mxu0 %v5022
    %5088 = vmatprep.subr.bf16.mxu0 %v5025
    %5089 = vmatpush1.bf16.msra.mxu0 %v5024
    %5090 = vmatprep.subr.bf16.mxu0 %v5027
    %5091 = vmatpush1.bf16.msra.mxu0 %v5026
    %5092 = vmatprep.subr.bf16.mxu0 %v5029
    %5093 = vmatpush1.bf16.msra.mxu0 %v5028
    %5094 = vmatprep.subr.bf16.mxu0 %v5031
    %5095 = vmatpush1.bf16.msra.mxu0 %v5030
    %5096 = vmatprep.subr.bf16.mxu0 %v5033
    %5097 = vmatpush1.bf16.msra.mxu0 %v5032
    %5098 = vmatprep.subr.bf16.mxu0 %v5035
    %5099 = vmatpush1.bf16.msra.mxu0 %v5034
    %5100 = vmatprep.subr.bf16.mxu0 %v5037
    %5101 = vmatpush1.bf16.msra.mxu0 %v5036
    %5102 = vmatprep.subr.bf16.mxu0 %v5039
    %5103 = vmatpush1.bf16.msra.mxu0 %v5038
    %5104 = vmatprep.subr.bf16.mxu0 %v5041
    %5105 = vmatpush1.bf16.msra.mxu0 %v5040
    %5106 = vmatprep.subr.bf16.mxu0 %v5043
    %5107 = vmatpush1.bf16.msra.mxu0 %v5042
    %5108 = vmatprep.subr.bf16.mxu0 %v5045
    %5109 = vmatpush1.bf16.msra.mxu0 %v5044
    %5110 = vmatprep.mubr.bf16.mxu0 %v4462
    %5111 = vmatmul.mubr.bf16.gmra.mrb[0].mxu0 %v4461
    %v5112 = vpop.f32.mrb[0].mxu0
    %v5113 = vadd.f32 %v4600, %v5112
    %v5114 = vpop.f32.mrb[0].mxu0
    %v5115 = vadd.f32 %v4602, %v5114
    %v5116 = vpop.f32.mrb[0].mxu0
    %v5117 = vadd.f32 %v4604, %v5116
    %v5118 = vpop.f32.mrb[0].mxu0
    %v5119 = vadd.f32 %v4606, %v5118
    %5120 = vmatprep.mubr.bf16.mxu0 %v4464
    %5121 = vmatmul.mubr.bf16.gmra.mrb[0].mxu0 %v4463
    %v5122 = vpop.f32.mrb[0].mxu0
    %v5123 = vadd.f32 %v4610, %v5122
    %v5124 = vpop.f32.mrb[0].mxu0
    %v5125 = vadd.f32 %v4612, %v5124
    %v5126 = vpop.f32.mrb[0].mxu0
    %v5127 = vadd.f32 %v4614, %v5126
    %v5128 = vpop.f32.mrb[0].mxu0
    %v5129 = vadd.f32 %v4616, %v5128
    %5130 = vmatprep.mubr.bf16.mxu0 %v4466
    %5131 = vmatmul.mubr.bf16.gmra.mrb[0].mxu0 %v4465
    %v5132 = vpop.f32.mrb[0].mxu0
    %v5133 = vadd.f32 %v4620, %v5132
    %v5134 = vpop.f32.mrb[0].mxu0
    %v5135 = vadd.f32 %v4622, %v5134
    %v5136 = vpop.f32.mrb[0].mxu0
    %v5137 = vadd.f32 %v4624, %v5136
    %v5138 = vpop.f32.mrb[0].mxu0
    %v5139 = vadd.f32 %v4626, %v5138
    %5140 = vmatprep.mubr.bf16.mxu0 %v4468
    %5141 = vmatmul.mubr.bf16.gmra.mrb[0].mxu0 %v4467
    %v5142 = vpop.f32.mrb[0].mxu0
    %v5143 = vadd.f32 %v4630, %v5142
    %v5144 = vpop.f32.mrb[0].mxu0
    %v5145 = vadd.f32 %v4632, %v5144
    %v5146 = vpop.f32.mrb[0].mxu0
    %v5147 = vadd.f32 %v4634, %v5146
    %v5148 = vpop.f32.mrb[0].mxu0
    %v5149 = vadd.f32 %v4636, %v5148
    %5150 = vmatprep.mubr.bf16.mxu0 %v4470
    %5151 = vmatmul.mubr.bf16.gmra.mrb[0].mxu0 %v4469
    %v5152 = vpop.f32.mrb[0].mxu0
    %v5153 = vadd.f32 %v4640, %v5152
    %v5154 = vpop.f32.mrb[0].mxu0
    %v5155 = vadd.f32 %v4642, %v5154
    %v5156 = vpop.f32.mrb[0].mxu0
    %v5157 = vadd.f32 %v4644, %v5156
    %v5158 = vpop.f32.mrb[0].mxu0
    %v5159 = vadd.f32 %v4646, %v5158
    %5160 = vmatprep.mubr.bf16.mxu0 %v4472
    %5161 = vmatmul.mubr.bf16.gmra.mrb[0].mxu0 %v4471
    %v5162 = vpop.f32.mrb[0].mxu0
    %v5163 = vadd.f32 %v4650, %v5162
    %v5164 = vpop.f32.mrb[0].mxu0
    %v5165 = vadd.f32 %v4652, %v5164
    %v5166 = vpop.f32.mrb[0].mxu0
    %v5167 = vadd.f32 %v4654, %v5166
    %v5168 = vpop.f32.mrb[0].mxu0
    %v5169 = vadd.f32 %v4656, %v5168
    %5170 = vmatprep.mubr.bf16.mxu0 %v4474
    %5171 = vmatmul.mubr.bf16.gmra.mrb[0].mxu0 %v4473
    %v5172 = vpop.f32.mrb[0].mxu0
    %v5173 = vadd.f32 %v4660, %v5172
    %v5174 = vpop.f32.mrb[0].mxu0
    %v5175 = vadd.f32 %v4662, %v5174
    %v5176 = vpop.f32.mrb[0].mxu0
    %v5177 = vadd.f32 %v4664, %v5176
    %v5178 = vpop.f32.mrb[0].mxu0
    %v5179 = vadd.f32 %v4666, %v5178
    %5180 = vmatprep.mubr.bf16.mxu0 %v4476
    %5181 = vmatmul.mubr.bf16.gmra.mrb[0].mxu0 %v4475
    %v5182 = vpop.f32.mrb[0].mxu0
    %v5183 = vadd.f32 %v4670, %v5182
    %v5184 = vpop.f32.mrb[0].mxu0
    %v5185 = vadd.f32 %v4672, %v5184
    %v5186 = vpop.f32.mrb[0].mxu0
    %v5187 = vadd.f32 %v4674, %v5186
    %v5188 = vpop.f32.mrb[0].mxu0
    %v5189 = vadd.f32 %v4676, %v5188
    %5190 = vmatprep.mubr.bf16.mxu0 %v4478
    %5191 = vmatmul.mubr.bf16.gmra.mrb[0].mxu0 %v4477
    %v5192 = vpop.f32.mrb[0].mxu0
    %v5193 = vadd.f32 %v4680, %v5192
    %v5194 = vpop.f32.mrb[0].mxu0
    %v5195 = vadd.f32 %v4682, %v5194
    %v5196 = vpop.f32.mrb[0].mxu0
    %v5197 = vadd.f32 %v4684, %v5196
    %v5198 = vpop.f32.mrb[0].mxu0
    %v5199 = vadd.f32 %v4686, %v5198
    %5200 = vmatprep.mubr.bf16.mxu0 %v4480
    %5201 = vmatmul.mubr.bf16.gmra.mrb[0].mxu0 %v4479
    %v5202 = vpop.f32.mrb[0].mxu0
    %v5203 = vadd.f32 %v4690, %v5202
    %v5204 = vpop.f32.mrb[0].mxu0
    %v5205 = vadd.f32 %v4692, %v5204
    %v5206 = vpop.f32.mrb[0].mxu0
    %v5207 = vadd.f32 %v4694, %v5206
    %v5208 = vpop.f32.mrb[0].mxu0
    %v5209 = vadd.f32 %v4696, %v5208
    %5210 = vmatprep.mubr.bf16.mxu0 %v4482
    %5211 = vmatmul.mubr.bf16.gmra.mrb[0].mxu0 %v4481
    %v5212 = vpop.f32.mrb[0].mxu0
    %v5213 = vadd.f32 %v4700, %v5212
    %v5214 = vpop.f32.mrb[0].mxu0
    %v5215 = vadd.f32 %v4702, %v5214
    %v5216 = vpop.f32.mrb[0].mxu0
    %v5217 = vadd.f32 %v4704, %v5216
    %v5218 = vpop.f32.mrb[0].mxu0
    %v5219 = vadd.f32 %v4706, %v5218
    %5220 = vmatprep.mubr.bf16.mxu0 %v4484
    %5221 = vmatmul.mubr.bf16.gmra.mrb[0].mxu0 %v4483
    %v5222 = vpop.f32.mrb[0].mxu0
    %v5223 = vadd.f32 %v4710, %v5222
    %v5224 = vpop.f32.mrb[0].mxu0
    %v5225 = vadd.f32 %v4712, %v5224
    %v5226 = vpop.f32.mrb[0].mxu0
    %v5227 = vadd.f32 %v4714, %v5226
    %v5228 = vpop.f32.mrb[0].mxu0
    %v5229 = vadd.f32 %v4716, %v5228
    %5230 = vmatprep.mubr.bf16.mxu0 %v4486
    %5231 = vmatmul.mubr.bf16.gmra.mrb[0].mxu0 %v4485
    %v5232 = vpop.f32.mrb[0].mxu0
    %v5233 = vadd.f32 %v4720, %v5232
    %v5234 = vpop.f32.mrb[0].mxu0
    %v5235 = vadd.f32 %v4722, %v5234
    %v5236 = vpop.f32.mrb[0].mxu0
    %v5237 = vadd.f32 %v4724, %v5236
    %v5238 = vpop.f32.mrb[0].mxu0
    %v5239 = vadd.f32 %v4726, %v5238
    %5240 = vmatprep.mubr.bf16.mxu0 %v4488
    %5241 = vmatmul.mubr.bf16.gmra.mrb[0].mxu0 %v4487
    %v5242 = vpop.f32.mrb[0].mxu0
    %v5243 = vadd.f32 %v4730, %v5242
    %v5244 = vpop.f32.mrb[0].mxu0
    %v5245 = vadd.f32 %v4732, %v5244
    %v5246 = vpop.f32.mrb[0].mxu0
    %v5247 = vadd.f32 %v4734, %v5246
    %v5248 = vpop.f32.mrb[0].mxu0
    %v5249 = vadd.f32 %v4736, %v5248
    %5250 = vmatprep.mubr.bf16.mxu0 %v4490
    %5251 = vmatmul.mubr.bf16.gmra.mrb[0].mxu0 %v4489
    %v5252 = vpop.f32.mrb[0].mxu0
    %v5253 = vadd.f32 %v4740, %v5252
    %v5254 = vpop.f32.mrb[0].mxu0
    %v5255 = vadd.f32 %v4742, %v5254
    %v5256 = vpop.f32.mrb[0].mxu0
    %v5257 = vadd.f32 %v4744, %v5256
    %v5258 = vpop.f32.mrb[0].mxu0
    %v5259 = vadd.f32 %v4746, %v5258
    %5260 = vmatprep.mubr.bf16.mxu0 %v4492
    %5261 = vmatmul.mubr.bf16.gmra.mrb[0].mxu0 %v4491
    %v5262 = vpop.f32.mrb[0].mxu0
    %v5263 = vadd.f32 %v4750, %v5262
    %v5264 = vpop.f32.mrb[0].mxu0
    %v5265 = vadd.f32 %v4752, %v5264
    %v5266 = vpop.f32.mrb[0].mxu0
    %v5267 = vadd.f32 %v4754, %v5266
    %v5268 = vpop.f32.mrb[0].mxu0
    %v5269 = vadd.f32 %v4756, %v5268
    %5270 = vmatprep.mubr.bf16.mxu0 %v4494
    %5271 = vmatmul.mubr.bf16.gmra.mrb[0].mxu0 %v4493
    %v5272 = vpop.f32.mrb[0].mxu0
    %v5273 = vadd.f32 %v4760, %v5272
    %v5274 = vpop.f32.mrb[0].mxu0
    %v5275 = vadd.f32 %v4762, %v5274
    %v5276 = vpop.f32.mrb[0].mxu0
    %v5277 = vadd.f32 %v4764, %v5276
    %v5278 = vpop.f32.mrb[0].mxu0
    %v5279 = vadd.f32 %v4766, %v5278
    %5280 = vmatprep.mubr.bf16.mxu0 %v4496
    %5281 = vmatmul.mubr.bf16.gmra.mrb[0].mxu0 %v4495
    %v5282 = vpop.f32.mrb[0].mxu0
    %v5283 = vadd.f32 %v4770, %v5282
    %v5284 = vpop.f32.mrb[0].mxu0
    %v5285 = vadd.f32 %v4772, %v5284
    %v5286 = vpop.f32.mrb[0].mxu0
    %v5287 = vadd.f32 %v4774, %v5286
    %v5288 = vpop.f32.mrb[0].mxu0
    %v5289 = vadd.f32 %v4776, %v5288
    %5290 = vmatprep.mubr.bf16.mxu0 %v4498
    %5291 = vmatmul.mubr.bf16.gmra.mrb[0].mxu0 %v4497
    %v5292 = vpop.f32.mrb[0].mxu0
    %v5293 = vadd.f32 %v4780, %v5292
    %v5294 = vpop.f32.mrb[0].mxu0
    %v5295 = vadd.f32 %v4782, %v5294
    %v5296 = vpop.f32.mrb[0].mxu0
    %v5297 = vadd.f32 %v4784, %v5296
    %v5298 = vpop.f32.mrb[0].mxu0
    %v5299 = vadd.f32 %v4786, %v5298
    %5300 = vmatprep.mubr.bf16.mxu0 %v4500
    %5301 = vmatmul.mubr.bf16.gmra.mrb[0].mxu0 %v4499
    %v5302 = vpop.f32.mrb[0].mxu0
    %v5303 = vadd.f32 %v4790, %v5302
    %v5304 = vpop.f32.mrb[0].mxu0
    %v5305 = vadd.f32 %v4792, %v5304
    %v5306 = vpop.f32.mrb[0].mxu0
    %v5307 = vadd.f32 %v4794, %v5306
    %v5308 = vpop.f32.mrb[0].mxu0
    %v5309 = vadd.f32 %v4796, %v5308
    %5310 = vmatprep.mubr.bf16.mxu0 %v4502
    %5311 = vmatmul.mubr.bf16.gmra.mrb[0].mxu0 %v4501
    %v5312 = vpop.f32.mrb[0].mxu0
    %v5313 = vadd.f32 %v4800, %v5312
    %v5314 = vpop.f32.mrb[0].mxu0
    %v5315 = vadd.f32 %v4802, %v5314
    %v5316 = vpop.f32.mrb[0].mxu0
    %v5317 = vadd.f32 %v4804, %v5316
    %v5318 = vpop.f32.mrb[0].mxu0
    %v5319 = vadd.f32 %v4806, %v5318
    %5320 = vmatprep.mubr.bf16.mxu0 %v4504
    %5321 = vmatmul.mubr.bf16.gmra.mrb[0].mxu0 %v4503
    %v5322 = vpop.f32.mrb[0].mxu0
    %v5323 = vadd.f32 %v4810, %v5322
    %v5324 = vpop.f32.mrb[0].mxu0
    %v5325 = vadd.f32 %v4812, %v5324
    %v5326 = vpop.f32.mrb[0].mxu0
    %v5327 = vadd.f32 %v4814, %v5326
    %v5328 = vpop.f32.mrb[0].mxu0
    %v5329 = vadd.f32 %v4816, %v5328
    %5330 = vmatprep.mubr.bf16.mxu0 %v4506
    %5331 = vmatmul.mubr.bf16.gmra.mrb[0].mxu0 %v4505
    %v5332 = vpop.f32.mrb[0].mxu0
    %v5333 = vadd.f32 %v4820, %v5332
    %v5334 = vpop.f32.mrb[0].mxu0
    %v5335 = vadd.f32 %v4822, %v5334
    %v5336 = vpop.f32.mrb[0].mxu0
    %v5337 = vadd.f32 %v4824, %v5336
    %v5338 = vpop.f32.mrb[0].mxu0
    %v5339 = vadd.f32 %v4826, %v5338
    %5340 = vmatprep.mubr.bf16.mxu0 %v4508
    %5341 = vmatmul.mubr.bf16.gmra.mrb[0].mxu0 %v4507
    %v5342 = vpop.f32.mrb[0].mxu0
    %v5343 = vadd.f32 %v4830, %v5342
    %v5344 = vpop.f32.mrb[0].mxu0
    %v5345 = vadd.f32 %v4832, %v5344
    %v5346 = vpop.f32.mrb[0].mxu0
    %v5347 = vadd.f32 %v4834, %v5346
    %v5348 = vpop.f32.mrb[0].mxu0
    %v5349 = vadd.f32 %v4836, %v5348
    %5350 = vmatprep.mubr.bf16.mxu0 %v4510
    %5351 = vmatmul.mubr.bf16.gmra.mrb[0].mxu0 %v4509
    %v5352 = vpop.f32.mrb[0].mxu0
    %v5353 = vadd.f32 %v4840, %v5352
    %v5354 = vpop.f32.mrb[0].mxu0
    %v5355 = vadd.f32 %v4842, %v5354
    %v5356 = vpop.f32.mrb[0].mxu0
    %v5357 = vadd.f32 %v4844, %v5356
    %v5358 = vpop.f32.mrb[0].mxu0
    %v5359 = vadd.f32 %v4846, %v5358
    %5360 = vmatprep.mubr.bf16.mxu0 %v4512
    %5361 = vmatmul.mubr.bf16.gmra.mrb[0].mxu0 %v4511
    %v5362 = vpop.f32.mrb[0].mxu0
    %v5363 = vadd.f32 %v4850, %v5362
    %v5364 = vpop.f32.mrb[0].mxu0
    %v5365 = vadd.f32 %v4852, %v5364
    %v5366 = vpop.f32.mrb[0].mxu0
    %v5367 = vadd.f32 %v4854, %v5366
    %v5368 = vpop.f32.mrb[0].mxu0
    %v5369 = vadd.f32 %v4856, %v5368
    %5370 = vmatprep.mubr.bf16.mxu0 %v4514
    %5371 = vmatmul.mubr.bf16.gmra.mrb[0].mxu0 %v4513
    %v5372 = vpop.f32.mrb[0].mxu0
    %v5373 = vadd.f32 %v4860, %v5372
    %v5374 = vpop.f32.mrb[0].mxu0
    %v5375 = vadd.f32 %v4862, %v5374
    %v5376 = vpop.f32.mrb[0].mxu0
    %v5377 = vadd.f32 %v4864, %v5376
    %v5378 = vpop.f32.mrb[0].mxu0
    %v5379 = vadd.f32 %v4866, %v5378
    %5380 = vmatprep.mubr.bf16.mxu0 %v4516
    %5381 = vmatmul.mubr.bf16.gmra.mrb[0].mxu0 %v4515
    %v5382 = vpop.f32.mrb[0].mxu0
    %v5383 = vadd.f32 %v4870, %v5382
    %v5384 = vpop.f32.mrb[0].mxu0
    %v5385 = vadd.f32 %v4872, %v5384
    %v5386 = vpop.f32.mrb[0].mxu0
    %v5387 = vadd.f32 %v4874, %v5386
    %v5388 = vpop.f32.mrb[0].mxu0
    %v5389 = vadd.f32 %v4876, %v5388
    %5390 = vmatprep.mubr.bf16.mxu0 %v4518
    %5391 = vmatmul.mubr.bf16.gmra.mrb[0].mxu0 %v4517
    %v5392 = vpop.f32.mrb[0].mxu0
    %v5393 = vadd.f32 %v4880, %v5392
    %v5394 = vpop.f32.mrb[0].mxu0
    %v5395 = vadd.f32 %v4882, %v5394
    %v5396 = vpop.f32.mrb[0].mxu0
    %v5397 = vadd.f32 %v4884, %v5396
    %v5398 = vpop.f32.mrb[0].mxu0
    %v5399 = vadd.f32 %v4886, %v5398
    %5400 = vmatprep.mubr.bf16.mxu0 %v4520
    %5401 = vmatmul.mubr.bf16.gmra.mrb[0].mxu0 %v4519
    %v5402 = vpop.f32.mrb[0].mxu0
    %v5403 = vadd.f32 %v4890, %v5402
    %v5404 = vpop.f32.mrb[0].mxu0
    %v5405 = vadd.f32 %v4892, %v5404
    %v5406 = vpop.f32.mrb[0].mxu0
    %v5407 = vadd.f32 %v4894, %v5406
    %v5408 = vpop.f32.mrb[0].mxu0
    %v5409 = vadd.f32 %v4896, %v5408
    %5410 = vmatprep.mubr.bf16.mxu0 %v4522
    %5411 = vmatmul.mubr.bf16.gmra.mrb[0].mxu0 %v4521
    %v5412 = vpop.f32.mrb[0].mxu0
    %v5413 = vadd.f32 %v4900, %v5412
    %v5414 = vpop.f32.mrb[0].mxu0
    %v5415 = vadd.f32 %v4902, %v5414
    %v5416 = vpop.f32.mrb[0].mxu0
    %v5417 = vadd.f32 %v4904, %v5416
    %v5418 = vpop.f32.mrb[0].mxu0
    %v5419 = vadd.f32 %v4906, %v5418
    %5420 = vmatprep.mubr.bf16.mxu0 %v4524
    %5421 = vmatmul.mubr.bf16.gmra.mrb[0].mxu0 %v4523
    %v5422 = vpop.f32.mrb[0].mxu0
    %v5423 = vadd.f32 %v4910, %v5422
    %v5424 = vpop.f32.mrb[0].mxu0
    %v5425 = vadd.f32 %v4912, %v5424
    %v5426 = vpop.f32.mrb[0].mxu0
    %v5427 = vadd.f32 %v4914, %v5426
    %v5428 = vpop.f32.mrb[0].mxu0
    %v5429 = vadd.f32 %v4916, %v5428
    %5430 = vdwg.mxu0
    %v5432 = vlaneseq
    %v5433 = vshrl.u32 %v5432, 7
    %v5434 = vsub.s32 0, %v5433
    %v5435 = vrot.slane %v494, %v5434
    %v5436 = vlaneseq
    %v5437 = vshrl.u32 %v5436, 7
    %v5438 = vsub.s32 1, %v5437
    %v5439 = vrot.slane %v494, %v5438
    %v5442 = vadd.f32 %v5113, %v5435
    %v5443 = vadd.f32 %v5115, %v5439
    %v5444 = vadd.f32 %v5117, %v5435
    %v5445 = vadd.f32 %v5119, %v5439
    %v5446 = vadd.f32 %v5123, %v5435
    %v5447 = vadd.f32 %v5125, %v5439
    %v5448 = vadd.f32 %v5127, %v5435
    %v5449 = vadd.f32 %v5129, %v5439
    %v5450 = vadd.f32 %v5133, %v5435
    %v5451 = vadd.f32 %v5135, %v5439
    %v5452 = vadd.f32 %v5137, %v5435
    %v5453 = vadd.f32 %v5139, %v5439
    %v5454 = vadd.f32 %v5143, %v5435
    %v5455 = vadd.f32 %v5145, %v5439
    %v5456 = vadd.f32 %v5147, %v5435
    %v5457 = vadd.f32 %v5149, %v5439
    %v5458 = vadd.f32 %v5153, %v5435
    %v5459 = vadd.f32 %v5155, %v5439
    %v5460 = vadd.f32 %v5157, %v5435
    %v5461 = vadd.f32 %v5159, %v5439
    %v5462 = vadd.f32 %v5163, %v5435
    %v5463 = vadd.f32 %v5165, %v5439
    %v5464 = vadd.f32 %v5167, %v5435
    %v5465 = vadd.f32 %v5169, %v5439
    %v5466 = vadd.f32 %v5173, %v5435
    %v5467 = vadd.f32 %v5175, %v5439
    %v5468 = vadd.f32 %v5177, %v5435
    %v5469 = vadd.f32 %v5179, %v5439
    %v5470 = vadd.f32 %v5183, %v5435
    %v5471 = vadd.f32 %v5185, %v5439
    %v5472 = vadd.f32 %v5187, %v5435
    %v5473 = vadd.f32 %v5189, %v5439
    %v5474 = vadd.f32 %v5193, %v5435
    %v5475 = vadd.f32 %v5195, %v5439
    %v5476 = vadd.f32 %v5197, %v5435
    %v5477 = vadd.f32 %v5199, %v5439
    %v5478 = vadd.f32 %v5203, %v5435
    %v5479 = vadd.f32 %v5205, %v5439
    %v5480 = vadd.f32 %v5207, %v5435
    %v5481 = vadd.f32 %v5209, %v5439
    %v5482 = vadd.f32 %v5213, %v5435
    %v5483 = vadd.f32 %v5215, %v5439
    %v5484 = vadd.f32 %v5217, %v5435
    %v5485 = vadd.f32 %v5219, %v5439
    %v5486 = vadd.f32 %v5223, %v5435
    %v5487 = vadd.f32 %v5225, %v5439
    %v5488 = vadd.f32 %v5227, %v5435
    %v5489 = vadd.f32 %v5229, %v5439
    %v5490 = vadd.f32 %v5233, %v5435
    %v5491 = vadd.f32 %v5235, %v5439
    %v5492 = vadd.f32 %v5237, %v5435
    %v5493 = vadd.f32 %v5239, %v5439
    %v5494 = vadd.f32 %v5243, %v5435
    %v5495 = vadd.f32 %v5245, %v5439
    %v5496 = vadd.f32 %v5247, %v5435
    %v5497 = vadd.f32 %v5249, %v5439
    %v5498 = vadd.f32 %v5253, %v5435
    %v5499 = vadd.f32 %v5255, %v5439
    %v5500 = vadd.f32 %v5257, %v5435
    %v5501 = vadd.f32 %v5259, %v5439
    %v5502 = vadd.f32 %v5263, %v5435
    %v5503 = vadd.f32 %v5265, %v5439
    %v5504 = vadd.f32 %v5267, %v5435
    %v5505 = vadd.f32 %v5269, %v5439
    %v5506 = vadd.f32 %v5273, %v5435
    %v5507 = vadd.f32 %v5275, %v5439
    %v5508 = vadd.f32 %v5277, %v5435
    %v5509 = vadd.f32 %v5279, %v5439
    %v5510 = vadd.f32 %v5283, %v5435
    %v5511 = vadd.f32 %v5285, %v5439
    %v5512 = vadd.f32 %v5287, %v5435
    %v5513 = vadd.f32 %v5289, %v5439
    %v5514 = vadd.f32 %v5293, %v5435
    %v5515 = vadd.f32 %v5295, %v5439
    %v5516 = vadd.f32 %v5297, %v5435
    %v5517 = vadd.f32 %v5299, %v5439
    %v5518 = vadd.f32 %v5303, %v5435
    %v5519 = vadd.f32 %v5305, %v5439
    %v5520 = vadd.f32 %v5307, %v5435
    %v5521 = vadd.f32 %v5309, %v5439
    %v5522 = vadd.f32 %v5313, %v5435
    %v5523 = vadd.f32 %v5315, %v5439
    %v5524 = vadd.f32 %v5317, %v5435
    %v5525 = vadd.f32 %v5319, %v5439
    %v5526 = vadd.f32 %v5323, %v5435
    %v5527 = vadd.f32 %v5325, %v5439
    %v5528 = vadd.f32 %v5327, %v5435
    %v5529 = vadd.f32 %v5329, %v5439
    %v5530 = vadd.f32 %v5333, %v5435
    %v5531 = vadd.f32 %v5335, %v5439
    %v5532 = vadd.f32 %v5337, %v5435
    %v5533 = vadd.f32 %v5339, %v5439
    %v5534 = vadd.f32 %v5343, %v5435
    %v5535 = vadd.f32 %v5345, %v5439
    %v5536 = vadd.f32 %v5347, %v5435
    %v5537 = vadd.f32 %v5349, %v5439
    %v5538 = vadd.f32 %v5353, %v5435
    %v5539 = vadd.f32 %v5355, %v5439
    %v5540 = vadd.f32 %v5357, %v5435
    %v5541 = vadd.f32 %v5359, %v5439
    %v5542 = vadd.f32 %v5363, %v5435
    %v5543 = vadd.f32 %v5365, %v5439
    %v5544 = vadd.f32 %v5367, %v5435
    %v5545 = vadd.f32 %v5369, %v5439
    %v5546 = vadd.f32 %v5373, %v5435
    %v5547 = vadd.f32 %v5375, %v5439
    %v5548 = vadd.f32 %v5377, %v5435
    %v5549 = vadd.f32 %v5379, %v5439
    %v5550 = vadd.f32 %v5383, %v5435
    %v5551 = vadd.f32 %v5385, %v5439
    %v5552 = vadd.f32 %v5387, %v5435
    %v5553 = vadd.f32 %v5389, %v5439
    %v5554 = vadd.f32 %v5393, %v5435
    %v5555 = vadd.f32 %v5395, %v5439
    %v5556 = vadd.f32 %v5397, %v5435
    %v5557 = vadd.f32 %v5399, %v5439
    %v5558 = vadd.f32 %v5403, %v5435
    %v5559 = vadd.f32 %v5405, %v5439
    %v5560 = vadd.f32 %v5407, %v5435
    %v5561 = vadd.f32 %v5409, %v5439
    %v5562 = vadd.f32 %v5413, %v5435
    %v5563 = vadd.f32 %v5415, %v5439
    %v5564 = vadd.f32 %v5417, %v5435
    %v5565 = vadd.f32 %v5419, %v5439
    %v5566 = vadd.f32 %v5423, %v5435
    %v5567 = vadd.f32 %v5425, %v5439
    %v5568 = vadd.f32 %v5427, %v5435
    %v5569 = vadd.f32 %v5429, %v5439
    %v5570 = vmax.f32 %v5442, 0.0
    %v5571 = vmax.f32 %v5443, 0.0
    %v5572 = vmax.f32 %v5444, 0.0
    %v5573 = vmax.f32 %v5445, 0.0
    %v5574 = vmax.f32 %v5446, 0.0
    %v5575 = vmax.f32 %v5447, 0.0
    %v5576 = vmax.f32 %v5448, 0.0
    %v5577 = vmax.f32 %v5449, 0.0
    %v5578 = vmax.f32 %v5450, 0.0
    %v5579 = vmax.f32 %v5451, 0.0
    %v5580 = vmax.f32 %v5452, 0.0
    %v5581 = vmax.f32 %v5453, 0.0
    %v5582 = vmax.f32 %v5454, 0.0
    %v5583 = vmax.f32 %v5455, 0.0
    %v5584 = vmax.f32 %v5456, 0.0
    %v5585 = vmax.f32 %v5457, 0.0
    %v5586 = vmax.f32 %v5458, 0.0
    %v5587 = vmax.f32 %v5459, 0.0
    %v5588 = vmax.f32 %v5460, 0.0
    %v5589 = vmax.f32 %v5461, 0.0
    %v5590 = vmax.f32 %v5462, 0.0
    %v5591 = vmax.f32 %v5463, 0.0
    %v5592 = vmax.f32 %v5464, 0.0
    %v5593 = vmax.f32 %v5465, 0.0
    %v5594 = vmax.f32 %v5466, 0.0
    %v5595 = vmax.f32 %v5467, 0.0
    %v5596 = vmax.f32 %v5468, 0.0
    %v5597 = vmax.f32 %v5469, 0.0
    %v5598 = vmax.f32 %v5470, 0.0
    %v5599 = vmax.f32 %v5471, 0.0
    %v5600 = vmax.f32 %v5472, 0.0
    %v5601 = vmax.f32 %v5473, 0.0
    %v5602 = vmax.f32 %v5474, 0.0
    %v5603 = vmax.f32 %v5475, 0.0
    %v5604 = vmax.f32 %v5476, 0.0
    %v5605 = vmax.f32 %v5477, 0.0
    %v5606 = vmax.f32 %v5478, 0.0
    %v5607 = vmax.f32 %v5479, 0.0
    %v5608 = vmax.f32 %v5480, 0.0
    %v5609 = vmax.f32 %v5481, 0.0
    %v5610 = vmax.f32 %v5482, 0.0
    %v5611 = vmax.f32 %v5483, 0.0
    %v5612 = vmax.f32 %v5484, 0.0
    %v5613 = vmax.f32 %v5485, 0.0
    %v5614 = vmax.f32 %v5486, 0.0
    %v5615 = vmax.f32 %v5487, 0.0
    %v5616 = vmax.f32 %v5488, 0.0
    %v5617 = vmax.f32 %v5489, 0.0
    %v5618 = vmax.f32 %v5490, 0.0
    %v5619 = vmax.f32 %v5491, 0.0
    %v5620 = vmax.f32 %v5492, 0.0
    %v5621 = vmax.f32 %v5493, 0.0
    %v5622 = vmax.f32 %v5494, 0.0
    %v5623 = vmax.f32 %v5495, 0.0
    %v5624 = vmax.f32 %v5496, 0.0
    %v5625 = vmax.f32 %v5497, 0.0
    %v5626 = vmax.f32 %v5498, 0.0
    %v5627 = vmax.f32 %v5499, 0.0
    %v5628 = vmax.f32 %v5500, 0.0
    %v5629 = vmax.f32 %v5501, 0.0
    %v5630 = vmax.f32 %v5502, 0.0
    %v5631 = vmax.f32 %v5503, 0.0
    %v5632 = vmax.f32 %v5504, 0.0
    %v5633 = vmax.f32 %v5505, 0.0
    %v5634 = vmax.f32 %v5506, 0.0
    %v5635 = vmax.f32 %v5507, 0.0
    %v5636 = vmax.f32 %v5508, 0.0
    %v5637 = vmax.f32 %v5509, 0.0
    %v5638 = vmax.f32 %v5510, 0.0
    %v5639 = vmax.f32 %v5511, 0.0
    %v5640 = vmax.f32 %v5512, 0.0
    %v5641 = vmax.f32 %v5513, 0.0
    %v5642 = vmax.f32 %v5514, 0.0
    %v5643 = vmax.f32 %v5515, 0.0
    %v5644 = vmax.f32 %v5516, 0.0
    %v5645 = vmax.f32 %v5517, 0.0
    %v5646 = vmax.f32 %v5518, 0.0
    %v5647 = vmax.f32 %v5519, 0.0
    %v5648 = vmax.f32 %v5520, 0.0
    %v5649 = vmax.f32 %v5521, 0.0
    %v5650 = vmax.f32 %v5522, 0.0
    %v5651 = vmax.f32 %v5523, 0.0
    %v5652 = vmax.f32 %v5524, 0.0
    %v5653 = vmax.f32 %v5525, 0.0
    %v5654 = vmax.f32 %v5526, 0.0
    %v5655 = vmax.f32 %v5527, 0.0
    %v5656 = vmax.f32 %v5528, 0.0
    %v5657 = vmax.f32 %v5529, 0.0
    %v5658 = vmax.f32 %v5530, 0.0
    %v5659 = vmax.f32 %v5531, 0.0
    %v5660 = vmax.f32 %v5532, 0.0
    %v5661 = vmax.f32 %v5533, 0.0
    %v5662 = vmax.f32 %v5534, 0.0
    %v5663 = vmax.f32 %v5535, 0.0
    %v5664 = vmax.f32 %v5536, 0.0
    %v5665 = vmax.f32 %v5537, 0.0
    %v5666 = vmax.f32 %v5538, 0.0
    %v5667 = vmax.f32 %v5539, 0.0
    %v5668 = vmax.f32 %v5540, 0.0
    %v5669 = vmax.f32 %v5541, 0.0
    %v5670 = vmax.f32 %v5542, 0.0
    %v5671 = vmax.f32 %v5543, 0.0
    %v5672 = vmax.f32 %v5544, 0.0
    %v5673 = vmax.f32 %v5545, 0.0
    %v5674 = vmax.f32 %v5546, 0.0
    %v5675 = vmax.f32 %v5547, 0.0
    %v5676 = vmax.f32 %v5548, 0.0
    %v5677 = vmax.f32 %v5549, 0.0
    %v5678 = vmax.f32 %v5550, 0.0
    %v5679 = vmax.f32 %v5551, 0.0
    %v5680 = vmax.f32 %v5552, 0.0
    %v5681 = vmax.f32 %v5553, 0.0
    %v5682 = vmax.f32 %v5554, 0.0
    %v5683 = vmax.f32 %v5555, 0.0
    %v5684 = vmax.f32 %v5556, 0.0
    %v5685 = vmax.f32 %v5557, 0.0
    %v5686 = vmax.f32 %v5558, 0.0
    %v5687 = vmax.f32 %v5559, 0.0
    %v5688 = vmax.f32 %v5560, 0.0
    %v5689 = vmax.f32 %v5561, 0.0
    %v5690 = vmax.f32 %v5562, 0.0
    %v5691 = vmax.f32 %v5563, 0.0
    %v5692 = vmax.f32 %v5564, 0.0
    %v5693 = vmax.f32 %v5565, 0.0
    %v5694 = vmax.f32 %v5566, 0.0
    %v5695 = vmax.f32 %v5567, 0.0
    %v5696 = vmax.f32 %v5568, 0.0
    %v5697 = vmax.f32 %v5569, 0.0
    %v5698 = vpack.c.bf16 %v5572, %v5570
    %v5699 = vpack.c.bf16 %v5573, %v5571
    %v5700 = vpack.c.bf16 %v5576, %v5574
    %v5701 = vpack.c.bf16 %v5577, %v5575
    %v5702 = vpack.c.bf16 %v5580, %v5578
    %v5703 = vpack.c.bf16 %v5581, %v5579
    %v5704 = vpack.c.bf16 %v5584, %v5582
    %v5705 = vpack.c.bf16 %v5585, %v5583
    %v5706 = vpack.c.bf16 %v5588, %v5586
    %v5707 = vpack.c.bf16 %v5589, %v5587
    %v5708 = vpack.c.bf16 %v5592, %v5590
    %v5709 = vpack.c.bf16 %v5593, %v5591
    %v5710 = vpack.c.bf16 %v5596, %v5594
    %v5711 = vpack.c.bf16 %v5597, %v5595
    %v5712 = vpack.c.bf16 %v5600, %v5598
    %v5713 = vpack.c.bf16 %v5601, %v5599
    %v5714 = vpack.c.bf16 %v5604, %v5602
    %v5715 = vpack.c.bf16 %v5605, %v5603
    %v5716 = vpack.c.bf16 %v5608, %v5606
    %v5717 = vpack.c.bf16 %v5609, %v5607
    %v5718 = vpack.c.bf16 %v5612, %v5610
    %v5719 = vpack.c.bf16 %v5613, %v5611
    %v5720 = vpack.c.bf16 %v5616, %v5614
    %v5721 = vpack.c.bf16 %v5617, %v5615
    %v5722 = vpack.c.bf16 %v5620, %v5618
    %v5723 = vpack.c.bf16 %v5621, %v5619
    %v5724 = vpack.c.bf16 %v5624, %v5622
    %v5725 = vpack.c.bf16 %v5625, %v5623
    %v5726 = vpack.c.bf16 %v5628, %v5626
    %v5727 = vpack.c.bf16 %v5629, %v5627
    %v5728 = vpack.c.bf16 %v5632, %v5630
    %v5729 = vpack.c.bf16 %v5633, %v5631
    %v5730 = vpack.c.bf16 %v5636, %v5634
    %v5731 = vpack.c.bf16 %v5637, %v5635
    %v5732 = vpack.c.bf16 %v5640, %v5638
    %v5733 = vpack.c.bf16 %v5641, %v5639
    %v5734 = vpack.c.bf16 %v5644, %v5642
    %v5735 = vpack.c.bf16 %v5645, %v5643
    %v5736 = vpack.c.bf16 %v5648, %v5646
    %v5737 = vpack.c.bf16 %v5649, %v5647
    %v5738 = vpack.c.bf16 %v5652, %v5650
    %v5739 = vpack.c.bf16 %v5653, %v5651
    %v5740 = vpack.c.bf16 %v5656, %v5654
    %v5741 = vpack.c.bf16 %v5657, %v5655
    %v5742 = vpack.c.bf16 %v5660, %v5658
    %v5743 = vpack.c.bf16 %v5661, %v5659
    %v5744 = vpack.c.bf16 %v5664, %v5662
    %v5745 = vpack.c.bf16 %v5665, %v5663
    %v5746 = vpack.c.bf16 %v5668, %v5666
    %v5747 = vpack.c.bf16 %v5669, %v5667
    %v5748 = vpack.c.bf16 %v5672, %v5670
    %v5749 = vpack.c.bf16 %v5673, %v5671
    %v5750 = vpack.c.bf16 %v5676, %v5674
    %v5751 = vpack.c.bf16 %v5677, %v5675
    %v5752 = vpack.c.bf16 %v5680, %v5678
    %v5753 = vpack.c.bf16 %v5681, %v5679
    %v5754 = vpack.c.bf16 %v5684, %v5682
    %v5755 = vpack.c.bf16 %v5685, %v5683
    %v5756 = vpack.c.bf16 %v5688, %v5686
    %v5757 = vpack.c.bf16 %v5689, %v5687
    %v5758 = vpack.c.bf16 %v5692, %v5690
    %v5759 = vpack.c.bf16 %v5693, %v5691
    %v5760 = vpack.c.bf16 %v5696, %v5694
    %v5761 = vpack.c.bf16 %v5697, %v5695
    %v5763 = vlaneseq
    %v5764 = vshrl.u32 %v5763, 7
    %v5765 = vsub.s32 0, %v5764
    %v5766 = vrot.slane %v527, %v5765
    %v5767 = vlaneseq
    %v5768 = vshrl.u32 %v5767, 7
    %v5769 = vsub.s32 1, %v5768
    %v5770 = vrot.slane %v527, %v5769
    %v5805 = vunpack.c.l.b16 %v495
    %v5806 = vunpack.c.h.b16 %v495
    %v5807 = vunpack.c.l.b16 %v496
    %v5808 = vunpack.c.h.b16 %v496
    %v5809 = vunpack.c.l.b16 %v497
    %v5810 = vunpack.c.h.b16 %v497
    %v5811 = vunpack.c.l.b16 %v498
    %v5812 = vunpack.c.h.b16 %v498
    %v5813 = vunpack.c.l.b16 %v499
    %v5814 = vunpack.c.h.b16 %v499
    %v5815 = vunpack.c.l.b16 %v500
    %v5816 = vunpack.c.h.b16 %v500
    %v5817 = vunpack.c.l.b16 %v501
    %v5818 = vunpack.c.h.b16 %v501
    %v5819 = vunpack.c.l.b16 %v502
    %v5820 = vunpack.c.h.b16 %v502
    %v5821 = vunpack.c.l.b16 %v503
    %v5822 = vunpack.c.h.b16 %v503
    %v5823 = vunpack.c.l.b16 %v504
    %v5824 = vunpack.c.h.b16 %v504
    %v5825 = vunpack.c.l.b16 %v505
    %v5826 = vunpack.c.h.b16 %v505
    %v5827 = vunpack.c.l.b16 %v506
    %v5828 = vunpack.c.h.b16 %v506
    %v5829 = vunpack.c.l.b16 %v507
    %v5830 = vunpack.c.h.b16 %v507
    %v5831 = vunpack.c.l.b16 %v508
    %v5832 = vunpack.c.h.b16 %v508
    %v5833 = vunpack.c.l.b16 %v509
    %v5834 = vunpack.c.h.b16 %v509
    %v5835 = vunpack.c.l.b16 %v510
    %v5836 = vunpack.c.h.b16 %v510
    %v5837 = vunpack.c.l.b16 %v511
    %v5838 = vunpack.c.h.b16 %v511
    %v5839 = vunpack.c.l.b16 %v512
    %v5840 = vunpack.c.h.b16 %v512
    %v5841 = vunpack.c.l.b16 %v513
    %v5842 = vunpack.c.h.b16 %v513
    %v5843 = vunpack.c.l.b16 %v514
    %v5844 = vunpack.c.h.b16 %v514
    %v5845 = vunpack.c.l.b16 %v515
    %v5846 = vunpack.c.h.b16 %v515
    %v5847 = vunpack.c.l.b16 %v516
    %v5848 = vunpack.c.h.b16 %v516
    %v5849 = vunpack.c.l.b16 %v517
    %v5850 = vunpack.c.h.b16 %v517
    %v5851 = vunpack.c.l.b16 %v518
    %v5852 = vunpack.c.h.b16 %v518
    %v5853 = vunpack.c.l.b16 %v519
    %v5854 = vunpack.c.h.b16 %v519
    %v5855 = vunpack.c.l.b16 %v520
    %v5856 = vunpack.c.h.b16 %v520
    %v5857 = vunpack.c.l.b16 %v521
    %v5858 = vunpack.c.h.b16 %v521
    %v5859 = vunpack.c.l.b16 %v522
    %v5860 = vunpack.c.h.b16 %v522
    %v5861 = vunpack.c.l.b16 %v523
    %v5862 = vunpack.c.h.b16 %v523
    %v5863 = vunpack.c.l.b16 %v524
    %v5864 = vunpack.c.h.b16 %v524
    %v5865 = vunpack.c.l.b16 %v525
    %v5866 = vunpack.c.h.b16 %v525
    %v5867 = vunpack.c.l.b16 %v526
    %v5868 = vunpack.c.h.b16 %v526
    %v5869 = vpack.c.b16 %v5807, %v5805
    %v5870 = vpack.c.b16 %v5808, %v5806
    %v5871 = vpack.c.b16 %v5811, %v5809
    %v5872 = vpack.c.b16 %v5812, %v5810
    %v5873 = vpack.c.b16 %v5815, %v5813
    %v5874 = vpack.c.b16 %v5816, %v5814
    %v5875 = vpack.c.b16 %v5819, %v5817
    %v5876 = vpack.c.b16 %v5820, %v5818
    %v5877 = vpack.c.b16 %v5823, %v5821
    %v5878 = vpack.c.b16 %v5824, %v5822
    %v5879 = vpack.c.b16 %v5827, %v5825
    %v5880 = vpack.c.b16 %v5828, %v5826
    %v5881 = vpack.c.b16 %v5831, %v5829
    %v5882 = vpack.c.b16 %v5832, %v5830
    %v5883 = vpack.c.b16 %v5835, %v5833
    %v5884 = vpack.c.b16 %v5836, %v5834
    %v5885 = vpack.c.b16 %v5839, %v5837
    %v5886 = vpack.c.b16 %v5840, %v5838
    %v5887 = vpack.c.b16 %v5843, %v5841
    %v5888 = vpack.c.b16 %v5844, %v5842
    %v5889 = vpack.c.b16 %v5847, %v5845
    %v5890 = vpack.c.b16 %v5848, %v5846
    %v5891 = vpack.c.b16 %v5851, %v5849
    %v5892 = vpack.c.b16 %v5852, %v5850
    %v5893 = vpack.c.b16 %v5855, %v5853
    %v5894 = vpack.c.b16 %v5856, %v5854
    %v5895 = vpack.c.b16 %v5859, %v5857
    %v5896 = vpack.c.b16 %v5860, %v5858
    %v5897 = vpack.c.b16 %v5863, %v5861
    %v5898 = vpack.c.b16 %v5864, %v5862
    %v5899 = vpack.c.b16 %v5867, %v5865
    %v5900 = vpack.c.b16 %v5868, %v5866
    %5933 = vmatprep.subr.bf16.mxu0 %v5870
    %5934 = vmatpush1.bf16.msra.mxu0 %v5869
    %5935 = vmatprep.subr.bf16.mxu0 %v5872
    %5936 = vmatpush1.bf16.msra.mxu0 %v5871
    %5937 = vmatprep.subr.bf16.mxu0 %v5874
    %5938 = vmatpush1.bf16.msra.mxu0 %v5873
    %5939 = vmatprep.subr.bf16.mxu0 %v5876
    %5940 = vmatpush1.bf16.msra.mxu0 %v5875
    %5941 = vmatprep.subr.bf16.mxu0 %v5878
    %5942 = vmatpush1.bf16.msra.mxu0 %v5877
    %5943 = vmatprep.subr.bf16.mxu0 %v5880
    %5944 = vmatpush1.bf16.msra.mxu0 %v5879
    %5945 = vmatprep.subr.bf16.mxu0 %v5882
    %5946 = vmatpush1.bf16.msra.mxu0 %v5881
    %5947 = vmatprep.subr.bf16.mxu0 %v5884
    %5948 = vmatpush1.bf16.msra.mxu0 %v5883
    %5949 = vmatprep.subr.bf16.mxu0 %v5886
    %5950 = vmatpush1.bf16.msra.mxu0 %v5885
    %5951 = vmatprep.subr.bf16.mxu0 %v5888
    %5952 = vmatpush1.bf16.msra.mxu0 %v5887
    %5953 = vmatprep.subr.bf16.mxu0 %v5890
    %5954 = vmatpush1.bf16.msra.mxu0 %v5889
    %5955 = vmatprep.subr.bf16.mxu0 %v5892
    %5956 = vmatpush1.bf16.msra.mxu0 %v5891
    %5957 = vmatprep.subr.bf16.mxu0 %v5894
    %5958 = vmatpush1.bf16.msra.mxu0 %v5893
    %5959 = vmatprep.subr.bf16.mxu0 %v5896
    %5960 = vmatpush1.bf16.msra.mxu0 %v5895
    %5961 = vmatprep.subr.bf16.mxu0 %v5898
    %5962 = vmatpush1.bf16.msra.mxu0 %v5897
    %5963 = vmatprep.subr.bf16.mxu0 %v5900
    %5964 = vmatpush1.bf16.msra.mxu0 %v5899
    %5965 = vmatprep.mubr.bf16.mxu0 %v5699
    %5966 = vmatmul.mubr.bf16.gmra.mrb[0].mxu0 %v5698
    %v5967 = vpop.f32.mrb[0].mxu0
    %v5968 = vadd.f32 %v5766, %v5967
    %v5969 = vpop.f32.mrb[0].mxu0
    %v5970 = vadd.f32 %v5770, %v5969
    %v5971 = vpop.f32.mrb[0].mxu0
    %v5972 = vadd.f32 %v5766, %v5971
    %v5973 = vpop.f32.mrb[0].mxu0
    %v5974 = vadd.f32 %v5770, %v5973
    %5975 = vmatprep.mubr.bf16.mxu0 %v5701
    %5976 = vmatmul.mubr.bf16.gmra.mrb[0].mxu0 %v5700
    %v5977 = vpop.f32.mrb[0].mxu0
    %v5978 = vadd.f32 %v5766, %v5977
    %v5979 = vpop.f32.mrb[0].mxu0
    %v5980 = vadd.f32 %v5770, %v5979
    %v5981 = vpop.f32.mrb[0].mxu0
    %v5982 = vadd.f32 %v5766, %v5981
    %v5983 = vpop.f32.mrb[0].mxu0
    %v5984 = vadd.f32 %v5770, %v5983
    %5985 = vmatprep.mubr.bf16.mxu0 %v5703
    %5986 = vmatmul.mubr.bf16.gmra.mrb[0].mxu0 %v5702
    %v5987 = vpop.f32.mrb[0].mxu0
    %v5988 = vadd.f32 %v5766, %v5987
    %v5989 = vpop.f32.mrb[0].mxu0
    %v5990 = vadd.f32 %v5770, %v5989
    %v5991 = vpop.f32.mrb[0].mxu0
    %v5992 = vadd.f32 %v5766, %v5991
    %v5993 = vpop.f32.mrb[0].mxu0
    %v5994 = vadd.f32 %v5770, %v5993
    %5995 = vmatprep.mubr.bf16.mxu0 %v5705
    %5996 = vmatmul.mubr.bf16.gmra.mrb[0].mxu0 %v5704
    %v5997 = vpop.f32.mrb[0].mxu0
    %v5998 = vadd.f32 %v5766, %v5997
    %v5999 = vpop.f32.mrb[0].mxu0
    %v6000 = vadd.f32 %v5770, %v5999
    %v6001 = vpop.f32.mrb[0].mxu0
    %v6002 = vadd.f32 %v5766, %v6001
    %v6003 = vpop.f32.mrb[0].mxu0
    %v6004 = vadd.f32 %v5770, %v6003
    %6005 = vmatprep.mubr.bf16.mxu0 %v5707
    %6006 = vmatmul.mubr.bf16.gmra.mrb[0].mxu0 %v5706
    %v6007 = vpop.f32.mrb[0].mxu0
    %v6008 = vadd.f32 %v5766, %v6007
    %v6009 = vpop.f32.mrb[0].mxu0
    %v6010 = vadd.f32 %v5770, %v6009
    %v6011 = vpop.f32.mrb[0].mxu0
    %v6012 = vadd.f32 %v5766, %v6011
    %v6013 = vpop.f32.mrb[0].mxu0
    %v6014 = vadd.f32 %v5770, %v6013
    %6015 = vmatprep.mubr.bf16.mxu0 %v5709
    %6016 = vmatmul.mubr.bf16.gmra.mrb[0].mxu0 %v5708
    %v6017 = vpop.f32.mrb[0].mxu0
    %v6018 = vadd.f32 %v5766, %v6017
    %v6019 = vpop.f32.mrb[0].mxu0
    %v6020 = vadd.f32 %v5770, %v6019
    %v6021 = vpop.f32.mrb[0].mxu0
    %v6022 = vadd.f32 %v5766, %v6021
    %v6023 = vpop.f32.mrb[0].mxu0
    %v6024 = vadd.f32 %v5770, %v6023
    %6025 = vmatprep.mubr.bf16.mxu0 %v5711
    %6026 = vmatmul.mubr.bf16.gmra.mrb[0].mxu0 %v5710
    %v6027 = vpop.f32.mrb[0].mxu0
    %v6028 = vadd.f32 %v5766, %v6027
    %v6029 = vpop.f32.mrb[0].mxu0
    %v6030 = vadd.f32 %v5770, %v6029
    %v6031 = vpop.f32.mrb[0].mxu0
    %v6032 = vadd.f32 %v5766, %v6031
    %v6033 = vpop.f32.mrb[0].mxu0
    %v6034 = vadd.f32 %v5770, %v6033
    %6035 = vmatprep.mubr.bf16.mxu0 %v5713
    %6036 = vmatmul.mubr.bf16.gmra.mrb[0].mxu0 %v5712
    %v6037 = vpop.f32.mrb[0].mxu0
    %v6038 = vadd.f32 %v5766, %v6037
    %v6039 = vpop.f32.mrb[0].mxu0
    %v6040 = vadd.f32 %v5770, %v6039
    %v6041 = vpop.f32.mrb[0].mxu0
    %v6042 = vadd.f32 %v5766, %v6041
    %v6043 = vpop.f32.mrb[0].mxu0
    %v6044 = vadd.f32 %v5770, %v6043
    %6045 = vmatprep.mubr.bf16.mxu0 %v5715
    %6046 = vmatmul.mubr.bf16.gmra.mrb[0].mxu0 %v5714
    %v6047 = vpop.f32.mrb[0].mxu0
    %v6048 = vadd.f32 %v5766, %v6047
    %v6049 = vpop.f32.mrb[0].mxu0
    %v6050 = vadd.f32 %v5770, %v6049
    %v6051 = vpop.f32.mrb[0].mxu0
    %v6052 = vadd.f32 %v5766, %v6051
    %v6053 = vpop.f32.mrb[0].mxu0
    %v6054 = vadd.f32 %v5770, %v6053
    %6055 = vmatprep.mubr.bf16.mxu0 %v5717
    %6056 = vmatmul.mubr.bf16.gmra.mrb[0].mxu0 %v5716
    %v6057 = vpop.f32.mrb[0].mxu0
    %v6058 = vadd.f32 %v5766, %v6057
    %v6059 = vpop.f32.mrb[0].mxu0
    %v6060 = vadd.f32 %v5770, %v6059
    %v6061 = vpop.f32.mrb[0].mxu0
    %v6062 = vadd.f32 %v5766, %v6061
    %v6063 = vpop.f32.mrb[0].mxu0
    %v6064 = vadd.f32 %v5770, %v6063
    %6065 = vmatprep.mubr.bf16.mxu0 %v5719
    %6066 = vmatmul.mubr.bf16.gmra.mrb[0].mxu0 %v5718
    %v6067 = vpop.f32.mrb[0].mxu0
    %v6068 = vadd.f32 %v5766, %v6067
    %v6069 = vpop.f32.mrb[0].mxu0
    %v6070 = vadd.f32 %v5770, %v6069
    %v6071 = vpop.f32.mrb[0].mxu0
    %v6072 = vadd.f32 %v5766, %v6071
    %v6073 = vpop.f32.mrb[0].mxu0
    %v6074 = vadd.f32 %v5770, %v6073
    %6075 = vmatprep.mubr.bf16.mxu0 %v5721
    %6076 = vmatmul.mubr.bf16.gmra.mrb[0].mxu0 %v5720
    %v6077 = vpop.f32.mrb[0].mxu0
    %v6078 = vadd.f32 %v5766, %v6077
    %v6079 = vpop.f32.mrb[0].mxu0
    %v6080 = vadd.f32 %v5770, %v6079
    %v6081 = vpop.f32.mrb[0].mxu0
    %v6082 = vadd.f32 %v5766, %v6081
    %v6083 = vpop.f32.mrb[0].mxu0
    %v6084 = vadd.f32 %v5770, %v6083
    %6085 = vmatprep.mubr.bf16.mxu0 %v5723
    %6086 = vmatmul.mubr.bf16.gmra.mrb[0].mxu0 %v5722
    %v6087 = vpop.f32.mrb[0].mxu0
    %v6088 = vadd.f32 %v5766, %v6087
    %v6089 = vpop.f32.mrb[0].mxu0
    %v6090 = vadd.f32 %v5770, %v6089
    %v6091 = vpop.f32.mrb[0].mxu0
    %v6092 = vadd.f32 %v5766, %v6091
    %v6093 = vpop.f32.mrb[0].mxu0
    %v6094 = vadd.f32 %v5770, %v6093
    %6095 = vmatprep.mubr.bf16.mxu0 %v5725
    %6096 = vmatmul.mubr.bf16.gmra.mrb[0].mxu0 %v5724
    %v6097 = vpop.f32.mrb[0].mxu0
    %v6098 = vadd.f32 %v5766, %v6097
    %v6099 = vpop.f32.mrb[0].mxu0
    %v6100 = vadd.f32 %v5770, %v6099
    %v6101 = vpop.f32.mrb[0].mxu0
    %v6102 = vadd.f32 %v5766, %v6101
    %v6103 = vpop.f32.mrb[0].mxu0
    %v6104 = vadd.f32 %v5770, %v6103
    %6105 = vmatprep.mubr.bf16.mxu0 %v5727
    %6106 = vmatmul.mubr.bf16.gmra.mrb[0].mxu0 %v5726
    %v6107 = vpop.f32.mrb[0].mxu0
    %v6108 = vadd.f32 %v5766, %v6107
    %v6109 = vpop.f32.mrb[0].mxu0
    %v6110 = vadd.f32 %v5770, %v6109
    %v6111 = vpop.f32.mrb[0].mxu0
    %v6112 = vadd.f32 %v5766, %v6111
    %v6113 = vpop.f32.mrb[0].mxu0
    %v6114 = vadd.f32 %v5770, %v6113
    %6115 = vmatprep.mubr.bf16.mxu0 %v5729
    %6116 = vmatmul.mubr.bf16.gmra.mrb[0].mxu0 %v5728
    %v6117 = vpop.f32.mrb[0].mxu0
    %v6118 = vadd.f32 %v5766, %v6117
    %v6119 = vpop.f32.mrb[0].mxu0
    %v6120 = vadd.f32 %v5770, %v6119
    %v6121 = vpop.f32.mrb[0].mxu0
    %v6122 = vadd.f32 %v5766, %v6121
    %v6123 = vpop.f32.mrb[0].mxu0
    %v6124 = vadd.f32 %v5770, %v6123
    %6125 = vmatprep.mubr.bf16.mxu0 %v5731
    %6126 = vmatmul.mubr.bf16.gmra.mrb[0].mxu0 %v5730
    %v6127 = vpop.f32.mrb[0].mxu0
    %v6128 = vadd.f32 %v5766, %v6127
    %v6129 = vpop.f32.mrb[0].mxu0
    %v6130 = vadd.f32 %v5770, %v6129
    %v6131 = vpop.f32.mrb[0].mxu0
    %v6132 = vadd.f32 %v5766, %v6131
    %v6133 = vpop.f32.mrb[0].mxu0
    %v6134 = vadd.f32 %v5770, %v6133
    %6135 = vmatprep.mubr.bf16.mxu0 %v5733
    %6136 = vmatmul.mubr.bf16.gmra.mrb[0].mxu0 %v5732
    %v6137 = vpop.f32.mrb[0].mxu0
    %v6138 = vadd.f32 %v5766, %v6137
    %v6139 = vpop.f32.mrb[0].mxu0
    %v6140 = vadd.f32 %v5770, %v6139
    %v6141 = vpop.f32.mrb[0].mxu0
    %v6142 = vadd.f32 %v5766, %v6141
    %v6143 = vpop.f32.mrb[0].mxu0
    %v6144 = vadd.f32 %v5770, %v6143
    %6145 = vmatprep.mubr.bf16.mxu0 %v5735
    %6146 = vmatmul.mubr.bf16.gmra.mrb[0].mxu0 %v5734
    %v6147 = vpop.f32.mrb[0].mxu0
    %v6148 = vadd.f32 %v5766, %v6147
    %v6149 = vpop.f32.mrb[0].mxu0
    %v6150 = vadd.f32 %v5770, %v6149
    %v6151 = vpop.f32.mrb[0].mxu0
    %v6152 = vadd.f32 %v5766, %v6151
    %v6153 = vpop.f32.mrb[0].mxu0
    %v6154 = vadd.f32 %v5770, %v6153
    %6155 = vmatprep.mubr.bf16.mxu0 %v5737
    %6156 = vmatmul.mubr.bf16.gmra.mrb[0].mxu0 %v5736
    %v6157 = vpop.f32.mrb[0].mxu0
    %v6158 = vadd.f32 %v5766, %v6157
    %v6159 = vpop.f32.mrb[0].mxu0
    %v6160 = vadd.f32 %v5770, %v6159
    %v6161 = vpop.f32.mrb[0].mxu0
    %v6162 = vadd.f32 %v5766, %v6161
    %v6163 = vpop.f32.mrb[0].mxu0
    %v6164 = vadd.f32 %v5770, %v6163
    %6165 = vmatprep.mubr.bf16.mxu0 %v5739
    %6166 = vmatmul.mubr.bf16.gmra.mrb[0].mxu0 %v5738
    %v6167 = vpop.f32.mrb[0].mxu0
    %v6168 = vadd.f32 %v5766, %v6167
    %v6169 = vpop.f32.mrb[0].mxu0
    %v6170 = vadd.f32 %v5770, %v6169
    %v6171 = vpop.f32.mrb[0].mxu0
    %v6172 = vadd.f32 %v5766, %v6171
    %v6173 = vpop.f32.mrb[0].mxu0
    %v6174 = vadd.f32 %v5770, %v6173
    %6175 = vmatprep.mubr.bf16.mxu0 %v5741
    %6176 = vmatmul.mubr.bf16.gmra.mrb[0].mxu0 %v5740
    %v6177 = vpop.f32.mrb[0].mxu0
    %v6178 = vadd.f32 %v5766, %v6177
    %v6179 = vpop.f32.mrb[0].mxu0
    %v6180 = vadd.f32 %v5770, %v6179
    %v6181 = vpop.f32.mrb[0].mxu0
    %v6182 = vadd.f32 %v5766, %v6181
    %v6183 = vpop.f32.mrb[0].mxu0
    %v6184 = vadd.f32 %v5770, %v6183
    %6185 = vmatprep.mubr.bf16.mxu0 %v5743
    %6186 = vmatmul.mubr.bf16.gmra.mrb[0].mxu0 %v5742
    %v6187 = vpop.f32.mrb[0].mxu0
    %v6188 = vadd.f32 %v5766, %v6187
    %v6189 = vpop.f32.mrb[0].mxu0
    %v6190 = vadd.f32 %v5770, %v6189
    %v6191 = vpop.f32.mrb[0].mxu0
    %v6192 = vadd.f32 %v5766, %v6191
    %v6193 = vpop.f32.mrb[0].mxu0
    %v6194 = vadd.f32 %v5770, %v6193
    %6195 = vmatprep.mubr.bf16.mxu0 %v5745
    %6196 = vmatmul.mubr.bf16.gmra.mrb[0].mxu0 %v5744
    %v6197 = vpop.f32.mrb[0].mxu0
    %v6198 = vadd.f32 %v5766, %v6197
    %v6199 = vpop.f32.mrb[0].mxu0
    %v6200 = vadd.f32 %v5770, %v6199
    %v6201 = vpop.f32.mrb[0].mxu0
    %v6202 = vadd.f32 %v5766, %v6201
    %v6203 = vpop.f32.mrb[0].mxu0
    %v6204 = vadd.f32 %v5770, %v6203
    %6205 = vmatprep.mubr.bf16.mxu0 %v5747
    %6206 = vmatmul.mubr.bf16.gmra.mrb[0].mxu0 %v5746
    %v6207 = vpop.f32.mrb[0].mxu0
    %v6208 = vadd.f32 %v5766, %v6207
    %v6209 = vpop.f32.mrb[0].mxu0
    %v6210 = vadd.f32 %v5770, %v6209
    %v6211 = vpop.f32.mrb[0].mxu0
    %v6212 = vadd.f32 %v5766, %v6211
    %v6213 = vpop.f32.mrb[0].mxu0
    %v6214 = vadd.f32 %v5770, %v6213
    %6215 = vmatprep.mubr.bf16.mxu0 %v5749
    %6216 = vmatmul.mubr.bf16.gmra.mrb[0].mxu0 %v5748
    %v6217 = vpop.f32.mrb[0].mxu0
    %v6218 = vadd.f32 %v5766, %v6217
    %v6219 = vpop.f32.mrb[0].mxu0
    %v6220 = vadd.f32 %v5770, %v6219
    %v6221 = vpop.f32.mrb[0].mxu0
    %v6222 = vadd.f32 %v5766, %v6221
    %v6223 = vpop.f32.mrb[0].mxu0
    %v6224 = vadd.f32 %v5770, %v6223
    %6225 = vmatprep.mubr.bf16.mxu0 %v5751
    %6226 = vmatmul.mubr.bf16.gmra.mrb[0].mxu0 %v5750
    %v6227 = vpop.f32.mrb[0].mxu0
    %v6228 = vadd.f32 %v5766, %v6227
    %v6229 = vpop.f32.mrb[0].mxu0
    %v6230 = vadd.f32 %v5770, %v6229
    %v6231 = vpop.f32.mrb[0].mxu0
    %v6232 = vadd.f32 %v5766, %v6231
    %v6233 = vpop.f32.mrb[0].mxu0
    %v6234 = vadd.f32 %v5770, %v6233
    %6235 = vmatprep.mubr.bf16.mxu0 %v5753
    %6236 = vmatmul.mubr.bf16.gmra.mrb[0].mxu0 %v5752
    %v6237 = vpop.f32.mrb[0].mxu0
    %v6238 = vadd.f32 %v5766, %v6237
    %v6239 = vpop.f32.mrb[0].mxu0
    %v6240 = vadd.f32 %v5770, %v6239
    %v6241 = vpop.f32.mrb[0].mxu0
    %v6242 = vadd.f32 %v5766, %v6241
    %v6243 = vpop.f32.mrb[0].mxu0
    %v6244 = vadd.f32 %v5770, %v6243
    %6245 = vmatprep.mubr.bf16.mxu0 %v5755
    %6246 = vmatmul.mubr.bf16.gmra.mrb[0].mxu0 %v5754
    %v6247 = vpop.f32.mrb[0].mxu0
    %v6248 = vadd.f32 %v5766, %v6247
    %v6249 = vpop.f32.mrb[0].mxu0
    %v6250 = vadd.f32 %v5770, %v6249
    %v6251 = vpop.f32.mrb[0].mxu0
    %v6252 = vadd.f32 %v5766, %v6251
    %v6253 = vpop.f32.mrb[0].mxu0
    %v6254 = vadd.f32 %v5770, %v6253
    %6255 = vmatprep.mubr.bf16.mxu0 %v5757
    %6256 = vmatmul.mubr.bf16.gmra.mrb[0].mxu0 %v5756
    %v6257 = vpop.f32.mrb[0].mxu0
    %v6258 = vadd.f32 %v5766, %v6257
    %v6259 = vpop.f32.mrb[0].mxu0
    %v6260 = vadd.f32 %v5770, %v6259
    %v6261 = vpop.f32.mrb[0].mxu0
    %v6262 = vadd.f32 %v5766, %v6261
    %v6263 = vpop.f32.mrb[0].mxu0
    %v6264 = vadd.f32 %v5770, %v6263
    %6265 = vmatprep.mubr.bf16.mxu0 %v5759
    %6266 = vmatmul.mubr.bf16.gmra.mrb[0].mxu0 %v5758
    %v6267 = vpop.f32.mrb[0].mxu0
    %v6268 = vadd.f32 %v5766, %v6267
    %v6269 = vpop.f32.mrb[0].mxu0
    %v6270 = vadd.f32 %v5770, %v6269
    %v6271 = vpop.f32.mrb[0].mxu0
    %v6272 = vadd.f32 %v5766, %v6271
    %v6273 = vpop.f32.mrb[0].mxu0
    %v6274 = vadd.f32 %v5770, %v6273
    %6275 = vmatprep.mubr.bf16.mxu0 %v5761
    %6276 = vmatmul.mubr.bf16.gmra.mrb[0].mxu0 %v5760
    %v6277 = vpop.f32.mrb[0].mxu0
    %v6278 = vadd.f32 %v5766, %v6277
    %v6279 = vpop.f32.mrb[0].mxu0
    %v6280 = vadd.f32 %v5770, %v6279
    %v6281 = vpop.f32.mrb[0].mxu0
    %v6282 = vadd.f32 %v5766, %v6281
    %v6283 = vpop.f32.mrb[0].mxu0
    %v6284 = vadd.f32 %v5770, %v6283
    %6285 = vdwg.mxu0
    %v6286 = vmax.f32 %v5968, 0.0
    %v6287 = vmax.f32 %v5970, 0.0
    %v6288 = vmax.f32 %v5972, 0.0
    %v6289 = vmax.f32 %v5974, 0.0
    %v6290 = vmax.f32 %v5978, 0.0
    %v6291 = vmax.f32 %v5980, 0.0
    %v6292 = vmax.f32 %v5982, 0.0
    %v6293 = vmax.f32 %v5984, 0.0
    %v6294 = vmax.f32 %v5988, 0.0
    %v6295 = vmax.f32 %v5990, 0.0
    %v6296 = vmax.f32 %v5992, 0.0
    %v6297 = vmax.f32 %v5994, 0.0
    %v6298 = vmax.f32 %v5998, 0.0
    %v6299 = vmax.f32 %v6000, 0.0
    %v6300 = vmax.f32 %v6002, 0.0
    %v6301 = vmax.f32 %v6004, 0.0
    %v6302 = vmax.f32 %v6008, 0.0
    %v6303 = vmax.f32 %v6010, 0.0
    %v6304 = vmax.f32 %v6012, 0.0
    %v6305 = vmax.f32 %v6014, 0.0
    %v6306 = vmax.f32 %v6018, 0.0
    %v6307 = vmax.f32 %v6020, 0.0
    %v6308 = vmax.f32 %v6022, 0.0
    %v6309 = vmax.f32 %v6024, 0.0
    %v6310 = vmax.f32 %v6028, 0.0
    %v6311 = vmax.f32 %v6030, 0.0
    %v6312 = vmax.f32 %v6032, 0.0
    %v6313 = vmax.f32 %v6034, 0.0
    %v6314 = vmax.f32 %v6038, 0.0
    %v6315 = vmax.f32 %v6040, 0.0
    %v6316 = vmax.f32 %v6042, 0.0
    %v6317 = vmax.f32 %v6044, 0.0
    %v6318 = vmax.f32 %v6048, 0.0
    %v6319 = vmax.f32 %v6050, 0.0
    %v6320 = vmax.f32 %v6052, 0.0
    %v6321 = vmax.f32 %v6054, 0.0
    %v6322 = vmax.f32 %v6058, 0.0
    %v6323 = vmax.f32 %v6060, 0.0
    %v6324 = vmax.f32 %v6062, 0.0
    %v6325 = vmax.f32 %v6064, 0.0
    %v6326 = vmax.f32 %v6068, 0.0
    %v6327 = vmax.f32 %v6070, 0.0
    %v6328 = vmax.f32 %v6072, 0.0
    %v6329 = vmax.f32 %v6074, 0.0
    %v6330 = vmax.f32 %v6078, 0.0
    %v6331 = vmax.f32 %v6080, 0.0
    %v6332 = vmax.f32 %v6082, 0.0
    %v6333 = vmax.f32 %v6084, 0.0
    %v6334 = vmax.f32 %v6088, 0.0
    %v6335 = vmax.f32 %v6090, 0.0
    %v6336 = vmax.f32 %v6092, 0.0
    %v6337 = vmax.f32 %v6094, 0.0
    %v6338 = vmax.f32 %v6098, 0.0
    %v6339 = vmax.f32 %v6100, 0.0
    %v6340 = vmax.f32 %v6102, 0.0
    %v6341 = vmax.f32 %v6104, 0.0
    %v6342 = vmax.f32 %v6108, 0.0
    %v6343 = vmax.f32 %v6110, 0.0
    %v6344 = vmax.f32 %v6112, 0.0
    %v6345 = vmax.f32 %v6114, 0.0
    %v6346 = vmax.f32 %v6118, 0.0
    %v6347 = vmax.f32 %v6120, 0.0
    %v6348 = vmax.f32 %v6122, 0.0
    %v6349 = vmax.f32 %v6124, 0.0
    %v6350 = vmax.f32 %v6128, 0.0
    %v6351 = vmax.f32 %v6130, 0.0
    %v6352 = vmax.f32 %v6132, 0.0
    %v6353 = vmax.f32 %v6134, 0.0
    %v6354 = vmax.f32 %v6138, 0.0
    %v6355 = vmax.f32 %v6140, 0.0
    %v6356 = vmax.f32 %v6142, 0.0
    %v6357 = vmax.f32 %v6144, 0.0
    %v6358 = vmax.f32 %v6148, 0.0
    %v6359 = vmax.f32 %v6150, 0.0
    %v6360 = vmax.f32 %v6152, 0.0
    %v6361 = vmax.f32 %v6154, 0.0
    %v6362 = vmax.f32 %v6158, 0.0
    %v6363 = vmax.f32 %v6160, 0.0
    %v6364 = vmax.f32 %v6162, 0.0
    %v6365 = vmax.f32 %v6164, 0.0
    %v6366 = vmax.f32 %v6168, 0.0
    %v6367 = vmax.f32 %v6170, 0.0
    %v6368 = vmax.f32 %v6172, 0.0
    %v6369 = vmax.f32 %v6174, 0.0
    %v6370 = vmax.f32 %v6178, 0.0
    %v6371 = vmax.f32 %v6180, 0.0
    %v6372 = vmax.f32 %v6182, 0.0
    %v6373 = vmax.f32 %v6184, 0.0
    %v6374 = vmax.f32 %v6188, 0.0
    %v6375 = vmax.f32 %v6190, 0.0
    %v6376 = vmax.f32 %v6192, 0.0
    %v6377 = vmax.f32 %v6194, 0.0
    %v6378 = vmax.f32 %v6198, 0.0
    %v6379 = vmax.f32 %v6200, 0.0
    %v6380 = vmax.f32 %v6202, 0.0
    %v6381 = vmax.f32 %v6204, 0.0
    %v6382 = vmax.f32 %v6208, 0.0
    %v6383 = vmax.f32 %v6210, 0.0
    %v6384 = vmax.f32 %v6212, 0.0
    %v6385 = vmax.f32 %v6214, 0.0
    %v6386 = vmax.f32 %v6218, 0.0
    %v6387 = vmax.f32 %v6220, 0.0
    %v6388 = vmax.f32 %v6222, 0.0
    %v6389 = vmax.f32 %v6224, 0.0
    %v6390 = vmax.f32 %v6228, 0.0
    %v6391 = vmax.f32 %v6230, 0.0
    %v6392 = vmax.f32 %v6232, 0.0
    %v6393 = vmax.f32 %v6234, 0.0
    %v6394 = vmax.f32 %v6238, 0.0
    %v6395 = vmax.f32 %v6240, 0.0
    %v6396 = vmax.f32 %v6242, 0.0
    %v6397 = vmax.f32 %v6244, 0.0
    %v6398 = vmax.f32 %v6248, 0.0
    %v6399 = vmax.f32 %v6250, 0.0
    %v6400 = vmax.f32 %v6252, 0.0
    %v6401 = vmax.f32 %v6254, 0.0
    %v6402 = vmax.f32 %v6258, 0.0
    %v6403 = vmax.f32 %v6260, 0.0
    %v6404 = vmax.f32 %v6262, 0.0
    %v6405 = vmax.f32 %v6264, 0.0
    %v6406 = vmax.f32 %v6268, 0.0
    %v6407 = vmax.f32 %v6270, 0.0
    %v6408 = vmax.f32 %v6272, 0.0
    %v6409 = vmax.f32 %v6274, 0.0
    %v6410 = vmax.f32 %v6278, 0.0
    %v6411 = vmax.f32 %v6280, 0.0
    %v6412 = vmax.f32 %v6282, 0.0
    %v6413 = vmax.f32 %v6284, 0.0
    %v6414 = vpack.c.bf16 %v6288, %v6286
    %v6415 = vpack.c.bf16 %v6289, %v6287
    %v6416 = vpack.c.bf16 %v6292, %v6290
    %v6417 = vpack.c.bf16 %v6293, %v6291
    %v6418 = vpack.c.bf16 %v6296, %v6294
    %v6419 = vpack.c.bf16 %v6297, %v6295
    %v6420 = vpack.c.bf16 %v6300, %v6298
    %v6421 = vpack.c.bf16 %v6301, %v6299
    %v6422 = vpack.c.bf16 %v6304, %v6302
    %v6423 = vpack.c.bf16 %v6305, %v6303
    %v6424 = vpack.c.bf16 %v6308, %v6306
    %v6425 = vpack.c.bf16 %v6309, %v6307
    %v6426 = vpack.c.bf16 %v6312, %v6310
    %v6427 = vpack.c.bf16 %v6313, %v6311
    %v6428 = vpack.c.bf16 %v6316, %v6314
    %v6429 = vpack.c.bf16 %v6317, %v6315
    %v6430 = vpack.c.bf16 %v6320, %v6318
    %v6431 = vpack.c.bf16 %v6321, %v6319
    %v6432 = vpack.c.bf16 %v6324, %v6322
    %v6433 = vpack.c.bf16 %v6325, %v6323
    %v6434 = vpack.c.bf16 %v6328, %v6326
    %v6435 = vpack.c.bf16 %v6329, %v6327
    %v6436 = vpack.c.bf16 %v6332, %v6330
    %v6437 = vpack.c.bf16 %v6333, %v6331
    %v6438 = vpack.c.bf16 %v6336, %v6334
    %v6439 = vpack.c.bf16 %v6337, %v6335
    %v6440 = vpack.c.bf16 %v6340, %v6338
    %v6441 = vpack.c.bf16 %v6341, %v6339
    %v6442 = vpack.c.bf16 %v6344, %v6342
    %v6443 = vpack.c.bf16 %v6345, %v6343
    %v6444 = vpack.c.bf16 %v6348, %v6346
    %v6445 = vpack.c.bf16 %v6349, %v6347
    %v6446 = vpack.c.bf16 %v6352, %v6350
    %v6447 = vpack.c.bf16 %v6353, %v6351
    %v6448 = vpack.c.bf16 %v6356, %v6354
    %v6449 = vpack.c.bf16 %v6357, %v6355
    %v6450 = vpack.c.bf16 %v6360, %v6358
    %v6451 = vpack.c.bf16 %v6361, %v6359
    %v6452 = vpack.c.bf16 %v6364, %v6362
    %v6453 = vpack.c.bf16 %v6365, %v6363
    %v6454 = vpack.c.bf16 %v6368, %v6366
    %v6455 = vpack.c.bf16 %v6369, %v6367
    %v6456 = vpack.c.bf16 %v6372, %v6370
    %v6457 = vpack.c.bf16 %v6373, %v6371
    %v6458 = vpack.c.bf16 %v6376, %v6374
    %v6459 = vpack.c.bf16 %v6377, %v6375
    %v6460 = vpack.c.bf16 %v6380, %v6378
    %v6461 = vpack.c.bf16 %v6381, %v6379
    %v6462 = vpack.c.bf16 %v6384, %v6382
    %v6463 = vpack.c.bf16 %v6385, %v6383
    %v6464 = vpack.c.bf16 %v6388, %v6386
    %v6465 = vpack.c.bf16 %v6389, %v6387
    %v6466 = vpack.c.bf16 %v6392, %v6390
    %v6467 = vpack.c.bf16 %v6393, %v6391
    %v6468 = vpack.c.bf16 %v6396, %v6394
    %v6469 = vpack.c.bf16 %v6397, %v6395
    %v6470 = vpack.c.bf16 %v6400, %v6398
    %v6471 = vpack.c.bf16 %v6401, %v6399
    %v6472 = vpack.c.bf16 %v6404, %v6402
    %v6473 = vpack.c.bf16 %v6405, %v6403
    %v6474 = vpack.c.bf16 %v6408, %v6406
    %v6475 = vpack.c.bf16 %v6409, %v6407
    %v6476 = vpack.c.bf16 %v6412, %v6410
    %v6477 = vpack.c.bf16 %v6413, %v6411
    %v6479 = vlaneseq
    %v6480 = vshrl.u32 %v6479, 7
    %v6481 = vsub.s32 0, %v6480
    %v6482 = vrot.slane %v560, %v6481
    %v6483 = vlaneseq
    %v6484 = vshrl.u32 %v6483, 7
    %v6485 = vsub.s32 1, %v6484
    %v6486 = vrot.slane %v560, %v6485
    %v6521 = vunpack.c.l.b16 %v528
    %v6522 = vunpack.c.h.b16 %v528
    %v6523 = vunpack.c.l.b16 %v529
    %v6524 = vunpack.c.h.b16 %v529
    %v6525 = vunpack.c.l.b16 %v530
    %v6526 = vunpack.c.h.b16 %v530
    %v6527 = vunpack.c.l.b16 %v531
    %v6528 = vunpack.c.h.b16 %v531
    %v6529 = vunpack.c.l.b16 %v532
    %v6530 = vunpack.c.h.b16 %v532
    %v6531 = vunpack.c.l.b16 %v533
    %v6532 = vunpack.c.h.b16 %v533
    %v6533 = vunpack.c.l.b16 %v534
    %v6534 = vunpack.c.h.b16 %v534
    %v6535 = vunpack.c.l.b16 %v535
    %v6536 = vunpack.c.h.b16 %v535
    %v6537 = vunpack.c.l.b16 %v536
    %v6538 = vunpack.c.h.b16 %v536
    %v6539 = vunpack.c.l.b16 %v537
    %v6540 = vunpack.c.h.b16 %v537
    %v6541 = vunpack.c.l.b16 %v538
    %v6542 = vunpack.c.h.b16 %v538
    %v6543 = vunpack.c.l.b16 %v539
    %v6544 = vunpack.c.h.b16 %v539
    %v6545 = vunpack.c.l.b16 %v540
    %v6546 = vunpack.c.h.b16 %v540
    %v6547 = vunpack.c.l.b16 %v541
    %v6548 = vunpack.c.h.b16 %v541
    %v6549 = vunpack.c.l.b16 %v542
    %v6550 = vunpack.c.h.b16 %v542
    %v6551 = vunpack.c.l.b16 %v543
    %v6552 = vunpack.c.h.b16 %v543
    %v6553 = vunpack.c.l.b16 %v544
    %v6554 = vunpack.c.h.b16 %v544
    %v6555 = vunpack.c.l.b16 %v545
    %v6556 = vunpack.c.h.b16 %v545
    %v6557 = vunpack.c.l.b16 %v546
    %v6558 = vunpack.c.h.b16 %v546
    %v6559 = vunpack.c.l.b16 %v547
    %v6560 = vunpack.c.h.b16 %v547
    %v6561 = vunpack.c.l.b16 %v548
    %v6562 = vunpack.c.h.b16 %v548
    %v6563 = vunpack.c.l.b16 %v549
    %v6564 = vunpack.c.h.b16 %v549
    %v6565 = vunpack.c.l.b16 %v550
    %v6566 = vunpack.c.h.b16 %v550
    %v6567 = vunpack.c.l.b16 %v551
    %v6568 = vunpack.c.h.b16 %v551
    %v6569 = vunpack.c.l.b16 %v552
    %v6570 = vunpack.c.h.b16 %v552
    %v6571 = vunpack.c.l.b16 %v553
    %v6572 = vunpack.c.h.b16 %v553
    %v6573 = vunpack.c.l.b16 %v554
    %v6574 = vunpack.c.h.b16 %v554
    %v6575 = vunpack.c.l.b16 %v555
    %v6576 = vunpack.c.h.b16 %v555
    %v6577 = vunpack.c.l.b16 %v556
    %v6578 = vunpack.c.h.b16 %v556
    %v6579 = vunpack.c.l.b16 %v557
    %v6580 = vunpack.c.h.b16 %v557
    %v6581 = vunpack.c.l.b16 %v558
    %v6582 = vunpack.c.h.b16 %v558
    %v6583 = vunpack.c.l.b16 %v559
    %v6584 = vunpack.c.h.b16 %v559
    %v6585 = vpack.c.b16 %v6523, %v6521
    %v6586 = vpack.c.b16 %v6524, %v6522
    %v6587 = vpack.c.b16 %v6527, %v6525
    %v6588 = vpack.c.b16 %v6528, %v6526
    %v6589 = vpack.c.b16 %v6531, %v6529
    %v6590 = vpack.c.b16 %v6532, %v6530
    %v6591 = vpack.c.b16 %v6535, %v6533
    %v6592 = vpack.c.b16 %v6536, %v6534
    %v6593 = vpack.c.b16 %v6539, %v6537
    %v6594 = vpack.c.b16 %v6540, %v6538
    %v6595 = vpack.c.b16 %v6543, %v6541
    %v6596 = vpack.c.b16 %v6544, %v6542
    %v6597 = vpack.c.b16 %v6547, %v6545
    %v6598 = vpack.c.b16 %v6548, %v6546
    %v6599 = vpack.c.b16 %v6551, %v6549
    %v6600 = vpack.c.b16 %v6552, %v6550
    %v6601 = vpack.c.b16 %v6555, %v6553
    %v6602 = vpack.c.b16 %v6556, %v6554
    %v6603 = vpack.c.b16 %v6559, %v6557
    %v6604 = vpack.c.b16 %v6560, %v6558
    %v6605 = vpack.c.b16 %v6563, %v6561
    %v6606 = vpack.c.b16 %v6564, %v6562
    %v6607 = vpack.c.b16 %v6567, %v6565
    %v6608 = vpack.c.b16 %v6568, %v6566
    %v6609 = vpack.c.b16 %v6571, %v6569
    %v6610 = vpack.c.b16 %v6572, %v6570
    %v6611 = vpack.c.b16 %v6575, %v6573
    %v6612 = vpack.c.b16 %v6576, %v6574
    %v6613 = vpack.c.b16 %v6579, %v6577
    %v6614 = vpack.c.b16 %v6580, %v6578
    %v6615 = vpack.c.b16 %v6583, %v6581
    %v6616 = vpack.c.b16 %v6584, %v6582
    %6649 = vmatprep.subr.bf16.mxu0 %v6586
    %6650 = vmatpush1.bf16.msra.mxu0 %v6585
    %6651 = vmatprep.subr.bf16.mxu0 %v6588
    %6652 = vmatpush1.bf16.msra.mxu0 %v6587
    %6653 = vmatprep.subr.bf16.mxu0 %v6590
    %6654 = vmatpush1.bf16.msra.mxu0 %v6589
    %6655 = vmatprep.subr.bf16.mxu0 %v6592
    %6656 = vmatpush1.bf16.msra.mxu0 %v6591
    %6657 = vmatprep.subr.bf16.mxu0 %v6594
    %6658 = vmatpush1.bf16.msra.mxu0 %v6593
    %6659 = vmatprep.subr.bf16.mxu0 %v6596
    %6660 = vmatpush1.bf16.msra.mxu0 %v6595
    %6661 = vmatprep.subr.bf16.mxu0 %v6598
    %6662 = vmatpush1.bf16.msra.mxu0 %v6597
    %6663 = vmatprep.subr.bf16.mxu0 %v6600
    %6664 = vmatpush1.bf16.msra.mxu0 %v6599
    %6665 = vmatprep.subr.bf16.mxu0 %v6602
    %6666 = vmatpush1.bf16.msra.mxu0 %v6601
    %6667 = vmatprep.subr.bf16.mxu0 %v6604
    %6668 = vmatpush1.bf16.msra.mxu0 %v6603
    %6669 = vmatprep.subr.bf16.mxu0 %v6606
    %6670 = vmatpush1.bf16.msra.mxu0 %v6605
    %6671 = vmatprep.subr.bf16.mxu0 %v6608
    %6672 = vmatpush1.bf16.msra.mxu0 %v6607
    %6673 = vmatprep.subr.bf16.mxu0 %v6610
    %6674 = vmatpush1.bf16.msra.mxu0 %v6609
    %6675 = vmatprep.subr.bf16.mxu0 %v6612
    %6676 = vmatpush1.bf16.msra.mxu0 %v6611
    %6677 = vmatprep.subr.bf16.mxu0 %v6614
    %6678 = vmatpush1.bf16.msra.mxu0 %v6613
    %6679 = vmatprep.subr.bf16.mxu0 %v6616
    %6680 = vmatpush1.bf16.msra.mxu0 %v6615
    %6681 = vmatprep.mubr.bf16.mxu0 %v6415
    %6682 = vmatmul.mubr.bf16.gmra.mrb[0].mxu0 %v6414
    %v6683 = vpop.f32.mrb[0].mxu0
    %v6684 = vadd.f32 %v6482, %v6683
    %v6685 = vpop.f32.mrb[0].mxu0
    %v6686 = vadd.f32 %v6486, %v6685
    %v6687 = vpop.f32.mrb[0].mxu0
    %v6688 = vadd.f32 %v6482, %v6687
    %v6689 = vpop.f32.mrb[0].mxu0
    %v6690 = vadd.f32 %v6486, %v6689
    %6691 = vmatprep.mubr.bf16.mxu0 %v6417
    %6692 = vmatmul.mubr.bf16.gmra.mrb[0].mxu0 %v6416
    %v6693 = vpop.f32.mrb[0].mxu0
    %v6694 = vadd.f32 %v6482, %v6693
    %v6695 = vpop.f32.mrb[0].mxu0
    %v6696 = vadd.f32 %v6486, %v6695
    %v6697 = vpop.f32.mrb[0].mxu0
    %v6698 = vadd.f32 %v6482, %v6697
    %v6699 = vpop.f32.mrb[0].mxu0
    %v6700 = vadd.f32 %v6486, %v6699
    %6701 = vmatprep.mubr.bf16.mxu0 %v6419
    %6702 = vmatmul.mubr.bf16.gmra.mrb[0].mxu0 %v6418
    %v6703 = vpop.f32.mrb[0].mxu0
    %v6704 = vadd.f32 %v6482, %v6703
    %v6705 = vpop.f32.mrb[0].mxu0
    %v6706 = vadd.f32 %v6486, %v6705
    %v6707 = vpop.f32.mrb[0].mxu0
    %v6708 = vadd.f32 %v6482, %v6707
    %v6709 = vpop.f32.mrb[0].mxu0
    %v6710 = vadd.f32 %v6486, %v6709
    %6711 = vmatprep.mubr.bf16.mxu0 %v6421
    %6712 = vmatmul.mubr.bf16.gmra.mrb[0].mxu0 %v6420
    %v6713 = vpop.f32.mrb[0].mxu0
    %v6714 = vadd.f32 %v6482, %v6713
    %v6715 = vpop.f32.mrb[0].mxu0
    %v6716 = vadd.f32 %v6486, %v6715
    %v6717 = vpop.f32.mrb[0].mxu0
    %v6718 = vadd.f32 %v6482, %v6717
    %v6719 = vpop.f32.mrb[0].mxu0
    %v6720 = vadd.f32 %v6486, %v6719
    %6721 = vmatprep.mubr.bf16.mxu0 %v6423
    %6722 = vmatmul.mubr.bf16.gmra.mrb[0].mxu0 %v6422
    %v6723 = vpop.f32.mrb[0].mxu0
    %v6724 = vadd.f32 %v6482, %v6723
    %v6725 = vpop.f32.mrb[0].mxu0
    %v6726 = vadd.f32 %v6486, %v6725
    %v6727 = vpop.f32.mrb[0].mxu0
    %v6728 = vadd.f32 %v6482, %v6727
    %v6729 = vpop.f32.mrb[0].mxu0
    %v6730 = vadd.f32 %v6486, %v6729
    %6731 = vmatprep.mubr.bf16.mxu0 %v6425
    %6732 = vmatmul.mubr.bf16.gmra.mrb[0].mxu0 %v6424
    %v6733 = vpop.f32.mrb[0].mxu0
    %v6734 = vadd.f32 %v6482, %v6733
    %v6735 = vpop.f32.mrb[0].mxu0
    %v6736 = vadd.f32 %v6486, %v6735
    %v6737 = vpop.f32.mrb[0].mxu0
    %v6738 = vadd.f32 %v6482, %v6737
    %v6739 = vpop.f32.mrb[0].mxu0
    %v6740 = vadd.f32 %v6486, %v6739
    %6741 = vmatprep.mubr.bf16.mxu0 %v6427
    %6742 = vmatmul.mubr.bf16.gmra.mrb[0].mxu0 %v6426
    %v6743 = vpop.f32.mrb[0].mxu0
    %v6744 = vadd.f32 %v6482, %v6743
    %v6745 = vpop.f32.mrb[0].mxu0
    %v6746 = vadd.f32 %v6486, %v6745
    %v6747 = vpop.f32.mrb[0].mxu0
    %v6748 = vadd.f32 %v6482, %v6747
    %v6749 = vpop.f32.mrb[0].mxu0
    %v6750 = vadd.f32 %v6486, %v6749
    %6751 = vmatprep.mubr.bf16.mxu0 %v6429
    %6752 = vmatmul.mubr.bf16.gmra.mrb[0].mxu0 %v6428
    %v6753 = vpop.f32.mrb[0].mxu0
    %v6754 = vadd.f32 %v6482, %v6753
    %v6755 = vpop.f32.mrb[0].mxu0
    %v6756 = vadd.f32 %v6486, %v6755
    %v6757 = vpop.f32.mrb[0].mxu0
    %v6758 = vadd.f32 %v6482, %v6757
    %v6759 = vpop.f32.mrb[0].mxu0
    %v6760 = vadd.f32 %v6486, %v6759
    %6761 = vmatprep.mubr.bf16.mxu0 %v6431
    %6762 = vmatmul.mubr.bf16.gmra.mrb[0].mxu0 %v6430
    %v6763 = vpop.f32.mrb[0].mxu0
    %v6764 = vadd.f32 %v6482, %v6763
    %v6765 = vpop.f32.mrb[0].mxu0
    %v6766 = vadd.f32 %v6486, %v6765
    %v6767 = vpop.f32.mrb[0].mxu0
    %v6768 = vadd.f32 %v6482, %v6767
    %v6769 = vpop.f32.mrb[0].mxu0
    %v6770 = vadd.f32 %v6486, %v6769
    %6771 = vmatprep.mubr.bf16.mxu0 %v6433
    %6772 = vmatmul.mubr.bf16.gmra.mrb[0].mxu0 %v6432
    %v6773 = vpop.f32.mrb[0].mxu0
    %v6774 = vadd.f32 %v6482, %v6773
    %v6775 = vpop.f32.mrb[0].mxu0
    %v6776 = vadd.f32 %v6486, %v6775
    %v6777 = vpop.f32.mrb[0].mxu0
    %v6778 = vadd.f32 %v6482, %v6777
    %v6779 = vpop.f32.mrb[0].mxu0
    %v6780 = vadd.f32 %v6486, %v6779
    %6781 = vmatprep.mubr.bf16.mxu0 %v6435
    %6782 = vmatmul.mubr.bf16.gmra.mrb[0].mxu0 %v6434
    %v6783 = vpop.f32.mrb[0].mxu0
    %v6784 = vadd.f32 %v6482, %v6783
    %v6785 = vpop.f32.mrb[0].mxu0
    %v6786 = vadd.f32 %v6486, %v6785
    %v6787 = vpop.f32.mrb[0].mxu0
    %v6788 = vadd.f32 %v6482, %v6787
    %v6789 = vpop.f32.mrb[0].mxu0
    %v6790 = vadd.f32 %v6486, %v6789
    %6791 = vmatprep.mubr.bf16.mxu0 %v6437
    %6792 = vmatmul.mubr.bf16.gmra.mrb[0].mxu0 %v6436
    %v6793 = vpop.f32.mrb[0].mxu0
    %v6794 = vadd.f32 %v6482, %v6793
    %v6795 = vpop.f32.mrb[0].mxu0
    %v6796 = vadd.f32 %v6486, %v6795
    %v6797 = vpop.f32.mrb[0].mxu0
    %v6798 = vadd.f32 %v6482, %v6797
    %v6799 = vpop.f32.mrb[0].mxu0
    %v6800 = vadd.f32 %v6486, %v6799
    %6801 = vmatprep.mubr.bf16.mxu0 %v6439
    %6802 = vmatmul.mubr.bf16.gmra.mrb[0].mxu0 %v6438
    %v6803 = vpop.f32.mrb[0].mxu0
    %v6804 = vadd.f32 %v6482, %v6803
    %v6805 = vpop.f32.mrb[0].mxu0
    %v6806 = vadd.f32 %v6486, %v6805
    %v6807 = vpop.f32.mrb[0].mxu0
    %v6808 = vadd.f32 %v6482, %v6807
    %v6809 = vpop.f32.mrb[0].mxu0
    %v6810 = vadd.f32 %v6486, %v6809
    %6811 = vmatprep.mubr.bf16.mxu0 %v6441
    %6812 = vmatmul.mubr.bf16.gmra.mrb[0].mxu0 %v6440
    %v6813 = vpop.f32.mrb[0].mxu0
    %v6814 = vadd.f32 %v6482, %v6813
    %v6815 = vpop.f32.mrb[0].mxu0
    %v6816 = vadd.f32 %v6486, %v6815
    %v6817 = vpop.f32.mrb[0].mxu0
    %v6818 = vadd.f32 %v6482, %v6817
    %v6819 = vpop.f32.mrb[0].mxu0
    %v6820 = vadd.f32 %v6486, %v6819
    %6821 = vmatprep.mubr.bf16.mxu0 %v6443
    %6822 = vmatmul.mubr.bf16.gmra.mrb[0].mxu0 %v6442
    %v6823 = vpop.f32.mrb[0].mxu0
    %v6824 = vadd.f32 %v6482, %v6823
    %v6825 = vpop.f32.mrb[0].mxu0
    %v6826 = vadd.f32 %v6486, %v6825
    %v6827 = vpop.f32.mrb[0].mxu0
    %v6828 = vadd.f32 %v6482, %v6827
    %v6829 = vpop.f32.mrb[0].mxu0
    %v6830 = vadd.f32 %v6486, %v6829
    %6831 = vmatprep.mubr.bf16.mxu0 %v6445
    %6832 = vmatmul.mubr.bf16.gmra.mrb[0].mxu0 %v6444
    %v6833 = vpop.f32.mrb[0].mxu0
    %v6834 = vadd.f32 %v6482, %v6833
    %v6835 = vpop.f32.mrb[0].mxu0
    %v6836 = vadd.f32 %v6486, %v6835
    %v6837 = vpop.f32.mrb[0].mxu0
    %v6838 = vadd.f32 %v6482, %v6837
    %v6839 = vpop.f32.mrb[0].mxu0
    %v6840 = vadd.f32 %v6486, %v6839
    %6841 = vmatprep.mubr.bf16.mxu0 %v6447
    %6842 = vmatmul.mubr.bf16.gmra.mrb[0].mxu0 %v6446
    %v6843 = vpop.f32.mrb[0].mxu0
    %v6844 = vadd.f32 %v6482, %v6843
    %v6845 = vpop.f32.mrb[0].mxu0
    %v6846 = vadd.f32 %v6486, %v6845
    %v6847 = vpop.f32.mrb[0].mxu0
    %v6848 = vadd.f32 %v6482, %v6847
    %v6849 = vpop.f32.mrb[0].mxu0
    %v6850 = vadd.f32 %v6486, %v6849
    %6851 = vmatprep.mubr.bf16.mxu0 %v6449
    %6852 = vmatmul.mubr.bf16.gmra.mrb[0].mxu0 %v6448
    %v6853 = vpop.f32.mrb[0].mxu0
    %v6854 = vadd.f32 %v6482, %v6853
    %v6855 = vpop.f32.mrb[0].mxu0
    %v6856 = vadd.f32 %v6486, %v6855
    %v6857 = vpop.f32.mrb[0].mxu0
    %v6858 = vadd.f32 %v6482, %v6857
    %v6859 = vpop.f32.mrb[0].mxu0
    %v6860 = vadd.f32 %v6486, %v6859
    %6861 = vmatprep.mubr.bf16.mxu0 %v6451
    %6862 = vmatmul.mubr.bf16.gmra.mrb[0].mxu0 %v6450
    %v6863 = vpop.f32.mrb[0].mxu0
    %v6864 = vadd.f32 %v6482, %v6863
    %v6865 = vpop.f32.mrb[0].mxu0
    %v6866 = vadd.f32 %v6486, %v6865
    %v6867 = vpop.f32.mrb[0].mxu0
    %v6868 = vadd.f32 %v6482, %v6867
    %v6869 = vpop.f32.mrb[0].mxu0
    %v6870 = vadd.f32 %v6486, %v6869
    %6871 = vmatprep.mubr.bf16.mxu0 %v6453
    %6872 = vmatmul.mubr.bf16.gmra.mrb[0].mxu0 %v6452
    %v6873 = vpop.f32.mrb[0].mxu0
    %v6874 = vadd.f32 %v6482, %v6873
    %v6875 = vpop.f32.mrb[0].mxu0
    %v6876 = vadd.f32 %v6486, %v6875
    %v6877 = vpop.f32.mrb[0].mxu0
    %v6878 = vadd.f32 %v6482, %v6877
    %v6879 = vpop.f32.mrb[0].mxu0
    %v6880 = vadd.f32 %v6486, %v6879
    %6881 = vmatprep.mubr.bf16.mxu0 %v6455
    %6882 = vmatmul.mubr.bf16.gmra.mrb[0].mxu0 %v6454
    %v6883 = vpop.f32.mrb[0].mxu0
    %v6884 = vadd.f32 %v6482, %v6883
    %v6885 = vpop.f32.mrb[0].mxu0
    %v6886 = vadd.f32 %v6486, %v6885
    %v6887 = vpop.f32.mrb[0].mxu0
    %v6888 = vadd.f32 %v6482, %v6887
    %v6889 = vpop.f32.mrb[0].mxu0
    %v6890 = vadd.f32 %v6486, %v6889
    %6891 = vmatprep.mubr.bf16.mxu0 %v6457
    %6892 = vmatmul.mubr.bf16.gmra.mrb[0].mxu0 %v6456
    %v6893 = vpop.f32.mrb[0].mxu0
    %v6894 = vadd.f32 %v6482, %v6893
    %v6895 = vpop.f32.mrb[0].mxu0
    %v6896 = vadd.f32 %v6486, %v6895
    %v6897 = vpop.f32.mrb[0].mxu0
    %v6898 = vadd.f32 %v6482, %v6897
    %v6899 = vpop.f32.mrb[0].mxu0
    %v6900 = vadd.f32 %v6486, %v6899
    %6901 = vmatprep.mubr.bf16.mxu0 %v6459
    %6902 = vmatmul.mubr.bf16.gmra.mrb[0].mxu0 %v6458
    %v6903 = vpop.f32.mrb[0].mxu0
    %v6904 = vadd.f32 %v6482, %v6903
    %v6905 = vpop.f32.mrb[0].mxu0
    %v6906 = vadd.f32 %v6486, %v6905
    %v6907 = vpop.f32.mrb[0].mxu0
    %v6908 = vadd.f32 %v6482, %v6907
    %v6909 = vpop.f32.mrb[0].mxu0
    %v6910 = vadd.f32 %v6486, %v6909
    %6911 = vmatprep.mubr.bf16.mxu0 %v6461
    %6912 = vmatmul.mubr.bf16.gmra.mrb[0].mxu0 %v6460
    %v6913 = vpop.f32.mrb[0].mxu0
    %v6914 = vadd.f32 %v6482, %v6913
    %v6915 = vpop.f32.mrb[0].mxu0
    %v6916 = vadd.f32 %v6486, %v6915
    %v6917 = vpop.f32.mrb[0].mxu0
    %v6918 = vadd.f32 %v6482, %v6917
    %v6919 = vpop.f32.mrb[0].mxu0
    %v6920 = vadd.f32 %v6486, %v6919
    %6921 = vmatprep.mubr.bf16.mxu0 %v6463
    %6922 = vmatmul.mubr.bf16.gmra.mrb[0].mxu0 %v6462
    %v6923 = vpop.f32.mrb[0].mxu0
    %v6924 = vadd.f32 %v6482, %v6923
    %v6925 = vpop.f32.mrb[0].mxu0
    %v6926 = vadd.f32 %v6486, %v6925
    %v6927 = vpop.f32.mrb[0].mxu0
    %v6928 = vadd.f32 %v6482, %v6927
    %v6929 = vpop.f32.mrb[0].mxu0
    %v6930 = vadd.f32 %v6486, %v6929
    %6931 = vmatprep.mubr.bf16.mxu0 %v6465
    %6932 = vmatmul.mubr.bf16.gmra.mrb[0].mxu0 %v6464
    %v6933 = vpop.f32.mrb[0].mxu0
    %v6934 = vadd.f32 %v6482, %v6933
    %v6935 = vpop.f32.mrb[0].mxu0
    %v6936 = vadd.f32 %v6486, %v6935
    %v6937 = vpop.f32.mrb[0].mxu0
    %v6938 = vadd.f32 %v6482, %v6937
    %v6939 = vpop.f32.mrb[0].mxu0
    %v6940 = vadd.f32 %v6486, %v6939
    %6941 = vmatprep.mubr.bf16.mxu0 %v6467
    %6942 = vmatmul.mubr.bf16.gmra.mrb[0].mxu0 %v6466
    %v6943 = vpop.f32.mrb[0].mxu0
    %v6944 = vadd.f32 %v6482, %v6943
    %v6945 = vpop.f32.mrb[0].mxu0
    %v6946 = vadd.f32 %v6486, %v6945
    %v6947 = vpop.f32.mrb[0].mxu0
    %v6948 = vadd.f32 %v6482, %v6947
    %v6949 = vpop.f32.mrb[0].mxu0
    %v6950 = vadd.f32 %v6486, %v6949
    %6951 = vmatprep.mubr.bf16.mxu0 %v6469
    %6952 = vmatmul.mubr.bf16.gmra.mrb[0].mxu0 %v6468
    %v6953 = vpop.f32.mrb[0].mxu0
    %v6954 = vadd.f32 %v6482, %v6953
    %v6955 = vpop.f32.mrb[0].mxu0
    %v6956 = vadd.f32 %v6486, %v6955
    %v6957 = vpop.f32.mrb[0].mxu0
    %v6958 = vadd.f32 %v6482, %v6957
    %v6959 = vpop.f32.mrb[0].mxu0
    %v6960 = vadd.f32 %v6486, %v6959
    %6961 = vmatprep.mubr.bf16.mxu0 %v6471
    %6962 = vmatmul.mubr.bf16.gmra.mrb[0].mxu0 %v6470
    %v6963 = vpop.f32.mrb[0].mxu0
    %v6964 = vadd.f32 %v6482, %v6963
    %v6965 = vpop.f32.mrb[0].mxu0
    %v6966 = vadd.f32 %v6486, %v6965
    %v6967 = vpop.f32.mrb[0].mxu0
    %v6968 = vadd.f32 %v6482, %v6967
    %v6969 = vpop.f32.mrb[0].mxu0
    %v6970 = vadd.f32 %v6486, %v6969
    %6971 = vmatprep.mubr.bf16.mxu0 %v6473
    %6972 = vmatmul.mubr.bf16.gmra.mrb[0].mxu0 %v6472
    %v6973 = vpop.f32.mrb[0].mxu0
    %v6974 = vadd.f32 %v6482, %v6973
    %v6975 = vpop.f32.mrb[0].mxu0
    %v6976 = vadd.f32 %v6486, %v6975
    %v6977 = vpop.f32.mrb[0].mxu0
    %v6978 = vadd.f32 %v6482, %v6977
    %v6979 = vpop.f32.mrb[0].mxu0
    %v6980 = vadd.f32 %v6486, %v6979
    %6981 = vmatprep.mubr.bf16.mxu0 %v6475
    %6982 = vmatmul.mubr.bf16.gmra.mrb[0].mxu0 %v6474
    %v6983 = vpop.f32.mrb[0].mxu0
    %v6984 = vadd.f32 %v6482, %v6983
    %v6985 = vpop.f32.mrb[0].mxu0
    %v6986 = vadd.f32 %v6486, %v6985
    %v6987 = vpop.f32.mrb[0].mxu0
    %v6988 = vadd.f32 %v6482, %v6987
    %v6989 = vpop.f32.mrb[0].mxu0
    %v6990 = vadd.f32 %v6486, %v6989
    %6991 = vmatprep.mubr.bf16.mxu0 %v6477
    %6992 = vmatmul.mubr.bf16.gmra.mrb[0].mxu0 %v6476
    %v6993 = vpop.f32.mrb[0].mxu0
    %v6994 = vadd.f32 %v6482, %v6993
    %v6995 = vpop.f32.mrb[0].mxu0
    %v6996 = vadd.f32 %v6486, %v6995
    %v6997 = vpop.f32.mrb[0].mxu0
    %v6998 = vadd.f32 %v6482, %v6997
    %v6999 = vpop.f32.mrb[0].mxu0
    %v7000 = vadd.f32 %v6486, %v6999
    %7001 = vdwg.mxu0
    %v7002 = vmax.f32 %v6684, 0.0
    %v7003 = vmax.f32 %v6686, 0.0
    %v7004 = vmax.f32 %v6688, 0.0
    %v7005 = vmax.f32 %v6690, 0.0
    %v7006 = vmax.f32 %v6694, 0.0
    %v7007 = vmax.f32 %v6696, 0.0
    %v7008 = vmax.f32 %v6698, 0.0
    %v7009 = vmax.f32 %v6700, 0.0
    %v7010 = vmax.f32 %v6704, 0.0
    %v7011 = vmax.f32 %v6706, 0.0
    %v7012 = vmax.f32 %v6708, 0.0
    %v7013 = vmax.f32 %v6710, 0.0
    %v7014 = vmax.f32 %v6714, 0.0
    %v7015 = vmax.f32 %v6716, 0.0
    %v7016 = vmax.f32 %v6718, 0.0
    %v7017 = vmax.f32 %v6720, 0.0
    %v7018 = vmax.f32 %v6724, 0.0
    %v7019 = vmax.f32 %v6726, 0.0
    %v7020 = vmax.f32 %v6728, 0.0
    %v7021 = vmax.f32 %v6730, 0.0
    %v7022 = vmax.f32 %v6734, 0.0
    %v7023 = vmax.f32 %v6736, 0.0
    %v7024 = vmax.f32 %v6738, 0.0
    %v7025 = vmax.f32 %v6740, 0.0
    %v7026 = vmax.f32 %v6744, 0.0
    %v7027 = vmax.f32 %v6746, 0.0
    %v7028 = vmax.f32 %v6748, 0.0
    %v7029 = vmax.f32 %v6750, 0.0
    %v7030 = vmax.f32 %v6754, 0.0
    %v7031 = vmax.f32 %v6756, 0.0
    %v7032 = vmax.f32 %v6758, 0.0
    %v7033 = vmax.f32 %v6760, 0.0
    %v7034 = vmax.f32 %v6764, 0.0
    %v7035 = vmax.f32 %v6766, 0.0
    %v7036 = vmax.f32 %v6768, 0.0
    %v7037 = vmax.f32 %v6770, 0.0
    %v7038 = vmax.f32 %v6774, 0.0
    %v7039 = vmax.f32 %v6776, 0.0
    %v7040 = vmax.f32 %v6778, 0.0
    %v7041 = vmax.f32 %v6780, 0.0
    %v7042 = vmax.f32 %v6784, 0.0
    %v7043 = vmax.f32 %v6786, 0.0
    %v7044 = vmax.f32 %v6788, 0.0
    %v7045 = vmax.f32 %v6790, 0.0
    %v7046 = vmax.f32 %v6794, 0.0
    %v7047 = vmax.f32 %v6796, 0.0
    %v7048 = vmax.f32 %v6798, 0.0
    %v7049 = vmax.f32 %v6800, 0.0
    %v7050 = vmax.f32 %v6804, 0.0
    %v7051 = vmax.f32 %v6806, 0.0
    %v7052 = vmax.f32 %v6808, 0.0
    %v7053 = vmax.f32 %v6810, 0.0
    %v7054 = vmax.f32 %v6814, 0.0
    %v7055 = vmax.f32 %v6816, 0.0
    %v7056 = vmax.f32 %v6818, 0.0
    %v7057 = vmax.f32 %v6820, 0.0
    %v7058 = vmax.f32 %v6824, 0.0
    %v7059 = vmax.f32 %v6826, 0.0
    %v7060 = vmax.f32 %v6828, 0.0
    %v7061 = vmax.f32 %v6830, 0.0
    %v7062 = vmax.f32 %v6834, 0.0
    %v7063 = vmax.f32 %v6836, 0.0
    %v7064 = vmax.f32 %v6838, 0.0
    %v7065 = vmax.f32 %v6840, 0.0
    %v7066 = vmax.f32 %v6844, 0.0
    %v7067 = vmax.f32 %v6846, 0.0
    %v7068 = vmax.f32 %v6848, 0.0
    %v7069 = vmax.f32 %v6850, 0.0
    %v7070 = vmax.f32 %v6854, 0.0
    %v7071 = vmax.f32 %v6856, 0.0
    %v7072 = vmax.f32 %v6858, 0.0
    %v7073 = vmax.f32 %v6860, 0.0
    %v7074 = vmax.f32 %v6864, 0.0
    %v7075 = vmax.f32 %v6866, 0.0
    %v7076 = vmax.f32 %v6868, 0.0
    %v7077 = vmax.f32 %v6870, 0.0
    %v7078 = vmax.f32 %v6874, 0.0
    %v7079 = vmax.f32 %v6876, 0.0
    %v7080 = vmax.f32 %v6878, 0.0
    %v7081 = vmax.f32 %v6880, 0.0
    %v7082 = vmax.f32 %v6884, 0.0
    %v7083 = vmax.f32 %v6886, 0.0
    %v7084 = vmax.f32 %v6888, 0.0
    %v7085 = vmax.f32 %v6890, 0.0
    %v7086 = vmax.f32 %v6894, 0.0
    %v7087 = vmax.f32 %v6896, 0.0
    %v7088 = vmax.f32 %v6898, 0.0
    %v7089 = vmax.f32 %v6900, 0.0
    %v7090 = vmax.f32 %v6904, 0.0
    %v7091 = vmax.f32 %v6906, 0.0
    %v7092 = vmax.f32 %v6908, 0.0
    %v7093 = vmax.f32 %v6910, 0.0
    %v7094 = vmax.f32 %v6914, 0.0
    %v7095 = vmax.f32 %v6916, 0.0
    %v7096 = vmax.f32 %v6918, 0.0
    %v7097 = vmax.f32 %v6920, 0.0
    %v7098 = vmax.f32 %v6924, 0.0
    %v7099 = vmax.f32 %v6926, 0.0
    %v7100 = vmax.f32 %v6928, 0.0
    %v7101 = vmax.f32 %v6930, 0.0
    %v7102 = vmax.f32 %v6934, 0.0
    %v7103 = vmax.f32 %v6936, 0.0
    %v7104 = vmax.f32 %v6938, 0.0
    %v7105 = vmax.f32 %v6940, 0.0
    %v7106 = vmax.f32 %v6944, 0.0
    %v7107 = vmax.f32 %v6946, 0.0
    %v7108 = vmax.f32 %v6948, 0.0
    %v7109 = vmax.f32 %v6950, 0.0
    %v7110 = vmax.f32 %v6954, 0.0
    %v7111 = vmax.f32 %v6956, 0.0
    %v7112 = vmax.f32 %v6958, 0.0
    %v7113 = vmax.f32 %v6960, 0.0
    %v7114 = vmax.f32 %v6964, 0.0
    %v7115 = vmax.f32 %v6966, 0.0
    %v7116 = vmax.f32 %v6968, 0.0
    %v7117 = vmax.f32 %v6970, 0.0
    %v7118 = vmax.f32 %v6974, 0.0
    %v7119 = vmax.f32 %v6976, 0.0
    %v7120 = vmax.f32 %v6978, 0.0
    %v7121 = vmax.f32 %v6980, 0.0
    %v7122 = vmax.f32 %v6984, 0.0
    %v7123 = vmax.f32 %v6986, 0.0
    %v7124 = vmax.f32 %v6988, 0.0
    %v7125 = vmax.f32 %v6990, 0.0
    %v7126 = vmax.f32 %v6994, 0.0
    %v7127 = vmax.f32 %v6996, 0.0
    %v7128 = vmax.f32 %v6998, 0.0
    %v7129 = vmax.f32 %v7000, 0.0
    %v7130 = vpack.c.bf16 %v7004, %v7002
    %v7131 = vpack.c.bf16 %v7005, %v7003
    %v7132 = vpack.c.bf16 %v7008, %v7006
    %v7133 = vpack.c.bf16 %v7009, %v7007
    %v7134 = vpack.c.bf16 %v7012, %v7010
    %v7135 = vpack.c.bf16 %v7013, %v7011
    %v7136 = vpack.c.bf16 %v7016, %v7014
    %v7137 = vpack.c.bf16 %v7017, %v7015
    %v7138 = vpack.c.bf16 %v7020, %v7018
    %v7139 = vpack.c.bf16 %v7021, %v7019
    %v7140 = vpack.c.bf16 %v7024, %v7022
    %v7141 = vpack.c.bf16 %v7025, %v7023
    %v7142 = vpack.c.bf16 %v7028, %v7026
    %v7143 = vpack.c.bf16 %v7029, %v7027
    %v7144 = vpack.c.bf16 %v7032, %v7030
    %v7145 = vpack.c.bf16 %v7033, %v7031
    %v7146 = vpack.c.bf16 %v7036, %v7034
    %v7147 = vpack.c.bf16 %v7037, %v7035
    %v7148 = vpack.c.bf16 %v7040, %v7038
    %v7149 = vpack.c.bf16 %v7041, %v7039
    %v7150 = vpack.c.bf16 %v7044, %v7042
    %v7151 = vpack.c.bf16 %v7045, %v7043
    %v7152 = vpack.c.bf16 %v7048, %v7046
    %v7153 = vpack.c.bf16 %v7049, %v7047
    %v7154 = vpack.c.bf16 %v7052, %v7050
    %v7155 = vpack.c.bf16 %v7053, %v7051
    %v7156 = vpack.c.bf16 %v7056, %v7054
    %v7157 = vpack.c.bf16 %v7057, %v7055
    %v7158 = vpack.c.bf16 %v7060, %v7058
    %v7159 = vpack.c.bf16 %v7061, %v7059
    %v7160 = vpack.c.bf16 %v7064, %v7062
    %v7161 = vpack.c.bf16 %v7065, %v7063
    %v7162 = vpack.c.bf16 %v7068, %v7066
    %v7163 = vpack.c.bf16 %v7069, %v7067
    %v7164 = vpack.c.bf16 %v7072, %v7070
    %v7165 = vpack.c.bf16 %v7073, %v7071
    %v7166 = vpack.c.bf16 %v7076, %v7074
    %v7167 = vpack.c.bf16 %v7077, %v7075
    %v7168 = vpack.c.bf16 %v7080, %v7078
    %v7169 = vpack.c.bf16 %v7081, %v7079
    %v7170 = vpack.c.bf16 %v7084, %v7082
    %v7171 = vpack.c.bf16 %v7085, %v7083
    %v7172 = vpack.c.bf16 %v7088, %v7086
    %v7173 = vpack.c.bf16 %v7089, %v7087
    %v7174 = vpack.c.bf16 %v7092, %v7090
    %v7175 = vpack.c.bf16 %v7093, %v7091
    %v7176 = vpack.c.bf16 %v7096, %v7094
    %v7177 = vpack.c.bf16 %v7097, %v7095
    %v7178 = vpack.c.bf16 %v7100, %v7098
    %v7179 = vpack.c.bf16 %v7101, %v7099
    %v7180 = vpack.c.bf16 %v7104, %v7102
    %v7181 = vpack.c.bf16 %v7105, %v7103
    %v7182 = vpack.c.bf16 %v7108, %v7106
    %v7183 = vpack.c.bf16 %v7109, %v7107
    %v7184 = vpack.c.bf16 %v7112, %v7110
    %v7185 = vpack.c.bf16 %v7113, %v7111
    %v7186 = vpack.c.bf16 %v7116, %v7114
    %v7187 = vpack.c.bf16 %v7117, %v7115
    %v7188 = vpack.c.bf16 %v7120, %v7118
    %v7189 = vpack.c.bf16 %v7121, %v7119
    %v7190 = vpack.c.bf16 %v7124, %v7122
    %v7191 = vpack.c.bf16 %v7125, %v7123
    %v7192 = vpack.c.bf16 %v7128, %v7126
    %v7193 = vpack.c.bf16 %v7129, %v7127
    %v7195 = vlaneseq
    %v7196 = vshrl.u32 %v7195, 7
    %v7197 = vsub.s32 0, %v7196
    %v7198 = vrot.slane %v625, %v7197
    %v7199 = vlaneseq
    %v7200 = vshrl.u32 %v7199, 7
    %v7201 = vsub.s32 1, %v7200
    %v7202 = vrot.slane %v625, %v7201
    %v7203 = vlaneseq
    %v7204 = vshrl.u32 %v7203, 7
    %v7205 = vsub.s32 2, %v7204
    %v7206 = vrot.slane %v625, %v7205
    %v7274 = vunpack.c.l.b16 %v561
    %v7275 = vunpack.c.h.b16 %v561
    %v7276 = vunpack.c.l.b16 %v562
    %v7277 = vunpack.c.l.b16 %v563
    %v7278 = vunpack.c.h.b16 %v563
    %v7279 = vunpack.c.l.b16 %v564
    %v7280 = vunpack.c.l.b16 %v565
    %v7281 = vunpack.c.h.b16 %v565
    %v7282 = vunpack.c.l.b16 %v566
    %v7283 = vunpack.c.l.b16 %v567
    %v7284 = vunpack.c.h.b16 %v567
    %v7285 = vunpack.c.l.b16 %v568
    %v7286 = vunpack.c.l.b16 %v569
    %v7287 = vunpack.c.h.b16 %v569
    %v7288 = vunpack.c.l.b16 %v570
    %v7289 = vunpack.c.l.b16 %v571
    %v7290 = vunpack.c.h.b16 %v571
    %v7291 = vunpack.c.l.b16 %v572
    %v7292 = vunpack.c.l.b16 %v573
    %v7293 = vunpack.c.h.b16 %v573
    %v7294 = vunpack.c.l.b16 %v574
    %v7295 = vunpack.c.l.b16 %v575
    %v7296 = vunpack.c.h.b16 %v575
    %v7297 = vunpack.c.l.b16 %v576
    %v7298 = vunpack.c.l.b16 %v577
    %v7299 = vunpack.c.h.b16 %v577
    %v7300 = vunpack.c.l.b16 %v578
    %v7301 = vunpack.c.l.b16 %v579
    %v7302 = vunpack.c.h.b16 %v579
    %v7303 = vunpack.c.l.b16 %v580
    %v7304 = vunpack.c.l.b16 %v581
    %v7305 = vunpack.c.h.b16 %v581
    %v7306 = vunpack.c.l.b16 %v582
    %v7307 = vunpack.c.l.b16 %v583
    %v7308 = vunpack.c.h.b16 %v583
    %v7309 = vunpack.c.l.b16 %v584
    %v7310 = vunpack.c.l.b16 %v585
    %v7311 = vunpack.c.h.b16 %v585
    %v7312 = vunpack.c.l.b16 %v586
    %v7313 = vunpack.c.l.b16 %v587
    %v7314 = vunpack.c.h.b16 %v587
    %v7315 = vunpack.c.l.b16 %v588
    %v7316 = vunpack.c.l.b16 %v589
    %v7317 = vunpack.c.h.b16 %v589
    %v7318 = vunpack.c.l.b16 %v590
    %v7319 = vunpack.c.l.b16 %v591
    %v7320 = vunpack.c.h.b16 %v591
    %v7321 = vunpack.c.l.b16 %v592
    %v7322 = vunpack.c.l.b16 %v593
    %v7323 = vunpack.c.h.b16 %v593
    %v7324 = vunpack.c.l.b16 %v594
    %v7325 = vunpack.c.l.b16 %v595
    %v7326 = vunpack.c.h.b16 %v595
    %v7327 = vunpack.c.l.b16 %v596
    %v7328 = vunpack.c.l.b16 %v597
    %v7329 = vunpack.c.h.b16 %v597
    %v7330 = vunpack.c.l.b16 %v598
    %v7331 = vunpack.c.l.b16 %v599
    %v7332 = vunpack.c.h.b16 %v599
    %v7333 = vunpack.c.l.b16 %v600
    %v7334 = vunpack.c.l.b16 %v601
    %v7335 = vunpack.c.h.b16 %v601
    %v7336 = vunpack.c.l.b16 %v602
    %v7337 = vunpack.c.l.b16 %v603
    %v7338 = vunpack.c.h.b16 %v603
    %v7339 = vunpack.c.l.b16 %v604
    %v7340 = vunpack.c.l.b16 %v605
    %v7341 = vunpack.c.h.b16 %v605
    %v7342 = vunpack.c.l.b16 %v606
    %v7343 = vunpack.c.l.b16 %v607
    %v7344 = vunpack.c.h.b16 %v607
    %v7345 = vunpack.c.l.b16 %v608
    %v7346 = vunpack.c.l.b16 %v609
    %v7347 = vunpack.c.h.b16 %v609
    %v7348 = vunpack.c.l.b16 %v610
    %v7349 = vunpack.c.l.b16 %v611
    %v7350 = vunpack.c.h.b16 %v611
    %v7351 = vunpack.c.l.b16 %v612
    %v7352 = vunpack.c.l.b16 %v613
    %v7353 = vunpack.c.h.b16 %v613
    %v7354 = vunpack.c.l.b16 %v614
    %v7355 = vunpack.c.l.b16 %v615
    %v7356 = vunpack.c.h.b16 %v615
    %v7357 = vunpack.c.l.b16 %v616
    %v7358 = vunpack.c.l.b16 %v617
    %v7359 = vunpack.c.h.b16 %v617
    %v7360 = vunpack.c.l.b16 %v618
    %v7361 = vunpack.c.l.b16 %v619
    %v7362 = vunpack.c.h.b16 %v619
    %v7363 = vunpack.c.l.b16 %v620
    %v7364 = vunpack.c.l.b16 %v621
    %v7365 = vunpack.c.h.b16 %v621
    %v7366 = vunpack.c.l.b16 %v622
    %v7367 = vunpack.c.l.b16 %v623
    %v7368 = vunpack.c.h.b16 %v623
    %v7369 = vunpack.c.l.b16 %v624
    %v7370 = vpack.c.b16 %v7277, %v7274
    %v7371 = vpack.c.b16 %v7278, %v7275
    %v7372 = vpack.c.b16 %v7279, %v7276
    %v7373 = vpack.c.b16 %v7283, %v7280
    %v7374 = vpack.c.b16 %v7284, %v7281
    %v7375 = vpack.c.b16 %v7285, %v7282
    %v7376 = vpack.c.b16 %v7289, %v7286
    %v7377 = vpack.c.b16 %v7290, %v7287
    %v7378 = vpack.c.b16 %v7291, %v7288
    %v7379 = vpack.c.b16 %v7295, %v7292
    %v7380 = vpack.c.b16 %v7296, %v7293
    %v7381 = vpack.c.b16 %v7297, %v7294
    %v7382 = vpack.c.b16 %v7301, %v7298
    %v7383 = vpack.c.b16 %v7302, %v7299
    %v7384 = vpack.c.b16 %v7303, %v7300
    %v7385 = vpack.c.b16 %v7307, %v7304
    %v7386 = vpack.c.b16 %v7308, %v7305
    %v7387 = vpack.c.b16 %v7309, %v7306
    %v7388 = vpack.c.b16 %v7313, %v7310
    %v7389 = vpack.c.b16 %v7314, %v7311
    %v7390 = vpack.c.b16 %v7315, %v7312
    %v7391 = vpack.c.b16 %v7319, %v7316
    %v7392 = vpack.c.b16 %v7320, %v7317
    %v7393 = vpack.c.b16 %v7321, %v7318
    %v7394 = vpack.c.b16 %v7325, %v7322
    %v7395 = vpack.c.b16 %v7326, %v7323
    %v7396 = vpack.c.b16 %v7327, %v7324
    %v7397 = vpack.c.b16 %v7331, %v7328
    %v7398 = vpack.c.b16 %v7332, %v7329
    %v7399 = vpack.c.b16 %v7333, %v7330
    %v7400 = vpack.c.b16 %v7337, %v7334
    %v7401 = vpack.c.b16 %v7338, %v7335
    %v7402 = vpack.c.b16 %v7339, %v7336
    %v7403 = vpack.c.b16 %v7343, %v7340
    %v7404 = vpack.c.b16 %v7344, %v7341
    %v7405 = vpack.c.b16 %v7345, %v7342
    %v7406 = vpack.c.b16 %v7349, %v7346
    %v7407 = vpack.c.b16 %v7350, %v7347
    %v7408 = vpack.c.b16 %v7351, %v7348
    %v7409 = vpack.c.b16 %v7355, %v7352
    %v7410 = vpack.c.b16 %v7356, %v7353
    %v7411 = vpack.c.b16 %v7357, %v7354
    %v7412 = vpack.c.b16 %v7361, %v7358
    %v7413 = vpack.c.b16 %v7362, %v7359
    %v7414 = vpack.c.b16 %v7363, %v7360
    %v7415 = vpack.c.b16 %v7367, %v7364
    %v7416 = vpack.c.b16 %v7368, %v7365
    %v7417 = vpack.c.b16 %v7369, %v7366
    %7466 = vmatprep.subr.bf16.mxu0 %v7371
    %7467 = vmatpush1.bf16.msra.mxu0 %v7370
    %7468 = vmatprep.subr.bf16.mxu0 %v7374
    %7469 = vmatpush1.bf16.msra.mxu0 %v7373
    %7470 = vmatprep.subr.bf16.mxu0 %v7377
    %7471 = vmatpush1.bf16.msra.mxu0 %v7376
    %7472 = vmatprep.subr.bf16.mxu0 %v7380
    %7473 = vmatpush1.bf16.msra.mxu0 %v7379
    %7474 = vmatprep.subr.bf16.mxu0 %v7383
    %7475 = vmatpush1.bf16.msra.mxu0 %v7382
    %7476 = vmatprep.subr.bf16.mxu0 %v7386
    %7477 = vmatpush1.bf16.msra.mxu0 %v7385
    %7478 = vmatprep.subr.bf16.mxu0 %v7389
    %7479 = vmatpush1.bf16.msra.mxu0 %v7388
    %7480 = vmatprep.subr.bf16.mxu0 %v7392
    %7481 = vmatpush1.bf16.msra.mxu0 %v7391
    %7482 = vmatprep.subr.bf16.mxu0 %v7395
    %7483 = vmatpush1.bf16.msra.mxu0 %v7394
    %7484 = vmatprep.subr.bf16.mxu0 %v7398
    %7485 = vmatpush1.bf16.msra.mxu0 %v7397
    %7486 = vmatprep.subr.bf16.mxu0 %v7401
    %7487 = vmatpush1.bf16.msra.mxu0 %v7400
    %7488 = vmatprep.subr.bf16.mxu0 %v7404
    %7489 = vmatpush1.bf16.msra.mxu0 %v7403
    %7490 = vmatprep.subr.bf16.mxu0 %v7407
    %7491 = vmatpush1.bf16.msra.mxu0 %v7406
    %7492 = vmatprep.subr.bf16.mxu0 %v7410
    %7493 = vmatpush1.bf16.msra.mxu0 %v7409
    %7494 = vmatprep.subr.bf16.mxu0 %v7413
    %7495 = vmatpush1.bf16.msra.mxu0 %v7412
    %7496 = vmatprep.subr.bf16.mxu0 %v7416
    %7497 = vmatpush1.bf16.msra.mxu0 %v7415
    %7498 = vmatprep.mubr.bf16.mxu0 %v7131
    %7499 = vmatmul.mubr.bf16.gmra.mrb[0].mxu0 %v7130
    %v7500 = vpop.f32.mrb[0].mxu0
    %v7501 = vadd.f32 %v7198, %v7500
    %v7502 = vpop.f32.mrb[0].mxu0
    %v7503 = vadd.f32 %v7202, %v7502
    %v7504 = vpop.f32.mrb[0].mxu0
    %v7505 = vadd.f32 %v7198, %v7504
    %v7506 = vpop.f32.mrb[0].mxu0
    %v7507 = vadd.f32 %v7202, %v7506
    %7508 = vmatprep.mubr.bf16.mxu0 %v7133
    %7509 = vmatmul.mubr.bf16.gmra.mrb[0].mxu0 %v7132
    %v7510 = vpop.f32.mrb[0].mxu0
    %v7511 = vadd.f32 %v7198, %v7510
    %v7512 = vpop.f32.mrb[0].mxu0
    %v7513 = vadd.f32 %v7202, %v7512
    %v7514 = vpop.f32.mrb[0].mxu0
    %v7515 = vadd.f32 %v7198, %v7514
    %v7516 = vpop.f32.mrb[0].mxu0
    %v7517 = vadd.f32 %v7202, %v7516
    %7518 = vmatprep.mubr.bf16.mxu0 %v7135
    %7519 = vmatmul.mubr.bf16.gmra.mrb[0].mxu0 %v7134
    %v7520 = vpop.f32.mrb[0].mxu0
    %v7521 = vadd.f32 %v7198, %v7520
    %v7522 = vpop.f32.mrb[0].mxu0
    %v7523 = vadd.f32 %v7202, %v7522
    %v7524 = vpop.f32.mrb[0].mxu0
    %v7525 = vadd.f32 %v7198, %v7524
    %v7526 = vpop.f32.mrb[0].mxu0
    %v7527 = vadd.f32 %v7202, %v7526
    %7528 = vmatprep.mubr.bf16.mxu0 %v7137
    %7529 = vmatmul.mubr.bf16.gmra.mrb[0].mxu0 %v7136
    %v7530 = vpop.f32.mrb[0].mxu0
    %v7531 = vadd.f32 %v7198, %v7530
    %v7532 = vpop.f32.mrb[0].mxu0
    %v7533 = vadd.f32 %v7202, %v7532
    %v7534 = vpop.f32.mrb[0].mxu0
    %v7535 = vadd.f32 %v7198, %v7534
    %v7536 = vpop.f32.mrb[0].mxu0
    %v7537 = vadd.f32 %v7202, %v7536
    %7538 = vmatprep.mubr.bf16.mxu0 %v7139
    %7539 = vmatmul.mubr.bf16.gmra.mrb[0].mxu0 %v7138
    %v7540 = vpop.f32.mrb[0].mxu0
    %v7541 = vadd.f32 %v7198, %v7540
    %v7542 = vpop.f32.mrb[0].mxu0
    %v7543 = vadd.f32 %v7202, %v7542
    %v7544 = vpop.f32.mrb[0].mxu0
    %v7545 = vadd.f32 %v7198, %v7544
    %v7546 = vpop.f32.mrb[0].mxu0
    %v7547 = vadd.f32 %v7202, %v7546
    %7548 = vmatprep.mubr.bf16.mxu0 %v7141
    %7549 = vmatmul.mubr.bf16.gmra.mrb[0].mxu0 %v7140
    %v7550 = vpop.f32.mrb[0].mxu0
    %v7551 = vadd.f32 %v7198, %v7550
    %v7552 = vpop.f32.mrb[0].mxu0
    %v7553 = vadd.f32 %v7202, %v7552
    %v7554 = vpop.f32.mrb[0].mxu0
    %v7555 = vadd.f32 %v7198, %v7554
    %v7556 = vpop.f32.mrb[0].mxu0
    %v7557 = vadd.f32 %v7202, %v7556
    %7558 = vmatprep.mubr.bf16.mxu0 %v7143
    %7559 = vmatmul.mubr.bf16.gmra.mrb[0].mxu0 %v7142
    %v7560 = vpop.f32.mrb[0].mxu0
    %v7561 = vadd.f32 %v7198, %v7560
    %v7562 = vpop.f32.mrb[0].mxu0
    %v7563 = vadd.f32 %v7202, %v7562
    %v7564 = vpop.f32.mrb[0].mxu0
    %v7565 = vadd.f32 %v7198, %v7564
    %v7566 = vpop.f32.mrb[0].mxu0
    %v7567 = vadd.f32 %v7202, %v7566
    %7568 = vmatprep.mubr.bf16.mxu0 %v7145
    %7569 = vmatmul.mubr.bf16.gmra.mrb[0].mxu0 %v7144
    %v7570 = vpop.f32.mrb[0].mxu0
    %v7571 = vadd.f32 %v7198, %v7570
    %v7572 = vpop.f32.mrb[0].mxu0
    %v7573 = vadd.f32 %v7202, %v7572
    %v7574 = vpop.f32.mrb[0].mxu0
    %v7575 = vadd.f32 %v7198, %v7574
    %v7576 = vpop.f32.mrb[0].mxu0
    %v7577 = vadd.f32 %v7202, %v7576
    %7578 = vmatprep.mubr.bf16.mxu0 %v7147
    %7579 = vmatmul.mubr.bf16.gmra.mrb[0].mxu0 %v7146
    %v7580 = vpop.f32.mrb[0].mxu0
    %v7581 = vadd.f32 %v7198, %v7580
    %v7582 = vpop.f32.mrb[0].mxu0
    %v7583 = vadd.f32 %v7202, %v7582
    %v7584 = vpop.f32.mrb[0].mxu0
    %v7585 = vadd.f32 %v7198, %v7584
    %v7586 = vpop.f32.mrb[0].mxu0
    %v7587 = vadd.f32 %v7202, %v7586
    %7588 = vmatprep.mubr.bf16.mxu0 %v7149
    %7589 = vmatmul.mubr.bf16.gmra.mrb[0].mxu0 %v7148
    %v7590 = vpop.f32.mrb[0].mxu0
    %v7591 = vadd.f32 %v7198, %v7590
    %v7592 = vpop.f32.mrb[0].mxu0
    %v7593 = vadd.f32 %v7202, %v7592
    %v7594 = vpop.f32.mrb[0].mxu0
    %v7595 = vadd.f32 %v7198, %v7594
    %v7596 = vpop.f32.mrb[0].mxu0
    %v7597 = vadd.f32 %v7202, %v7596
    %7598 = vmatprep.mubr.bf16.mxu0 %v7151
    %7599 = vmatmul.mubr.bf16.gmra.mrb[0].mxu0 %v7150
    %v7600 = vpop.f32.mrb[0].mxu0
    %v7601 = vadd.f32 %v7198, %v7600
    %v7602 = vpop.f32.mrb[0].mxu0
    %v7603 = vadd.f32 %v7202, %v7602
    %v7604 = vpop.f32.mrb[0].mxu0
    %v7605 = vadd.f32 %v7198, %v7604
    %v7606 = vpop.f32.mrb[0].mxu0
    %v7607 = vadd.f32 %v7202, %v7606
    %7608 = vmatprep.mubr.bf16.mxu0 %v7153
    %7609 = vmatmul.mubr.bf16.gmra.mrb[0].mxu0 %v7152
    %v7610 = vpop.f32.mrb[0].mxu0
    %v7611 = vadd.f32 %v7198, %v7610
    %v7612 = vpop.f32.mrb[0].mxu0
    %v7613 = vadd.f32 %v7202, %v7612
    %v7614 = vpop.f32.mrb[0].mxu0
    %v7615 = vadd.f32 %v7198, %v7614
    %v7616 = vpop.f32.mrb[0].mxu0
    %v7617 = vadd.f32 %v7202, %v7616
    %7618 = vmatprep.mubr.bf16.mxu0 %v7155
    %7619 = vmatmul.mubr.bf16.gmra.mrb[0].mxu0 %v7154
    %v7620 = vpop.f32.mrb[0].mxu0
    %v7621 = vadd.f32 %v7198, %v7620
    %v7622 = vpop.f32.mrb[0].mxu0
    %v7623 = vadd.f32 %v7202, %v7622
    %v7624 = vpop.f32.mrb[0].mxu0
    %v7625 = vadd.f32 %v7198, %v7624
    %v7626 = vpop.f32.mrb[0].mxu0
    %v7627 = vadd.f32 %v7202, %v7626
    %7628 = vmatprep.mubr.bf16.mxu0 %v7157
    %7629 = vmatmul.mubr.bf16.gmra.mrb[0].mxu0 %v7156
    %v7630 = vpop.f32.mrb[0].mxu0
    %v7631 = vadd.f32 %v7198, %v7630
    %v7632 = vpop.f32.mrb[0].mxu0
    %v7633 = vadd.f32 %v7202, %v7632
    %v7634 = vpop.f32.mrb[0].mxu0
    %v7635 = vadd.f32 %v7198, %v7634
    %v7636 = vpop.f32.mrb[0].mxu0
    %v7637 = vadd.f32 %v7202, %v7636
    %7638 = vmatprep.mubr.bf16.mxu0 %v7159
    %7639 = vmatmul.mubr.bf16.gmra.mrb[0].mxu0 %v7158
    %v7640 = vpop.f32.mrb[0].mxu0
    %v7641 = vadd.f32 %v7198, %v7640
    %v7642 = vpop.f32.mrb[0].mxu0
    %v7643 = vadd.f32 %v7202, %v7642
    %v7644 = vpop.f32.mrb[0].mxu0
    %v7645 = vadd.f32 %v7198, %v7644
    %v7646 = vpop.f32.mrb[0].mxu0
    %v7647 = vadd.f32 %v7202, %v7646
    %7648 = vmatprep.mubr.bf16.mxu0 %v7161
    %7649 = vmatmul.mubr.bf16.gmra.mrb[0].mxu0 %v7160
    %v7650 = vpop.f32.mrb[0].mxu0
    %v7651 = vadd.f32 %v7198, %v7650
    %v7652 = vpop.f32.mrb[0].mxu0
    %v7653 = vadd.f32 %v7202, %v7652
    %v7654 = vpop.f32.mrb[0].mxu0
    %v7655 = vadd.f32 %v7198, %v7654
    %v7656 = vpop.f32.mrb[0].mxu0
    %v7657 = vadd.f32 %v7202, %v7656
    %7658 = vmatprep.mubr.bf16.mxu0 %v7163
    %7659 = vmatmul.mubr.bf16.gmra.mrb[0].mxu0 %v7162
    %v7660 = vpop.f32.mrb[0].mxu0
    %v7661 = vadd.f32 %v7198, %v7660
    %v7662 = vpop.f32.mrb[0].mxu0
    %v7663 = vadd.f32 %v7202, %v7662
    %v7664 = vpop.f32.mrb[0].mxu0
    %v7665 = vadd.f32 %v7198, %v7664
    %v7666 = vpop.f32.mrb[0].mxu0
    %v7667 = vadd.f32 %v7202, %v7666
    %7668 = vmatprep.mubr.bf16.mxu0 %v7165
    %7669 = vmatmul.mubr.bf16.gmra.mrb[0].mxu0 %v7164
    %v7670 = vpop.f32.mrb[0].mxu0
    %v7671 = vadd.f32 %v7198, %v7670
    %v7672 = vpop.f32.mrb[0].mxu0
    %v7673 = vadd.f32 %v7202, %v7672
    %v7674 = vpop.f32.mrb[0].mxu0
    %v7675 = vadd.f32 %v7198, %v7674
    %v7676 = vpop.f32.mrb[0].mxu0
    %v7677 = vadd.f32 %v7202, %v7676
    %7678 = vmatprep.mubr.bf16.mxu0 %v7167
    %7679 = vmatmul.mubr.bf16.gmra.mrb[0].mxu0 %v7166
    %v7680 = vpop.f32.mrb[0].mxu0
    %v7681 = vadd.f32 %v7198, %v7680
    %v7682 = vpop.f32.mrb[0].mxu0
    %v7683 = vadd.f32 %v7202, %v7682
    %v7684 = vpop.f32.mrb[0].mxu0
    %v7685 = vadd.f32 %v7198, %v7684
    %v7686 = vpop.f32.mrb[0].mxu0
    %v7687 = vadd.f32 %v7202, %v7686
    %7688 = vmatprep.mubr.bf16.mxu0 %v7169
    %7689 = vmatmul.mubr.bf16.gmra.mrb[0].mxu0 %v7168
    %v7690 = vpop.f32.mrb[0].mxu0
    %v7691 = vadd.f32 %v7198, %v7690
    %v7692 = vpop.f32.mrb[0].mxu0
    %v7693 = vadd.f32 %v7202, %v7692
    %v7694 = vpop.f32.mrb[0].mxu0
    %v7695 = vadd.f32 %v7198, %v7694
    %v7696 = vpop.f32.mrb[0].mxu0
    %v7697 = vadd.f32 %v7202, %v7696
    %7698 = vmatprep.mubr.bf16.mxu0 %v7171
    %7699 = vmatmul.mubr.bf16.gmra.mrb[0].mxu0 %v7170
    %v7700 = vpop.f32.mrb[0].mxu0
    %v7701 = vadd.f32 %v7198, %v7700
    %v7702 = vpop.f32.mrb[0].mxu0
    %v7703 = vadd.f32 %v7202, %v7702
    %v7704 = vpop.f32.mrb[0].mxu0
    %v7705 = vadd.f32 %v7198, %v7704
    %v7706 = vpop.f32.mrb[0].mxu0
    %v7707 = vadd.f32 %v7202, %v7706
    %7708 = vmatprep.mubr.bf16.mxu0 %v7173
    %7709 = vmatmul.mubr.bf16.gmra.mrb[0].mxu0 %v7172
    %v7710 = vpop.f32.mrb[0].mxu0
    %v7711 = vadd.f32 %v7198, %v7710
    %v7712 = vpop.f32.mrb[0].mxu0
    %v7713 = vadd.f32 %v7202, %v7712
    %v7714 = vpop.f32.mrb[0].mxu0
    %v7715 = vadd.f32 %v7198, %v7714
    %v7716 = vpop.f32.mrb[0].mxu0
    %v7717 = vadd.f32 %v7202, %v7716
    %7718 = vmatprep.mubr.bf16.mxu0 %v7175
    %7719 = vmatmul.mubr.bf16.gmra.mrb[0].mxu0 %v7174
    %v7720 = vpop.f32.mrb[0].mxu0
    %v7721 = vadd.f32 %v7198, %v7720
    %v7722 = vpop.f32.mrb[0].mxu0
    %v7723 = vadd.f32 %v7202, %v7722
    %v7724 = vpop.f32.mrb[0].mxu0
    %v7725 = vadd.f32 %v7198, %v7724
    %v7726 = vpop.f32.mrb[0].mxu0
    %v7727 = vadd.f32 %v7202, %v7726
    %7728 = vmatprep.mubr.bf16.mxu0 %v7177
    %7729 = vmatmul.mubr.bf16.gmra.mrb[0].mxu0 %v7176
    %v7730 = vpop.f32.mrb[0].mxu0
    %v7731 = vadd.f32 %v7198, %v7730
    %v7732 = vpop.f32.mrb[0].mxu0
    %v7733 = vadd.f32 %v7202, %v7732
    %v7734 = vpop.f32.mrb[0].mxu0
    %v7735 = vadd.f32 %v7198, %v7734
    %v7736 = vpop.f32.mrb[0].mxu0
    %v7737 = vadd.f32 %v7202, %v7736
    %7738 = vmatprep.mubr.bf16.mxu0 %v7179
    %7739 = vmatmul.mubr.bf16.gmra.mrb[0].mxu0 %v7178
    %v7740 = vpop.f32.mrb[0].mxu0
    %v7741 = vadd.f32 %v7198, %v7740
    %v7742 = vpop.f32.mrb[0].mxu0
    %v7743 = vadd.f32 %v7202, %v7742
    %v7744 = vpop.f32.mrb[0].mxu0
    %v7745 = vadd.f32 %v7198, %v7744
    %v7746 = vpop.f32.mrb[0].mxu0
    %v7747 = vadd.f32 %v7202, %v7746
    %7748 = vmatprep.mubr.bf16.mxu0 %v7181
    %7749 = vmatmul.mubr.bf16.gmra.mrb[0].mxu0 %v7180
    %v7750 = vpop.f32.mrb[0].mxu0
    %v7751 = vadd.f32 %v7198, %v7750
    %v7752 = vpop.f32.mrb[0].mxu0
    %v7753 = vadd.f32 %v7202, %v7752
    %v7754 = vpop.f32.mrb[0].mxu0
    %v7755 = vadd.f32 %v7198, %v7754
    %v7756 = vpop.f32.mrb[0].mxu0
    %v7757 = vadd.f32 %v7202, %v7756
    %7758 = vmatprep.mubr.bf16.mxu0 %v7183
    %7759 = vmatmul.mubr.bf16.gmra.mrb[0].mxu0 %v7182
    %v7760 = vpop.f32.mrb[0].mxu0
    %v7761 = vadd.f32 %v7198, %v7760
    %v7762 = vpop.f32.mrb[0].mxu0
    %v7763 = vadd.f32 %v7202, %v7762
    %v7764 = vpop.f32.mrb[0].mxu0
    %v7765 = vadd.f32 %v7198, %v7764
    %v7766 = vpop.f32.mrb[0].mxu0
    %v7767 = vadd.f32 %v7202, %v7766
    %7768 = vmatprep.mubr.bf16.mxu0 %v7185
    %7769 = vmatmul.mubr.bf16.gmra.mrb[0].mxu0 %v7184
    %v7770 = vpop.f32.mrb[0].mxu0
    %v7771 = vadd.f32 %v7198, %v7770
    %v7772 = vpop.f32.mrb[0].mxu0
    %v7773 = vadd.f32 %v7202, %v7772
    %v7774 = vpop.f32.mrb[0].mxu0
    %v7775 = vadd.f32 %v7198, %v7774
    %v7776 = vpop.f32.mrb[0].mxu0
    %v7777 = vadd.f32 %v7202, %v7776
    %7778 = vmatprep.mubr.bf16.mxu0 %v7187
    %7779 = vmatmul.mubr.bf16.gmra.mrb[0].mxu0 %v7186
    %v7780 = vpop.f32.mrb[0].mxu0
    %v7781 = vadd.f32 %v7198, %v7780
    %v7782 = vpop.f32.mrb[0].mxu0
    %v7783 = vadd.f32 %v7202, %v7782
    %v7784 = vpop.f32.mrb[0].mxu0
    %v7785 = vadd.f32 %v7198, %v7784
    %v7786 = vpop.f32.mrb[0].mxu0
    %v7787 = vadd.f32 %v7202, %v7786
    %7788 = vmatprep.mubr.bf16.mxu0 %v7189
    %7789 = vmatmul.mubr.bf16.gmra.mrb[0].mxu0 %v7188
    %v7790 = vpop.f32.mrb[0].mxu0
    %v7791 = vadd.f32 %v7198, %v7790
    %v7792 = vpop.f32.mrb[0].mxu0
    %v7793 = vadd.f32 %v7202, %v7792
    %v7794 = vpop.f32.mrb[0].mxu0
    %v7795 = vadd.f32 %v7198, %v7794
    %v7796 = vpop.f32.mrb[0].mxu0
    %v7797 = vadd.f32 %v7202, %v7796
    %7798 = vmatprep.mubr.bf16.mxu0 %v7191
    %7799 = vmatmul.mubr.bf16.gmra.mrb[0].mxu0 %v7190
    %v7800 = vpop.f32.mrb[0].mxu0
    %v7801 = vadd.f32 %v7198, %v7800
    %v7802 = vpop.f32.mrb[0].mxu0
    %v7803 = vadd.f32 %v7202, %v7802
    %v7804 = vpop.f32.mrb[0].mxu0
    %v7805 = vadd.f32 %v7198, %v7804
    %v7806 = vpop.f32.mrb[0].mxu0
    %v7807 = vadd.f32 %v7202, %v7806
    %7808 = vmatprep.mubr.bf16.mxu0 %v7193
    %7809 = vmatmul.mubr.bf16.gmra.mrb[0].mxu0 %v7192
    %v7810 = vpop.f32.mrb[0].mxu0
    %v7811 = vadd.f32 %v7198, %v7810
    %v7812 = vpop.f32.mrb[0].mxu0
    %v7813 = vadd.f32 %v7202, %v7812
    %v7814 = vpop.f32.mrb[0].mxu0
    %v7815 = vadd.f32 %v7198, %v7814
    %v7816 = vpop.f32.mrb[0].mxu0
    %v7817 = vadd.f32 %v7202, %v7816
    %7818 = vdwg.mxu0
    %7819 = vmatprep.subr.bf16.mxu0 0
    %7820 = vmatpush1.bf16.msra.mxu0 %v7372
    %7821 = vmatprep.subr.bf16.mxu0 0
    %7822 = vmatpush1.bf16.msra.mxu0 %v7375
    %7823 = vmatprep.subr.bf16.mxu0 0
    %7824 = vmatpush1.bf16.msra.mxu0 %v7378
    %7825 = vmatprep.subr.bf16.mxu0 0
    %7826 = vmatpush1.bf16.msra.mxu0 %v7381
    %7827 = vmatprep.subr.bf16.mxu0 0
    %7828 = vmatpush1.bf16.msra.mxu0 %v7384
    %7829 = vmatprep.subr.bf16.mxu0 0
    %7830 = vmatpush1.bf16.msra.mxu0 %v7387
    %7831 = vmatprep.subr.bf16.mxu0 0
    %7832 = vmatpush1.bf16.msra.mxu0 %v7390
    %7833 = vmatprep.subr.bf16.mxu0 0
    %7834 = vmatpush1.bf16.msra.mxu0 %v7393
    %7835 = vmatprep.subr.bf16.mxu0 0
    %7836 = vmatpush1.bf16.msra.mxu0 %v7396
    %7837 = vmatprep.subr.bf16.mxu0 0
    %7838 = vmatpush1.bf16.msra.mxu0 %v7399
    %7839 = vmatprep.subr.bf16.mxu0 0
    %7840 = vmatpush1.bf16.msra.mxu0 %v7402
    %7841 = vmatprep.subr.bf16.mxu0 0
    %7842 = vmatpush1.bf16.msra.mxu0 %v7405
    %7843 = vmatprep.subr.bf16.mxu0 0
    %7844 = vmatpush1.bf16.msra.mxu0 %v7408
    %7845 = vmatprep.subr.bf16.mxu0 0
    %7846 = vmatpush1.bf16.msra.mxu0 %v7411
    %7847 = vmatprep.subr.bf16.mxu0 0
    %7848 = vmatpush1.bf16.msra.mxu0 %v7414
    %7849 = vmatprep.subr.bf16.mxu0 0
    %7850 = vmatpush1.bf16.msra.mxu0 %v7417
    %7851 = vmatprep.mubr.bf16.mxu0 %v7131
    %7852 = vmatmul.mubr.bf16.gmra.mrb[0].mxu0 %v7130
    %v7853 = vpop.f32.mrb[0].mxu0
    %v7854 = vadd.f32 %v7206, %v7853
    %v7855 = vpop.f32.mrb[0].mxu0
    %v7856 = vpop.f32.mrb[0].mxu0
    %v7857 = vadd.f32 %v7206, %v7856
    %v7858 = vpop.f32.mrb[0].mxu0
    %7859 = vmatprep.mubr.bf16.mxu0 %v7133
    %7860 = vmatmul.mubr.bf16.gmra.mrb[0].mxu0 %v7132
    %v7861 = vpop.f32.mrb[0].mxu0
    %v7862 = vadd.f32 %v7206, %v7861
    %v7863 = vpop.f32.mrb[0].mxu0
    %v7864 = vpop.f32.mrb[0].mxu0
    %v7865 = vadd.f32 %v7206, %v7864
    %v7866 = vpop.f32.mrb[0].mxu0
    %7867 = vmatprep.mubr.bf16.mxu0 %v7135
    %7868 = vmatmul.mubr.bf16.gmra.mrb[0].mxu0 %v7134
    %v7869 = vpop.f32.mrb[0].mxu0
    %v7870 = vadd.f32 %v7206, %v7869
    %v7871 = vpop.f32.mrb[0].mxu0
    %v7872 = vpop.f32.mrb[0].mxu0
    %v7873 = vadd.f32 %v7206, %v7872
    %v7874 = vpop.f32.mrb[0].mxu0
    %7875 = vmatprep.mubr.bf16.mxu0 %v7137
    %7876 = vmatmul.mubr.bf16.gmra.mrb[0].mxu0 %v7136
    %v7877 = vpop.f32.mrb[0].mxu0
    %v7878 = vadd.f32 %v7206, %v7877
    %v7879 = vpop.f32.mrb[0].mxu0
    %v7880 = vpop.f32.mrb[0].mxu0
    %v7881 = vadd.f32 %v7206, %v7880
    %v7882 = vpop.f32.mrb[0].mxu0
    %7883 = vmatprep.mubr.bf16.mxu0 %v7139
    %7884 = vmatmul.mubr.bf16.gmra.mrb[0].mxu0 %v7138
    %v7885 = vpop.f32.mrb[0].mxu0
    %v7886 = vadd.f32 %v7206, %v7885
    %v7887 = vpop.f32.mrb[0].mxu0
    %v7888 = vpop.f32.mrb[0].mxu0
    %v7889 = vadd.f32 %v7206, %v7888
    %v7890 = vpop.f32.mrb[0].mxu0
    %7891 = vmatprep.mubr.bf16.mxu0 %v7141
    %7892 = vmatmul.mubr.bf16.gmra.mrb[0].mxu0 %v7140
    %v7893 = vpop.f32.mrb[0].mxu0
    %v7894 = vadd.f32 %v7206, %v7893
    %v7895 = vpop.f32.mrb[0].mxu0
    %v7896 = vpop.f32.mrb[0].mxu0
    %v7897 = vadd.f32 %v7206, %v7896
    %v7898 = vpop.f32.mrb[0].mxu0
    %7899 = vmatprep.mubr.bf16.mxu0 %v7143
    %7900 = vmatmul.mubr.bf16.gmra.mrb[0].mxu0 %v7142
    %v7901 = vpop.f32.mrb[0].mxu0
    %v7902 = vadd.f32 %v7206, %v7901
    %v7903 = vpop.f32.mrb[0].mxu0
    %v7904 = vpop.f32.mrb[0].mxu0
    %v7905 = vadd.f32 %v7206, %v7904
    %v7906 = vpop.f32.mrb[0].mxu0
    %7907 = vmatprep.mubr.bf16.mxu0 %v7145
    %7908 = vmatmul.mubr.bf16.gmra.mrb[0].mxu0 %v7144
    %v7909 = vpop.f32.mrb[0].mxu0
    %v7910 = vadd.f32 %v7206, %v7909
    %v7911 = vpop.f32.mrb[0].mxu0
    %v7912 = vpop.f32.mrb[0].mxu0
    %v7913 = vadd.f32 %v7206, %v7912
    %v7914 = vpop.f32.mrb[0].mxu0
    %7915 = vmatprep.mubr.bf16.mxu0 %v7147
    %7916 = vmatmul.mubr.bf16.gmra.mrb[0].mxu0 %v7146
    %v7917 = vpop.f32.mrb[0].mxu0
    %v7918 = vadd.f32 %v7206, %v7917
    %v7919 = vpop.f32.mrb[0].mxu0
    %v7920 = vpop.f32.mrb[0].mxu0
    %v7921 = vadd.f32 %v7206, %v7920
    %v7922 = vpop.f32.mrb[0].mxu0
    %7923 = vmatprep.mubr.bf16.mxu0 %v7149
    %7924 = vmatmul.mubr.bf16.gmra.mrb[0].mxu0 %v7148
    %v7925 = vpop.f32.mrb[0].mxu0
    %v7926 = vadd.f32 %v7206, %v7925
    %v7927 = vpop.f32.mrb[0].mxu0
    %v7928 = vpop.f32.mrb[0].mxu0
    %v7929 = vadd.f32 %v7206, %v7928
    %v7930 = vpop.f32.mrb[0].mxu0
    %7931 = vmatprep.mubr.bf16.mxu0 %v7151
    %7932 = vmatmul.mubr.bf16.gmra.mrb[0].mxu0 %v7150
    %v7933 = vpop.f32.mrb[0].mxu0
    %v7934 = vadd.f32 %v7206, %v7933
    %v7935 = vpop.f32.mrb[0].mxu0
    %v7936 = vpop.f32.mrb[0].mxu0
    %v7937 = vadd.f32 %v7206, %v7936
    %v7938 = vpop.f32.mrb[0].mxu0
    %7939 = vmatprep.mubr.bf16.mxu0 %v7153
    %7940 = vmatmul.mubr.bf16.gmra.mrb[0].mxu0 %v7152
    %v7941 = vpop.f32.mrb[0].mxu0
    %v7942 = vadd.f32 %v7206, %v7941
    %v7943 = vpop.f32.mrb[0].mxu0
    %v7944 = vpop.f32.mrb[0].mxu0
    %v7945 = vadd.f32 %v7206, %v7944
    %v7946 = vpop.f32.mrb[0].mxu0
    %7947 = vmatprep.mubr.bf16.mxu0 %v7155
    %7948 = vmatmul.mubr.bf16.gmra.mrb[0].mxu0 %v7154
    %v7949 = vpop.f32.mrb[0].mxu0
    %v7950 = vadd.f32 %v7206, %v7949
    %v7951 = vpop.f32.mrb[0].mxu0
    %v7952 = vpop.f32.mrb[0].mxu0
    %v7953 = vadd.f32 %v7206, %v7952
    %v7954 = vpop.f32.mrb[0].mxu0
    %7955 = vmatprep.mubr.bf16.mxu0 %v7157
    %7956 = vmatmul.mubr.bf16.gmra.mrb[0].mxu0 %v7156
    %v7957 = vpop.f32.mrb[0].mxu0
    %v7958 = vadd.f32 %v7206, %v7957
    %v7959 = vpop.f32.mrb[0].mxu0
    %v7960 = vpop.f32.mrb[0].mxu0
    %v7961 = vadd.f32 %v7206, %v7960
    %v7962 = vpop.f32.mrb[0].mxu0
    %7963 = vmatprep.mubr.bf16.mxu0 %v7159
    %7964 = vmatmul.mubr.bf16.gmra.mrb[0].mxu0 %v7158
    %v7965 = vpop.f32.mrb[0].mxu0
    %v7966 = vadd.f32 %v7206, %v7965
    %v7967 = vpop.f32.mrb[0].mxu0
    %v7968 = vpop.f32.mrb[0].mxu0
    %v7969 = vadd.f32 %v7206, %v7968
    %v7970 = vpop.f32.mrb[0].mxu0
    %7971 = vmatprep.mubr.bf16.mxu0 %v7161
    %7972 = vmatmul.mubr.bf16.gmra.mrb[0].mxu0 %v7160
    %v7973 = vpop.f32.mrb[0].mxu0
    %v7974 = vadd.f32 %v7206, %v7973
    %v7975 = vpop.f32.mrb[0].mxu0
    %v7976 = vpop.f32.mrb[0].mxu0
    %v7977 = vadd.f32 %v7206, %v7976
    %v7978 = vpop.f32.mrb[0].mxu0
    %7979 = vmatprep.mubr.bf16.mxu0 %v7163
    %7980 = vmatmul.mubr.bf16.gmra.mrb[0].mxu0 %v7162
    %v7981 = vpop.f32.mrb[0].mxu0
    %v7982 = vadd.f32 %v7206, %v7981
    %v7983 = vpop.f32.mrb[0].mxu0
    %v7984 = vpop.f32.mrb[0].mxu0
    %v7985 = vadd.f32 %v7206, %v7984
    %v7986 = vpop.f32.mrb[0].mxu0
    %7987 = vmatprep.mubr.bf16.mxu0 %v7165
    %7988 = vmatmul.mubr.bf16.gmra.mrb[0].mxu0 %v7164
    %v7989 = vpop.f32.mrb[0].mxu0
    %v7990 = vadd.f32 %v7206, %v7989
    %v7991 = vpop.f32.mrb[0].mxu0
    %v7992 = vpop.f32.mrb[0].mxu0
    %v7993 = vadd.f32 %v7206, %v7992
    %v7994 = vpop.f32.mrb[0].mxu0
    %7995 = vmatprep.mubr.bf16.mxu0 %v7167
    %7996 = vmatmul.mubr.bf16.gmra.mrb[0].mxu0 %v7166
    %v7997 = vpop.f32.mrb[0].mxu0
    %v7998 = vadd.f32 %v7206, %v7997
    %v7999 = vpop.f32.mrb[0].mxu0
    %v8000 = vpop.f32.mrb[0].mxu0
    %v8001 = vadd.f32 %v7206, %v8000
    %v8002 = vpop.f32.mrb[0].mxu0
    %8003 = vmatprep.mubr.bf16.mxu0 %v7169
    %8004 = vmatmul.mubr.bf16.gmra.mrb[0].mxu0 %v7168
    %v8005 = vpop.f32.mrb[0].mxu0
    %v8006 = vadd.f32 %v7206, %v8005
    %v8007 = vpop.f32.mrb[0].mxu0
    %v8008 = vpop.f32.mrb[0].mxu0
    %v8009 = vadd.f32 %v7206, %v8008
    %v8010 = vpop.f32.mrb[0].mxu0
    %8011 = vmatprep.mubr.bf16.mxu0 %v7171
    %8012 = vmatmul.mubr.bf16.gmra.mrb[0].mxu0 %v7170
    %v8013 = vpop.f32.mrb[0].mxu0
    %v8014 = vadd.f32 %v7206, %v8013
    %v8015 = vpop.f32.mrb[0].mxu0
    %v8016 = vpop.f32.mrb[0].mxu0
    %v8017 = vadd.f32 %v7206, %v8016
    %v8018 = vpop.f32.mrb[0].mxu0
    %8019 = vmatprep.mubr.bf16.mxu0 %v7173
    %8020 = vmatmul.mubr.bf16.gmra.mrb[0].mxu0 %v7172
    %v8021 = vpop.f32.mrb[0].mxu0
    %v8022 = vadd.f32 %v7206, %v8021
    %v8023 = vpop.f32.mrb[0].mxu0
    %v8024 = vpop.f32.mrb[0].mxu0
    %v8025 = vadd.f32 %v7206, %v8024
    %v8026 = vpop.f32.mrb[0].mxu0
    %8027 = vmatprep.mubr.bf16.mxu0 %v7175
    %8028 = vmatmul.mubr.bf16.gmra.mrb[0].mxu0 %v7174
    %v8029 = vpop.f32.mrb[0].mxu0
    %v8030 = vadd.f32 %v7206, %v8029
    %v8031 = vpop.f32.mrb[0].mxu0
    %v8032 = vpop.f32.mrb[0].mxu0
    %v8033 = vadd.f32 %v7206, %v8032
    %v8034 = vpop.f32.mrb[0].mxu0
    %8035 = vmatprep.mubr.bf16.mxu0 %v7177
    %8036 = vmatmul.mubr.bf16.gmra.mrb[0].mxu0 %v7176
    %v8037 = vpop.f32.mrb[0].mxu0
    %v8038 = vadd.f32 %v7206, %v8037
    %v8039 = vpop.f32.mrb[0].mxu0
    %v8040 = vpop.f32.mrb[0].mxu0
    %v8041 = vadd.f32 %v7206, %v8040
    %v8042 = vpop.f32.mrb[0].mxu0
    %8043 = vmatprep.mubr.bf16.mxu0 %v7179
    %8044 = vmatmul.mubr.bf16.gmra.mrb[0].mxu0 %v7178
    %v8045 = vpop.f32.mrb[0].mxu0
    %v8046 = vadd.f32 %v7206, %v8045
    %v8047 = vpop.f32.mrb[0].mxu0
    %v8048 = vpop.f32.mrb[0].mxu0
    %v8049 = vadd.f32 %v7206, %v8048
    %v8050 = vpop.f32.mrb[0].mxu0
    %8051 = vmatprep.mubr.bf16.mxu0 %v7181
    %8052 = vmatmul.mubr.bf16.gmra.mrb[0].mxu0 %v7180
    %v8053 = vpop.f32.mrb[0].mxu0
    %v8054 = vadd.f32 %v7206, %v8053
    %v8055 = vpop.f32.mrb[0].mxu0
    %v8056 = vpop.f32.mrb[0].mxu0
    %v8057 = vadd.f32 %v7206, %v8056
    %v8058 = vpop.f32.mrb[0].mxu0
    %8059 = vmatprep.mubr.bf16.mxu0 %v7183
    %8060 = vmatmul.mubr.bf16.gmra.mrb[0].mxu0 %v7182
    %v8061 = vpop.f32.mrb[0].mxu0
    %v8062 = vadd.f32 %v7206, %v8061
    %v8063 = vpop.f32.mrb[0].mxu0
    %v8064 = vpop.f32.mrb[0].mxu0
    %v8065 = vadd.f32 %v7206, %v8064
    %v8066 = vpop.f32.mrb[0].mxu0
    %8067 = vmatprep.mubr.bf16.mxu0 %v7185
    %8068 = vmatmul.mubr.bf16.gmra.mrb[0].mxu0 %v7184
    %v8069 = vpop.f32.mrb[0].mxu0
    %v8070 = vadd.f32 %v7206, %v8069
    %v8071 = vpop.f32.mrb[0].mxu0
    %v8072 = vpop.f32.mrb[0].mxu0
    %v8073 = vadd.f32 %v7206, %v8072
    %v8074 = vpop.f32.mrb[0].mxu0
    %8075 = vmatprep.mubr.bf16.mxu0 %v7187
    %8076 = vmatmul.mubr.bf16.gmra.mrb[0].mxu0 %v7186
    %v8077 = vpop.f32.mrb[0].mxu0
    %v8078 = vadd.f32 %v7206, %v8077
    %v8079 = vpop.f32.mrb[0].mxu0
    %v8080 = vpop.f32.mrb[0].mxu0
    %v8081 = vadd.f32 %v7206, %v8080
    %v8082 = vpop.f32.mrb[0].mxu0
    %8083 = vmatprep.mubr.bf16.mxu0 %v7189
    %8084 = vmatmul.mubr.bf16.gmra.mrb[0].mxu0 %v7188
    %v8085 = vpop.f32.mrb[0].mxu0
    %v8086 = vadd.f32 %v7206, %v8085
    %v8087 = vpop.f32.mrb[0].mxu0
    %v8088 = vpop.f32.mrb[0].mxu0
    %v8089 = vadd.f32 %v7206, %v8088
    %v8090 = vpop.f32.mrb[0].mxu0
    %8091 = vmatprep.mubr.bf16.mxu0 %v7191
    %8092 = vmatmul.mubr.bf16.gmra.mrb[0].mxu0 %v7190
    %v8093 = vpop.f32.mrb[0].mxu0
    %v8094 = vadd.f32 %v7206, %v8093
    %v8095 = vpop.f32.mrb[0].mxu0
    %v8096 = vpop.f32.mrb[0].mxu0
    %v8097 = vadd.f32 %v7206, %v8096
    %v8098 = vpop.f32.mrb[0].mxu0
    %8099 = vmatprep.mubr.bf16.mxu0 %v7193
    %8100 = vmatmul.mubr.bf16.gmra.mrb[0].mxu0 %v7192
    %v8101 = vpop.f32.mrb[0].mxu0
    %v8102 = vadd.f32 %v7206, %v8101
    %v8103 = vpop.f32.mrb[0].mxu0
    %v8104 = vpop.f32.mrb[0].mxu0
    %v8105 = vadd.f32 %v7206, %v8104
    %v8106 = vpop.f32.mrb[0].mxu0
    %8107 = vdwg.mxu0
    %v8108 = vpack.c.bf16 %v7505, %v7501
    %v8109 = vpack.c.bf16 %v7507, %v7503
    %v8110 = vpack.c.bf16 %v7515, %v7511
    %v8111 = vpack.c.bf16 %v7517, %v7513
    %v8112 = vpack.c.bf16 %v7525, %v7521
    %v8113 = vpack.c.bf16 %v7527, %v7523
    %v8114 = vpack.c.bf16 %v7535, %v7531
    %v8115 = vpack.c.bf16 %v7537, %v7533
    %v8116 = vpack.c.bf16 %v7545, %v7541
    %v8117 = vpack.c.bf16 %v7547, %v7543
    %v8118 = vpack.c.bf16 %v7555, %v7551
    %v8119 = vpack.c.bf16 %v7557, %v7553
    %v8120 = vpack.c.bf16 %v7565, %v7561
    %v8121 = vpack.c.bf16 %v7567, %v7563
    %v8122 = vpack.c.bf16 %v7575, %v7571
    %v8123 = vpack.c.bf16 %v7577, %v7573
    %v8124 = vpack.c.bf16 %v7585, %v7581
    %v8125 = vpack.c.bf16 %v7587, %v7583
    %v8126 = vpack.c.bf16 %v7595, %v7591
    %v8127 = vpack.c.bf16 %v7597, %v7593
    %v8128 = vpack.c.bf16 %v7605, %v7601
    %v8129 = vpack.c.bf16 %v7607, %v7603
    %v8130 = vpack.c.bf16 %v7615, %v7611
    %v8131 = vpack.c.bf16 %v7617, %v7613
    %v8132 = vpack.c.bf16 %v7625, %v7621
    %v8133 = vpack.c.bf16 %v7627, %v7623
    %v8134 = vpack.c.bf16 %v7635, %v7631
    %v8135 = vpack.c.bf16 %v7637, %v7633
    %v8136 = vpack.c.bf16 %v7645, %v7641
    %v8137 = vpack.c.bf16 %v7647, %v7643
    %v8138 = vpack.c.bf16 %v7655, %v7651
    %v8139 = vpack.c.bf16 %v7657, %v7653
    %v8140 = vpack.c.bf16 %v7665, %v7661
    %v8141 = vpack.c.bf16 %v7667, %v7663
    %v8142 = vpack.c.bf16 %v7675, %v7671
    %v8143 = vpack.c.bf16 %v7677, %v7673
    %v8144 = vpack.c.bf16 %v7685, %v7681
    %v8145 = vpack.c.bf16 %v7687, %v7683
    %v8146 = vpack.c.bf16 %v7695, %v7691
    %v8147 = vpack.c.bf16 %v7697, %v7693
    %v8148 = vpack.c.bf16 %v7705, %v7701
    %v8149 = vpack.c.bf16 %v7707, %v7703
    %v8150 = vpack.c.bf16 %v7715, %v7711
    %v8151 = vpack.c.bf16 %v7717, %v7713
    %v8152 = vpack.c.bf16 %v7725, %v7721
    %v8153 = vpack.c.bf16 %v7727, %v7723
    %v8154 = vpack.c.bf16 %v7735, %v7731
    %v8155 = vpack.c.bf16 %v7737, %v7733
    %v8156 = vpack.c.bf16 %v7745, %v7741
    %v8157 = vpack.c.bf16 %v7747, %v7743
    %v8158 = vpack.c.bf16 %v7755, %v7751
    %v8159 = vpack.c.bf16 %v7757, %v7753
    %v8160 = vpack.c.bf16 %v7765, %v7761
    %v8161 = vpack.c.bf16 %v7767, %v7763
    %v8162 = vpack.c.bf16 %v7775, %v7771
    %v8163 = vpack.c.bf16 %v7777, %v7773
    %v8164 = vpack.c.bf16 %v7785, %v7781
    %v8165 = vpack.c.bf16 %v7787, %v7783
    %v8166 = vpack.c.bf16 %v7795, %v7791
    %v8167 = vpack.c.bf16 %v7797, %v7793
    %v8168 = vpack.c.bf16 %v7805, %v7801
    %v8169 = vpack.c.bf16 %v7807, %v7803
    %v8170 = vpack.c.bf16 %v7815, %v7811
    %v8171 = vpack.c.bf16 %v7817, %v7813
    %v8236 = vunpack.c.l.b16 %v744
    %v8237 = vunpack.c.l.b16 %v745
    %v8238 = vunpack.c.l.b16 %v746
    %v8239 = vunpack.c.l.b16 %v747
    %v8240 = vunpack.c.l.b16 %v748
    %v8241 = vunpack.c.l.b16 %v749
    %v8242 = vunpack.c.l.b16 %v750
    %v8243 = vunpack.c.l.b16 %v751
    %v8244 = vunpack.c.l.b16 %v752
    %v8245 = vunpack.c.l.b16 %v753
    %v8246 = vunpack.c.l.b16 %v754
    %v8247 = vunpack.c.l.b16 %v755
    %v8248 = vunpack.c.l.b16 %v756
    %v8249 = vunpack.c.l.b16 %v757
    %v8250 = vunpack.c.l.b16 %v758
    %v8251 = vunpack.c.l.b16 %v759
    %v8252 = vunpack.c.l.b16 %v760
    %v8253 = vunpack.c.l.b16 %v761
    %v8254 = vunpack.c.l.b16 %v762
    %v8255 = vunpack.c.l.b16 %v763
    %v8256 = vunpack.c.l.b16 %v764
    %v8257 = vunpack.c.l.b16 %v765
    %v8258 = vunpack.c.l.b16 %v766
    %v8259 = vunpack.c.l.b16 %v767
    %v8260 = vunpack.c.l.b16 %v768
    %v8261 = vunpack.c.l.b16 %v769
    %v8262 = vunpack.c.l.b16 %v770
    %v8263 = vunpack.c.l.b16 %v771
    %v8264 = vunpack.c.l.b16 %v772
    %v8265 = vunpack.c.l.b16 %v773
    %v8266 = vunpack.c.l.b16 %v774
    %v8267 = vunpack.c.l.b16 %v775
    %v8268 = vunpack.c.l.b16 %v776
    %v8269 = vunpack.c.l.b16 %v777
    %v8270 = vunpack.c.l.b16 %v778
    %v8271 = vunpack.c.l.b16 %v779
    %v8272 = vunpack.c.l.b16 %v780
    %v8273 = vunpack.c.l.b16 %v781
    %v8274 = vunpack.c.l.b16 %v782
    %v8275 = vunpack.c.l.b16 %v783
    %v8276 = vunpack.c.l.b16 %v784
    %v8277 = vunpack.c.l.b16 %v785
    %v8278 = vunpack.c.l.b16 %v786
    %v8279 = vunpack.c.l.b16 %v787
    %v8280 = vunpack.c.l.b16 %v788
    %v8281 = vunpack.c.l.b16 %v789
    %v8282 = vunpack.c.l.b16 %v790
    %v8283 = vunpack.c.l.b16 %v791
    %v8284 = vunpack.c.l.b16 %v792
    %v8285 = vunpack.c.l.b16 %v793
    %v8286 = vunpack.c.l.b16 %v794
    %v8287 = vunpack.c.l.b16 %v795
    %v8288 = vunpack.c.l.b16 %v796
    %v8289 = vunpack.c.l.b16 %v797
    %v8290 = vunpack.c.l.b16 %v798
    %v8291 = vunpack.c.l.b16 %v799
    %v8292 = vunpack.c.l.b16 %v800
    %v8293 = vunpack.c.l.b16 %v801
    %v8294 = vunpack.c.l.b16 %v802
    %v8295 = vunpack.c.l.b16 %v803
    %v8296 = vunpack.c.l.b16 %v804
    %v8297 = vunpack.c.l.b16 %v805
    %v8298 = vunpack.c.l.b16 %v806
    %v8299 = vunpack.c.l.b16 %v807
    %v8300 = vpack.c.b16 %v8237, %v8236
    %v8301 = vpack.c.b16 %v8239, %v8238
    %v8302 = vpack.c.b16 %v8241, %v8240
    %v8303 = vpack.c.b16 %v8243, %v8242
    %v8304 = vpack.c.b16 %v8245, %v8244
    %v8305 = vpack.c.b16 %v8247, %v8246
    %v8306 = vpack.c.b16 %v8249, %v8248
    %v8307 = vpack.c.b16 %v8251, %v8250
    %v8308 = vpack.c.b16 %v8253, %v8252
    %v8309 = vpack.c.b16 %v8255, %v8254
    %v8310 = vpack.c.b16 %v8257, %v8256
    %v8311 = vpack.c.b16 %v8259, %v8258
    %v8312 = vpack.c.b16 %v8261, %v8260
    %v8313 = vpack.c.b16 %v8263, %v8262
    %v8314 = vpack.c.b16 %v8265, %v8264
    %v8315 = vpack.c.b16 %v8267, %v8266
    %v8316 = vpack.c.b16 %v8269, %v8268
    %v8317 = vpack.c.b16 %v8271, %v8270
    %v8318 = vpack.c.b16 %v8273, %v8272
    %v8319 = vpack.c.b16 %v8275, %v8274
    %v8320 = vpack.c.b16 %v8277, %v8276
    %v8321 = vpack.c.b16 %v8279, %v8278
    %v8322 = vpack.c.b16 %v8281, %v8280
    %v8323 = vpack.c.b16 %v8283, %v8282
    %v8324 = vpack.c.b16 %v8285, %v8284
    %v8325 = vpack.c.b16 %v8287, %v8286
    %v8326 = vpack.c.b16 %v8289, %v8288
    %v8327 = vpack.c.b16 %v8291, %v8290
    %v8328 = vpack.c.b16 %v8293, %v8292
    %v8329 = vpack.c.b16 %v8295, %v8294
    %v8330 = vpack.c.b16 %v8297, %v8296
    %v8331 = vpack.c.b16 %v8299, %v8298
    %v8336 = vunpack.c.l.b16 %v658
    %v8337 = vunpack.c.l.b16 %v659
    %v8338 = vunpack.c.l.b16 %v660
    %v8339 = vunpack.c.l.b16 %v661
    %v8340 = vpack.c.b16 %v8337, %v8336
    %v8341 = vpack.c.b16 %v8339, %v8338
    %vm8344 = vcmask 261120
    %v8346 = vsel %vm8344, %v8300, 0
    %v8349 = vsel %vm8344, %v8301, 0
    %v8352 = vsel %vm8344, %v8302, 0
    %v8355 = vsel %vm8344, %v8303, 0
    %v8358 = vsel %vm8344, %v8304, 0
    %v8361 = vsel %vm8344, %v8305, 0
    %v8364 = vsel %vm8344, %v8306, 0
    %v8367 = vsel %vm8344, %v8307, 0
    %v8370 = vsel %vm8344, %v8308, 0
    %v8373 = vsel %vm8344, %v8309, 0
    %v8376 = vsel %vm8344, %v8310, 0
    %v8379 = vsel %vm8344, %v8311, 0
    %v8382 = vsel %vm8344, %v8312, 0
    %v8385 = vsel %vm8344, %v8313, 0
    %v8388 = vsel %vm8344, %v8314, 0
    %v8391 = vsel %vm8344, %v8315, 0
    %v8394 = vsel %vm8344, %v8316, 0
    %v8397 = vsel %vm8344, %v8317, 0
    %v8400 = vsel %vm8344, %v8318, 0
    %v8403 = vsel %vm8344, %v8319, 0
    %v8406 = vsel %vm8344, %v8320, 0
    %v8409 = vsel %vm8344, %v8321, 0
    %v8412 = vsel %vm8344, %v8322, 0
    %v8415 = vsel %vm8344, %v8323, 0
    %v8418 = vsel %vm8344, %v8324, 0
    %v8421 = vsel %vm8344, %v8325, 0
    %v8424 = vsel %vm8344, %v8326, 0
    %v8427 = vsel %vm8344, %v8327, 0
    %v8430 = vsel %vm8344, %v8328, 0
    %v8433 = vsel %vm8344, %v8329, 0
    %v8436 = vsel %vm8344, %v8330, 0
    %v8439 = vsel %vm8344, %v8331, 0
    %8441 = vmatprep.subr.bf16.mxu0 0
    %8442 = vmatpush1.bf16.msra.mxu0 %v8340
    %8443 = vmatprep.subr.bf16.mxu0 0
    %8444 = vmatpush1.bf16.msra.mxu0 %v8341
    %8445 = vmatprep.subr.bf16.mxu0 0
    %8446 = vmatpush1.bf16.msra.mxu0 0
    %8447 = vmatprep.subr.bf16.mxu0 0
    %8448 = vmatpush1.bf16.msra.mxu0 0
    %8449 = vmatprep.subr.bf16.mxu0 0
    %8450 = vmatpush1.bf16.msra.mxu0 0
    %8451 = vmatprep.subr.bf16.mxu0 0
    %8452 = vmatpush1.bf16.msra.mxu0 0
    %8453 = vmatprep.subr.bf16.mxu0 0
    %8454 = vmatpush1.bf16.msra.mxu0 0
    %8455 = vmatprep.subr.bf16.mxu0 0
    %8456 = vmatpush1.bf16.msra.mxu0 0
    %8457 = vmatprep.subr.bf16.mxu0 0
    %8458 = vmatpush1.bf16.msra.mxu0 0
    %8459 = vmatprep.subr.bf16.mxu0 0
    %8460 = vmatpush1.bf16.msra.mxu0 0
    %8461 = vmatprep.subr.bf16.mxu0 0
    %8462 = vmatpush1.bf16.msra.mxu0 0
    %8463 = vmatprep.subr.bf16.mxu0 0
    %8464 = vmatpush1.bf16.msra.mxu0 0
    %8465 = vmatprep.subr.bf16.mxu0 0
    %8466 = vmatpush1.bf16.msra.mxu0 0
    %8467 = vmatprep.subr.bf16.mxu0 0
    %8468 = vmatpush1.bf16.msra.mxu0 0
    %8469 = vmatprep.subr.bf16.mxu0 0
    %8470 = vmatpush1.bf16.msra.mxu0 0
    %8471 = vmatprep.subr.bf16.mxu0 0
    %8472 = vmatpush1.bf16.msra.mxu0 0
    %8473 = vmatprep.mubr.bf16.mxu0 0
    %8474 = vmatmul.mubr.bf16.gmra.mrb[0].mxu0 %v8346
    %v8475 = vpop.f32.mrb[0].mxu0
    %v8476 = vadd.f32 0.0, %v8475
    %v8477 = vpop.f32.mrb[0].mxu0
    %v8478 = vpop.f32.mrb[0].mxu0
    %v8479 = vadd.f32 0.0, %v8478
    %v8480 = vpop.f32.mrb[0].mxu0
    %8481 = vmatprep.mubr.bf16.mxu0 0
    %8482 = vmatmul.mubr.bf16.gmra.mrb[0].mxu0 %v8349
    %v8483 = vpop.f32.mrb[0].mxu0
    %v8484 = vadd.f32 0.0, %v8483
    %v8485 = vpop.f32.mrb[0].mxu0
    %v8486 = vpop.f32.mrb[0].mxu0
    %v8487 = vadd.f32 0.0, %v8486
    %v8488 = vpop.f32.mrb[0].mxu0
    %8489 = vmatprep.mubr.bf16.mxu0 0
    %8490 = vmatmul.mubr.bf16.gmra.mrb[0].mxu0 %v8352
    %v8491 = vpop.f32.mrb[0].mxu0
    %v8492 = vadd.f32 0.0, %v8491
    %v8493 = vpop.f32.mrb[0].mxu0
    %v8494 = vpop.f32.mrb[0].mxu0
    %v8495 = vadd.f32 0.0, %v8494
    %v8496 = vpop.f32.mrb[0].mxu0
    %8497 = vmatprep.mubr.bf16.mxu0 0
    %8498 = vmatmul.mubr.bf16.gmra.mrb[0].mxu0 %v8355
    %v8499 = vpop.f32.mrb[0].mxu0
    %v8500 = vadd.f32 0.0, %v8499
    %v8501 = vpop.f32.mrb[0].mxu0
    %v8502 = vpop.f32.mrb[0].mxu0
    %v8503 = vadd.f32 0.0, %v8502
    %v8504 = vpop.f32.mrb[0].mxu0
    %8505 = vmatprep.mubr.bf16.mxu0 0
    %8506 = vmatmul.mubr.bf16.gmra.mrb[0].mxu0 %v8358
    %v8507 = vpop.f32.mrb[0].mxu0
    %v8508 = vadd.f32 0.0, %v8507
    %v8509 = vpop.f32.mrb[0].mxu0
    %v8510 = vpop.f32.mrb[0].mxu0
    %v8511 = vadd.f32 0.0, %v8510
    %v8512 = vpop.f32.mrb[0].mxu0
    %8513 = vmatprep.mubr.bf16.mxu0 0
    %8514 = vmatmul.mubr.bf16.gmra.mrb[0].mxu0 %v8361
    %v8515 = vpop.f32.mrb[0].mxu0
    %v8516 = vadd.f32 0.0, %v8515
    %v8517 = vpop.f32.mrb[0].mxu0
    %v8518 = vpop.f32.mrb[0].mxu0
    %v8519 = vadd.f32 0.0, %v8518
    %v8520 = vpop.f32.mrb[0].mxu0
    %8521 = vmatprep.mubr.bf16.mxu0 0
    %8522 = vmatmul.mubr.bf16.gmra.mrb[0].mxu0 %v8364
    %v8523 = vpop.f32.mrb[0].mxu0
    %v8524 = vadd.f32 0.0, %v8523
    %v8525 = vpop.f32.mrb[0].mxu0
    %v8526 = vpop.f32.mrb[0].mxu0
    %v8527 = vadd.f32 0.0, %v8526
    %v8528 = vpop.f32.mrb[0].mxu0
    %8529 = vmatprep.mubr.bf16.mxu0 0
    %8530 = vmatmul.mubr.bf16.gmra.mrb[0].mxu0 %v8367
    %v8531 = vpop.f32.mrb[0].mxu0
    %v8532 = vadd.f32 0.0, %v8531
    %v8533 = vpop.f32.mrb[0].mxu0
    %v8534 = vpop.f32.mrb[0].mxu0
    %v8535 = vadd.f32 0.0, %v8534
    %v8536 = vpop.f32.mrb[0].mxu0
    %8537 = vmatprep.mubr.bf16.mxu0 0
    %8538 = vmatmul.mubr.bf16.gmra.mrb[0].mxu0 %v8370
    %v8539 = vpop.f32.mrb[0].mxu0
    %v8540 = vadd.f32 0.0, %v8539
    %v8541 = vpop.f32.mrb[0].mxu0
    %v8542 = vpop.f32.mrb[0].mxu0
    %v8543 = vadd.f32 0.0, %v8542
    %v8544 = vpop.f32.mrb[0].mxu0
    %8545 = vmatprep.mubr.bf16.mxu0 0
    %8546 = vmatmul.mubr.bf16.gmra.mrb[0].mxu0 %v8373
    %v8547 = vpop.f32.mrb[0].mxu0
    %v8548 = vadd.f32 0.0, %v8547
    %v8549 = vpop.f32.mrb[0].mxu0
    %v8550 = vpop.f32.mrb[0].mxu0
    %v8551 = vadd.f32 0.0, %v8550
    %v8552 = vpop.f32.mrb[0].mxu0
    %8553 = vmatprep.mubr.bf16.mxu0 0
    %8554 = vmatmul.mubr.bf16.gmra.mrb[0].mxu0 %v8376
    %v8555 = vpop.f32.mrb[0].mxu0
    %v8556 = vadd.f32 0.0, %v8555
    %v8557 = vpop.f32.mrb[0].mxu0
    %v8558 = vpop.f32.mrb[0].mxu0
    %v8559 = vadd.f32 0.0, %v8558
    %v8560 = vpop.f32.mrb[0].mxu0
    %8561 = vmatprep.mubr.bf16.mxu0 0
    %8562 = vmatmul.mubr.bf16.gmra.mrb[0].mxu0 %v8379
    %v8563 = vpop.f32.mrb[0].mxu0
    %v8564 = vadd.f32 0.0, %v8563
    %v8565 = vpop.f32.mrb[0].mxu0
    %v8566 = vpop.f32.mrb[0].mxu0
    %v8567 = vadd.f32 0.0, %v8566
    %v8568 = vpop.f32.mrb[0].mxu0
    %8569 = vmatprep.mubr.bf16.mxu0 0
    %8570 = vmatmul.mubr.bf16.gmra.mrb[0].mxu0 %v8382
    %v8571 = vpop.f32.mrb[0].mxu0
    %v8572 = vadd.f32 0.0, %v8571
    %v8573 = vpop.f32.mrb[0].mxu0
    %v8574 = vpop.f32.mrb[0].mxu0
    %v8575 = vadd.f32 0.0, %v8574
    %v8576 = vpop.f32.mrb[0].mxu0
    %8577 = vmatprep.mubr.bf16.mxu0 0
    %8578 = vmatmul.mubr.bf16.gmra.mrb[0].mxu0 %v8385
    %v8579 = vpop.f32.mrb[0].mxu0
    %v8580 = vadd.f32 0.0, %v8579
    %v8581 = vpop.f32.mrb[0].mxu0
    %v8582 = vpop.f32.mrb[0].mxu0
    %v8583 = vadd.f32 0.0, %v8582
    %v8584 = vpop.f32.mrb[0].mxu0
    %8585 = vmatprep.mubr.bf16.mxu0 0
    %8586 = vmatmul.mubr.bf16.gmra.mrb[0].mxu0 %v8388
    %v8587 = vpop.f32.mrb[0].mxu0
    %v8588 = vadd.f32 0.0, %v8587
    %v8589 = vpop.f32.mrb[0].mxu0
    %v8590 = vpop.f32.mrb[0].mxu0
    %v8591 = vadd.f32 0.0, %v8590
    %v8592 = vpop.f32.mrb[0].mxu0
    %8593 = vmatprep.mubr.bf16.mxu0 0
    %8594 = vmatmul.mubr.bf16.gmra.mrb[0].mxu0 %v8391
    %v8595 = vpop.f32.mrb[0].mxu0
    %v8596 = vadd.f32 0.0, %v8595
    %v8597 = vpop.f32.mrb[0].mxu0
    %v8598 = vpop.f32.mrb[0].mxu0
    %v8599 = vadd.f32 0.0, %v8598
    %v8600 = vpop.f32.mrb[0].mxu0
    %8601 = vmatprep.mubr.bf16.mxu0 0
    %8602 = vmatmul.mubr.bf16.gmra.mrb[0].mxu0 %v8394
    %v8603 = vpop.f32.mrb[0].mxu0
    %v8604 = vadd.f32 0.0, %v8603
    %v8605 = vpop.f32.mrb[0].mxu0
    %v8606 = vpop.f32.mrb[0].mxu0
    %v8607 = vadd.f32 0.0, %v8606
    %v8608 = vpop.f32.mrb[0].mxu0
    %8609 = vmatprep.mubr.bf16.mxu0 0
    %8610 = vmatmul.mubr.bf16.gmra.mrb[0].mxu0 %v8397
    %v8611 = vpop.f32.mrb[0].mxu0
    %v8612 = vadd.f32 0.0, %v8611
    %v8613 = vpop.f32.mrb[0].mxu0
    %v8614 = vpop.f32.mrb[0].mxu0
    %v8615 = vadd.f32 0.0, %v8614
    %v8616 = vpop.f32.mrb[0].mxu0
    %8617 = vmatprep.mubr.bf16.mxu0 0
    %8618 = vmatmul.mubr.bf16.gmra.mrb[0].mxu0 %v8400
    %v8619 = vpop.f32.mrb[0].mxu0
    %v8620 = vadd.f32 0.0, %v8619
    %v8621 = vpop.f32.mrb[0].mxu0
    %v8622 = vpop.f32.mrb[0].mxu0
    %v8623 = vadd.f32 0.0, %v8622
    %v8624 = vpop.f32.mrb[0].mxu0
    %8625 = vmatprep.mubr.bf16.mxu0 0
    %8626 = vmatmul.mubr.bf16.gmra.mrb[0].mxu0 %v8403
    %v8627 = vpop.f32.mrb[0].mxu0
    %v8628 = vadd.f32 0.0, %v8627
    %v8629 = vpop.f32.mrb[0].mxu0
    %v8630 = vpop.f32.mrb[0].mxu0
    %v8631 = vadd.f32 0.0, %v8630
    %v8632 = vpop.f32.mrb[0].mxu0
    %8633 = vmatprep.mubr.bf16.mxu0 0
    %8634 = vmatmul.mubr.bf16.gmra.mrb[0].mxu0 %v8406
    %v8635 = vpop.f32.mrb[0].mxu0
    %v8636 = vadd.f32 0.0, %v8635
    %v8637 = vpop.f32.mrb[0].mxu0
    %v8638 = vpop.f32.mrb[0].mxu0
    %v8639 = vadd.f32 0.0, %v8638
    %v8640 = vpop.f32.mrb[0].mxu0
    %8641 = vmatprep.mubr.bf16.mxu0 0
    %8642 = vmatmul.mubr.bf16.gmra.mrb[0].mxu0 %v8409
    %v8643 = vpop.f32.mrb[0].mxu0
    %v8644 = vadd.f32 0.0, %v8643
    %v8645 = vpop.f32.mrb[0].mxu0
    %v8646 = vpop.f32.mrb[0].mxu0
    %v8647 = vadd.f32 0.0, %v8646
    %v8648 = vpop.f32.mrb[0].mxu0
    %8649 = vmatprep.mubr.bf16.mxu0 0
    %8650 = vmatmul.mubr.bf16.gmra.mrb[0].mxu0 %v8412
    %v8651 = vpop.f32.mrb[0].mxu0
    %v8652 = vadd.f32 0.0, %v8651
    %v8653 = vpop.f32.mrb[0].mxu0
    %v8654 = vpop.f32.mrb[0].mxu0
    %v8655 = vadd.f32 0.0, %v8654
    %v8656 = vpop.f32.mrb[0].mxu0
    %8657 = vmatprep.mubr.bf16.mxu0 0
    %8658 = vmatmul.mubr.bf16.gmra.mrb[0].mxu0 %v8415
    %v8659 = vpop.f32.mrb[0].mxu0
    %v8660 = vadd.f32 0.0, %v8659
    %v8661 = vpop.f32.mrb[0].mxu0
    %v8662 = vpop.f32.mrb[0].mxu0
    %v8663 = vadd.f32 0.0, %v8662
    %v8664 = vpop.f32.mrb[0].mxu0
    %8665 = vmatprep.mubr.bf16.mxu0 0
    %8666 = vmatmul.mubr.bf16.gmra.mrb[0].mxu0 %v8418
    %v8667 = vpop.f32.mrb[0].mxu0
    %v8668 = vadd.f32 0.0, %v8667
    %v8669 = vpop.f32.mrb[0].mxu0
    %v8670 = vpop.f32.mrb[0].mxu0
    %v8671 = vadd.f32 0.0, %v8670
    %v8672 = vpop.f32.mrb[0].mxu0
    %8673 = vmatprep.mubr.bf16.mxu0 0
    %8674 = vmatmul.mubr.bf16.gmra.mrb[0].mxu0 %v8421
    %v8675 = vpop.f32.mrb[0].mxu0
    %v8676 = vadd.f32 0.0, %v8675
    %v8677 = vpop.f32.mrb[0].mxu0
    %v8678 = vpop.f32.mrb[0].mxu0
    %v8679 = vadd.f32 0.0, %v8678
    %v8680 = vpop.f32.mrb[0].mxu0
    %8681 = vmatprep.mubr.bf16.mxu0 0
    %8682 = vmatmul.mubr.bf16.gmra.mrb[0].mxu0 %v8424
    %v8683 = vpop.f32.mrb[0].mxu0
    %v8684 = vadd.f32 0.0, %v8683
    %v8685 = vpop.f32.mrb[0].mxu0
    %v8686 = vpop.f32.mrb[0].mxu0
    %v8687 = vadd.f32 0.0, %v8686
    %v8688 = vpop.f32.mrb[0].mxu0
    %8689 = vmatprep.mubr.bf16.mxu0 0
    %8690 = vmatmul.mubr.bf16.gmra.mrb[0].mxu0 %v8427
    %v8691 = vpop.f32.mrb[0].mxu0
    %v8692 = vadd.f32 0.0, %v8691
    %v8693 = vpop.f32.mrb[0].mxu0
    %v8694 = vpop.f32.mrb[0].mxu0
    %v8695 = vadd.f32 0.0, %v8694
    %v8696 = vpop.f32.mrb[0].mxu0
    %8697 = vmatprep.mubr.bf16.mxu0 0
    %8698 = vmatmul.mubr.bf16.gmra.mrb[0].mxu0 %v8430
    %v8699 = vpop.f32.mrb[0].mxu0
    %v8700 = vadd.f32 0.0, %v8699
    %v8701 = vpop.f32.mrb[0].mxu0
    %v8702 = vpop.f32.mrb[0].mxu0
    %v8703 = vadd.f32 0.0, %v8702
    %v8704 = vpop.f32.mrb[0].mxu0
    %8705 = vmatprep.mubr.bf16.mxu0 0
    %8706 = vmatmul.mubr.bf16.gmra.mrb[0].mxu0 %v8433
    %v8707 = vpop.f32.mrb[0].mxu0
    %v8708 = vadd.f32 0.0, %v8707
    %v8709 = vpop.f32.mrb[0].mxu0
    %v8710 = vpop.f32.mrb[0].mxu0
    %v8711 = vadd.f32 0.0, %v8710
    %v8712 = vpop.f32.mrb[0].mxu0
    %8713 = vmatprep.mubr.bf16.mxu0 0
    %8714 = vmatmul.mubr.bf16.gmra.mrb[0].mxu0 %v8436
    %v8715 = vpop.f32.mrb[0].mxu0
    %v8716 = vadd.f32 0.0, %v8715
    %v8717 = vpop.f32.mrb[0].mxu0
    %v8718 = vpop.f32.mrb[0].mxu0
    %v8719 = vadd.f32 0.0, %v8718
    %v8720 = vpop.f32.mrb[0].mxu0
    %8721 = vmatprep.mubr.bf16.mxu0 0
    %8722 = vmatmul.mubr.bf16.gmra.mrb[0].mxu0 %v8439
    %v8723 = vpop.f32.mrb[0].mxu0
    %v8724 = vadd.f32 0.0, %v8723
    %v8725 = vpop.f32.mrb[0].mxu0
    %v8726 = vpop.f32.mrb[0].mxu0
    %v8727 = vadd.f32 0.0, %v8726
    %v8728 = vpop.f32.mrb[0].mxu0
    %8729 = vdwg.mxu0
    %v8762 = vunpack.c.l.b16 %v626
    %v8763 = vunpack.c.l.b16 %v627
    %v8764 = vunpack.c.l.b16 %v628
    %v8765 = vunpack.c.l.b16 %v629
    %v8766 = vunpack.c.l.b16 %v630
    %v8767 = vunpack.c.l.b16 %v631
    %v8768 = vunpack.c.l.b16 %v632
    %v8769 = vunpack.c.l.b16 %v633
    %v8770 = vunpack.c.l.b16 %v634
    %v8771 = vunpack.c.l.b16 %v635
    %v8772 = vunpack.c.l.b16 %v636
    %v8773 = vunpack.c.l.b16 %v637
    %v8774 = vunpack.c.l.b16 %v638
    %v8775 = vunpack.c.l.b16 %v639
    %v8776 = vunpack.c.l.b16 %v640
    %v8777 = vunpack.c.l.b16 %v641
    %v8778 = vunpack.c.l.b16 %v642
    %v8779 = vunpack.c.l.b16 %v643
    %v8780 = vunpack.c.l.b16 %v644
    %v8781 = vunpack.c.l.b16 %v645
    %v8782 = vunpack.c.l.b16 %v646
    %v8783 = vunpack.c.l.b16 %v647
    %v8784 = vunpack.c.l.b16 %v648
    %v8785 = vunpack.c.l.b16 %v649
    %v8786 = vunpack.c.l.b16 %v650
    %v8787 = vunpack.c.l.b16 %v651
    %v8788 = vunpack.c.l.b16 %v652
    %v8789 = vunpack.c.l.b16 %v653
    %v8790 = vunpack.c.l.b16 %v654
    %v8791 = vunpack.c.l.b16 %v655
    %v8792 = vunpack.c.l.b16 %v656
    %v8793 = vunpack.c.l.b16 %v657
    %v8794 = vpack.c.b16 %v8763, %v8762
    %v8795 = vpack.c.b16 %v8765, %v8764
    %v8796 = vpack.c.b16 %v8767, %v8766
    %v8797 = vpack.c.b16 %v8769, %v8768
    %v8798 = vpack.c.b16 %v8771, %v8770
    %v8799 = vpack.c.b16 %v8773, %v8772
    %v8800 = vpack.c.b16 %v8775, %v8774
    %v8801 = vpack.c.b16 %v8777, %v8776
    %v8802 = vpack.c.b16 %v8779, %v8778
    %v8803 = vpack.c.b16 %v8781, %v8780
    %v8804 = vpack.c.b16 %v8783, %v8782
    %v8805 = vpack.c.b16 %v8785, %v8784
    %v8806 = vpack.c.b16 %v8787, %v8786
    %v8807 = vpack.c.b16 %v8789, %v8788
    %v8808 = vpack.c.b16 %v8791, %v8790
    %v8809 = vpack.c.b16 %v8793, %v8792
    %8826 = vmatprep.subr.bf16.mxu0 0
    %8827 = vmatpush1.bf16.msra.mxu0 %v8794
    %8828 = vmatprep.subr.bf16.mxu0 0
    %8829 = vmatpush1.bf16.msra.mxu0 %v8795
    %8830 = vmatprep.subr.bf16.mxu0 0
    %8831 = vmatpush1.bf16.msra.mxu0 %v8796
    %8832 = vmatprep.subr.bf16.mxu0 0
    %8833 = vmatpush1.bf16.msra.mxu0 %v8797
    %8834 = vmatprep.subr.bf16.mxu0 0
    %8835 = vmatpush1.bf16.msra.mxu0 %v8798
    %8836 = vmatprep.subr.bf16.mxu0 0
    %8837 = vmatpush1.bf16.msra.mxu0 %v8799
    %8838 = vmatprep.subr.bf16.mxu0 0
    %8839 = vmatpush1.bf16.msra.mxu0 %v8800
    %8840 = vmatprep.subr.bf16.mxu0 0
    %8841 = vmatpush1.bf16.msra.mxu0 %v8801
    %8842 = vmatprep.subr.bf16.mxu0 0
    %8843 = vmatpush1.bf16.msra.mxu0 %v8802
    %8844 = vmatprep.subr.bf16.mxu0 0
    %8845 = vmatpush1.bf16.msra.mxu0 %v8803
    %8846 = vmatprep.subr.bf16.mxu0 0
    %8847 = vmatpush1.bf16.msra.mxu0 %v8804
    %8848 = vmatprep.subr.bf16.mxu0 0
    %8849 = vmatpush1.bf16.msra.mxu0 %v8805
    %8850 = vmatprep.subr.bf16.mxu0 0
    %8851 = vmatpush1.bf16.msra.mxu0 %v8806
    %8852 = vmatprep.subr.bf16.mxu0 0
    %8853 = vmatpush1.bf16.msra.mxu0 %v8807
    %8854 = vmatprep.subr.bf16.mxu0 0
    %8855 = vmatpush1.bf16.msra.mxu0 %v8808
    %8856 = vmatprep.subr.bf16.mxu0 0
    %8857 = vmatpush1.bf16.msra.mxu0 %v8809
    %8858 = vmatprep.mubr.bf16.mxu0 %v8109
    %8859 = vmatmul.mubr.bf16.gmra.mrb[0].mxu0 %v8108
    %v8860 = vpop.f32.mrb[0].mxu0
    %v8861 = vadd.f32 %v8476, %v8860
    %v8862 = vpop.f32.mrb[0].mxu0
    %v8863 = vpop.f32.mrb[0].mxu0
    %v8864 = vadd.f32 %v8479, %v8863
    %v8865 = vpop.f32.mrb[0].mxu0
    %8866 = vmatprep.mubr.bf16.mxu0 %v8111
    %8867 = vmatmul.mubr.bf16.gmra.mrb[0].mxu0 %v8110
    %v8868 = vpop.f32.mrb[0].mxu0
    %v8869 = vadd.f32 %v8484, %v8868
    %v8870 = vpop.f32.mrb[0].mxu0
    %v8871 = vpop.f32.mrb[0].mxu0
    %v8872 = vadd.f32 %v8487, %v8871
    %v8873 = vpop.f32.mrb[0].mxu0
    %8874 = vmatprep.mubr.bf16.mxu0 %v8113
    %8875 = vmatmul.mubr.bf16.gmra.mrb[0].mxu0 %v8112
    %v8876 = vpop.f32.mrb[0].mxu0
    %v8877 = vadd.f32 %v8492, %v8876
    %v8878 = vpop.f32.mrb[0].mxu0
    %v8879 = vpop.f32.mrb[0].mxu0
    %v8880 = vadd.f32 %v8495, %v8879
    %v8881 = vpop.f32.mrb[0].mxu0
    %8882 = vmatprep.mubr.bf16.mxu0 %v8115
    %8883 = vmatmul.mubr.bf16.gmra.mrb[0].mxu0 %v8114
    %v8884 = vpop.f32.mrb[0].mxu0
    %v8885 = vadd.f32 %v8500, %v8884
    %v8886 = vpop.f32.mrb[0].mxu0
    %v8887 = vpop.f32.mrb[0].mxu0
    %v8888 = vadd.f32 %v8503, %v8887
    %v8889 = vpop.f32.mrb[0].mxu0
    %8890 = vmatprep.mubr.bf16.mxu0 %v8117
    %8891 = vmatmul.mubr.bf16.gmra.mrb[0].mxu0 %v8116
    %v8892 = vpop.f32.mrb[0].mxu0
    %v8893 = vadd.f32 %v8508, %v8892
    %v8894 = vpop.f32.mrb[0].mxu0
    %v8895 = vpop.f32.mrb[0].mxu0
    %v8896 = vadd.f32 %v8511, %v8895
    %v8897 = vpop.f32.mrb[0].mxu0
    %8898 = vmatprep.mubr.bf16.mxu0 %v8119
    %8899 = vmatmul.mubr.bf16.gmra.mrb[0].mxu0 %v8118
    %v8900 = vpop.f32.mrb[0].mxu0
    %v8901 = vadd.f32 %v8516, %v8900
    %v8902 = vpop.f32.mrb[0].mxu0
    %v8903 = vpop.f32.mrb[0].mxu0
    %v8904 = vadd.f32 %v8519, %v8903
    %v8905 = vpop.f32.mrb[0].mxu0
    %8906 = vmatprep.mubr.bf16.mxu0 %v8121
    %8907 = vmatmul.mubr.bf16.gmra.mrb[0].mxu0 %v8120
    %v8908 = vpop.f32.mrb[0].mxu0
    %v8909 = vadd.f32 %v8524, %v8908
    %v8910 = vpop.f32.mrb[0].mxu0
    %v8911 = vpop.f32.mrb[0].mxu0
    %v8912 = vadd.f32 %v8527, %v8911
    %v8913 = vpop.f32.mrb[0].mxu0
    %8914 = vmatprep.mubr.bf16.mxu0 %v8123
    %8915 = vmatmul.mubr.bf16.gmra.mrb[0].mxu0 %v8122
    %v8916 = vpop.f32.mrb[0].mxu0
    %v8917 = vadd.f32 %v8532, %v8916
    %v8918 = vpop.f32.mrb[0].mxu0
    %v8919 = vpop.f32.mrb[0].mxu0
    %v8920 = vadd.f32 %v8535, %v8919
    %v8921 = vpop.f32.mrb[0].mxu0
    %8922 = vmatprep.mubr.bf16.mxu0 %v8125
    %8923 = vmatmul.mubr.bf16.gmra.mrb[0].mxu0 %v8124
    %v8924 = vpop.f32.mrb[0].mxu0
    %v8925 = vadd.f32 %v8540, %v8924
    %v8926 = vpop.f32.mrb[0].mxu0
    %v8927 = vpop.f32.mrb[0].mxu0
    %v8928 = vadd.f32 %v8543, %v8927
    %v8929 = vpop.f32.mrb[0].mxu0
    %8930 = vmatprep.mubr.bf16.mxu0 %v8127
    %8931 = vmatmul.mubr.bf16.gmra.mrb[0].mxu0 %v8126
    %v8932 = vpop.f32.mrb[0].mxu0
    %v8933 = vadd.f32 %v8548, %v8932
    %v8934 = vpop.f32.mrb[0].mxu0
    %v8935 = vpop.f32.mrb[0].mxu0
    %v8936 = vadd.f32 %v8551, %v8935
    %v8937 = vpop.f32.mrb[0].mxu0
    %8938 = vmatprep.mubr.bf16.mxu0 %v8129
    %8939 = vmatmul.mubr.bf16.gmra.mrb[0].mxu0 %v8128
    %v8940 = vpop.f32.mrb[0].mxu0
    %v8941 = vadd.f32 %v8556, %v8940
    %v8942 = vpop.f32.mrb[0].mxu0
    %v8943 = vpop.f32.mrb[0].mxu0
    %v8944 = vadd.f32 %v8559, %v8943
    %v8945 = vpop.f32.mrb[0].mxu0
    %8946 = vmatprep.mubr.bf16.mxu0 %v8131
    %8947 = vmatmul.mubr.bf16.gmra.mrb[0].mxu0 %v8130
    %v8948 = vpop.f32.mrb[0].mxu0
    %v8949 = vadd.f32 %v8564, %v8948
    %v8950 = vpop.f32.mrb[0].mxu0
    %v8951 = vpop.f32.mrb[0].mxu0
    %v8952 = vadd.f32 %v8567, %v8951
    %v8953 = vpop.f32.mrb[0].mxu0
    %8954 = vmatprep.mubr.bf16.mxu0 %v8133
    %8955 = vmatmul.mubr.bf16.gmra.mrb[0].mxu0 %v8132
    %v8956 = vpop.f32.mrb[0].mxu0
    %v8957 = vadd.f32 %v8572, %v8956
    %v8958 = vpop.f32.mrb[0].mxu0
    %v8959 = vpop.f32.mrb[0].mxu0
    %v8960 = vadd.f32 %v8575, %v8959
    %v8961 = vpop.f32.mrb[0].mxu0
    %8962 = vmatprep.mubr.bf16.mxu0 %v8135
    %8963 = vmatmul.mubr.bf16.gmra.mrb[0].mxu0 %v8134
    %v8964 = vpop.f32.mrb[0].mxu0
    %v8965 = vadd.f32 %v8580, %v8964
    %v8966 = vpop.f32.mrb[0].mxu0
    %v8967 = vpop.f32.mrb[0].mxu0
    %v8968 = vadd.f32 %v8583, %v8967
    %v8969 = vpop.f32.mrb[0].mxu0
    %8970 = vmatprep.mubr.bf16.mxu0 %v8137
    %8971 = vmatmul.mubr.bf16.gmra.mrb[0].mxu0 %v8136
    %v8972 = vpop.f32.mrb[0].mxu0
    %v8973 = vadd.f32 %v8588, %v8972
    %v8974 = vpop.f32.mrb[0].mxu0
    %v8975 = vpop.f32.mrb[0].mxu0
    %v8976 = vadd.f32 %v8591, %v8975
    %v8977 = vpop.f32.mrb[0].mxu0
    %8978 = vmatprep.mubr.bf16.mxu0 %v8139
    %8979 = vmatmul.mubr.bf16.gmra.mrb[0].mxu0 %v8138
    %v8980 = vpop.f32.mrb[0].mxu0
    %v8981 = vadd.f32 %v8596, %v8980
    %v8982 = vpop.f32.mrb[0].mxu0
    %v8983 = vpop.f32.mrb[0].mxu0
    %v8984 = vadd.f32 %v8599, %v8983
    %v8985 = vpop.f32.mrb[0].mxu0
    %8986 = vmatprep.mubr.bf16.mxu0 %v8141
    %8987 = vmatmul.mubr.bf16.gmra.mrb[0].mxu0 %v8140
    %v8988 = vpop.f32.mrb[0].mxu0
    %v8989 = vadd.f32 %v8604, %v8988
    %v8990 = vpop.f32.mrb[0].mxu0
    %v8991 = vpop.f32.mrb[0].mxu0
    %v8992 = vadd.f32 %v8607, %v8991
    %v8993 = vpop.f32.mrb[0].mxu0
    %8994 = vmatprep.mubr.bf16.mxu0 %v8143
    %8995 = vmatmul.mubr.bf16.gmra.mrb[0].mxu0 %v8142
    %v8996 = vpop.f32.mrb[0].mxu0
    %v8997 = vadd.f32 %v8612, %v8996
    %v8998 = vpop.f32.mrb[0].mxu0
    %v8999 = vpop.f32.mrb[0].mxu0
    %v9000 = vadd.f32 %v8615, %v8999
    %v9001 = vpop.f32.mrb[0].mxu0
    %9002 = vmatprep.mubr.bf16.mxu0 %v8145
    %9003 = vmatmul.mubr.bf16.gmra.mrb[0].mxu0 %v8144
    %v9004 = vpop.f32.mrb[0].mxu0
    %v9005 = vadd.f32 %v8620, %v9004
    %v9006 = vpop.f32.mrb[0].mxu0
    %v9007 = vpop.f32.mrb[0].mxu0
    %v9008 = vadd.f32 %v8623, %v9007
    %v9009 = vpop.f32.mrb[0].mxu0
    %9010 = vmatprep.mubr.bf16.mxu0 %v8147
    %9011 = vmatmul.mubr.bf16.gmra.mrb[0].mxu0 %v8146
    %v9012 = vpop.f32.mrb[0].mxu0
    %v9013 = vadd.f32 %v8628, %v9012
    %v9014 = vpop.f32.mrb[0].mxu0
    %v9015 = vpop.f32.mrb[0].mxu0
    %v9016 = vadd.f32 %v8631, %v9015
    %v9017 = vpop.f32.mrb[0].mxu0
    %9018 = vmatprep.mubr.bf16.mxu0 %v8149
    %9019 = vmatmul.mubr.bf16.gmra.mrb[0].mxu0 %v8148
    %v9020 = vpop.f32.mrb[0].mxu0
    %v9021 = vadd.f32 %v8636, %v9020
    %v9022 = vpop.f32.mrb[0].mxu0
    %v9023 = vpop.f32.mrb[0].mxu0
    %v9024 = vadd.f32 %v8639, %v9023
    %v9025 = vpop.f32.mrb[0].mxu0
    %9026 = vmatprep.mubr.bf16.mxu0 %v8151
    %9027 = vmatmul.mubr.bf16.gmra.mrb[0].mxu0 %v8150
    %v9028 = vpop.f32.mrb[0].mxu0
    %v9029 = vadd.f32 %v8644, %v9028
    %v9030 = vpop.f32.mrb[0].mxu0
    %v9031 = vpop.f32.mrb[0].mxu0
    %v9032 = vadd.f32 %v8647, %v9031
    %v9033 = vpop.f32.mrb[0].mxu0
    %9034 = vmatprep.mubr.bf16.mxu0 %v8153
    %9035 = vmatmul.mubr.bf16.gmra.mrb[0].mxu0 %v8152
    %v9036 = vpop.f32.mrb[0].mxu0
    %v9037 = vadd.f32 %v8652, %v9036
    %v9038 = vpop.f32.mrb[0].mxu0
    %v9039 = vpop.f32.mrb[0].mxu0
    %v9040 = vadd.f32 %v8655, %v9039
    %v9041 = vpop.f32.mrb[0].mxu0
    %9042 = vmatprep.mubr.bf16.mxu0 %v8155
    %9043 = vmatmul.mubr.bf16.gmra.mrb[0].mxu0 %v8154
    %v9044 = vpop.f32.mrb[0].mxu0
    %v9045 = vadd.f32 %v8660, %v9044
    %v9046 = vpop.f32.mrb[0].mxu0
    %v9047 = vpop.f32.mrb[0].mxu0
    %v9048 = vadd.f32 %v8663, %v9047
    %v9049 = vpop.f32.mrb[0].mxu0
    %9050 = vmatprep.mubr.bf16.mxu0 %v8157
    %9051 = vmatmul.mubr.bf16.gmra.mrb[0].mxu0 %v8156
    %v9052 = vpop.f32.mrb[0].mxu0
    %v9053 = vadd.f32 %v8668, %v9052
    %v9054 = vpop.f32.mrb[0].mxu0
    %v9055 = vpop.f32.mrb[0].mxu0
    %v9056 = vadd.f32 %v8671, %v9055
    %v9057 = vpop.f32.mrb[0].mxu0
    %9058 = vmatprep.mubr.bf16.mxu0 %v8159
    %9059 = vmatmul.mubr.bf16.gmra.mrb[0].mxu0 %v8158
    %v9060 = vpop.f32.mrb[0].mxu0
    %v9061 = vadd.f32 %v8676, %v9060
    %v9062 = vpop.f32.mrb[0].mxu0
    %v9063 = vpop.f32.mrb[0].mxu0
    %v9064 = vadd.f32 %v8679, %v9063
    %v9065 = vpop.f32.mrb[0].mxu0
    %9066 = vmatprep.mubr.bf16.mxu0 %v8161
    %9067 = vmatmul.mubr.bf16.gmra.mrb[0].mxu0 %v8160
    %v9068 = vpop.f32.mrb[0].mxu0
    %v9069 = vadd.f32 %v8684, %v9068
    %v9070 = vpop.f32.mrb[0].mxu0
    %v9071 = vpop.f32.mrb[0].mxu0
    %v9072 = vadd.f32 %v8687, %v9071
    %v9073 = vpop.f32.mrb[0].mxu0
    %9074 = vmatprep.mubr.bf16.mxu0 %v8163
    %9075 = vmatmul.mubr.bf16.gmra.mrb[0].mxu0 %v8162
    %v9076 = vpop.f32.mrb[0].mxu0
    %v9077 = vadd.f32 %v8692, %v9076
    %v9078 = vpop.f32.mrb[0].mxu0
    %v9079 = vpop.f32.mrb[0].mxu0
    %v9080 = vadd.f32 %v8695, %v9079
    %v9081 = vpop.f32.mrb[0].mxu0
    %9082 = vmatprep.mubr.bf16.mxu0 %v8165
    %9083 = vmatmul.mubr.bf16.gmra.mrb[0].mxu0 %v8164
    %v9084 = vpop.f32.mrb[0].mxu0
    %v9085 = vadd.f32 %v8700, %v9084
    %v9086 = vpop.f32.mrb[0].mxu0
    %v9087 = vpop.f32.mrb[0].mxu0
    %v9088 = vadd.f32 %v8703, %v9087
    %v9089 = vpop.f32.mrb[0].mxu0
    %9090 = vmatprep.mubr.bf16.mxu0 %v8167
    %9091 = vmatmul.mubr.bf16.gmra.mrb[0].mxu0 %v8166
    %v9092 = vpop.f32.mrb[0].mxu0
    %v9093 = vadd.f32 %v8708, %v9092
    %v9094 = vpop.f32.mrb[0].mxu0
    %v9095 = vpop.f32.mrb[0].mxu0
    %v9096 = vadd.f32 %v8711, %v9095
    %v9097 = vpop.f32.mrb[0].mxu0
    %9098 = vmatprep.mubr.bf16.mxu0 %v8169
    %9099 = vmatmul.mubr.bf16.gmra.mrb[0].mxu0 %v8168
    %v9100 = vpop.f32.mrb[0].mxu0
    %v9101 = vadd.f32 %v8716, %v9100
    %v9102 = vpop.f32.mrb[0].mxu0
    %v9103 = vpop.f32.mrb[0].mxu0
    %v9104 = vadd.f32 %v8719, %v9103
    %v9105 = vpop.f32.mrb[0].mxu0
    %9106 = vmatprep.mubr.bf16.mxu0 %v8171
    %9107 = vmatmul.mubr.bf16.gmra.mrb[0].mxu0 %v8170
    %v9108 = vpop.f32.mrb[0].mxu0
    %v9109 = vadd.f32 %v8724, %v9108
    %v9110 = vpop.f32.mrb[0].mxu0
    %v9111 = vpop.f32.mrb[0].mxu0
    %v9112 = vadd.f32 %v8727, %v9111
    %v9113 = vpop.f32.mrb[0].mxu0
    %9114 = vdwg.mxu0
    %v9116 = vlaneseq
    %v9117 = vshrl.u32 %v9116, 7
    %v9118 = vsub.s32 0, %v9117
    %v9119 = vrot.slane %v662, %v9118
    %v9121 = vadd.f32 %v8861, %v9119
    %v9122 = vadd.f32 %v8864, %v9119
    %v9123 = vadd.f32 %v8869, %v9119
    %v9124 = vadd.f32 %v8872, %v9119
    %v9125 = vadd.f32 %v8877, %v9119
    %v9126 = vadd.f32 %v8880, %v9119
    %v9127 = vadd.f32 %v8885, %v9119
    %v9128 = vadd.f32 %v8888, %v9119
    %v9129 = vadd.f32 %v8893, %v9119
    %v9130 = vadd.f32 %v8896, %v9119
    %v9131 = vadd.f32 %v8901, %v9119
    %v9132 = vadd.f32 %v8904, %v9119
    %v9133 = vadd.f32 %v8909, %v9119
    %v9134 = vadd.f32 %v8912, %v9119
    %v9135 = vadd.f32 %v8917, %v9119
    %v9136 = vadd.f32 %v8920, %v9119
    %v9137 = vadd.f32 %v8925, %v9119
    %v9138 = vadd.f32 %v8928, %v9119
    %v9139 = vadd.f32 %v8933, %v9119
    %v9140 = vadd.f32 %v8936, %v9119
    %v9141 = vadd.f32 %v8941, %v9119
    %v9142 = vadd.f32 %v8944, %v9119
    %v9143 = vadd.f32 %v8949, %v9119
    %v9144 = vadd.f32 %v8952, %v9119
    %v9145 = vadd.f32 %v8957, %v9119
    %v9146 = vadd.f32 %v8960, %v9119
    %v9147 = vadd.f32 %v8965, %v9119
    %v9148 = vadd.f32 %v8968, %v9119
    %v9149 = vadd.f32 %v8973, %v9119
    %v9150 = vadd.f32 %v8976, %v9119
    %v9151 = vadd.f32 %v8981, %v9119
    %v9152 = vadd.f32 %v8984, %v9119
    %v9153 = vadd.f32 %v8989, %v9119
    %v9154 = vadd.f32 %v8992, %v9119
    %v9155 = vadd.f32 %v8997, %v9119
    %v9156 = vadd.f32 %v9000, %v9119
    %v9157 = vadd.f32 %v9005, %v9119
    %v9158 = vadd.f32 %v9008, %v9119
    %v9159 = vadd.f32 %v9013, %v9119
    %v9160 = vadd.f32 %v9016, %v9119
    %v9161 = vadd.f32 %v9021, %v9119
    %v9162 = vadd.f32 %v9024, %v9119
    %v9163 = vadd.f32 %v9029, %v9119
    %v9164 = vadd.f32 %v9032, %v9119
    %v9165 = vadd.f32 %v9037, %v9119
    %v9166 = vadd.f32 %v9040, %v9119
    %v9167 = vadd.f32 %v9045, %v9119
    %v9168 = vadd.f32 %v9048, %v9119
    %v9169 = vadd.f32 %v9053, %v9119
    %v9170 = vadd.f32 %v9056, %v9119
    %v9171 = vadd.f32 %v9061, %v9119
    %v9172 = vadd.f32 %v9064, %v9119
    %v9173 = vadd.f32 %v9069, %v9119
    %v9174 = vadd.f32 %v9072, %v9119
    %v9175 = vadd.f32 %v9077, %v9119
    %v9176 = vadd.f32 %v9080, %v9119
    %v9177 = vadd.f32 %v9085, %v9119
    %v9178 = vadd.f32 %v9088, %v9119
    %v9179 = vadd.f32 %v9093, %v9119
    %v9180 = vadd.f32 %v9096, %v9119
    %v9181 = vadd.f32 %v9101, %v9119
    %v9182 = vadd.f32 %v9104, %v9119
    %v9183 = vadd.f32 %v9109, %v9119
    %v9184 = vadd.f32 %v9112, %v9119
    %v9185 = vmax.f32 %v9121, 0.0
    %v9186 = vmax.f32 %v9122, 0.0
    %v9187 = vmax.f32 %v9123, 0.0
    %v9188 = vmax.f32 %v9124, 0.0
    %v9189 = vmax.f32 %v9125, 0.0
    %v9190 = vmax.f32 %v9126, 0.0
    %v9191 = vmax.f32 %v9127, 0.0
    %v9192 = vmax.f32 %v9128, 0.0
    %v9193 = vmax.f32 %v9129, 0.0
    %v9194 = vmax.f32 %v9130, 0.0
    %v9195 = vmax.f32 %v9131, 0.0
    %v9196 = vmax.f32 %v9132, 0.0
    %v9197 = vmax.f32 %v9133, 0.0
    %v9198 = vmax.f32 %v9134, 0.0
    %v9199 = vmax.f32 %v9135, 0.0
    %v9200 = vmax.f32 %v9136, 0.0
    %v9201 = vmax.f32 %v9137, 0.0
    %v9202 = vmax.f32 %v9138, 0.0
    %v9203 = vmax.f32 %v9139, 0.0
    %v9204 = vmax.f32 %v9140, 0.0
    %v9205 = vmax.f32 %v9141, 0.0
    %v9206 = vmax.f32 %v9142, 0.0
    %v9207 = vmax.f32 %v9143, 0.0
    %v9208 = vmax.f32 %v9144, 0.0
    %v9209 = vmax.f32 %v9145, 0.0
    %v9210 = vmax.f32 %v9146, 0.0
    %v9211 = vmax.f32 %v9147, 0.0
    %v9212 = vmax.f32 %v9148, 0.0
    %v9213 = vmax.f32 %v9149, 0.0
    %v9214 = vmax.f32 %v9150, 0.0
    %v9215 = vmax.f32 %v9151, 0.0
    %v9216 = vmax.f32 %v9152, 0.0
    %v9217 = vmax.f32 %v9153, 0.0
    %v9218 = vmax.f32 %v9154, 0.0
    %v9219 = vmax.f32 %v9155, 0.0
    %v9220 = vmax.f32 %v9156, 0.0
    %v9221 = vmax.f32 %v9157, 0.0
    %v9222 = vmax.f32 %v9158, 0.0
    %v9223 = vmax.f32 %v9159, 0.0
    %v9224 = vmax.f32 %v9160, 0.0
    %v9225 = vmax.f32 %v9161, 0.0
    %v9226 = vmax.f32 %v9162, 0.0
    %v9227 = vmax.f32 %v9163, 0.0
    %v9228 = vmax.f32 %v9164, 0.0
    %v9229 = vmax.f32 %v9165, 0.0
    %v9230 = vmax.f32 %v9166, 0.0
    %v9231 = vmax.f32 %v9167, 0.0
    %v9232 = vmax.f32 %v9168, 0.0
    %v9233 = vmax.f32 %v9169, 0.0
    %v9234 = vmax.f32 %v9170, 0.0
    %v9235 = vmax.f32 %v9171, 0.0
    %v9236 = vmax.f32 %v9172, 0.0
    %v9237 = vmax.f32 %v9173, 0.0
    %v9238 = vmax.f32 %v9174, 0.0
    %v9239 = vmax.f32 %v9175, 0.0
    %v9240 = vmax.f32 %v9176, 0.0
    %v9241 = vmax.f32 %v9177, 0.0
    %v9242 = vmax.f32 %v9178, 0.0
    %v9243 = vmax.f32 %v9179, 0.0
    %v9244 = vmax.f32 %v9180, 0.0
    %v9245 = vmax.f32 %v9181, 0.0
    %v9246 = vmax.f32 %v9182, 0.0
    %v9247 = vmax.f32 %v9183, 0.0
    %v9248 = vmax.f32 %v9184, 0.0
    %v9249 = vpack.c.bf16 %v9186, %v9185
    %v9250 = vpack.c.bf16 %v9188, %v9187
    %v9251 = vpack.c.bf16 %v9190, %v9189
    %v9252 = vpack.c.bf16 %v9192, %v9191
    %v9253 = vpack.c.bf16 %v9194, %v9193
    %v9254 = vpack.c.bf16 %v9196, %v9195
    %v9255 = vpack.c.bf16 %v9198, %v9197
    %v9256 = vpack.c.bf16 %v9200, %v9199
    %v9257 = vpack.c.bf16 %v9202, %v9201
    %v9258 = vpack.c.bf16 %v9204, %v9203
    %v9259 = vpack.c.bf16 %v9206, %v9205
    %v9260 = vpack.c.bf16 %v9208, %v9207
    %v9261 = vpack.c.bf16 %v9210, %v9209
    %v9262 = vpack.c.bf16 %v9212, %v9211
    %v9263 = vpack.c.bf16 %v9214, %v9213
    %v9264 = vpack.c.bf16 %v9216, %v9215
    %v9265 = vpack.c.bf16 %v9218, %v9217
    %v9266 = vpack.c.bf16 %v9220, %v9219
    %v9267 = vpack.c.bf16 %v9222, %v9221
    %v9268 = vpack.c.bf16 %v9224, %v9223
    %v9269 = vpack.c.bf16 %v9226, %v9225
    %v9270 = vpack.c.bf16 %v9228, %v9227
    %v9271 = vpack.c.bf16 %v9230, %v9229
    %v9272 = vpack.c.bf16 %v9232, %v9231
    %v9273 = vpack.c.bf16 %v9234, %v9233
    %v9274 = vpack.c.bf16 %v9236, %v9235
    %v9275 = vpack.c.bf16 %v9238, %v9237
    %v9276 = vpack.c.bf16 %v9240, %v9239
    %v9277 = vpack.c.bf16 %v9242, %v9241
    %v9278 = vpack.c.bf16 %v9244, %v9243
    %v9279 = vpack.c.bf16 %v9246, %v9245
    %v9280 = vpack.c.bf16 %v9248, %v9247
    %v9282 = vlaneseq
    %v9283 = vshrl.u32 %v9282, 7
    %v9284 = vsub.s32 0, %v9283
    %v9285 = vrot.slane %v679, %v9284
    %v9303 = vunpack.c.l.b16 %v663
    %v9304 = vunpack.c.l.b16 %v664
    %v9305 = vunpack.c.l.b16 %v665
    %v9306 = vunpack.c.l.b16 %v666
    %v9307 = vunpack.c.l.b16 %v667
    %v9308 = vunpack.c.l.b16 %v668
    %v9309 = vunpack.c.l.b16 %v669
    %v9310 = vunpack.c.l.b16 %v670
    %v9311 = vunpack.c.l.b16 %v671
    %v9312 = vunpack.c.l.b16 %v672
    %v9313 = vunpack.c.l.b16 %v673
    %v9314 = vunpack.c.l.b16 %v674
    %v9315 = vunpack.c.l.b16 %v675
    %v9316 = vunpack.c.l.b16 %v676
    %v9317 = vunpack.c.l.b16 %v677
    %v9318 = vunpack.c.l.b16 %v678
    %v9319 = vpack.c.b16 %v9304, %v9303
    %v9320 = vpack.c.b16 %v9306, %v9305
    %v9321 = vpack.c.b16 %v9308, %v9307
    %v9322 = vpack.c.b16 %v9310, %v9309
    %v9323 = vpack.c.b16 %v9312, %v9311
    %v9324 = vpack.c.b16 %v9314, %v9313
    %v9325 = vpack.c.b16 %v9316, %v9315
    %v9326 = vpack.c.b16 %v9318, %v9317
    %9335 = vmatprep.subr.bf16.mxu0 0
    %9336 = vmatpush1.bf16.msra.mxu0 %v9319
    %9337 = vmatprep.subr.bf16.mxu0 0
    %9338 = vmatpush1.bf16.msra.mxu0 %v9320
    %9339 = vmatprep.subr.bf16.mxu0 0
    %9340 = vmatpush1.bf16.msra.mxu0 %v9321
    %9341 = vmatprep.subr.bf16.mxu0 0
    %9342 = vmatpush1.bf16.msra.mxu0 %v9322
    %9343 = vmatprep.subr.bf16.mxu0 0
    %9344 = vmatpush1.bf16.msra.mxu0 %v9323
    %9345 = vmatprep.subr.bf16.mxu0 0
    %9346 = vmatpush1.bf16.msra.mxu0 %v9324
    %9347 = vmatprep.subr.bf16.mxu0 0
    %9348 = vmatpush1.bf16.msra.mxu0 %v9325
    %9349 = vmatprep.subr.bf16.mxu0 0
    %9350 = vmatpush1.bf16.msra.mxu0 %v9326
    %9351 = vmatprep.subr.bf16.mxu0 0
    %9352 = vmatpush1.bf16.msra.mxu0 0
    %9353 = vmatprep.subr.bf16.mxu0 0
    %9354 = vmatpush1.bf16.msra.mxu0 0
    %9355 = vmatprep.subr.bf16.mxu0 0
    %9356 = vmatpush1.bf16.msra.mxu0 0
    %9357 = vmatprep.subr.bf16.mxu0 0
    %9358 = vmatpush1.bf16.msra.mxu0 0
    %9359 = vmatprep.subr.bf16.mxu0 0
    %9360 = vmatpush1.bf16.msra.mxu0 0
    %9361 = vmatprep.subr.bf16.mxu0 0
    %9362 = vmatpush1.bf16.msra.mxu0 0
    %9363 = vmatprep.subr.bf16.mxu0 0
    %9364 = vmatpush1.bf16.msra.mxu0 0
    %9365 = vmatprep.subr.bf16.mxu0 0
    %9366 = vmatpush1.bf16.msra.mxu0 0
    %9367 = vmatprep.mubr.bf16.mxu0 0
    %9368 = vmatmul.mubr.bf16.gmra.mrb[0].mxu0 %v9249
    %v9369 = vpop.f32.mrb[0].mxu0
    %v9370 = vadd.f32 %v9285, %v9369
    %v9371 = vpop.f32.mrb[0].mxu0
    %v9372 = vpop.f32.mrb[0].mxu0
    %v9373 = vadd.f32 %v9285, %v9372
    %v9374 = vpop.f32.mrb[0].mxu0
    %9375 = vmatprep.mubr.bf16.mxu0 0
    %9376 = vmatmul.mubr.bf16.gmra.mrb[0].mxu0 %v9250
    %v9377 = vpop.f32.mrb[0].mxu0
    %v9378 = vadd.f32 %v9285, %v9377
    %v9379 = vpop.f32.mrb[0].mxu0
    %v9380 = vpop.f32.mrb[0].mxu0
    %v9381 = vadd.f32 %v9285, %v9380
    %v9382 = vpop.f32.mrb[0].mxu0
    %9383 = vmatprep.mubr.bf16.mxu0 0
    %9384 = vmatmul.mubr.bf16.gmra.mrb[0].mxu0 %v9251
    %v9385 = vpop.f32.mrb[0].mxu0
    %v9386 = vadd.f32 %v9285, %v9385
    %v9387 = vpop.f32.mrb[0].mxu0
    %v9388 = vpop.f32.mrb[0].mxu0
    %v9389 = vadd.f32 %v9285, %v9388
    %v9390 = vpop.f32.mrb[0].mxu0
    %9391 = vmatprep.mubr.bf16.mxu0 0
    %9392 = vmatmul.mubr.bf16.gmra.mrb[0].mxu0 %v9252
    %v9393 = vpop.f32.mrb[0].mxu0
    %v9394 = vadd.f32 %v9285, %v9393
    %v9395 = vpop.f32.mrb[0].mxu0
    %v9396 = vpop.f32.mrb[0].mxu0
    %v9397 = vadd.f32 %v9285, %v9396
    %v9398 = vpop.f32.mrb[0].mxu0
    %9399 = vmatprep.mubr.bf16.mxu0 0
    %9400 = vmatmul.mubr.bf16.gmra.mrb[0].mxu0 %v9253
    %v9401 = vpop.f32.mrb[0].mxu0
    %v9402 = vadd.f32 %v9285, %v9401
    %v9403 = vpop.f32.mrb[0].mxu0
    %v9404 = vpop.f32.mrb[0].mxu0
    %v9405 = vadd.f32 %v9285, %v9404
    %v9406 = vpop.f32.mrb[0].mxu0
    %9407 = vmatprep.mubr.bf16.mxu0 0
    %9408 = vmatmul.mubr.bf16.gmra.mrb[0].mxu0 %v9254
    %v9409 = vpop.f32.mrb[0].mxu0
    %v9410 = vadd.f32 %v9285, %v9409
    %v9411 = vpop.f32.mrb[0].mxu0
    %v9412 = vpop.f32.mrb[0].mxu0
    %v9413 = vadd.f32 %v9285, %v9412
    %v9414 = vpop.f32.mrb[0].mxu0
    %9415 = vmatprep.mubr.bf16.mxu0 0
    %9416 = vmatmul.mubr.bf16.gmra.mrb[0].mxu0 %v9255
    %v9417 = vpop.f32.mrb[0].mxu0
    %v9418 = vadd.f32 %v9285, %v9417
    %v9419 = vpop.f32.mrb[0].mxu0
    %v9420 = vpop.f32.mrb[0].mxu0
    %v9421 = vadd.f32 %v9285, %v9420
    %v9422 = vpop.f32.mrb[0].mxu0
    %9423 = vmatprep.mubr.bf16.mxu0 0
    %9424 = vmatmul.mubr.bf16.gmra.mrb[0].mxu0 %v9256
    %v9425 = vpop.f32.mrb[0].mxu0
    %v9426 = vadd.f32 %v9285, %v9425
    %v9427 = vpop.f32.mrb[0].mxu0
    %v9428 = vpop.f32.mrb[0].mxu0
    %v9429 = vadd.f32 %v9285, %v9428
    %v9430 = vpop.f32.mrb[0].mxu0
    %9431 = vmatprep.mubr.bf16.mxu0 0
    %9432 = vmatmul.mubr.bf16.gmra.mrb[0].mxu0 %v9257
    %v9433 = vpop.f32.mrb[0].mxu0
    %v9434 = vadd.f32 %v9285, %v9433
    %v9435 = vpop.f32.mrb[0].mxu0
    %v9436 = vpop.f32.mrb[0].mxu0
    %v9437 = vadd.f32 %v9285, %v9436
    %v9438 = vpop.f32.mrb[0].mxu0
    %9439 = vmatprep.mubr.bf16.mxu0 0
    %9440 = vmatmul.mubr.bf16.gmra.mrb[0].mxu0 %v9258
    %v9441 = vpop.f32.mrb[0].mxu0
    %v9442 = vadd.f32 %v9285, %v9441
    %v9443 = vpop.f32.mrb[0].mxu0
    %v9444 = vpop.f32.mrb[0].mxu0
    %v9445 = vadd.f32 %v9285, %v9444
    %v9446 = vpop.f32.mrb[0].mxu0
    %9447 = vmatprep.mubr.bf16.mxu0 0
    %9448 = vmatmul.mubr.bf16.gmra.mrb[0].mxu0 %v9259
    %v9449 = vpop.f32.mrb[0].mxu0
    %v9450 = vadd.f32 %v9285, %v9449
    %v9451 = vpop.f32.mrb[0].mxu0
    %v9452 = vpop.f32.mrb[0].mxu0
    %v9453 = vadd.f32 %v9285, %v9452
    %v9454 = vpop.f32.mrb[0].mxu0
    %9455 = vmatprep.mubr.bf16.mxu0 0
    %9456 = vmatmul.mubr.bf16.gmra.mrb[0].mxu0 %v9260
    %v9457 = vpop.f32.mrb[0].mxu0
    %v9458 = vadd.f32 %v9285, %v9457
    %v9459 = vpop.f32.mrb[0].mxu0
    %v9460 = vpop.f32.mrb[0].mxu0
    %v9461 = vadd.f32 %v9285, %v9460
    %v9462 = vpop.f32.mrb[0].mxu0
    %9463 = vmatprep.mubr.bf16.mxu0 0
    %9464 = vmatmul.mubr.bf16.gmra.mrb[0].mxu0 %v9261
    %v9465 = vpop.f32.mrb[0].mxu0
    %v9466 = vadd.f32 %v9285, %v9465
    %v9467 = vpop.f32.mrb[0].mxu0
    %v9468 = vpop.f32.mrb[0].mxu0
    %v9469 = vadd.f32 %v9285, %v9468
    %v9470 = vpop.f32.mrb[0].mxu0
    %9471 = vmatprep.mubr.bf16.mxu0 0
    %9472 = vmatmul.mubr.bf16.gmra.mrb[0].mxu0 %v9262
    %v9473 = vpop.f32.mrb[0].mxu0
    %v9474 = vadd.f32 %v9285, %v9473
    %v9475 = vpop.f32.mrb[0].mxu0
    %v9476 = vpop.f32.mrb[0].mxu0
    %v9477 = vadd.f32 %v9285, %v9476
    %v9478 = vpop.f32.mrb[0].mxu0
    %9479 = vmatprep.mubr.bf16.mxu0 0
    %9480 = vmatmul.mubr.bf16.gmra.mrb[0].mxu0 %v9263
    %v9481 = vpop.f32.mrb[0].mxu0
    %v9482 = vadd.f32 %v9285, %v9481
    %v9483 = vpop.f32.mrb[0].mxu0
    %v9484 = vpop.f32.mrb[0].mxu0
    %v9485 = vadd.f32 %v9285, %v9484
    %v9486 = vpop.f32.mrb[0].mxu0
    %9487 = vmatprep.mubr.bf16.mxu0 0
    %9488 = vmatmul.mubr.bf16.gmra.mrb[0].mxu0 %v9264
    %v9489 = vpop.f32.mrb[0].mxu0
    %v9490 = vadd.f32 %v9285, %v9489
    %v9491 = vpop.f32.mrb[0].mxu0
    %v9492 = vpop.f32.mrb[0].mxu0
    %v9493 = vadd.f32 %v9285, %v9492
    %v9494 = vpop.f32.mrb[0].mxu0
    %9495 = vmatprep.mubr.bf16.mxu0 0
    %9496 = vmatmul.mubr.bf16.gmra.mrb[0].mxu0 %v9265
    %v9497 = vpop.f32.mrb[0].mxu0
    %v9498 = vadd.f32 %v9285, %v9497
    %v9499 = vpop.f32.mrb[0].mxu0
    %v9500 = vpop.f32.mrb[0].mxu0
    %v9501 = vadd.f32 %v9285, %v9500
    %v9502 = vpop.f32.mrb[0].mxu0
    %9503 = vmatprep.mubr.bf16.mxu0 0
    %9504 = vmatmul.mubr.bf16.gmra.mrb[0].mxu0 %v9266
    %v9505 = vpop.f32.mrb[0].mxu0
    %v9506 = vadd.f32 %v9285, %v9505
    %v9507 = vpop.f32.mrb[0].mxu0
    %v9508 = vpop.f32.mrb[0].mxu0
    %v9509 = vadd.f32 %v9285, %v9508
    %v9510 = vpop.f32.mrb[0].mxu0
    %9511 = vmatprep.mubr.bf16.mxu0 0
    %9512 = vmatmul.mubr.bf16.gmra.mrb[0].mxu0 %v9267
    %v9513 = vpop.f32.mrb[0].mxu0
    %v9514 = vadd.f32 %v9285, %v9513
    %v9515 = vpop.f32.mrb[0].mxu0
    %v9516 = vpop.f32.mrb[0].mxu0
    %v9517 = vadd.f32 %v9285, %v9516
    %v9518 = vpop.f32.mrb[0].mxu0
    %9519 = vmatprep.mubr.bf16.mxu0 0
    %9520 = vmatmul.mubr.bf16.gmra.mrb[0].mxu0 %v9268
    %v9521 = vpop.f32.mrb[0].mxu0
    %v9522 = vadd.f32 %v9285, %v9521
    %v9523 = vpop.f32.mrb[0].mxu0
    %v9524 = vpop.f32.mrb[0].mxu0
    %v9525 = vadd.f32 %v9285, %v9524
    %v9526 = vpop.f32.mrb[0].mxu0
    %9527 = vmatprep.mubr.bf16.mxu0 0
    %9528 = vmatmul.mubr.bf16.gmra.mrb[0].mxu0 %v9269
    %v9529 = vpop.f32.mrb[0].mxu0
    %v9530 = vadd.f32 %v9285, %v9529
    %v9531 = vpop.f32.mrb[0].mxu0
    %v9532 = vpop.f32.mrb[0].mxu0
    %v9533 = vadd.f32 %v9285, %v9532
    %v9534 = vpop.f32.mrb[0].mxu0
    %9535 = vmatprep.mubr.bf16.mxu0 0
    %9536 = vmatmul.mubr.bf16.gmra.mrb[0].mxu0 %v9270
    %v9537 = vpop.f32.mrb[0].mxu0
    %v9538 = vadd.f32 %v9285, %v9537
    %v9539 = vpop.f32.mrb[0].mxu0
    %v9540 = vpop.f32.mrb[0].mxu0
    %v9541 = vadd.f32 %v9285, %v9540
    %v9542 = vpop.f32.mrb[0].mxu0
    %9543 = vmatprep.mubr.bf16.mxu0 0
    %9544 = vmatmul.mubr.bf16.gmra.mrb[0].mxu0 %v9271
    %v9545 = vpop.f32.mrb[0].mxu0
    %v9546 = vadd.f32 %v9285, %v9545
    %v9547 = vpop.f32.mrb[0].mxu0
    %v9548 = vpop.f32.mrb[0].mxu0
    %v9549 = vadd.f32 %v9285, %v9548
    %v9550 = vpop.f32.mrb[0].mxu0
    %9551 = vmatprep.mubr.bf16.mxu0 0
    %9552 = vmatmul.mubr.bf16.gmra.mrb[0].mxu0 %v9272
    %v9553 = vpop.f32.mrb[0].mxu0
    %v9554 = vadd.f32 %v9285, %v9553
    %v9555 = vpop.f32.mrb[0].mxu0
    %v9556 = vpop.f32.mrb[0].mxu0
    %v9557 = vadd.f32 %v9285, %v9556
    %v9558 = vpop.f32.mrb[0].mxu0
    %9559 = vmatprep.mubr.bf16.mxu0 0
    %9560 = vmatmul.mubr.bf16.gmra.mrb[0].mxu0 %v9273
    %v9561 = vpop.f32.mrb[0].mxu0
    %v9562 = vadd.f32 %v9285, %v9561
    %v9563 = vpop.f32.mrb[0].mxu0
    %v9564 = vpop.f32.mrb[0].mxu0
    %v9565 = vadd.f32 %v9285, %v9564
    %v9566 = vpop.f32.mrb[0].mxu0
    %9567 = vmatprep.mubr.bf16.mxu0 0
    %9568 = vmatmul.mubr.bf16.gmra.mrb[0].mxu0 %v9274
    %v9569 = vpop.f32.mrb[0].mxu0
    %v9570 = vadd.f32 %v9285, %v9569
    %v9571 = vpop.f32.mrb[0].mxu0
    %v9572 = vpop.f32.mrb[0].mxu0
    %v9573 = vadd.f32 %v9285, %v9572
    %v9574 = vpop.f32.mrb[0].mxu0
    %9575 = vmatprep.mubr.bf16.mxu0 0
    %9576 = vmatmul.mubr.bf16.gmra.mrb[0].mxu0 %v9275
    %v9577 = vpop.f32.mrb[0].mxu0
    %v9578 = vadd.f32 %v9285, %v9577
    %v9579 = vpop.f32.mrb[0].mxu0
    %v9580 = vpop.f32.mrb[0].mxu0
    %v9581 = vadd.f32 %v9285, %v9580
    %v9582 = vpop.f32.mrb[0].mxu0
    %9583 = vmatprep.mubr.bf16.mxu0 0
    %9584 = vmatmul.mubr.bf16.gmra.mrb[0].mxu0 %v9276
    %v9585 = vpop.f32.mrb[0].mxu0
    %v9586 = vadd.f32 %v9285, %v9585
    %v9587 = vpop.f32.mrb[0].mxu0
    %v9588 = vpop.f32.mrb[0].mxu0
    %v9589 = vadd.f32 %v9285, %v9588
    %v9590 = vpop.f32.mrb[0].mxu0
    %9591 = vmatprep.mubr.bf16.mxu0 0
    %9592 = vmatmul.mubr.bf16.gmra.mrb[0].mxu0 %v9277
    %v9593 = vpop.f32.mrb[0].mxu0
    %v9594 = vadd.f32 %v9285, %v9593
    %v9595 = vpop.f32.mrb[0].mxu0
    %v9596 = vpop.f32.mrb[0].mxu0
    %v9597 = vadd.f32 %v9285, %v9596
    %v9598 = vpop.f32.mrb[0].mxu0
    %9599 = vmatprep.mubr.bf16.mxu0 0
    %9600 = vmatmul.mubr.bf16.gmra.mrb[0].mxu0 %v9278
    %v9601 = vpop.f32.mrb[0].mxu0
    %v9602 = vadd.f32 %v9285, %v9601
    %v9603 = vpop.f32.mrb[0].mxu0
    %v9604 = vpop.f32.mrb[0].mxu0
    %v9605 = vadd.f32 %v9285, %v9604
    %v9606 = vpop.f32.mrb[0].mxu0
    %9607 = vmatprep.mubr.bf16.mxu0 0
    %9608 = vmatmul.mubr.bf16.gmra.mrb[0].mxu0 %v9279
    %v9609 = vpop.f32.mrb[0].mxu0
    %v9610 = vadd.f32 %v9285, %v9609
    %v9611 = vpop.f32.mrb[0].mxu0
    %v9612 = vpop.f32.mrb[0].mxu0
    %v9613 = vadd.f32 %v9285, %v9612
    %v9614 = vpop.f32.mrb[0].mxu0
    %9615 = vmatprep.mubr.bf16.mxu0 0
    %9616 = vmatmul.mubr.bf16.gmra.mrb[0].mxu0 %v9280
    %v9617 = vpop.f32.mrb[0].mxu0
    %v9618 = vadd.f32 %v9285, %v9617
    %v9619 = vpop.f32.mrb[0].mxu0
    %v9620 = vpop.f32.mrb[0].mxu0
    %v9621 = vadd.f32 %v9285, %v9620
    %v9622 = vpop.f32.mrb[0].mxu0
    %9623 = vdwg.mxu0
    %v9624 = vadd.f32 %v9370, %v7854
    %v9625 = vadd.f32 %v9373, %v7857
    %v9626 = vadd.f32 %v9378, %v7862
    %v9627 = vadd.f32 %v9381, %v7865
    %v9628 = vadd.f32 %v9386, %v7870
    %v9629 = vadd.f32 %v9389, %v7873
    %v9630 = vadd.f32 %v9394, %v7878
    %v9631 = vadd.f32 %v9397, %v7881
    %v9632 = vadd.f32 %v9402, %v7886
    %v9633 = vadd.f32 %v9405, %v7889
    %v9634 = vadd.f32 %v9410, %v7894
    %v9635 = vadd.f32 %v9413, %v7897
    %v9636 = vadd.f32 %v9418, %v7902
    %v9637 = vadd.f32 %v9421, %v7905
    %v9638 = vadd.f32 %v9426, %v7910
    %v9639 = vadd.f32 %v9429, %v7913
    %v9640 = vadd.f32 %v9434, %v7918
    %v9641 = vadd.f32 %v9437, %v7921
    %v9642 = vadd.f32 %v9442, %v7926
    %v9643 = vadd.f32 %v9445, %v7929
    %v9644 = vadd.f32 %v9450, %v7934
    %v9645 = vadd.f32 %v9453, %v7937
    %v9646 = vadd.f32 %v9458, %v7942
    %v9647 = vadd.f32 %v9461, %v7945
    %v9648 = vadd.f32 %v9466, %v7950
    %v9649 = vadd.f32 %v9469, %v7953
    %v9650 = vadd.f32 %v9474, %v7958
    %v9651 = vadd.f32 %v9477, %v7961
    %v9652 = vadd.f32 %v9482, %v7966
    %v9653 = vadd.f32 %v9485, %v7969
    %v9654 = vadd.f32 %v9490, %v7974
    %v9655 = vadd.f32 %v9493, %v7977
    %v9656 = vadd.f32 %v9498, %v7982
    %v9657 = vadd.f32 %v9501, %v7985
    %v9658 = vadd.f32 %v9506, %v7990
    %v9659 = vadd.f32 %v9509, %v7993
    %v9660 = vadd.f32 %v9514, %v7998
    %v9661 = vadd.f32 %v9517, %v8001
    %v9662 = vadd.f32 %v9522, %v8006
    %v9663 = vadd.f32 %v9525, %v8009
    %v9664 = vadd.f32 %v9530, %v8014
    %v9665 = vadd.f32 %v9533, %v8017
    %v9666 = vadd.f32 %v9538, %v8022
    %v9667 = vadd.f32 %v9541, %v8025
    %v9668 = vadd.f32 %v9546, %v8030
    %v9669 = vadd.f32 %v9549, %v8033
    %v9670 = vadd.f32 %v9554, %v8038
    %v9671 = vadd.f32 %v9557, %v8041
    %v9672 = vadd.f32 %v9562, %v8046
    %v9673 = vadd.f32 %v9565, %v8049
    %v9674 = vadd.f32 %v9570, %v8054
    %v9675 = vadd.f32 %v9573, %v8057
    %v9676 = vadd.f32 %v9578, %v8062
    %v9677 = vadd.f32 %v9581, %v8065
    %v9678 = vadd.f32 %v9586, %v8070
    %v9679 = vadd.f32 %v9589, %v8073
    %v9680 = vadd.f32 %v9594, %v8078
    %v9681 = vadd.f32 %v9597, %v8081
    %v9682 = vadd.f32 %v9602, %v8086
    %v9683 = vadd.f32 %v9605, %v8089
    %v9684 = vadd.f32 %v9610, %v8094
    %v9685 = vadd.f32 %v9613, %v8097
    %v9686 = vadd.f32 %v9618, %v8102
    %v9687 = vadd.f32 %v9621, %v8105
    %9688 = vst [vmem:[#allocation31] sm:$0xff] %v9624
    %9689 = vst [vmem:[#allocation31 + $0x8] sm:$0xff] %v9625
    %9690 = vst [vmem:[#allocation31 + $0x10] sm:$0xff] %v9626
    %9691 = vst [vmem:[#allocation31 + $0x18] sm:$0xff] %v9627
    %9692 = vst [vmem:[#allocation31 + $0x20] sm:$0xff] %v9628
    %9693 = vst [vmem:[#allocation31 + $0x28] sm:$0xff] %v9629
    %9694 = vst [vmem:[#allocation31 + $0x30] sm:$0xff] %v9630
    %9695 = vst [vmem:[#allocation31 + $0x38] sm:$0xff] %v9631
    %9696 = vst [vmem:[#allocation31 + $0x40] sm:$0xff] %v9632
    %9697 = vst [vmem:[#allocation31 + $0x48] sm:$0xff] %v9633
    %9698 = vst [vmem:[#allocation31 + $0x50] sm:$0xff] %v9634
    %9699 = vst [vmem:[#allocation31 + $0x58] sm:$0xff] %v9635
    %9700 = vst [vmem:[#allocation31 + $0x60] sm:$0xff] %v9636
    %9701 = vst [vmem:[#allocation31 + $0x68] sm:$0xff] %v9637
    %9702 = vst [vmem:[#allocation31 + $0x70] sm:$0xff] %v9638
    %9703 = vst [vmem:[#allocation31 + $0x78] sm:$0xff] %v9639
    %9704 = vst [vmem:[#allocation31 + $0x80] sm:$0xff] %v9640
    %9705 = vst [vmem:[#allocation31 + $0x88] sm:$0xff] %v9641
    %9706 = vst [vmem:[#allocation31 + $0x90] sm:$0xff] %v9642
    %9707 = vst [vmem:[#allocation31 + $0x98] sm:$0xff] %v9643
    %9708 = vst [vmem:[#allocation31 + $0xa0] sm:$0xff] %v9644
    %9709 = vst [vmem:[#allocation31 + $0xa8] sm:$0xff] %v9645
    %9710 = vst [vmem:[#allocation31 + $0xb0] sm:$0xff] %v9646
    %9711 = vst [vmem:[#allocation31 + $0xb8] sm:$0xff] %v9647
    %9712 = vst [vmem:[#allocation31 + $0xc0] sm:$0xff] %v9648
    %9713 = vst [vmem:[#allocation31 + $0xc8] sm:$0xff] %v9649
    %9714 = vst [vmem:[#allocation31 + $0xd0] sm:$0xff] %v9650
    %9715 = vst [vmem:[#allocation31 + $0xd8] sm:$0xff] %v9651
    %9716 = vst [vmem:[#allocation31 + $0xe0] sm:$0xff] %v9652
    %9717 = vst [vmem:[#allocation31 + $0xe8] sm:$0xff] %v9653
    %9718 = vst [vmem:[#allocation31 + $0xf0] sm:$0xff] %v9654
    %9719 = vst [vmem:[#allocation31 + $0xf8] sm:$0xff] %v9655
    %9720 = vst [vmem:[#allocation31 + $0x100] sm:$0xff] %v9656
    %9721 = vst [vmem:[#allocation31 + $0x108] sm:$0xff] %v9657
    %9722 = vst [vmem:[#allocation31 + $0x110] sm:$0xff] %v9658
    %9723 = vst [vmem:[#allocation31 + $0x118] sm:$0xff] %v9659
    %9724 = vst [vmem:[#allocation31 + $0x120] sm:$0xff] %v9660
    %9725 = vst [vmem:[#allocation31 + $0x128] sm:$0xff] %v9661
    %9726 = vst [vmem:[#allocation31 + $0x130] sm:$0xff] %v9662
    %9727 = vst [vmem:[#allocation31 + $0x138] sm:$0xff] %v9663
    %9728 = vst [vmem:[#allocation31 + $0x140] sm:$0xff] %v9664
    %9729 = vst [vmem:[#allocation31 + $0x148] sm:$0xff] %v9665
    %9730 = vst [vmem:[#allocation31 + $0x150] sm:$0xff] %v9666
    %9731 = vst [vmem:[#allocation31 + $0x158] sm:$0xff] %v9667
    %9732 = vst [vmem:[#allocation31 + $0x160] sm:$0xff] %v9668
    %9733 = vst [vmem:[#allocation31 + $0x168] sm:$0xff] %v9669
    %9734 = vst [vmem:[#allocation31 + $0x170] sm:$0xff] %v9670
    %9735 = vst [vmem:[#allocation31 + $0x178] sm:$0xff] %v9671
    %9736 = vst [vmem:[#allocation31 + $0x180] sm:$0xff] %v9672
    %9737 = vst [vmem:[#allocation31 + $0x188] sm:$0xff] %v9673
    %9738 = vst [vmem:[#allocation31 + $0x190] sm:$0xff] %v9674
    %9739 = vst [vmem:[#allocation31 + $0x198] sm:$0xff] %v9675
    %9740 = vst [vmem:[#allocation31 + $0x1a0] sm:$0xff] %v9676
    %9741 = vst [vmem:[#allocation31 + $0x1a8] sm:$0xff] %v9677
    %9742 = vst [vmem:[#allocation31 + $0x1b0] sm:$0xff] %v9678
    %9743 = vst [vmem:[#allocation31 + $0x1b8] sm:$0xff] %v9679
    %9744 = vst [vmem:[#allocation31 + $0x1c0] sm:$0xff] %v9680
    %9745 = vst [vmem:[#allocation31 + $0x1c8] sm:$0xff] %v9681
    %9746 = vst [vmem:[#allocation31 + $0x1d0] sm:$0xff] %v9682
    %9747 = vst [vmem:[#allocation31 + $0x1d8] sm:$0xff] %v9683
    %9748 = vst [vmem:[#allocation31 + $0x1e0] sm:$0xff] %v9684
    %9749 = vst [vmem:[#allocation31 + $0x1e8] sm:$0xff] %v9685
    %9750 = vst [vmem:[#allocation31 + $0x1f0] sm:$0xff] %v9686
    %9751 = vst [vmem:[#allocation31 + $0x1f8] sm:$0xff] %v9687
    // Predicated region
    $region178: #{tpu_custom_call.1} parent=1 // pred_check
      _
    $region179: #{tpu_custom_call.1} parent=1 // pred_check_branch
      %9753 = sbr.rel (0) target = $region181
    $region180: #{tpu_custom_call.1} parent=1 // pred_region
      %s9755 = ssub.s32 8192, 8192
      %9756 = vsyncadd [#allocation4], %s9755
      %s9757 = sshll.u32 [#allocation31], 4
      %s9758 = int_to_ptr.vmem [resolvable:$true] %s9757
      %9763 = dma.vmem_to_hbm [thread:$0]  %s9758, 8192, %s26, [#allocation4], 128, 128, 8
    $region181: #{tpu_custom_call.1} parent=1 // pred_fallthru
      _
    // Predicated region
    $region182: #{tpu_custom_call.1} parent=1 // pred_check
      _
    $region183: #{tpu_custom_call.1} parent=1 // pred_check_branch
      %9765 = sbr.rel (0) target = $region185
    $region184: #{tpu_custom_call.1} parent=1 // pred_region
      %9766 = dma.done [#allocation4], 8192
    $region185: #{tpu_custom_call.1} parent=1 // pred_fallthru
      _
    %9767 = vsyncpa [#allocation3], 1
    %9768 = vsyncpa [#allocation6], 1
    %9769 = vsyncpa [#allocation9], 1
    %9770 = vsyncpa [#allocation12], 1
    %9771 = vsyncpa [#allocation15], 1
    %9772 = vsyncpa [#allocation18], 1
    %9773 = vsyncpa [#allocation21], 1
    %9774 = vsyncpa [#allocation24], 1
    %9775 = vsyncpa [#allocation27], 1
    %9776 = vsyncpa [#allocation30], 1
    %9777 = vsyncpa [#allocation4], 1

</llo_original>
